<compile_context>
chip_gen: v6e
topology: v6e:2x2x1
jax: 0.10.0
libtpu: 0.0.40
codegen_flags: <defaults>
</compile_context>

<pallas_src>
import functools

import jax
import jax.numpy as jnp
from jax.experimental import pallas as pl
from jax.experimental.pallas import tpu as pltpu

BN_EPS = 1e-5
_VSPEC = pl.BlockSpec(memory_space=pltpu.MemorySpace.VMEM)


def _round_up(x, m):
    return ((x + m - 1) // m) * m


def _gen_cfg():
    """(row-tile cap, scoped-VMEM limit) per TPU generation (conservative default)."""
    cap_bytes = 0
    try:
        cap_bytes = int(getattr(pltpu.get_tpu_info(), "vmem_capacity_bytes", 0) or 0)
    except Exception:
        cap_bytes = 0
    if cap_bytes >= 96 * 1024 * 1024:          # v5e / v6e: 128 MiB VMEM
        return 1024, 64 * 1024 * 1024
    return 512, 32 * 1024 * 1024               # v7x (64 MiB) or unknown: safe point


def _choose_tiling(n_points, cap):
    """Row tile (multiple of 8, <= cap), #tiles, padded N (pad rows are masked)."""
    n8 = _round_up(max(n_points, 8), 8)
    tile = min(cap, n8)
    n_tiles = -(-n8 // tile)
    tile = _round_up(-(-n8 // n_tiles), 8)     # spread rows evenly, minimize padding
    return tile, n_tiles, tile * n_tiles


# ----------------------------------------------------------------------------
# Fused conv trunk kernel.
# Grid = (phase=2, batch, point_tiles); all axes "arbitrary" (BN reductions).
# ----------------------------------------------------------------------------
def _bn_affine(sum_ref, sumsq_ref, gamma_ref, beta_ref, count):
    """Train-mode BN as per-channel affine (scale, shift) from accumulated sums."""
    inv = 1.0 / count
    mean = sum_ref[...] * inv
    var = jnp.maximum(sumsq_ref[...] * inv - mean * mean, 0.0)   # biased var
    scale = gamma_ref[...] * jax.lax.rsqrt(var + BN_EPS)
    shift = beta_ref[...] - mean * scale
    return scale, shift


def _fused_col_stats(y, valid=None):
    """Single pass over 8-row chunks of y -> (sum, sumsq, max, min) along axis 0.

    Shares each VMEM read of the (tile_n, C3) conv3 tile across all four
    reductions (the hot loop of phase 1).  `valid` is an optional (rows,1)
    bool mask excluding padded rows.
    """
    rows, cols = y.shape
    neg = jnp.float32(-jnp.inf)
    pos = jnp.float32(jnp.inf)
    s = jnp.zeros((8, cols), jnp.float32)
    q = jnp.zeros((8, cols), jnp.float32)
    mx = jnp.full((8, cols), neg, jnp.float32)
    mn = jnp.full((8, cols), pos, jnp.float32)
    for r0 in range(0, rows, 8):
        c = y[r0:r0 + 8, :]
        if valid is not None:
            v = valid[r0:r0 + 8, :]
            vf = v.astype(jnp.float32)
            s = s + c * vf
            q = q + (c * c) * vf
            mx = jnp.maximum(mx, jnp.where(v, c, neg))
            mn = jnp.minimum(mn, jnp.where(v, c, pos))
        else:
            s = s + c
            q = q + c * c
            mx = jnp.maximum(mx, c)
            mn = jnp.minimum(mn, c)
    return (jnp.sum(s, axis=0, keepdims=True), jnp.sum(q, axis=0, keepdims=True),
            jnp.max(mx, axis=0, keepdims=True), jnp.min(mn, axis=0, keepdims=True))


def _trunk_kernel(x_ref, w1_ref, w2_ref, w3_ref,
                  sc1_ref, sh1_ref, g2_ref, be2_ref, g3_ref, be3_ref,
                  o_ref,
                  s2_ref, q2_ref, s3_ref, q3_ref, mx_ref, mn_ref,
                  *, total_rows, n_true, tile_n, relu_final, needs_mask):
    phase = pl.program_id(0)
    b = pl.program_id(1)
    n = pl.program_id(2)
    nb = pl.num_programs(1)
    nn = pl.num_programs(2)

    @pl.when((phase == 0) & (b == 0) & (n == 0))
    def _init():
        s2_ref[...] = jnp.zeros_like(s2_ref)
        q2_ref[...] = jnp.zeros_like(q2_ref)
        s3_ref[...] = jnp.zeros_like(s3_ref)
        q3_ref[...] = jnp.zeros_like(q3_ref)
        mx_ref[...] = jnp.full_like(mx_ref, -jnp.inf)
        mn_ref[...] = jnp.full_like(mn_ref, jnp.inf)

    x = x_ref[0]                  # (tile_n, 2) f32
    w1 = w1_ref[0]                # (2, C1) f32 (per-batch folded or shared)
    # Layer 1 on the VPU: a depth-2 contraction would waste the MXU.
    y1 = x[:, 0:1] * w1[0:1, :] + x[:, 1:2] * w1[1:2, :]        # (tile_n, C1) f32

    if needs_mask:
        row = jax.lax.broadcasted_iota(jnp.int32, (tile_n, 1), 0) + n * tile_n
        valid = row < n_true
        validf = valid.astype(jnp.float32)
    else:
        valid = None
        validf = None

    # bn1 affine was precomputed analytically in the wrapper (layer 1 is linear).
    h1 = jnp.maximum(y1 * sc1_ref[...] + sh1_ref[...], 0.0)
    # conv2 on the MXU: bf16 operands, f32 accumulation.
    y2 = jnp.dot(h1.astype(jnp.bfloat16), w2_ref[...],
                 preferred_element_type=jnp.float32)             # (tile_n, C2) f32

    @pl.when(phase == 0)          # sweep 1: bn2 statistics
    def _stats2():
        if needs_mask:
            s2_ref[...] += jnp.sum(y2 * validf, axis=0, keepdims=True)
            q2_ref[...] += jnp.sum((y2 * y2) * validf, axis=0, keepdims=True)
        else:
            s2_ref[...] += jnp.sum(y2, axis=0, keepdims=True)
            q2_ref[...] += jnp.sum(y2 * y2, axis=0, keepdims=True)

    @pl.when(phase == 1)          # sweep 2: bn3 statistics + per-batch max/min pool
    def _stats3():
        sc2, sh2 = _bn_affine(s2_ref, q2_ref, g2_ref, be2_ref, total_rows)
        h2 = jnp.maximum(y2 * sc2 + sh2, 0.0)
        y3 = jnp.dot(h2.astype(jnp.bfloat16), w3_ref[...],
                     preferred_element_type=jnp.float32)         # (tile_n, C3) f32
        ts, tq, tmx, tmn = _fused_col_stats(y3, valid)
        s3_ref[...] += ts
        q3_ref[...] += tq
        rs = pl.ds(b, 1)          # O(C3) dynamic single-row pooling update
        mx_ref[rs, :] = jnp.maximum(mx_ref[rs, :], tmx)
        mn_ref[rs, :] = jnp.minimum(mn_ref[rs, :], tmn)

    @pl.when((phase == 1) & (b == nb - 1) & (n == nn - 1))
    def _finalize():
        sc3, sh3 = _bn_affine(s3_ref, q3_ref, g3_ref, be3_ref, total_rows)
        # max_n(a*y+b) == a*max(y)+b if a>=0 else a*min(y)+b; ReLU is monotone.
        sel = jnp.where(sc3 >= 0.0, mx_ref[...], mn_ref[...])    # (B, C3)
        out = sel * sc3 + sh3
        if relu_final:
            out = jnp.maximum(out, 0.0)
        o_ref[...] = out.astype(o_ref.dtype)


def fused_conv_trunk(x_bnd, w1_b, w2, w3, bn1, bn2, bn3, *, relu_final):
    """x_bnd: (B, N, 2) channel-last points; w1_b: (B|1, 2, C1) conv1 weights."""
    B, N, d = x_bnd.shape
    C1, C2, C3 = w1_b.shape[-1], w2.shape[-1], w3.shape[-1]
    total_rows = B * N

    # ---- analytic bn1 statistics (replaces a full phase-0 sweep) -------------
    colsum = jnp.sum(x_bnd, axis=1)                              # (B, d)
    gram = jnp.einsum('bnd,bne->bde', x_bnd, x_bnd)              # (B, d, d)
    if w1_b.shape[0] == 1:
        w1s = w1_b[0]
        s1 = jnp.sum(colsum, axis=0) @ w1s                       # (C1,)
        q1 = jnp.einsum('de,dc,ec->c', jnp.sum(gram, axis=0), w1s, w1s)
    else:
        s1 = jnp.einsum('bd,bdc->c', colsum, w1_b)
        q1 = jnp.einsum('bde,bdc,bec->c', gram, w1_b, w1_b)
    m1 = s1 / total_rows
    v1 = jnp.maximum(q1 / total_rows - m1 * m1, 0.0)
    sc1 = (bn1[0] * jax.lax.rsqrt(v1 + BN_EPS)).reshape(1, C1)
    sh1 = (bn1[1] - m1 * sc1[0]).reshape(1, C1)

    # ---- generation-aware, N-robust tiling -----------------------------------
    tile_cap, vmem_limit = _gen_cfg()
    tile_n, n_tiles, n_pad = _choose_tiling(N, tile_cap)
    needs_mask = (n_pad != N)
    if needs_mask:
        x_bnd = jnp.pad(x_bnd, ((0, 0), (0, n_pad - N), (0, 0)))

    # bf16 weights: halves VMEM residency / DMA, exploits the bf16 MXU path.
    w2_bf = w2.astype(jnp.bfloat16)
    w3_bf = w3.astype(jnp.bfloat16)
    g2, be2 = bn2[0].reshape(1, C2), bn2[1].reshape(1, C2)
    g3, be3 = bn3[0].reshape(1, C3), bn3[1].reshape(1, C3)

    kern = functools.partial(_trunk_kernel, total_rows=total_rows, n_true=N,
                             tile_n=tile_n, relu_final=relu_final,
                             needs_mask=needs_mask)
    const2 = lambda p, b, n: (0, 0)
    if w1_b.shape[0] == 1:        # shared conv1 weight: never re-index per batch
        w1_map = lambda p, b, n: (0, 0, 0)
    else:
        w1_map = lambda p, b, n: (b, 0, 0)

    return pl.pallas_call(
        kern,
        out_shape=jax.ShapeDtypeStruct((B, C3), jnp.float32),
        grid_spec=pltpu.PrefetchScalarGridSpec(
            num_scalar_prefetch=0,
            grid=(2, B, n_tiles),
            in_specs=[
                pl.BlockSpec((1, tile_n, d), lambda p, b, n: (b, n, 0)),  # x
                pl.BlockSpec((1, d, C1), w1_map),                         # W1
                pl.BlockSpec((C1, C2), const2),                           # W2 (bf16, resident)
                pl.BlockSpec((C2, C3), const2),                           # W3 (bf16, resident)
                pl.BlockSpec((1, C1), const2), pl.BlockSpec((1, C1), const2),  # bn1 affine
                pl.BlockSpec((1, C2), const2), pl.BlockSpec((1, C2), const2),  # bn2 gamma/beta
                pl.BlockSpec((1, C3), const2), pl.BlockSpec((1, C3), const2),  # bn3 gamma/beta
            ],
            out_specs=pl.BlockSpec((B, C3), const2),
            scratch_shapes=[
                pltpu.VMEM((1, C2), jnp.float32), pltpu.VMEM((1, C2), jnp.float32),
                pltpu.VMEM((1, C3), jnp.float32), pltpu.VMEM((1, C3), jnp.float32),
                pltpu.VMEM((B, C3), jnp.float32), pltpu.VMEM((B, C3), jnp.float32),
            ],
        ),
        compiler_params=pltpu.CompilerParams(
            # BN stats / pooled accumulators couple every tile -> no "parallel"
            # axes (per-core scratch would give wrong statistics).
            dimension_semantics=("arbitrary", "arbitrary", "arbitrary"),
            vmem_limit_bytes=vmem_limit,
        ),
    )(x_bnd, w1_b, w2_bf, w3_bf, sc1, sh1, g2, be2, g3, be3)


# ----------------------------------------------------------------------------
# Fused STN FC head:  fc1 -> bn4/relu -> fc2 -> bn5/relu -> fc3 + bias + iden
# ----------------------------------------------------------------------------
def _bn_rows(y, gamma, beta):
    mean = jnp.mean(y, axis=0, keepdims=True)
    var = jnp.mean(jnp.square(y - mean), axis=0, keepdims=True)   # biased
    return (y - mean) * jax.lax.rsqrt(var + BN_EPS) * gamma + beta


def _stn_head_kernel(g_ref, w1_ref, w2_ref, w3_ref, b3_ref,
                     g4_ref, be4_ref, g5_ref, be5_ref, o_ref):
    h = jnp.dot(g_ref[...].astype(jnp.bfloat16), w1_ref[...],
                preferred_element_type=jnp.float32)
    h = jnp.maximum(_bn_rows(h, g4_ref[...], be4_ref[...]), 0.0)
    h = jnp.dot(h.astype(jnp.bfloat16), w2_ref[...],
                preferred_element_type=jnp.float32)
    h = jnp.maximum(_bn_rows(h, g5_ref[...], be5_ref[...]), 0.0)
    h = jnp.dot(h, w3_ref[...], preferred_element_type=jnp.float32) + b3_ref[...]
    col = jax.lax.broadcasted_iota(jnp.int32, h.shape, 1)
    iden = jnp.where((col == 0) | (col == 3), 1.0, 0.0).astype(h.dtype)  # [1,0,0,1]
    o_ref[...] = h + iden


def stn_head(g, w1, bn4, w2, bn5, w3, b3):
    B, F1 = g.shape
    H1, H2, KO = w1.shape[1], w2.shape[1], w3.shape[1]
    flops = 2 * B * (F1 * H1 + H1 * H2 + H2 * KO)
    bytes_accessed = (F1 * H1 + H1 * H2) * 2 + H2 * KO * 4 + B * (F1 + KO) * 4
    return pl.pallas_call(
        _stn_head_kernel,
        out_shape=jax.ShapeDtypeStruct((B, KO), jnp.float32),
        in_specs=[_VSPEC] * 9,
        out_specs=_VSPEC,
        cost_estimate=pl.CostEstimate(flops=int(flops), transcendentals=0,
                                      bytes_accessed=int(bytes_accessed)),
    )(g, w1.astype(jnp.bfloat16), w2.astype(jnp.bfloat16), w3, b3.reshape(1, -1),
      bn4[0].reshape(1, -1), bn4[1].reshape(1, -1),
      bn5[0].reshape(1, -1), bn5[1].reshape(1, -1))


# ----------------------------------------------------------------------------
# Parameters (deterministic, synthetic).  Biases feeding a train-mode BN are
# omitted: they are exactly cancelled by the mean subtraction.
# ----------------------------------------------------------------------------
def init_params(key):
    def dense(k, cin, cout, scale=0.1):
        return jax.random.normal(k, (cin, cout), jnp.float32) * scale

    def bn(c):  # PyTorch BatchNorm1d init: gamma=1, beta=0
        return jnp.ones((c,), jnp.float32), jnp.zeros((c,), jnp.float32)

    ks = jax.random.split(key, 10)
    return {
        # STN3d
        'stn_c1': dense(ks[0], 2, 64),     'stn_bn1': bn(64),
        'stn_c2': dense(ks[1], 64, 128),   'stn_bn2': bn(128),
        'stn_c3': dense(ks[2], 128, 1024), 'stn_bn3': bn(1024),
        'stn_f1': dense(ks[3], 1024, 512), 'stn_bn4': bn(512),
        'stn_f2': dense(ks[4], 512, 256),  'stn_bn5': bn(256),
        'stn_f3': dense(ks[5], 256, 4),
        'stn_f3_b': jax.random.normal(ks[9], (4,), jnp.float32) * 0.1,
        # PointNetfeat trunk
        'c1': dense(ks[6], 2, 64),     'bn1': bn(64),
        'c2': dense(ks[7], 64, 128),   'bn2': bn(128),
        'c3': dense(ks[8], 128, 1024), 'bn3': bn(1024),
    }


# ----------------------------------------------------------------------------
# Forward pass (global_feat=True, feature_transform=False)
# ----------------------------------------------------------------------------
def pointnetfeat_forward(x_bcn, p):
    B, d, N = x_bcn.shape
    x_t = jnp.transpose(x_bcn, (0, 2, 1))                       # (B, N, 2), once

    # --- STN3d: fused conv trunk (+relu after bn3), then fused FC head -------
    stn_feat = fused_conv_trunk(x_t, p['stn_c1'][None], p['stn_c2'], p['stn_c3'],
                                p['stn_bn1'], p['stn_bn2'], p['stn_bn3'],
                                relu_final=True)                 # (B, 1024)
    trans4 = stn_head(stn_feat, p['stn_f1'], p['stn_bn4'],
                      p['stn_f2'], p['stn_bn5'],
                      p['stn_f3'], p['stn_f3_b'])                # (B, 4)
    trans = trans4.reshape(B, 2, 2)

    # --- fold the 2x2 transform into conv1: removes the bmm pass entirely ----
    w1_main = jnp.einsum('bde,ec->bdc', trans, p['c1'])          # (B, 2, 64)

    # --- main trunk: conv1..conv3 + bn3 (no relu) + max, one fused kernel ----
    gfeat = fused_conv_trunk(x_t, w1_main, p['c2'], p['c3'],
                             p['bn1'], p['bn2'], p['bn3'],
                             relu_final=False)                   # (B, 1024)
    # TODO(synk): feature_transform=True (STNkd) and the global_feat=False
    # concat path are not exercised by the default config and not implemented.
    return gfeat, trans, None


# ----------------------------------------------------------------------------
if __name__ == "__main__":
    key = jax.random.PRNGKey(0)
    kx, kp = jax.random.split(key)

    B, d, N = 2, 2, 128                    # (batch, coord channels, n_points)
    x = jax.random.normal(kx, (B, d, N), jnp.float32)
    params = init_params(kp)

    fwd = jax.jit(lambda inp: pointnetfeat_forward(inp, params))
    global_feat, trans, trans_feat = fwd(x)
    jax.block_until_ready((global_feat, trans))

    assert global_feat.shape == (B, 1024)
    assert trans.shape == (B, 2, 2)
    assert trans_feat is None
    assert bool(jnp.all(jnp.isfinite(global_feat)))
    assert bool(jnp.all(jnp.isfinite(trans)))
    print("KERNEL_OK")
</pallas_src>

<mosaic_0001>
module attributes {stable_mosaic.version = 11 : i64} {
  func.func @_stn_head_kernel(%arg0: memref<2x1024xf32, #tpu.memory_space<vmem>>, %arg1: memref<1024x512xbf16, #tpu.memory_space<vmem>>, %arg2: memref<512x256xbf16, #tpu.memory_space<vmem>>, %arg3: memref<256x4xf32, #tpu.memory_space<vmem>>, %arg4: memref<1x4xf32, #tpu.memory_space<vmem>>, %arg5: memref<1x512xf32, #tpu.memory_space<vmem>>, %arg6: memref<1x512xf32, #tpu.memory_space<vmem>>, %arg7: memref<1x256xf32, #tpu.memory_space<vmem>>, %arg8: memref<1x256xf32, #tpu.memory_space<vmem>>, %arg9: memref<2x4xf32, #tpu.memory_space<vmem>>) attributes {dimension_semantics = [], scalar_prefetch = 0 : i64, scratch_operands = 0 : i64, tpu.core_type = #tpu.core_type<tc>} {
    %c0 = arith.constant 0 : index
    %c0_0 = arith.constant 0 : index
    %0 = vector.load %arg0[%c0, %c0_0] : memref<2x1024xf32, #tpu.memory_space<vmem>>, vector<2x1024xf32>
    %1 = arith.truncf %0 : vector<2x1024xf32> to vector<2x1024xbf16>
    %c0_1 = arith.constant 0 : index
    %c0_2 = arith.constant 0 : index
    %2 = vector.load %arg1[%c0_1, %c0_2] : memref<1024x512xbf16, #tpu.memory_space<vmem>>, vector<1024x512xbf16>
    %cst = arith.constant dense<0.000000e+00> : vector<2x512xf32>
    %3 = tpu.matmul %1, %2, %cst {dimension_numbers = #tpu.dot_dimension_numbers<[1], [0], [0], [1], [0, 0, 1, 1], [], []>} : vector<2x1024xbf16>, vector<1024x512xbf16>, vector<2x512xf32> -> vector<2x512xf32>
    %c0_3 = arith.constant 0 : index
    %c0_4 = arith.constant 0 : index
    %4 = vector.load %arg5[%c0_3, %c0_4] : memref<1x512xf32, #tpu.memory_space<vmem>>, vector<1x512xf32>
    %c0_5 = arith.constant 0 : index
    %c0_6 = arith.constant 0 : index
    %5 = vector.load %arg6[%c0_5, %c0_6] : memref<1x512xf32, #tpu.memory_space<vmem>>, vector<1x512xf32>
    %cst_7 = arith.constant dense<0.000000e+00> : vector<512xf32>
    %6 = vector.multi_reduction <add>, %3, %cst_7 [0] : vector<2x512xf32> to vector<512xf32>
    %7 = vector.shape_cast %6 : vector<512xf32> to vector<1x512xf32>
    %cst_8 = arith.constant 2.000000e+00 : f32
    %8 = vector.broadcast %cst_8 : f32 to vector<1x512xf32>
    %9 = arith.divf %7, %8 : vector<1x512xf32>
    %10 = vector.broadcast %9 : vector<1x512xf32> to vector<2x512xf32>
    %11 = arith.subf %3, %10 : vector<2x512xf32>
    %12 = arith.mulf %11, %11 : vector<2x512xf32>
    %cst_9 = arith.constant dense<0.000000e+00> : vector<512xf32>
    %13 = vector.multi_reduction <add>, %12, %cst_9 [0] : vector<2x512xf32> to vector<512xf32>
    %14 = vector.shape_cast %13 : vector<512xf32> to vector<1x512xf32>
    %cst_10 = arith.constant 2.000000e+00 : f32
    %15 = vector.broadcast %cst_10 : f32 to vector<1x512xf32>
    %16 = arith.divf %14, %15 : vector<1x512xf32>
    %17 = vector.broadcast %9 : vector<1x512xf32> to vector<2x512xf32>
    %18 = arith.subf %3, %17 : vector<2x512xf32>
    %cst_11 = arith.constant 9.99999974E-6 : f32
    %19 = vector.broadcast %cst_11 : f32 to vector<1x512xf32>
    %20 = arith.addf %16, %19 : vector<1x512xf32>
    %21 = math.rsqrt %20 : vector<1x512xf32>
    %22 = vector.broadcast %21 : vector<1x512xf32> to vector<2x512xf32>
    %23 = arith.mulf %18, %22 : vector<2x512xf32>
    %24 = vector.broadcast %4 : vector<1x512xf32> to vector<2x512xf32>
    %25 = arith.mulf %23, %24 : vector<2x512xf32>
    %26 = vector.broadcast %5 : vector<1x512xf32> to vector<2x512xf32>
    %27 = arith.addf %25, %26 : vector<2x512xf32>
    %cst_12 = arith.constant 0.000000e+00 : f32
    %28 = vector.broadcast %cst_12 : f32 to vector<2x512xf32>
    %29 = arith.maximumf %27, %28 : vector<2x512xf32>
    %30 = arith.truncf %29 : vector<2x512xf32> to vector<2x512xbf16>
    %c0_13 = arith.constant 0 : index
    %c0_14 = arith.constant 0 : index
    %31 = vector.load %arg2[%c0_13, %c0_14] : memref<512x256xbf16, #tpu.memory_space<vmem>>, vector<512x256xbf16>
    %cst_15 = arith.constant dense<0.000000e+00> : vector<2x256xf32>
    %32 = tpu.matmul %30, %31, %cst_15 {dimension_numbers = #tpu.dot_dimension_numbers<[1], [0], [0], [1], [0, 0, 1, 1], [], []>} : vector<2x512xbf16>, vector<512x256xbf16>, vector<2x256xf32> -> vector<2x256xf32>
    %c0_16 = arith.constant 0 : index
    %c0_17 = arith.constant 0 : index
    %33 = vector.load %arg7[%c0_16, %c0_17] : memref<1x256xf32, #tpu.memory_space<vmem>>, vector<1x256xf32>
    %c0_18 = arith.constant 0 : index
    %c0_19 = arith.constant 0 : index
    %34 = vector.load %arg8[%c0_18, %c0_19] : memref<1x256xf32, #tpu.memory_space<vmem>>, vector<1x256xf32>
    %cst_20 = arith.constant dense<0.000000e+00> : vector<256xf32>
    %35 = vector.multi_reduction <add>, %32, %cst_20 [0] : vector<2x256xf32> to vector<256xf32>
    %36 = vector.shape_cast %35 : vector<256xf32> to vector<1x256xf32>
    %cst_21 = arith.constant 2.000000e+00 : f32
    %37 = vector.broadcast %cst_21 : f32 to vector<1x256xf32>
    %38 = arith.divf %36, %37 : vector<1x256xf32>
    %39 = vector.broadcast %38 : vector<1x256xf32> to vector<2x256xf32>
    %40 = arith.subf %32, %39 : vector<2x256xf32>
    %41 = arith.mulf %40, %40 : vector<2x256xf32>
    %cst_22 = arith.constant dense<0.000000e+00> : vector<256xf32>
    %42 = vector.multi_reduction <add>, %41, %cst_22 [0] : vector<2x256xf32> to vector<256xf32>
    %43 = vector.shape_cast %42 : vector<256xf32> to vector<1x256xf32>
    %cst_23 = arith.constant 2.000000e+00 : f32
    %44 = vector.broadcast %cst_23 : f32 to vector<1x256xf32>
    %45 = arith.divf %43, %44 : vector<1x256xf32>
    %46 = vector.broadcast %38 : vector<1x256xf32> to vector<2x256xf32>
    %47 = arith.subf %32, %46 : vector<2x256xf32>
    %cst_24 = arith.constant 9.99999974E-6 : f32
    %48 = vector.broadcast %cst_24 : f32 to vector<1x256xf32>
    %49 = arith.addf %45, %48 : vector<1x256xf32>
    %50 = math.rsqrt %49 : vector<1x256xf32>
    %51 = vector.broadcast %50 : vector<1x256xf32> to vector<2x256xf32>
    %52 = arith.mulf %47, %51 : vector<2x256xf32>
    %53 = vector.broadcast %33 : vector<1x256xf32> to vector<2x256xf32>
    %54 = arith.mulf %52, %53 : vector<2x256xf32>
    %55 = vector.broadcast %34 : vector<1x256xf32> to vector<2x256xf32>
    %56 = arith.addf %54, %55 : vector<2x256xf32>
    %cst_25 = arith.constant 0.000000e+00 : f32
    %57 = vector.broadcast %cst_25 : f32 to vector<2x256xf32>
    %58 = arith.maximumf %56, %57 : vector<2x256xf32>
    %c0_26 = arith.constant 0 : index
    %c0_27 = arith.constant 0 : index
    %59 = vector.load %arg3[%c0_26, %c0_27] : memref<256x4xf32, #tpu.memory_space<vmem>>, vector<256x4xf32>
    %cst_28 = arith.constant dense<0.000000e+00> : vector<2x4xf32>
    %60 = tpu.matmul %58, %59, %cst_28 {dimension_numbers = #tpu.dot_dimension_numbers<[1], [0], [0], [1], [0, 0, 1, 1], [], []>} : vector<2x256xf32>, vector<256x4xf32>, vector<2x4xf32> -> vector<2x4xf32>
    %c0_29 = arith.constant 0 : index
    %c0_30 = arith.constant 0 : index
    %61 = vector.load %arg4[%c0_29, %c0_30] : memref<1x4xf32, #tpu.memory_space<vmem>>, vector<1x4xf32>
    %62 = vector.broadcast %61 : vector<1x4xf32> to vector<2x4xf32>
    %63 = arith.addf %60, %62 : vector<2x4xf32>
    %64 = tpu.iota {dimensions = array<i32: 1>} : vector<2x4xi32>
    %c0_i32 = arith.constant 0 : i32
    %65 = vector.broadcast %c0_i32 : i32 to vector<2x4xi32>
    %66 = arith.cmpi eq, %64, %65 : vector<2x4xi32>
    %c3_i32 = arith.constant 3 : i32
    %67 = vector.broadcast %c3_i32 : i32 to vector<2x4xi32>
    %68 = arith.cmpi eq, %64, %67 : vector<2x4xi32>
    %69 = arith.ori %66, %68 : vector<2x4xi1>
    %cst_31 = arith.constant 1.000000e+00 : f32
    %cst_32 = arith.constant 0.000000e+00 : f32
    %70 = vector.broadcast %cst_31 : f32 to vector<2x4xf32>
    %71 = vector.broadcast %cst_32 : f32 to vector<2x4xf32>
    %72 = arith.select %69, %70, %71 : vector<2x4xi1>, vector<2x4xf32>
    %73 = arith.addf %63, %72 : vector<2x4xf32>
    %c0_33 = arith.constant 0 : index
    %c0_34 = arith.constant 0 : index
    %74 = vector.load %arg9[%c0_33, %c0_34] : memref<2x4xf32, #tpu.memory_space<vmem>>, vector<2x4xf32>
    tpu.vector_store %arg9[%c0_33, %c0_34], %73 {strides = array<i32>} : memref<2x4xf32, #tpu.memory_space<vmem>>, vector<2x4xf32>,
    return
  }
}

module attributes {stable_mosaic.version = 11 : i64} {
  func.func @_trunk_kernel(%arg0: i32, %arg1: i32, %arg2: i32, %arg3: memref<1x128x2xf32, #tpu.memory_space<vmem>>, %arg4: memref<1x2x64xf32, #tpu.memory_space<vmem>>, %arg5: memref<64x128xbf16, #tpu.memory_space<vmem>>, %arg6: memref<128x1024xbf16, #tpu.memory_space<vmem>>, %arg7: memref<1x64xf32, #tpu.memory_space<vmem>>, %arg8: memref<1x64xf32, #tpu.memory_space<vmem>>, %arg9: memref<1x128xf32, #tpu.memory_space<vmem>>, %arg10: memref<1x128xf32, #tpu.memory_space<vmem>>, %arg11: memref<1x1024xf32, #tpu.memory_space<vmem>>, %arg12: memref<1x1024xf32, #tpu.memory_space<vmem>>, %arg13: memref<2x1024xf32, #tpu.memory_space<vmem>>, %arg14: memref<1x128xf32, #tpu.memory_space<vmem>>, %arg15: memref<1x128xf32, #tpu.memory_space<vmem>>, %arg16: memref<1x1024xf32, #tpu.memory_space<vmem>>, %arg17: memref<1x1024xf32, #tpu.memory_space<vmem>>, %arg18: memref<2x1024xf32, #tpu.memory_space<vmem>>, %arg19: memref<2x1024xf32, #tpu.memory_space<vmem>>) attributes {dimension_semantics = [#tpu.dimension_semantics<arbitrary>, #tpu.dimension_semantics<arbitrary>, #tpu.dimension_semantics<arbitrary>], iteration_bounds = array<i64: 2, 2, 1>, scalar_prefetch = 0 : i64, scratch_operands = 6 : i64, tpu.core_type = #tpu.core_type<tc>, window_params = [{transform_indices = @transform_0, window_bounds = array<i64: 1, 128, 2>}, {pipeline_mode = #tpu.pipeline_mode<synchronous>, transform_indices = @transform_1, window_bounds = array<i64: 1, 2, 64>}, {pipeline_mode = #tpu.pipeline_mode<synchronous>, transform_indices = @transform_2, window_bounds = array<i64: 64, 128>}, {pipeline_mode = #tpu.pipeline_mode<synchronous>, transform_indices = @transform_3, window_bounds = array<i64: 128, 1024>}, {pipeline_mode = #tpu.pipeline_mode<synchronous>, transform_indices = @transform_4, window_bounds = array<i64: 1, 64>}, {pipeline_mode = #tpu.pipeline_mode<synchronous>, transform_indices = @transform_5, window_bounds = array<i64: 1, 64>}, {pipeline_mode = #tpu.pipeline_mode<synchronous>, transform_indices = @transform_6, window_bounds = array<i64: 1, 128>}, {pipeline_mode = #tpu.pipeline_mode<synchronous>, transform_indices = @transform_7, window_bounds = array<i64: 1, 128>}, {pipeline_mode = #tpu.pipeline_mode<synchronous>, transform_indices = @transform_8, window_bounds = array<i64: 1, 1024>}, {pipeline_mode = #tpu.pipeline_mode<synchronous>, transform_indices = @transform_9, window_bounds = array<i64: 1, 1024>}, {pipeline_mode = #tpu.pipeline_mode<synchronous>, transform_indices = @transform_10, window_bounds = array<i64: 2, 1024>}]} {
    %c0_i32 = arith.constant 0 : i32
    %0 = arith.cmpi eq, %arg0, %c0_i32 : i32
    %c0_i32_0 = arith.constant 0 : i32
    %1 = arith.cmpi eq, %arg1, %c0_i32_0 : i32
    %2 = arith.andi %0, %1 : i1
    %c0_i32_1 = arith.constant 0 : i32
    %3 = arith.cmpi eq, %arg2, %c0_i32_1 : i32
    %4 = arith.andi %2, %3 : i1
    %5 = arith.extui %4 : i1 to i32
    %c0_i32_2 = arith.constant 0 : i32
    %6 = arith.cmpi ne, %5, %c0_i32_2 : i32
    scf.if %6 {
      %cst_22 = arith.constant 0.000000e+00 : f32
      %46 = vector.broadcast %cst_22 : f32 to vector<1x128xf32>
      %c0_23 = arith.constant 0 : index
      %c0_24 = arith.constant 0 : index
      %47 = vector.load %arg14[%c0_23, %c0_24] : memref<1x128xf32, #tpu.memory_space<vmem>>, vector<1x128xf32>
      tpu.vector_store %arg14[%c0_23, %c0_24], %46 {strides = array<i32>} : memref<1x128xf32, #tpu.memory_space<vmem>>, vector<1x128xf32>,
      %cst_25 = arith.constant 0.000000e+00 : f32
      %48 = vector.broadcast %cst_25 : f32 to vector<1x128xf32>
      %c0_26 = arith.constant 0 : index
      %c0_27 = arith.constant 0 : index
      %49 = vector.load %arg15[%c0_26, %c0_27] : memref<1x128xf32, #tpu.memory_space<vmem>>, vector<1x128xf32>
      tpu.vector_store %arg15[%c0_26, %c0_27], %48 {strides = array<i32>} : memref<1x128xf32, #tpu.memory_space<vmem>>, vector<1x128xf32>,
      %cst_28 = arith.constant 0.000000e+00 : f32
      %50 = vector.broadcast %cst_28 : f32 to vector<1x1024xf32>
      %c0_29 = arith.constant 0 : index
      %c0_30 = arith.constant 0 : index
      %51 = vector.load %arg16[%c0_29, %c0_30] : memref<1x1024xf32, #tpu.memory_space<vmem>>, vector<1x1024xf32>
      tpu.vector_store %arg16[%c0_29, %c0_30], %50 {strides = array<i32>} : memref<1x1024xf32, #tpu.memory_space<vmem>>, vector<1x1024xf32>,
      %cst_31 = arith.constant 0.000000e+00 : f32
      %52 = vector.broadcast %cst_31 : f32 to vector<1x1024xf32>
      %c0_32 = arith.constant 0 : index
      %c0_33 = arith.constant 0 : index
      %53 = vector.load %arg17[%c0_32, %c0_33] : memref<1x1024xf32, #tpu.memory_space<vmem>>, vector<1x1024xf32>
      tpu.vector_store %arg17[%c0_32, %c0_33], %52 {strides = array<i32>} : memref<1x1024xf32, #tpu.memory_space<vmem>>, vector<1x1024xf32>,
      %cst_34 = arith.constant 0xFF800000 : f32
      %54 = vector.broadcast %cst_34 : f32 to vector<2x1024xf32>
      %c0_35 = arith.constant 0 : index
      %c0_36 = arith.constant 0 : index
      %55 = vector.load %arg18[%c0_35, %c0_36] : memref<2x1024xf32, #tpu.memory_space<vmem>>, vector<2x1024xf32>
      tpu.vector_store %arg18[%c0_35, %c0_36], %54 {strides = array<i32>} : memref<2x1024xf32, #tpu.memory_space<vmem>>, vector<2x1024xf32>,
      %cst_37 = arith.constant 0x7F800000 : f32
      %56 = vector.broadcast %cst_37 : f32 to vector<2x1024xf32>
      %c0_38 = arith.constant 0 : index
      %c0_39 = arith.constant 0 : index
      %57 = vector.load %arg19[%c0_38, %c0_39] : memref<2x1024xf32, #tpu.memory_space<vmem>>, vector<2x1024xf32>
      tpu.vector_store %arg19[%c0_38, %c0_39], %56 {strides = array<i32>} : memref<2x1024xf32, #tpu.memory_space<vmem>>, vector<2x1024xf32>,
    } else {
    }
    %c0 = arith.constant 0 : index
    %c0_3 = arith.constant 0 : index
    %c0_4 = arith.constant 0 : index
    %7 = vector.load %arg3[%c0, %c0_3, %c0_4] : memref<1x128x2xf32, #tpu.memory_space<vmem>>, vector<1x128x2xf32>
    %8 = vector.shape_cast %7 : vector<1x128x2xf32> to vector<128x2xf32>
    %c0_5 = arith.constant 0 : index
    %c0_6 = arith.constant 0 : index
    %c0_7 = arith.constant 0 : index
    %9 = vector.load %arg4[%c0_5, %c0_6, %c0_7] : memref<1x2x64xf32, #tpu.memory_space<vmem>>, vector<1x2x64xf32>
    %10 = vector.shape_cast %9 : vector<1x2x64xf32> to vector<2x64xf32>
    %11 = vector.extract_strided_slice %8 {offsets = [0, 0], sizes = [128, 1], strides = [1, 1]} : vector<128x2xf32> to vector<128x1xf32>
    %12 = vector.extract_strided_slice %10 {offsets = [0, 0], sizes = [1, 64], strides = [1, 1]} : vector<2x64xf32> to vector<1x64xf32>
    %13 = vector.broadcast %11 : vector<128x1xf32> to vector<128x64xf32>
    %14 = vector.broadcast %12 : vector<1x64xf32> to vector<128x64xf32>
    %15 = arith.mulf %13, %14 : vector<128x64xf32>
    %16 = vector.extract_strided_slice %8 {offsets = [0, 1], sizes = [128, 1], strides = [1, 1]} : vector<128x2xf32> to vector<128x1xf32>
    %17 = vector.extract_strided_slice %10 {offsets = [1, 0], sizes = [1, 64], strides = [1, 1]} : vector<2x64xf32> to vector<1x64xf32>
    %18 = vector.broadcast %16 : vector<128x1xf32> to vector<128x64xf32>
    %19 = vector.broadcast %17 : vector<1x64xf32> to vector<128x64xf32>
    %20 = arith.mulf %18, %19 : vector<128x64xf32>
    %21 = arith.addf %15, %20 : vector<128x64xf32>
    %c0_8 = arith.constant 0 : index
    %c0_9 = arith.constant 0 : index
    %22 = vector.load %arg7[%c0_8, %c0_9] : memref<1x64xf32, #tpu.memory_space<vmem>>, vector<1x64xf32>
    %23 = vector.broadcast %22 : vector<1x64xf32> to vector<128x64xf32>
    %24 = arith.mulf %21, %23 : vector<128x64xf32>
    %c0_10 = arith.constant 0 : index
    %c0_11 = arith.constant 0 : index
    %25 = vector.load %arg8[%c0_10, %c0_11] : memref<1x64xf32, #tpu.memory_space<vmem>>, vector<1x64xf32>
    %26 = vector.broadcast %25 : vector<1x64xf32> to vector<128x64xf32>
    %27 = arith.addf %24, %26 : vector<128x64xf32>
    %cst = arith.constant 0.000000e+00 : f32
    %28 = vector.broadcast %cst : f32 to vector<128x64xf32>
    %29 = arith.maximumf %27, %28 : vector<128x64xf32>
    %30 = arith.truncf %29 : vector<128x64xf32> to vector<128x64xbf16>
    %c0_12 = arith.constant 0 : index
    %c0_13 = arith.constant 0 : index
    %31 = vector.load %arg5[%c0_12, %c0_13] : memref<64x128xbf16, #tpu.memory_space<vmem>>, vector<64x128xbf16>
    %cst_14 = arith.constant dense<0.000000e+00> : vector<128x128xf32>
    %32 = tpu.matmul %30, %31, %cst_14 {dimension_numbers = #tpu.dot_dimension_numbers<[1], [0], [0], [1], [0, 0, 1, 1], [], []>} : vector<128x64xbf16>, vector<64x128xbf16>, vector<128x128xf32> -> vector<128x128xf32>
    %c0_i32_15 = arith.constant 0 : i32
    %33 = arith.cmpi eq, %arg0, %c0_i32_15 : i32
    %34 = arith.extui %33 : i1 to i32
    %c0_i32_16 = arith.constant 0 : i32
    %35 = arith.cmpi ne, %34, %c0_i32_16 : i32
    scf.if %35 {
      %c0_22 = arith.constant 0 : index
      %c0_23 = arith.constant 0 : index
      %46 = vector.load %arg14[%c0_22, %c0_23] : memref<1x128xf32, #tpu.memory_space<vmem>>, vector<1x128xf32>
      %cst_24 = arith.constant dense<0.000000e+00> : vector<128xf32>
      %47 = vector.multi_reduction <add>, %32, %cst_24 [0] : vector<128x128xf32> to vector<128xf32>
      %48 = vector.shape_cast %47 : vector<128xf32> to vector<1x128xf32>
      %49 = arith.addf %46, %48 : vector<1x128xf32>
      %c0_25 = arith.constant 0 : index
      %c0_26 = arith.constant 0 : index
      %50 = vector.load %arg14[%c0_25, %c0_26] : memref<1x128xf32, #tpu.memory_space<vmem>>, vector<1x128xf32>
      tpu.vector_store %arg14[%c0_25, %c0_26], %49 {strides = array<i32>} : memref<1x128xf32, #tpu.memory_space<vmem>>, vector<1x128xf32>,
      %c0_27 = arith.constant 0 : index
      %c0_28 = arith.constant 0 : index
      %51 = vector.load %arg15[%c0_27, %c0_28] : memref<1x128xf32, #tpu.memory_space<vmem>>, vector<1x128xf32>
      %52 = arith.mulf %32, %32 : vector<128x128xf32>
      %cst_29 = arith.constant dense<0.000000e+00> : vector<128xf32>
      %53 = vector.multi_reduction <add>, %52, %cst_29 [0] : vector<128x128xf32> to vector<128xf32>
      %54 = vector.shape_cast %53 : vector<128xf32> to vector<1x128xf32>
      %55 = arith.addf %51, %54 : vector<1x128xf32>
      %c0_30 = arith.constant 0 : index
      %c0_31 = arith.constant 0 : index
      %56 = vector.load %arg15[%c0_30, %c0_31] : memref<1x128xf32, #tpu.memory_space<vmem>>, vector<1x128xf32>
      tpu.vector_store %arg15[%c0_30, %c0_31], %55 {strides = array<i32>} : memref<1x128xf32, #tpu.memory_space<vmem>>, vector<1x128xf32>,
    } else {
    }
    %c1_i32 = arith.constant 1 : i32
    %36 = arith.cmpi eq, %arg0, %c1_i32 : i32
    %37 = arith.extui %36 : i1 to i32
    %c0_i32_17 = arith.constant 0 : i32
    %38 = arith.cmpi ne, %37, %c0_i32_17 : i32
    scf.if %38 {
      %c0_22 = arith.constant 0 : index
      %c0_23 = arith.constant 0 : index
      %46 = vector.load %arg14[%c0_22, %c0_23] : memref<1x128xf32, #tpu.memory_space<vmem>>, vector<1x128xf32>
      %cst_24 = arith.constant 3.906250e-03 : f32
      %47 = vector.broadcast %cst_24 : f32 to vector<1x128xf32>
      %48 = arith.mulf %46, %47 : vector<1x128xf32>
      %c0_25 = arith.constant 0 : index
      %c0_26 = arith.constant 0 : index
      %49 = vector.load %arg15[%c0_25, %c0_26] : memref<1x128xf32, #tpu.memory_space<vmem>>, vector<1x128xf32>
      %cst_27 = arith.constant 3.906250e-03 : f32
      %50 = vector.broadcast %cst_27 : f32 to vector<1x128xf32>
      %51 = arith.mulf %49, %50 : vector<1x128xf32>
      %52 = arith.mulf %48, %48 : vector<1x128xf32>
      %53 = arith.subf %51, %52 : vector<1x128xf32>
      %cst_28 = arith.constant 0.000000e+00 : f32
      %54 = vector.broadcast %cst_28 : f32 to vector<1x128xf32>
      %55 = arith.maximumf %53, %54 : vector<1x128xf32>
      %c0_29 = arith.constant 0 : index
      %c0_30 = arith.constant 0 : index
      %56 = vector.load %arg9[%c0_29, %c0_30] : memref<1x128xf32, #tpu.memory_space<vmem>>, vector<1x128xf32>
      %cst_31 = arith.constant 9.99999974E-6 : f32
      %57 = vector.broadcast %cst_31 : f32 to vector<1x128xf32>
      %58 = arith.addf %55, %57 : vector<1x128xf32>
      %59 = math.rsqrt %58 : vector<1x128xf32>
      %60 = arith.mulf %56, %59 : vector<1x128xf32>
      %c0_32 = arith.constant 0 : index
      %c0_33 = arith.constant 0 : index
      %61 = vector.load %arg10[%c0_32, %c0_33] : memref<1x128xf32, #tpu.memory_space<vmem>>, vector<1x128xf32>
      %62 = arith.mulf %48, %60 : vector<1x128xf32>
      %63 = arith.subf %61, %62 : vector<1x128xf32>
      %64 = vector.broadcast %60 : vector<1x128xf32> to vector<128x128xf32>
      %65 = arith.mulf %32, %64 : vector<128x128xf32>
      %66 = vector.broadcast %63 : vector<1x128xf32> to vector<128x128xf32>
      %67 = arith.addf %65, %66 : vector<128x128xf32>
      %cst_34 = arith.constant 0.000000e+00 : f32
      %68 = vector.broadcast %cst_34 : f32 to vector<128x128xf32>
      %69 = arith.maximumf %67, %68 : vector<128x128xf32>
      %70 = arith.truncf %69 : vector<128x128xf32> to vector<128x128xbf16>
      %c0_35 = arith.constant 0 : index
      %c0_36 = arith.constant 0 : index
      %71 = vector.load %arg6[%c0_35, %c0_36] : memref<128x1024xbf16, #tpu.memory_space<vmem>>, vector<128x1024xbf16>
      %cst_37 = arith.constant dense<0.000000e+00> : vector<128x1024xf32>
      %72 = tpu.matmul %70, %71, %cst_37 {dimension_numbers = #tpu.dot_dimension_numbers<[1], [0], [0], [1], [0, 0, 1, 1], [], []>} : vector<128x128xbf16>, vector<128x1024xbf16>, vector<128x1024xf32> -> vector<128x1024xf32>
      %cst_38 = arith.constant 0.000000e+00 : f32
      %73 = vector.broadcast %cst_38 : f32 to vector<8x1024xf32>
      %cst_39 = arith.constant 0.000000e+00 : f32
      %74 = vector.broadcast %cst_39 : f32 to vector<8x1024xf32>
      %cst_40 = arith.constant 0xFF800000 : f32
      %75 = vector.broadcast %cst_40 : f32 to vector<8x1024xf32>
      %cst_41 = arith.constant 0x7F800000 : f32
      %76 = vector.broadcast %cst_41 : f32 to vector<8x1024xf32>
      %77 = vector.extract_strided_slice %72 {offsets = [0, 0], sizes = [8, 1024], strides = [1, 1]} : vector<128x1024xf32> to vector<8x1024xf32>
      %78 = arith.addf %73, %77 : vector<8x1024xf32>
      %79 = arith.mulf %77, %77 : vector<8x1024xf32>
      %80 = arith.addf %74, %79 : vector<8x1024xf32>
      %81 = arith.maximumf %75, %77 : vector<8x1024xf32>
      %82 = arith.minimumf %76, %77 : vector<8x1024xf32>
      %83 = vector.extract_strided_slice %72 {offsets = [8, 0], sizes = [8, 1024], strides = [1, 1]} : vector<128x1024xf32> to vector<8x1024xf32>
      %84 = arith.addf %78, %83 : vector<8x1024xf32>
      %85 = arith.mulf %83, %83 : vector<8x1024xf32>
      %86 = arith.addf %80, %85 : vector<8x1024xf32>
      %87 = arith.maximumf %81, %83 : vector<8x1024xf32>
      %88 = arith.minimumf %82, %83 : vector<8x1024xf32>
      %89 = vector.extract_strided_slice %72 {offsets = [16, 0], sizes = [8, 1024], strides = [1, 1]} : vector<128x1024xf32> to vector<8x1024xf32>
      %90 = arith.addf %84, %89 : vector<8x1024xf32>
      %91 = arith.mulf %89, %89 : vector<8x1024xf32>
      %92 = arith.addf %86, %91 : vector<8x1024xf32>
      %93 = arith.maximumf %87, %89 : vector<8x1024xf32>
      %94 = arith.minimumf %88, %89 : vector<8x1024xf32>
      %95 = vector.extract_strided_slice %72 {offsets = [24, 0], sizes = [8, 1024], strides = [1, 1]} : vector<128x1024xf32> to vector<8x1024xf32>
      %96 = arith.addf %90, %95 : vector<8x1024xf32>
      %97 = arith.mulf %95, %95 : vector<8x1024xf32>
      %98 = arith.addf %92, %97 : vector<8x1024xf32>
      %99 = arith.maximumf %93, %95 : vector<8x1024xf32>
      %100 = arith.minimumf %94, %95 : vector<8x1024xf32>
      %101 = vector.extract_strided_slice %72 {offsets = [32, 0], sizes = [8, 1024], strides = [1, 1]} : vector<128x1024xf32> to vector<8x1024xf32>
      %102 = arith.addf %96, %101 : vector<8x1024xf32>
      %103 = arith.mulf %101, %101 : vector<8x1024xf32>
      %104 = arith.addf %98, %103 : vector<8x1024xf32>
      %105 = arith.maximumf %99, %101 : vector<8x1024xf32>
      %106 = arith.minimumf %100, %101 : vector<8x1024xf32>
      %107 = vector.extract_strided_slice %72 {offsets = [40, 0], sizes = [8, 1024], strides = [1, 1]} : vector<128x1024xf32> to vector<8x1024xf32>
      %108 = arith.addf %102, %107 : vector<8x1024xf32>
      %109 = arith.mulf %107, %107 : vector<8x1024xf32>
      %110 = arith.addf %104, %109 : vector<8x1024xf32>
      %111 = arith.maximumf %105, %107 : vector<8x1024xf32>
      %112 = arith.minimumf %106, %107 : vector<8x1024xf32>
      %113 = vector.extract_strided_slice %72 {offsets = [48, 0], sizes = [8, 1024], strides = [1, 1]} : vector<128x1024xf32> to vector<8x1024xf32>
      %114 = arith.addf %108, %113 : vector<8x1024xf32>
      %115 = arith.mulf %113, %113 : vector<8x1024xf32>
      %116 = arith.addf %110, %115 : vector<8x1024xf32>
      %117 = arith.maximumf %111, %113 : vector<8x1024xf32>
      %118 = arith.minimumf %112, %113 : vector<8x1024xf32>
      %119 = vector.extract_strided_slice %72 {offsets = [56, 0], sizes = [8, 1024], strides = [1, 1]} : vector<128x1024xf32> to vector<8x1024xf32>
      %120 = arith.addf %114, %119 : vector<8x1024xf32>
      %121 = arith.mulf %119, %119 : vector<8x1024xf32>
      %122 = arith.addf %116, %121 : vector<8x1024xf32>
      %123 = arith.maximumf %117, %119 : vector<8x1024xf32>
      %124 = arith.minimumf %118, %119 : vector<8x1024xf32>
      %125 = vector.extract_strided_slice %72 {offsets = [64, 0], sizes = [8, 1024], strides = [1, 1]} : vector<128x1024xf32> to vector<8x1024xf32>
      %126 = arith.addf %120, %125 : vector<8x1024xf32>
      %127 = arith.mulf %125, %125 : vector<8x1024xf32>
      %128 = arith.addf %122, %127 : vector<8x1024xf32>
      %129 = arith.maximumf %123, %125 : vector<8x1024xf32>
      %130 = arith.minimumf %124, %125 : vector<8x1024xf32>
      %131 = vector.extract_strided_slice %72 {offsets = [72, 0], sizes = [8, 1024], strides = [1, 1]} : vector<128x1024xf32> to vector<8x1024xf32>
      %132 = arith.addf %126, %131 : vector<8x1024xf32>
      %133 = arith.mulf %131, %131 : vector<8x1024xf32>
      %134 = arith.addf %128, %133 : vector<8x1024xf32>
      %135 = arith.maximumf %129, %131 : vector<8x1024xf32>
      %136 = arith.minimumf %130, %131 : vector<8x1024xf32>
      %137 = vector.extract_strided_slice %72 {offsets = [80, 0], sizes = [8, 1024], strides = [1, 1]} : vector<128x1024xf32> to vector<8x1024xf32>
      %138 = arith.addf %132, %137 : vector<8x1024xf32>
      %139 = arith.mulf %137, %137 : vector<8x1024xf32>
      %140 = arith.addf %134, %139 : vector<8x1024xf32>
      %141 = arith.maximumf %135, %137 : vector<8x1024xf32>
      %142 = arith.minimumf %136, %137 : vector<8x1024xf32>
      %143 = vector.extract_strided_slice %72 {offsets = [88, 0], sizes = [8, 1024], strides = [1, 1]} : vector<128x1024xf32> to vector<8x1024xf32>
      %144 = arith.addf %138, %143 : vector<8x1024xf32>
      %145 = arith.mulf %143, %143 : vector<8x1024xf32>
      %146 = arith.addf %140, %145 : vector<8x1024xf32>
      %147 = arith.maximumf %141, %143 : vector<8x1024xf32>
      %148 = arith.minimumf %142, %143 : vector<8x1024xf32>
      %149 = vector.extract_strided_slice %72 {offsets = [96, 0], sizes = [8, 1024], strides = [1, 1]} : vector<128x1024xf32> to vector<8x1024xf32>
      %150 = arith.addf %144, %149 : vector<8x1024xf32>
      %151 = arith.mulf %149, %149 : vector<8x1024xf32>
      %152 = arith.addf %146, %151 : vector<8x1024xf32>
      %153 = arith.maximumf %147, %149 : vector<8x1024xf32>
      %154 = arith.minimumf %148, %149 : vector<8x1024xf32>
      %155 = vector.extract_strided_slice %72 {offsets = [104, 0], sizes = [8, 1024], strides = [1, 1]} : vector<128x1024xf32> to vector<8x1024xf32>
      %156 = arith.addf %150, %155 : vector<8x1024xf32>
      %157 = arith.mulf %155, %155 : vector<8x1024xf32>
      %158 = arith.addf %152, %157 : vector<8x1024xf32>
      %159 = arith.maximumf %153, %155 : vector<8x1024xf32>
      %160 = arith.minimumf %154, %155 : vector<8x1024xf32>
      %161 = vector.extract_strided_slice %72 {offsets = [112, 0], sizes = [8, 1024], strides = [1, 1]} : vector<128x1024xf32> to vector<8x1024xf32>
      %162 = arith.addf %156, %161 : vector<8x1024xf32>
      %163 = arith.mulf %161, %161 : vector<8x1024xf32>
      %164 = arith.addf %158, %163 : vector<8x1024xf32>
      %165 = arith.maximumf %159, %161 : vector<8x1024xf32>
      %166 = arith.minimumf %160, %161 : vector<8x1024xf32>
      %167 = vector.extract_strided_slice %72 {offsets = [120, 0], sizes = [8, 1024], strides = [1, 1]} : vector<128x1024xf32> to vector<8x1024xf32>
      %168 = arith.addf %162, %167 : vector<8x1024xf32>
      %169 = arith.mulf %167, %167 : vector<8x1024xf32>
      %170 = arith.addf %164, %169 : vector<8x1024xf32>
      %171 = arith.maximumf %165, %167 : vector<8x1024xf32>
      %172 = arith.minimumf %166, %167 : vector<8x1024xf32>
      %cst_42 = arith.constant dense<0.000000e+00> : vector<1024xf32>
      %173 = vector.multi_reduction <add>, %168, %cst_42 [0] : vector<8x1024xf32> to vector<1024xf32>
      %174 = vector.shape_cast %173 : vector<1024xf32> to vector<1x1024xf32>
      %cst_43 = arith.constant dense<0.000000e+00> : vector<1024xf32>
      %175 = vector.multi_reduction <add>, %170, %cst_43 [0] : vector<8x1024xf32> to vector<1024xf32>
      %176 = vector.shape_cast %175 : vector<1024xf32> to vector<1x1024xf32>
      %cst_44 = arith.constant dense<0xFF800000> : vector<1024xf32>
      %177 = vector.multi_reduction <maximumf>, %171, %cst_44 [0] : vector<8x1024xf32> to vector<1024xf32>
      %178 = vector.shape_cast %177 : vector<1024xf32> to vector<1x1024xf32>
      %cst_45 = arith.constant dense<0x7F800000> : vector<1024xf32>
      %179 = vector.multi_reduction <minimumf>, %172, %cst_45 [0] : vector<8x1024xf32> to vector<1024xf32>
      %180 = vector.shape_cast %179 : vector<1024xf32> to vector<1x1024xf32>
      %c0_46 = arith.constant 0 : index
      %c0_47 = arith.constant 0 : index
      %181 = vector.load %arg16[%c0_46, %c0_47] : memref<1x1024xf32, #tpu.memory_space<vmem>>, vector<1x1024xf32>
      %182 = arith.addf %181, %174 : vector<1x1024xf32>
      %c0_48 = arith.constant 0 : index
      %c0_49 = arith.constant 0 : index
      %183 = vector.load %arg16[%c0_48, %c0_49] : memref<1x1024xf32, #tpu.memory_space<vmem>>, vector<1x1024xf32>
      tpu.vector_store %arg16[%c0_48, %c0_49], %182 {strides = array<i32>} : memref<1x1024xf32, #tpu.memory_space<vmem>>, vector<1x1024xf32>,
      %c0_50 = arith.constant 0 : index
      %c0_51 = arith.constant 0 : index
      %184 = vector.load %arg17[%c0_50, %c0_51] : memref<1x1024xf32, #tpu.memory_space<vmem>>, vector<1x1024xf32>
      %185 = arith.addf %184, %176 : vector<1x1024xf32>
      %c0_52 = arith.constant 0 : index
      %c0_53 = arith.constant 0 : index
      %186 = vector.load %arg17[%c0_52, %c0_53] : memref<1x1024xf32, #tpu.memory_space<vmem>>, vector<1x1024xf32>
      tpu.vector_store %arg17[%c0_52, %c0_53], %185 {strides = array<i32>} : memref<1x1024xf32, #tpu.memory_space<vmem>>, vector<1x1024xf32>,
      %187 = arith.index_cast %arg1 : i32 to index
      %c0_54 = arith.constant 0 : index
      %188 = vector.load %arg18[%187, %c0_54] : memref<2x1024xf32, #tpu.memory_space<vmem>>, vector<1x1024xf32>
      %189 = arith.maximumf %188, %178 : vector<1x1024xf32>
      %190 = arith.index_cast %arg1 : i32 to index
      %c0_55 = arith.constant 0 : index
      %191 = vector.load %arg18[%190, %c0_55] : memref<2x1024xf32, #tpu.memory_space<vmem>>, vector<1x1024xf32>
      tpu.vector_store %arg18[%190, %c0_55], %189 {strides = array<i32>} : memref<2x1024xf32, #tpu.memory_space<vmem>>, vector<1x1024xf32>,
      %192 = arith.index_cast %arg1 : i32 to index
      %c0_56 = arith.constant 0 : index
      %193 = vector.load %arg19[%192, %c0_56] : memref<2x1024xf32, #tpu.memory_space<vmem>>, vector<1x1024xf32>
      %194 = arith.minimumf %193, %180 : vector<1x1024xf32>
      %195 = arith.index_cast %arg1 : i32 to index
      %c0_57 = arith.constant 0 : index
      %196 = vector.load %arg19[%195, %c0_57] : memref<2x1024xf32, #tpu.memory_space<vmem>>, vector<1x1024xf32>
      tpu.vector_store %arg19[%195, %c0_57], %194 {strides = array<i32>} : memref<2x1024xf32, #tpu.memory_space<vmem>>, vector<1x1024xf32>,
    } else {
    }
    %c1_i32_18 = arith.constant 1 : i32
    %39 = arith.cmpi eq, %arg0, %c1_i32_18 : i32
    %c1_i32_19 = arith.constant 1 : i32
    %40 = arith.cmpi eq, %arg1, %c1_i32_19 : i32
    %41 = arith.andi %39, %40 : i1
    %c0_i32_20 = arith.constant 0 : i32
    %42 = arith.cmpi eq, %arg2, %c0_i32_20 : i32
    %43 = arith.andi %41, %42 : i1
    %44 = arith.extui %43 : i1 to i32
    %c0_i32_21 = arith.constant 0 : i32
    %45 = arith.cmpi ne, %44, %c0_i32_21 : i32
    scf.if %45 {
      %c0_22 = arith.constant 0 : index
      %c0_23 = arith.constant 0 : index
      %46 = vector.load %arg16[%c0_22, %c0_23] : memref<1x1024xf32, #tpu.memory_space<vmem>>, vector<1x1024xf32>
      %cst_24 = arith.constant 3.906250e-03 : f32
      %47 = vector.broadcast %cst_24 : f32 to vector<1x1024xf32>
      %48 = arith.mulf %46, %47 : vector<1x1024xf32>
      %c0_25 = arith.constant 0 : index
      %c0_26 = arith.constant 0 : index
      %49 = vector.load %arg17[%c0_25, %c0_26] : memref<1x1024xf32, #tpu.memory_space<vmem>>, vector<1x1024xf32>
      %cst_27 = arith.constant 3.906250e-03 : f32
      %50 = vector.broadcast %cst_27 : f32 to vector<1x1024xf32>
      %51 = arith.mulf %49, %50 : vector<1x1024xf32>
      %52 = arith.mulf %48, %48 : vector<1x1024xf32>
      %53 = arith.subf %51, %52 : vector<1x1024xf32>
      %cst_28 = arith.constant 0.000000e+00 : f32
      %54 = vector.broadcast %cst_28 : f32 to vector<1x1024xf32>
      %55 = arith.maximumf %53, %54 : vector<1x1024xf32>
      %c0_29 = arith.constant 0 : index
      %c0_30 = arith.constant 0 : index
      %56 = vector.load %arg11[%c0_29, %c0_30] : memref<1x1024xf32, #tpu.memory_space<vmem>>, vector<1x1024xf32>
      %cst_31 = arith.constant 9.99999974E-6 : f32
      %57 = vector.broadcast %cst_31 : f32 to vector<1x1024xf32>
      %58 = arith.addf %55, %57 : vector<1x1024xf32>
      %59 = math.rsqrt %58 : vector<1x1024xf32>
      %60 = arith.mulf %56, %59 : vector<1x1024xf32>
      %c0_32 = arith.constant 0 : index
      %c0_33 = arith.constant 0 : index
      %61 = vector.load %arg12[%c0_32, %c0_33] : memref<1x1024xf32, #tpu.memory_space<vmem>>, vector<1x1024xf32>
      %62 = arith.mulf %48, %60 : vector<1x1024xf32>
      %63 = arith.subf %61, %62 : vector<1x1024xf32>
      %cst_34 = arith.constant 0.000000e+00 : f32
      %64 = vector.broadcast %cst_34 : f32 to vector<1x1024xf32>
      %65 = arith.cmpf oge, %60, %64 : vector<1x1024xf32>
      %c0_35 = arith.constant 0 : index
      %c0_36 = arith.constant 0 : index
      %66 = vector.load %arg18[%c0_35, %c0_36] : memref<2x1024xf32, #tpu.memory_space<vmem>>, vector<2x1024xf32>
      %c0_37 = arith.constant 0 : index
      %c0_38 = arith.constant 0 : index
      %67 = vector.load %arg19[%c0_37, %c0_38] : memref<2x1024xf32, #tpu.memory_space<vmem>>, vector<2x1024xf32>
      %68 = vector.shape_cast %65 : vector<1x1024xi1> to vector<1x1024xi1>
      %69 = vector.broadcast %68 : vector<1x1024xi1> to vector<2x1024xi1>
      %70 = arith.select %69, %66, %67 : vector<2x1024xi1>, vector<2x1024xf32>
      %71 = vector.broadcast %60 : vector<1x1024xf32> to vector<2x1024xf32>
      %72 = arith.mulf %70, %71 : vector<2x1024xf32>
      %73 = vector.broadcast %63 : vector<1x1024xf32> to vector<2x1024xf32>
      %74 = arith.addf %72, %73 : vector<2x1024xf32>
      %cst_39 = arith.constant 0.000000e+00 : f32
      %75 = vector.broadcast %cst_39 : f32 to vector<2x1024xf32>
      %76 = arith.maximumf %74, %75 : vector<2x1024xf32>
      %c0_40 = arith.constant 0 : index
      %c0_41 = arith.constant 0 : index
      %77 = vector.load %arg13[%c0_40, %c0_41] : memref<2x1024xf32, #tpu.memory_space<vmem>>, vector<2x1024xf32>
      tpu.vector_store %arg13[%c0_40, %c0_41], %76 {strides = array<i32>} : memref<2x1024xf32, #tpu.memory_space<vmem>>, vector<2x1024xf32>,
    } else {
    }
    return
  }
  func.func @transform_0(%arg0: i32, %arg1: i32, %arg2: i32) -> (i32, i32, i32) {
    %c0_i32 = arith.constant 0 : i32
    %c0_i32_0 = arith.constant 0 : i32
    return %arg1, %arg2, %c0_i32 : i32, i32, i32
  }
  func.func @transform_1(%arg0: i32, %arg1: i32, %arg2: i32) -> (i32, i32, i32) {
    %c0_i32 = arith.constant 0 : i32
    %c0_i32_0 = arith.constant 0 : i32
    %c0_i32_1 = arith.constant 0 : i32
    %c0_i32_2 = arith.constant 0 : i32
    return %c0_i32, %c0_i32_0, %c0_i32_1 : i32, i32, i32
  }
  func.func @transform_2(%arg0: i32, %arg1: i32, %arg2: i32) -> (i32, i32) {
    %c0_i32 = arith.constant 0 : i32
    %c0_i32_0 = arith.constant 0 : i32
    %c0_i32_1 = arith.constant 0 : i32
    return %c0_i32, %c0_i32_0 : i32, i32
  }
  func.func @transform_3(%arg0: i32, %arg1: i32, %arg2: i32) -> (i32, i32) {
    %c0_i32 = arith.constant 0 : i32
    %c0_i32_0 = arith.constant 0 : i32
    %c0_i32_1 = arith.constant 0 : i32
    return %c0_i32, %c0_i32_0 : i32, i32
  }
  func.func @transform_4(%arg0: i32, %arg1: i32, %arg2: i32) -> (i32, i32) {
    %c0_i32 = arith.constant 0 : i32
    %c0_i32_0 = arith.constant 0 : i32
    %c0_i32_1 = arith.constant 0 : i32
    return %c0_i32, %c0_i32_0 : i32, i32
  }
  func.func @transform_5(%arg0: i32, %arg1: i32, %arg2: i32) -> (i32, i32) {
    %c0_i32 = arith.constant 0 : i32
    %c0_i32_0 = arith.constant 0 : i32
    %c0_i32_1 = arith.constant 0 : i32
    return %c0_i32, %c0_i32_0 : i32, i32
  }
  func.func @transform_6(%arg0: i32, %arg1: i32, %arg2: i32) -> (i32, i32) {
    %c0_i32 = arith.constant 0 : i32
    %c0_i32_0 = arith.constant 0 : i32
    %c0_i32_1 = arith.constant 0 : i32
    return %c0_i32, %c0_i32_0 : i32, i32
  }
  func.func @transform_7(%arg0: i32, %arg1: i32, %arg2: i32) -> (i32, i32) {
    %c0_i32 = arith.constant 0 : i32
    %c0_i32_0 = arith.constant 0 : i32
    %c0_i32_1 = arith.constant 0 : i32
    return %c0_i32, %c0_i32_0 : i32, i32
  }
  func.func @transform_8(%arg0: i32, %arg1: i32, %arg2: i32) -> (i32, i32) {
    %c0_i32 = arith.constant 0 : i32
    %c0_i32_0 = arith.constant 0 : i32
    %c0_i32_1 = arith.constant 0 : i32
    return %c0_i32, %c0_i32_0 : i32, i32
  }
  func.func @transform_9(%arg0: i32, %arg1: i32, %arg2: i32) -> (i32, i32) {
    %c0_i32 = arith.constant 0 : i32
    %c0_i32_0 = arith.constant 0 : i32
    %c0_i32_1 = arith.constant 0 : i32
    return %c0_i32, %c0_i32_0 : i32, i32
  }
  func.func @transform_10(%arg0: i32, %arg1: i32, %arg2: i32) -> (i32, i32) {
    %c0_i32 = arith.constant 0 : i32
    %c0_i32_0 = arith.constant 0 : i32
    %c0_i32_1 = arith.constant 0 : i32
    return %c0_i32, %c0_i32_0 : i32, i32
  }
}

module attributes {stable_mosaic.version = 11 : i64} {
  func.func @_trunk_kernel(%arg0: i32, %arg1: i32, %arg2: i32, %arg3: memref<1x128x2xf32, #tpu.memory_space<vmem>>, %arg4: memref<1x2x64xf32, #tpu.memory_space<vmem>>, %arg5: memref<64x128xbf16, #tpu.memory_space<vmem>>, %arg6: memref<128x1024xbf16, #tpu.memory_space<vmem>>, %arg7: memref<1x64xf32, #tpu.memory_space<vmem>>, %arg8: memref<1x64xf32, #tpu.memory_space<vmem>>, %arg9: memref<1x128xf32, #tpu.memory_space<vmem>>, %arg10: memref<1x128xf32, #tpu.memory_space<vmem>>, %arg11: memref<1x1024xf32, #tpu.memory_space<vmem>>, %arg12: memref<1x1024xf32, #tpu.memory_space<vmem>>, %arg13: memref<2x1024xf32, #tpu.memory_space<vmem>>, %arg14: memref<1x128xf32, #tpu.memory_space<vmem>>, %arg15: memref<1x128xf32, #tpu.memory_space<vmem>>, %arg16: memref<1x1024xf32, #tpu.memory_space<vmem>>, %arg17: memref<1x1024xf32, #tpu.memory_space<vmem>>, %arg18: memref<2x1024xf32, #tpu.memory_space<vmem>>, %arg19: memref<2x1024xf32, #tpu.memory_space<vmem>>) attributes {dimension_semantics = [#tpu.dimension_semantics<arbitrary>, #tpu.dimension_semantics<arbitrary>, #tpu.dimension_semantics<arbitrary>], iteration_bounds = array<i64: 2, 2, 1>, scalar_prefetch = 0 : i64, scratch_operands = 6 : i64, tpu.core_type = #tpu.core_type<tc>, window_params = [{transform_indices = @transform_0, window_bounds = array<i64: 1, 128, 2>}, {transform_indices = @transform_1, window_bounds = array<i64: 1, 2, 64>}, {pipeline_mode = #tpu.pipeline_mode<synchronous>, transform_indices = @transform_2, window_bounds = array<i64: 64, 128>}, {pipeline_mode = #tpu.pipeline_mode<synchronous>, transform_indices = @transform_3, window_bounds = array<i64: 128, 1024>}, {pipeline_mode = #tpu.pipeline_mode<synchronous>, transform_indices = @transform_4, window_bounds = array<i64: 1, 64>}, {pipeline_mode = #tpu.pipeline_mode<synchronous>, transform_indices = @transform_5, window_bounds = array<i64: 1, 64>}, {pipeline_mode = #tpu.pipeline_mode<synchronous>, transform_indices = @transform_6, window_bounds = array<i64: 1, 128>}, {pipeline_mode = #tpu.pipeline_mode<synchronous>, transform_indices = @transform_7, window_bounds = array<i64: 1, 128>}, {pipeline_mode = #tpu.pipeline_mode<synchronous>, transform_indices = @transform_8, window_bounds = array<i64: 1, 1024>}, {pipeline_mode = #tpu.pipeline_mode<synchronous>, transform_indices = @transform_9, window_bounds = array<i64: 1, 1024>}, {pipeline_mode = #tpu.pipeline_mode<synchronous>, transform_indices = @transform_10, window_bounds = array<i64: 2, 1024>}]} {
    %c0_i32 = arith.constant 0 : i32
    %0 = arith.cmpi eq, %arg0, %c0_i32 : i32
    %c0_i32_0 = arith.constant 0 : i32
    %1 = arith.cmpi eq, %arg1, %c0_i32_0 : i32
    %2 = arith.andi %0, %1 : i1
    %c0_i32_1 = arith.constant 0 : i32
    %3 = arith.cmpi eq, %arg2, %c0_i32_1 : i32
    %4 = arith.andi %2, %3 : i1
    %5 = arith.extui %4 : i1 to i32
    %c0_i32_2 = arith.constant 0 : i32
    %6 = arith.cmpi ne, %5, %c0_i32_2 : i32
    scf.if %6 {
      %cst_22 = arith.constant 0.000000e+00 : f32
      %46 = vector.broadcast %cst_22 : f32 to vector<1x128xf32>
      %c0_23 = arith.constant 0 : index
      %c0_24 = arith.constant 0 : index
      %47 = vector.load %arg14[%c0_23, %c0_24] : memref<1x128xf32, #tpu.memory_space<vmem>>, vector<1x128xf32>
      tpu.vector_store %arg14[%c0_23, %c0_24], %46 {strides = array<i32>} : memref<1x128xf32, #tpu.memory_space<vmem>>, vector<1x128xf32>,
      %cst_25 = arith.constant 0.000000e+00 : f32
      %48 = vector.broadcast %cst_25 : f32 to vector<1x128xf32>
      %c0_26 = arith.constant 0 : index
      %c0_27 = arith.constant 0 : index
      %49 = vector.load %arg15[%c0_26, %c0_27] : memref<1x128xf32, #tpu.memory_space<vmem>>, vector<1x128xf32>
      tpu.vector_store %arg15[%c0_26, %c0_27], %48 {strides = array<i32>} : memref<1x128xf32, #tpu.memory_space<vmem>>, vector<1x128xf32>,
      %cst_28 = arith.constant 0.000000e+00 : f32
      %50 = vector.broadcast %cst_28 : f32 to vector<1x1024xf32>
      %c0_29 = arith.constant 0 : index
      %c0_30 = arith.constant 0 : index
      %51 = vector.load %arg16[%c0_29, %c0_30] : memref<1x1024xf32, #tpu.memory_space<vmem>>, vector<1x1024xf32>
      tpu.vector_store %arg16[%c0_29, %c0_30], %50 {strides = array<i32>} : memref<1x1024xf32, #tpu.memory_space<vmem>>, vector<1x1024xf32>,
      %cst_31 = arith.constant 0.000000e+00 : f32
      %52 = vector.broadcast %cst_31 : f32 to vector<1x1024xf32>
      %c0_32 = arith.constant 0 : index
      %c0_33 = arith.constant 0 : index
      %53 = vector.load %arg17[%c0_32, %c0_33] : memref<1x1024xf32, #tpu.memory_space<vmem>>, vector<1x1024xf32>
      tpu.vector_store %arg17[%c0_32, %c0_33], %52 {strides = array<i32>} : memref<1x1024xf32, #tpu.memory_space<vmem>>, vector<1x1024xf32>,
      %cst_34 = arith.constant 0xFF800000 : f32
      %54 = vector.broadcast %cst_34 : f32 to vector<2x1024xf32>
      %c0_35 = arith.constant 0 : index
      %c0_36 = arith.constant 0 : index
      %55 = vector.load %arg18[%c0_35, %c0_36] : memref<2x1024xf32, #tpu.memory_space<vmem>>, vector<2x1024xf32>
      tpu.vector_store %arg18[%c0_35, %c0_36], %54 {strides = array<i32>} : memref<2x1024xf32, #tpu.memory_space<vmem>>, vector<2x1024xf32>,
      %cst_37 = arith.constant 0x7F800000 : f32
      %56 = vector.broadcast %cst_37 : f32 to vector<2x1024xf32>
      %c0_38 = arith.constant 0 : index
      %c0_39 = arith.constant 0 : index
      %57 = vector.load %arg19[%c0_38, %c0_39] : memref<2x1024xf32, #tpu.memory_space<vmem>>, vector<2x1024xf32>
      tpu.vector_store %arg19[%c0_38, %c0_39], %56 {strides = array<i32>} : memref<2x1024xf32, #tpu.memory_space<vmem>>, vector<2x1024xf32>,
    } else {
    }
    %c0 = arith.constant 0 : index
    %c0_3 = arith.constant 0 : index
    %c0_4 = arith.constant 0 : index
    %7 = vector.load %arg3[%c0, %c0_3, %c0_4] : memref<1x128x2xf32, #tpu.memory_space<vmem>>, vector<1x128x2xf32>
    %8 = vector.shape_cast %7 : vector<1x128x2xf32> to vector<128x2xf32>
    %c0_5 = arith.constant 0 : index
    %c0_6 = arith.constant 0 : index
    %c0_7 = arith.constant 0 : index
    %9 = vector.load %arg4[%c0_5, %c0_6, %c0_7] : memref<1x2x64xf32, #tpu.memory_space<vmem>>, vector<1x2x64xf32>
    %10 = vector.shape_cast %9 : vector<1x2x64xf32> to vector<2x64xf32>
    %11 = vector.extract_strided_slice %8 {offsets = [0, 0], sizes = [128, 1], strides = [1, 1]} : vector<128x2xf32> to vector<128x1xf32>
    %12 = vector.extract_strided_slice %10 {offsets = [0, 0], sizes = [1, 64], strides = [1, 1]} : vector<2x64xf32> to vector<1x64xf32>
    %13 = vector.broadcast %11 : vector<128x1xf32> to vector<128x64xf32>
    %14 = vector.broadcast %12 : vector<1x64xf32> to vector<128x64xf32>
    %15 = arith.mulf %13, %14 : vector<128x64xf32>
    %16 = vector.extract_strided_slice %8 {offsets = [0, 1], sizes = [128, 1], strides = [1, 1]} : vector<128x2xf32> to vector<128x1xf32>
    %17 = vector.extract_strided_slice %10 {offsets = [1, 0], sizes = [1, 64], strides = [1, 1]} : vector<2x64xf32> to vector<1x64xf32>
    %18 = vector.broadcast %16 : vector<128x1xf32> to vector<128x64xf32>
    %19 = vector.broadcast %17 : vector<1x64xf32> to vector<128x64xf32>
    %20 = arith.mulf %18, %19 : vector<128x64xf32>
    %21 = arith.addf %15, %20 : vector<128x64xf32>
    %c0_8 = arith.constant 0 : index
    %c0_9 = arith.constant 0 : index
    %22 = vector.load %arg7[%c0_8, %c0_9] : memref<1x64xf32, #tpu.memory_space<vmem>>, vector<1x64xf32>
    %23 = vector.broadcast %22 : vector<1x64xf32> to vector<128x64xf32>
    %24 = arith.mulf %21, %23 : vector<128x64xf32>
    %c0_10 = arith.constant 0 : index
    %c0_11 = arith.constant 0 : index
    %25 = vector.load %arg8[%c0_10, %c0_11] : memref<1x64xf32, #tpu.memory_space<vmem>>, vector<1x64xf32>
    %26 = vector.broadcast %25 : vector<1x64xf32> to vector<128x64xf32>
    %27 = arith.addf %24, %26 : vector<128x64xf32>
    %cst = arith.constant 0.000000e+00 : f32
    %28 = vector.broadcast %cst : f32 to vector<128x64xf32>
    %29 = arith.maximumf %27, %28 : vector<128x64xf32>
    %30 = arith.truncf %29 : vector<128x64xf32> to vector<128x64xbf16>
    %c0_12 = arith.constant 0 : index
    %c0_13 = arith.constant 0 : index
    %31 = vector.load %arg5[%c0_12, %c0_13] : memref<64x128xbf16, #tpu.memory_space<vmem>>, vector<64x128xbf16>
    %cst_14 = arith.constant dense<0.000000e+00> : vector<128x128xf32>
    %32 = tpu.matmul %30, %31, %cst_14 {dimension_numbers = #tpu.dot_dimension_numbers<[1], [0], [0], [1], [0, 0, 1, 1], [], []>} : vector<128x64xbf16>, vector<64x128xbf16>, vector<128x128xf32> -> vector<128x128xf32>
    %c0_i32_15 = arith.constant 0 : i32
    %33 = arith.cmpi eq, %arg0, %c0_i32_15 : i32
    %34 = arith.extui %33 : i1 to i32
    %c0_i32_16 = arith.constant 0 : i32
    %35 = arith.cmpi ne, %34, %c0_i32_16 : i32
    scf.if %35 {
      %c0_22 = arith.constant 0 : index
      %c0_23 = arith.constant 0 : index
      %46 = vector.load %arg14[%c0_22, %c0_23] : memref<1x128xf32, #tpu.memory_space<vmem>>, vector<1x128xf32>
      %cst_24 = arith.constant dense<0.000000e+00> : vector<128xf32>
      %47 = vector.multi_reduction <add>, %32, %cst_24 [0] : vector<128x128xf32> to vector<128xf32>
      %48 = vector.shape_cast %47 : vector<128xf32> to vector<1x128xf32>
      %49 = arith.addf %46, %48 : vector<1x128xf32>
      %c0_25 = arith.constant 0 : index
      %c0_26 = arith.constant 0 : index
      %50 = vector.load %arg14[%c0_25, %c0_26] : memref<1x128xf32, #tpu.memory_space<vmem>>, vector<1x128xf32>
      tpu.vector_store %arg14[%c0_25, %c0_26], %49 {strides = array<i32>} : memref<1x128xf32, #tpu.memory_space<vmem>>, vector<1x128xf32>,
      %c0_27 = arith.constant 0 : index
      %c0_28 = arith.constant 0 : index
      %51 = vector.load %arg15[%c0_27, %c0_28] : memref<1x128xf32, #tpu.memory_space<vmem>>, vector<1x128xf32>
      %52 = arith.mulf %32, %32 : vector<128x128xf32>
      %cst_29 = arith.constant dense<0.000000e+00> : vector<128xf32>
      %53 = vector.multi_reduction <add>, %52, %cst_29 [0] : vector<128x128xf32> to vector<128xf32>
      %54 = vector.shape_cast %53 : vector<128xf32> to vector<1x128xf32>
      %55 = arith.addf %51, %54 : vector<1x128xf32>
      %c0_30 = arith.constant 0 : index
      %c0_31 = arith.constant 0 : index
      %56 = vector.load %arg15[%c0_30, %c0_31] : memref<1x128xf32, #tpu.memory_space<vmem>>, vector<1x128xf32>
      tpu.vector_store %arg15[%c0_30, %c0_31], %55 {strides = array<i32>} : memref<1x128xf32, #tpu.memory_space<vmem>>, vector<1x128xf32>,
    } else {
    }
    %c1_i32 = arith.constant 1 : i32
    %36 = arith.cmpi eq, %arg0, %c1_i32 : i32
    %37 = arith.extui %36 : i1 to i32
    %c0_i32_17 = arith.constant 0 : i32
    %38 = arith.cmpi ne, %37, %c0_i32_17 : i32
    scf.if %38 {
      %c0_22 = arith.constant 0 : index
      %c0_23 = arith.constant 0 : index
      %46 = vector.load %arg14[%c0_22, %c0_23] : memref<1x128xf32, #tpu.memory_space<vmem>>, vector<1x128xf32>
      %cst_24 = arith.constant 3.906250e-03 : f32
      %47 = vector.broadcast %cst_24 : f32 to vector<1x128xf32>
      %48 = arith.mulf %46, %47 : vector<1x128xf32>
      %c0_25 = arith.constant 0 : index
      %c0_26 = arith.constant 0 : index
      %49 = vector.load %arg15[%c0_25, %c0_26] : memref<1x128xf32, #tpu.memory_space<vmem>>, vector<1x128xf32>
      %cst_27 = arith.constant 3.906250e-03 : f32
      %50 = vector.broadcast %cst_27 : f32 to vector<1x128xf32>
      %51 = arith.mulf %49, %50 : vector<1x128xf32>
      %52 = arith.mulf %48, %48 : vector<1x128xf32>
      %53 = arith.subf %51, %52 : vector<1x128xf32>
      %cst_28 = arith.constant 0.000000e+00 : f32
      %54 = vector.broadcast %cst_28 : f32 to vector<1x128xf32>
      %55 = arith.maximumf %53, %54 : vector<1x128xf32>
      %c0_29 = arith.constant 0 : index
      %c0_30 = arith.constant 0 : index
      %56 = vector.load %arg9[%c0_29, %c0_30] : memref<1x128xf32, #tpu.memory_space<vmem>>, vector<1x128xf32>
      %cst_31 = arith.constant 9.99999974E-6 : f32
      %57 = vector.broadcast %cst_31 : f32 to vector<1x128xf32>
      %58 = arith.addf %55, %57 : vector<1x128xf32>
      %59 = math.rsqrt %58 : vector<1x128xf32>
      %60 = arith.mulf %56, %59 : vector<1x128xf32>
      %c0_32 = arith.constant 0 : index
      %c0_33 = arith.constant 0 : index
      %61 = vector.load %arg10[%c0_32, %c0_33] : memref<1x128xf32, #tpu.memory_space<vmem>>, vector<1x128xf32>
      %62 = arith.mulf %48, %60 : vector<1x128xf32>
      %63 = arith.subf %61, %62 : vector<1x128xf32>
      %64 = vector.broadcast %60 : vector<1x128xf32> to vector<128x128xf32>
      %65 = arith.mulf %32, %64 : vector<128x128xf32>
      %66 = vector.broadcast %63 : vector<1x128xf32> to vector<128x128xf32>
      %67 = arith.addf %65, %66 : vector<128x128xf32>
      %cst_34 = arith.constant 0.000000e+00 : f32
      %68 = vector.broadcast %cst_34 : f32 to vector<128x128xf32>
      %69 = arith.maximumf %67, %68 : vector<128x128xf32>
      %70 = arith.truncf %69 : vector<128x128xf32> to vector<128x128xbf16>
      %c0_35 = arith.constant 0 : index
      %c0_36 = arith.constant 0 : index
      %71 = vector.load %arg6[%c0_35, %c0_36] : memref<128x1024xbf16, #tpu.memory_space<vmem>>, vector<128x1024xbf16>
      %cst_37 = arith.constant dense<0.000000e+00> : vector<128x1024xf32>
      %72 = tpu.matmul %70, %71, %cst_37 {dimension_numbers = #tpu.dot_dimension_numbers<[1], [0], [0], [1], [0, 0, 1, 1], [], []>} : vector<128x128xbf16>, vector<128x1024xbf16>, vector<128x1024xf32> -> vector<128x1024xf32>
      %cst_38 = arith.constant 0.000000e+00 : f32
      %73 = vector.broadcast %cst_38 : f32 to vector<8x1024xf32>
      %cst_39 = arith.constant 0.000000e+00 : f32
      %74 = vector.broadcast %cst_39 : f32 to vector<8x1024xf32>
      %cst_40 = arith.constant 0xFF800000 : f32
      %75 = vector.broadcast %cst_40 : f32 to vector<8x1024xf32>
      %cst_41 = arith.constant 0x7F800000 : f32
      %76 = vector.broadcast %cst_41 : f32 to vector<8x1024xf32>
      %77 = vector.extract_strided_slice %72 {offsets = [0, 0], sizes = [8, 1024], strides = [1, 1]} : vector<128x1024xf32> to vector<8x1024xf32>
      %78 = arith.addf %73, %77 : vector<8x1024xf32>
      %79 = arith.mulf %77, %77 : vector<8x1024xf32>
      %80 = arith.addf %74, %79 : vector<8x1024xf32>
      %81 = arith.maximumf %75, %77 : vector<8x1024xf32>
      %82 = arith.minimumf %76, %77 : vector<8x1024xf32>
      %83 = vector.extract_strided_slice %72 {offsets = [8, 0], sizes = [8, 1024], strides = [1, 1]} : vector<128x1024xf32> to vector<8x1024xf32>
      %84 = arith.addf %78, %83 : vector<8x1024xf32>
      %85 = arith.mulf %83, %83 : vector<8x1024xf32>
      %86 = arith.addf %80, %85 : vector<8x1024xf32>
      %87 = arith.maximumf %81, %83 : vector<8x1024xf32>
      %88 = arith.minimumf %82, %83 : vector<8x1024xf32>
      %89 = vector.extract_strided_slice %72 {offsets = [16, 0], sizes = [8, 1024], strides = [1, 1]} : vector<128x1024xf32> to vector<8x1024xf32>
      %90 = arith.addf %84, %89 : vector<8x1024xf32>
      %91 = arith.mulf %89, %89 : vector<8x1024xf32>
      %92 = arith.addf %86, %91 : vector<8x1024xf32>
      %93 = arith.maximumf %87, %89 : vector<8x1024xf32>
      %94 = arith.minimumf %88, %89 : vector<8x1024xf32>
      %95 = vector.extract_strided_slice %72 {offsets = [24, 0], sizes = [8, 1024], strides = [1, 1]} : vector<128x1024xf32> to vector<8x1024xf32>
      %96 = arith.addf %90, %95 : vector<8x1024xf32>
      %97 = arith.mulf %95, %95 : vector<8x1024xf32>
      %98 = arith.addf %92, %97 : vector<8x1024xf32>
      %99 = arith.maximumf %93, %95 : vector<8x1024xf32>
      %100 = arith.minimumf %94, %95 : vector<8x1024xf32>
      %101 = vector.extract_strided_slice %72 {offsets = [32, 0], sizes = [8, 1024], strides = [1, 1]} : vector<128x1024xf32> to vector<8x1024xf32>
      %102 = arith.addf %96, %101 : vector<8x1024xf32>
      %103 = arith.mulf %101, %101 : vector<8x1024xf32>
      %104 = arith.addf %98, %103 : vector<8x1024xf32>
      %105 = arith.maximumf %99, %101 : vector<8x1024xf32>
      %106 = arith.minimumf %100, %101 : vector<8x1024xf32>
      %107 = vector.extract_strided_slice %72 {offsets = [40, 0], sizes = [8, 1024], strides = [1, 1]} : vector<128x1024xf32> to vector<8x1024xf32>
      %108 = arith.addf %102, %107 : vector<8x1024xf32>
      %109 = arith.mulf %107, %107 : vector<8x1024xf32>
      %110 = arith.addf %104, %109 : vector<8x1024xf32>
      %111 = arith.maximumf %105, %107 : vector<8x1024xf32>
      %112 = arith.minimumf %106, %107 : vector<8x1024xf32>
      %113 = vector.extract_strided_slice %72 {offsets = [48, 0], sizes = [8, 1024], strides = [1, 1]} : vector<128x1024xf32> to vector<8x1024xf32>
      %114 = arith.addf %108, %113 : vector<8x1024xf32>
      %115 = arith.mulf %113, %113 : vector<8x1024xf32>
      %116 = arith.addf %110, %115 : vector<8x1024xf32>
      %117 = arith.maximumf %111, %113 : vector<8x1024xf32>
      %118 = arith.minimumf %112, %113 : vector<8x1024xf32>
      %119 = vector.extract_strided_slice %72 {offsets = [56, 0], sizes = [8, 1024], strides = [1, 1]} : vector<128x1024xf32> to vector<8x1024xf32>
      %120 = arith.addf %114, %119 : vector<8x1024xf32>
      %121 = arith.mulf %119, %119 : vector<8x1024xf32>
      %122 = arith.addf %116, %121 : vector<8x1024xf32>
      %123 = arith.maximumf %117, %119 : vector<8x1024xf32>
      %124 = arith.minimumf %118, %119 : vector<8x1024xf32>
      %125 = vector.extract_strided_slice %72 {offsets = [64, 0], sizes = [8, 1024], strides = [1, 1]} : vector<128x1024xf32> to vector<8x1024xf32>
      %126 = arith.addf %120, %125 : vector<8x1024xf32>
      %127 = arith.mulf %125, %125 : vector<8x1024xf32>
      %128 = arith.addf %122, %127 : vector<8x1024xf32>
      %129 = arith.maximumf %123, %125 : vector<8x1024xf32>
      %130 = arith.minimumf %124, %125 : vector<8x1024xf32>
      %131 = vector.extract_strided_slice %72 {offsets = [72, 0], sizes = [8, 1024], strides = [1, 1]} : vector<128x1024xf32> to vector<8x1024xf32>
      %132 = arith.addf %126, %131 : vector<8x1024xf32>
      %133 = arith.mulf %131, %131 : vector<8x1024xf32>
      %134 = arith.addf %128, %133 : vector<8x1024xf32>
      %135 = arith.maximumf %129, %131 : vector<8x1024xf32>
      %136 = arith.minimumf %130, %131 : vector<8x1024xf32>
      %137 = vector.extract_strided_slice %72 {offsets = [80, 0], sizes = [8, 1024], strides = [1, 1]} : vector<128x1024xf32> to vector<8x1024xf32>
      %138 = arith.addf %132, %137 : vector<8x1024xf32>
      %139 = arith.mulf %137, %137 : vector<8x1024xf32>
      %140 = arith.addf %134, %139 : vector<8x1024xf32>
      %141 = arith.maximumf %135, %137 : vector<8x1024xf32>
      %142 = arith.minimumf %136, %137 : vector<8x1024xf32>
      %143 = vector.extract_strided_slice %72 {offsets = [88, 0], sizes = [8, 1024], strides = [1, 1]} : vector<128x1024xf32> to vector<8x1024xf32>
      %144 = arith.addf %138, %143 : vector<8x1024xf32>
      %145 = arith.mulf %143, %143 : vector<8x1024xf32>
      %146 = arith.addf %140, %145 : vector<8x1024xf32>
      %147 = arith.maximumf %141, %143 : vector<8x1024xf32>
      %148 = arith.minimumf %142, %143 : vector<8x1024xf32>
      %149 = vector.extract_strided_slice %72 {offsets = [96, 0], sizes = [8, 1024], strides = [1, 1]} : vector<128x1024xf32> to vector<8x1024xf32>
      %150 = arith.addf %144, %149 : vector<8x1024xf32>
      %151 = arith.mulf %149, %149 : vector<8x1024xf32>
      %152 = arith.addf %146, %151 : vector<8x1024xf32>
      %153 = arith.maximumf %147, %149 : vector<8x1024xf32>
      %154 = arith.minimumf %148, %149 : vector<8x1024xf32>
      %155 = vector.extract_strided_slice %72 {offsets = [104, 0], sizes = [8, 1024], strides = [1, 1]} : vector<128x1024xf32> to vector<8x1024xf32>
      %156 = arith.addf %150, %155 : vector<8x1024xf32>
      %157 = arith.mulf %155, %155 : vector<8x1024xf32>
      %158 = arith.addf %152, %157 : vector<8x1024xf32>
      %159 = arith.maximumf %153, %155 : vector<8x1024xf32>
      %160 = arith.minimumf %154, %155 : vector<8x1024xf32>
      %161 = vector.extract_strided_slice %72 {offsets = [112, 0], sizes = [8, 1024], strides = [1, 1]} : vector<128x1024xf32> to vector<8x1024xf32>
      %162 = arith.addf %156, %161 : vector<8x1024xf32>
      %163 = arith.mulf %161, %161 : vector<8x1024xf32>
      %164 = arith.addf %158, %163 : vector<8x1024xf32>
      %165 = arith.maximumf %159, %161 : vector<8x1024xf32>
      %166 = arith.minimumf %160, %161 : vector<8x1024xf32>
      %167 = vector.extract_strided_slice %72 {offsets = [120, 0], sizes = [8, 1024], strides = [1, 1]} : vector<128x1024xf32> to vector<8x1024xf32>
      %168 = arith.addf %162, %167 : vector<8x1024xf32>
      %169 = arith.mulf %167, %167 : vector<8x1024xf32>
      %170 = arith.addf %164, %169 : vector<8x1024xf32>
      %171 = arith.maximumf %165, %167 : vector<8x1024xf32>
      %172 = arith.minimumf %166, %167 : vector<8x1024xf32>
      %cst_42 = arith.constant dense<0.000000e+00> : vector<1024xf32>
      %173 = vector.multi_reduction <add>, %168, %cst_42 [0] : vector<8x1024xf32> to vector<1024xf32>
      %174 = vector.shape_cast %173 : vector<1024xf32> to vector<1x1024xf32>
      %cst_43 = arith.constant dense<0.000000e+00> : vector<1024xf32>
      %175 = vector.multi_reduction <add>, %170, %cst_43 [0] : vector<8x1024xf32> to vector<1024xf32>
      %176 = vector.shape_cast %175 : vector<1024xf32> to vector<1x1024xf32>
      %cst_44 = arith.constant dense<0xFF800000> : vector<1024xf32>
      %177 = vector.multi_reduction <maximumf>, %171, %cst_44 [0] : vector<8x1024xf32> to vector<1024xf32>
      %178 = vector.shape_cast %177 : vector<1024xf32> to vector<1x1024xf32>
      %cst_45 = arith.constant dense<0x7F800000> : vector<1024xf32>
      %179 = vector.multi_reduction <minimumf>, %172, %cst_45 [0] : vector<8x1024xf32> to vector<1024xf32>
      %180 = vector.shape_cast %179 : vector<1024xf32> to vector<1x1024xf32>
      %c0_46 = arith.constant 0 : index
      %c0_47 = arith.constant 0 : index
      %181 = vector.load %arg16[%c0_46, %c0_47] : memref<1x1024xf32, #tpu.memory_space<vmem>>, vector<1x1024xf32>
      %182 = arith.addf %181, %174 : vector<1x1024xf32>
      %c0_48 = arith.constant 0 : index
      %c0_49 = arith.constant 0 : index
      %183 = vector.load %arg16[%c0_48, %c0_49] : memref<1x1024xf32, #tpu.memory_space<vmem>>, vector<1x1024xf32>
      tpu.vector_store %arg16[%c0_48, %c0_49], %182 {strides = array<i32>} : memref<1x1024xf32, #tpu.memory_space<vmem>>, vector<1x1024xf32>,
      %c0_50 = arith.constant 0 : index
      %c0_51 = arith.constant 0 : index
      %184 = vector.load %arg17[%c0_50, %c0_51] : memref<1x1024xf32, #tpu.memory_space<vmem>>, vector<1x1024xf32>
      %185 = arith.addf %184, %176 : vector<1x1024xf32>
      %c0_52 = arith.constant 0 : index
      %c0_53 = arith.constant 0 : index
      %186 = vector.load %arg17[%c0_52, %c0_53] : memref<1x1024xf32, #tpu.memory_space<vmem>>, vector<1x1024xf32>
      tpu.vector_store %arg17[%c0_52, %c0_53], %185 {strides = array<i32>} : memref<1x1024xf32, #tpu.memory_space<vmem>>, vector<1x1024xf32>,
      %187 = arith.index_cast %arg1 : i32 to index
      %c0_54 = arith.constant 0 : index
      %188 = vector.load %arg18[%187, %c0_54] : memref<2x1024xf32, #tpu.memory_space<vmem>>, vector<1x1024xf32>
      %189 = arith.maximumf %188, %178 : vector<1x1024xf32>
      %190 = arith.index_cast %arg1 : i32 to index
      %c0_55 = arith.constant 0 : index
      %191 = vector.load %arg18[%190, %c0_55] : memref<2x1024xf32, #tpu.memory_space<vmem>>, vector<1x1024xf32>
      tpu.vector_store %arg18[%190, %c0_55], %189 {strides = array<i32>} : memref<2x1024xf32, #tpu.memory_space<vmem>>, vector<1x1024xf32>,
      %192 = arith.index_cast %arg1 : i32 to index
      %c0_56 = arith.constant 0 : index
      %193 = vector.load %arg19[%192, %c0_56] : memref<2x1024xf32, #tpu.memory_space<vmem>>, vector<1x1024xf32>
      %194 = arith.minimumf %193, %180 : vector<1x1024xf32>
      %195 = arith.index_cast %arg1 : i32 to index
      %c0_57 = arith.constant 0 : index
      %196 = vector.load %arg19[%195, %c0_57] : memref<2x1024xf32, #tpu.memory_space<vmem>>, vector<1x1024xf32>
      tpu.vector_store %arg19[%195, %c0_57], %194 {strides = array<i32>} : memref<2x1024xf32, #tpu.memory_space<vmem>>, vector<1x1024xf32>,
    } else {
    }
    %c1_i32_18 = arith.constant 1 : i32
    %39 = arith.cmpi eq, %arg0, %c1_i32_18 : i32
    %c1_i32_19 = arith.constant 1 : i32
    %40 = arith.cmpi eq, %arg1, %c1_i32_19 : i32
    %41 = arith.andi %39, %40 : i1
    %c0_i32_20 = arith.constant 0 : i32
    %42 = arith.cmpi eq, %arg2, %c0_i32_20 : i32
    %43 = arith.andi %41, %42 : i1
    %44 = arith.extui %43 : i1 to i32
    %c0_i32_21 = arith.constant 0 : i32
    %45 = arith.cmpi ne, %44, %c0_i32_21 : i32
    scf.if %45 {
      %c0_22 = arith.constant 0 : index
      %c0_23 = arith.constant 0 : index
      %46 = vector.load %arg16[%c0_22, %c0_23] : memref<1x1024xf32, #tpu.memory_space<vmem>>, vector<1x1024xf32>
      %cst_24 = arith.constant 3.906250e-03 : f32
      %47 = vector.broadcast %cst_24 : f32 to vector<1x1024xf32>
      %48 = arith.mulf %46, %47 : vector<1x1024xf32>
      %c0_25 = arith.constant 0 : index
      %c0_26 = arith.constant 0 : index
      %49 = vector.load %arg17[%c0_25, %c0_26] : memref<1x1024xf32, #tpu.memory_space<vmem>>, vector<1x1024xf32>
      %cst_27 = arith.constant 3.906250e-03 : f32
      %50 = vector.broadcast %cst_27 : f32 to vector<1x1024xf32>
      %51 = arith.mulf %49, %50 : vector<1x1024xf32>
      %52 = arith.mulf %48, %48 : vector<1x1024xf32>
      %53 = arith.subf %51, %52 : vector<1x1024xf32>
      %cst_28 = arith.constant 0.000000e+00 : f32
      %54 = vector.broadcast %cst_28 : f32 to vector<1x1024xf32>
      %55 = arith.maximumf %53, %54 : vector<1x1024xf32>
      %c0_29 = arith.constant 0 : index
      %c0_30 = arith.constant 0 : index
      %56 = vector.load %arg11[%c0_29, %c0_30] : memref<1x1024xf32, #tpu.memory_space<vmem>>, vector<1x1024xf32>
      %cst_31 = arith.constant 9.99999974E-6 : f32
      %57 = vector.broadcast %cst_31 : f32 to vector<1x1024xf32>
      %58 = arith.addf %55, %57 : vector<1x1024xf32>
      %59 = math.rsqrt %58 : vector<1x1024xf32>
      %60 = arith.mulf %56, %59 : vector<1x1024xf32>
      %c0_32 = arith.constant 0 : index
      %c0_33 = arith.constant 0 : index
      %61 = vector.load %arg12[%c0_32, %c0_33] : memref<1x1024xf32, #tpu.memory_space<vmem>>, vector<1x1024xf32>
      %62 = arith.mulf %48, %60 : vector<1x1024xf32>
      %63 = arith.subf %61, %62 : vector<1x1024xf32>
      %cst_34 = arith.constant 0.000000e+00 : f32
      %64 = vector.broadcast %cst_34 : f32 to vector<1x1024xf32>
      %65 = arith.cmpf oge, %60, %64 : vector<1x1024xf32>
      %c0_35 = arith.constant 0 : index
      %c0_36 = arith.constant 0 : index
      %66 = vector.load %arg18[%c0_35, %c0_36] : memref<2x1024xf32, #tpu.memory_space<vmem>>, vector<2x1024xf32>
      %c0_37 = arith.constant 0 : index
      %c0_38 = arith.constant 0 : index
      %67 = vector.load %arg19[%c0_37, %c0_38] : memref<2x1024xf32, #tpu.memory_space<vmem>>, vector<2x1024xf32>
      %68 = vector.shape_cast %65 : vector<1x1024xi1> to vector<1x1024xi1>
      %69 = vector.broadcast %68 : vector<1x1024xi1> to vector<2x1024xi1>
      %70 = arith.select %69, %66, %67 : vector<2x1024xi1>, vector<2x1024xf32>
      %71 = vector.broadcast %60 : vector<1x1024xf32> to vector<2x1024xf32>
      %72 = arith.mulf %70, %71 : vector<2x1024xf32>
      %73 = vector.broadcast %63 : vector<1x1024xf32> to vector<2x1024xf32>
      %74 = arith.addf %72, %73 : vector<2x1024xf32>
      %c0_39 = arith.constant 0 : index
      %c0_40 = arith.constant 0 : index
      %75 = vector.load %arg13[%c0_39, %c0_40] : memref<2x1024xf32, #tpu.memory_space<vmem>>, vector<2x1024xf32>
      tpu.vector_store %arg13[%c0_39, %c0_40], %74 {strides = array<i32>} : memref<2x1024xf32, #tpu.memory_space<vmem>>, vector<2x1024xf32>,
    } else {
    }
    return
  }
  func.func @transform_0(%arg0: i32, %arg1: i32, %arg2: i32) -> (i32, i32, i32) {
    %c0_i32 = arith.constant 0 : i32
    %c0_i32_0 = arith.constant 0 : i32
    return %arg1, %arg2, %c0_i32 : i32, i32, i32
  }
  func.func @transform_1(%arg0: i32, %arg1: i32, %arg2: i32) -> (i32, i32, i32) {
    %c0_i32 = arith.constant 0 : i32
    %c0_i32_0 = arith.constant 0 : i32
    %c0_i32_1 = arith.constant 0 : i32
    return %arg1, %c0_i32, %c0_i32_0 : i32, i32, i32
  }
  func.func @transform_2(%arg0: i32, %arg1: i32, %arg2: i32) -> (i32, i32) {
    %c0_i32 = arith.constant 0 : i32
    %c0_i32_0 = arith.constant 0 : i32
    %c0_i32_1 = arith.constant 0 : i32
    return %c0_i32, %c0_i32_0 : i32, i32
  }
  func.func @transform_3(%arg0: i32, %arg1: i32, %arg2: i32) -> (i32, i32) {
    %c0_i32 = arith.constant 0 : i32
    %c0_i32_0 = arith.constant 0 : i32
    %c0_i32_1 = arith.constant 0 : i32
    return %c0_i32, %c0_i32_0 : i32, i32
  }
  func.func @transform_4(%arg0: i32, %arg1: i32, %arg2: i32) -> (i32, i32) {
    %c0_i32 = arith.constant 0 : i32
    %c0_i32_0 = arith.constant 0 : i32
    %c0_i32_1 = arith.constant 0 : i32
    return %c0_i32, %c0_i32_0 : i32, i32
  }
  func.func @transform_5(%arg0: i32, %arg1: i32, %arg2: i32) -> (i32, i32) {
    %c0_i32 = arith.constant 0 : i32
    %c0_i32_0 = arith.constant 0 : i32
    %c0_i32_1 = arith.constant 0 : i32
    return %c0_i32, %c0_i32_0 : i32, i32
  }
  func.func @transform_6(%arg0: i32, %arg1: i32, %arg2: i32) -> (i32, i32) {
    %c0_i32 = arith.constant 0 : i32
    %c0_i32_0 = arith.constant 0 : i32
    %c0_i32_1 = arith.constant 0 : i32
    return %c0_i32, %c0_i32_0 : i32, i32
  }
  func.func @transform_7(%arg0: i32, %arg1: i32, %arg2: i32) -> (i32, i32) {
    %c0_i32 = arith.constant 0 : i32
    %c0_i32_0 = arith.constant 0 : i32
    %c0_i32_1 = arith.constant 0 : i32
    return %c0_i32, %c0_i32_0 : i32, i32
  }
  func.func @transform_8(%arg0: i32, %arg1: i32, %arg2: i32) -> (i32, i32) {
    %c0_i32 = arith.constant 0 : i32
    %c0_i32_0 = arith.constant 0 : i32
    %c0_i32_1 = arith.constant 0 : i32
    return %c0_i32, %c0_i32_0 : i32, i32
  }
  func.func @transform_9(%arg0: i32, %arg1: i32, %arg2: i32) -> (i32, i32) {
    %c0_i32 = arith.constant 0 : i32
    %c0_i32_0 = arith.constant 0 : i32
    %c0_i32_1 = arith.constant 0 : i32
    return %c0_i32, %c0_i32_0 : i32, i32
  }
  func.func @transform_10(%arg0: i32, %arg1: i32, %arg2: i32) -> (i32, i32) {
    %c0_i32 = arith.constant 0 : i32
    %c0_i32_0 = arith.constant 0 : i32
    %c0_i32_1 = arith.constant 0 : i32
    return %c0_i32, %c0_i32_0 : i32, i32
  }
}

</mosaic_0001>

<llo_original>
// kernel: _lambda_.3
$region0: #{_lambda_.3}
  #allocation0 [shape = 'u32[]', space=smem, size = 0x4, offset = 0x4, fixed_abs, tag = 'smem constant byte address 0x4 - core index']
  #allocation1 [shape = 'u32[144,128]{1,0:T(1,128)}', space=vmem, size = 0x12000, scoped, tag = 'internal scratch']
  #allocation2 [shape = 'f32[1,128]{1,0:T(1,128)}', space=vmem, size = 0x200, scoped, tag = 'scratch operand']
  #allocation3 [shape = 'f32[1,128]{1,0:T(1,128)}', space=vmem, size = 0x200, scoped, tag = 'scratch operand']
  #allocation4 [shape = 'f32[1,1024]{1,0:T(1,128)}', space=vmem, size = 0x1000, scoped, tag = 'scratch operand']
  #allocation5 [shape = 'f32[1,1024]{1,0:T(1,128)}', space=vmem, size = 0x1000, scoped, tag = 'scratch operand']
  #allocation6 [shape = 'f32[2,1024]{1,0:T(2,128)}', space=vmem, size = 0x2000, scoped, tag = 'scratch operand']
  #allocation7 [shape = 'f32[2,1024]{1,0:T(2,128)}', space=vmem, size = 0x2000, scoped, tag = 'scratch operand']
  %s0 = inlined_call_operand.vmem [shape: f32[2,128,2], index: 0, kind: input, shape index: {}]
  %s1 = inlined_call_operand.vmem [shape: f32[1,2,64], index: 1, kind: input, shape index: {}]
  %s2 = inlined_call_operand.vmem [shape: bf16[64,128], index: 2, kind: input, shape index: {}]
  %s3 = inlined_call_operand.hbm [shape: bf16[128,1024], index: 3, kind: input, shape index: {}]
  %s4 = inlined_call_operand.vmem [shape: f32[1,64], index: 4, kind: input, shape index: {}]
  %s5 = inlined_call_operand.vmem [shape: f32[1,64], index: 5, kind: input, shape index: {}]
  %s6 = inlined_call_operand.vmem [shape: f32[1,128], index: 6, kind: input, shape index: {}]
  %s7 = inlined_call_operand.vmem [shape: f32[1,128], index: 7, kind: input, shape index: {}]
  %s8 = inlined_call_operand.vmem [shape: f32[1,1024], index: 8, kind: input, shape index: {}]
  %s9 = inlined_call_operand.vmem [shape: f32[1,1024], index: 9, kind: input, shape index: {}]
  %s10 = inlined_call_operand.vmem [shape: f32[2,1024], index: 10, kind: output, shape index: {}]
  %s11 = sld [smem:[#allocation0]]
  $region93: #{_lambda_.3} parent=0
    _
  %s13 = ssub.s32 1, %s11
  %s14 = scalar_select 0, %s13, %s11
  $region1: #{_lambda_.3} parent=0
    #allocation8 [shape = 'u8[262144]{0}', space=vmem, size = 0x40000, scoped, tag = 'input window, operand 3, single buffered']
    #allocation9 [shape = 's32[2]{0}', space=sflag, size = 0x8, scoped, tag = 'scoped memory for _lambda_.3']
    %15 = vsyncpa [#allocation9], 0
    loop: start=0, step=1, limit=6
    $region2: #{_lambda_.3} parent=1 // loop_pre_header
      _
    $region3: #{_lambda_.3} parent=1 // loop_header
      %s17 = sphi 0, %s21
      %p18 = scmp.ge.s32.totalorder %s17, 6
      %s24 = sphi 0, %s43
      %s25 = sphi 0, %s39
      %s26 = sphi 0, %s35
      %s27 = sphi 0, %s24
      %s28 = sphi 0, %s25
      %s29 = sphi 0, %s26
      %s30 = sphi 0, %s27
      %s31 = sphi 0, %s28
      %s32 = sphi 0, %s29
      %s48 = sphi 0, %s50
      %s51 = sphi 0, %s48
      %s52 = sphi 0, %s51
      %s68 = sphi 0, %s52
      %s72 = sphi 0, %s72
      %s74 = sphi 0, %s72
      %s75 = sphi 0, %s74
      %s89 = sphi 0, %s75
      %s93 = sphi 0, %s93
      %s95 = sphi 0, %s93
      %s96 = sphi 0, %s95
      %s110 = sphi 0, %s96
      %s114 = sphi 0, %s114
      %s116 = sphi 0, %s114
      %s117 = sphi 0, %s116
      %s131 = sphi 0, %s117
      %s135 = sphi 0, %s135
      %s137 = sphi 0, %s135
      %s138 = sphi 0, %s137
      %s152 = sphi 0, %s138
      %s156 = sphi 0, %s156
      %s158 = sphi 0, %s156
      %s159 = sphi 0, %s158
      %s173 = sphi 0, %s159
      %s177 = sphi 0, %s177
      %s179 = sphi 0, %s177
      %s180 = sphi 0, %s179
      %s194 = sphi 0, %s180
      %s198 = sphi 0, %s198
      %s200 = sphi 0, %s198
      %s201 = sphi 0, %s200
      %s215 = sphi 0, %s201
      %s219 = sphi 0, %s219
      %s221 = sphi 0, %s219
      %s222 = sphi 0, %s221
      %s236 = sphi 0, %s222
      %s240 = sphi 0, %s240
      %s242 = sphi 0, %s240
      %s243 = sphi 0, %s242
      %s257 = sphi 0, %s243
      %s261 = sphi 0, %s261
      %s263 = sphi 0, %s261
      %s264 = sphi 0, %s263
      %s278 = sphi 0, %s264
    $region4: #{_lambda_.3} parent=1 // loop_header_branch
      %20 = sbr.rel (%p18) target = $region8
    $region5: #{_lambda_.3} parent=1 // loop_body
      %s22 = ssub.s32 %s17, 1
      %s23 = ssub.s32 %s17, 2
      %s33 = sadd.s32 1, %s26
      %p34 = scmp.ge.s32.totalorder %s33, 1
      %s35 = scalar_select %p34, 0, %s33
      %s36 = sadd.s32 1, %s25
      %s37 = scalar_select %p34, %s36, %s25
      %p38 = scmp.ge.s32.totalorder %s37, 2
      %s39 = scalar_select %p38, 0, %s37
      %s40 = sadd.s32 1, %s24
      %s41 = scalar_select %p38, %s40, %s24
      %p42 = scmp.ge.s32.totalorder %s41, 2
      %s43 = scalar_select %p42, 0, %s41
      %s44 = ssub.s32 %s25, %s39
      %s45 = ssub.s32 %s26, %s35
      %s46 = sor.u32 %s44, %s45
      %p47 = scmp.eq.s32.totalorder %s46, 0
      %s49 = sadd.s32 %s48, 1
      %s50 = scalar_select %p47, %s48, %s49
      %p53 = pneg %p47
      %p54 = scmp.eq.s32.totalorder %s17, 3
      %p55 = por %p53, %p54
      %p56 = scmp.ne.s32.totalorder %s48, %s51
      %p57 = scmp.eq.s32.totalorder %s17, 0
      %p58 = por %p56, %p57
      %p59 = scmp.ne.s32.totalorder %s48, %s51
      %p60 = scmp.eq.s32.totalorder %s22, 3
      %p61 = por %p59, %p60
      %p62 = scmp.ne.s32.totalorder %s51, %s52
      %p63 = scmp.eq.s32.totalorder %s22, 0
      %p64 = por %p62, %p63
      %p65 = scmp.ne.s32.totalorder %s51, %s52
      %p66 = scmp.eq.s32.totalorder %s23, 3
      %p67 = por %p65, %p66
      %p69 = scmp.ne.s32.totalorder %s52, %s68
      %p70 = scmp.eq.s32.totalorder %s23, 0
      %p71 = por %p69, %p70
      %s73 = sadd.s32 %s72, 1
      %p76 = scmp.eq.s32.totalorder %s17, 3
      %p77 = scmp.ne.s32.totalorder %s72, %s74
      %p78 = scmp.eq.s32.totalorder %s17, 0
      %p79 = por %p77, %p78
      %p80 = scmp.ne.s32.totalorder %s72, %s74
      %p81 = scmp.eq.s32.totalorder %s22, 3
      %p82 = por %p80, %p81
      %p83 = scmp.ne.s32.totalorder %s74, %s75
      %p84 = scmp.eq.s32.totalorder %s22, 0
      %p85 = por %p83, %p84
      %p86 = scmp.ne.s32.totalorder %s74, %s75
      %p87 = scmp.eq.s32.totalorder %s23, 3
      %p88 = por %p86, %p87
      %p90 = scmp.ne.s32.totalorder %s75, %s89
      %p91 = scmp.eq.s32.totalorder %s23, 0
      %p92 = por %p90, %p91
      %s94 = sadd.s32 %s93, 1
      %p97 = scmp.eq.s32.totalorder %s17, 3
      %p98 = scmp.ne.s32.totalorder %s93, %s95
      %p99 = scmp.eq.s32.totalorder %s17, 0
      %p100 = por %p98, %p99
      %p101 = scmp.ne.s32.totalorder %s93, %s95
      %p102 = scmp.eq.s32.totalorder %s22, 3
      %p103 = por %p101, %p102
      %p104 = scmp.ne.s32.totalorder %s95, %s96
      %p105 = scmp.eq.s32.totalorder %s22, 0
      %p106 = por %p104, %p105
      %p107 = scmp.ne.s32.totalorder %s95, %s96
      %p108 = scmp.eq.s32.totalorder %s23, 3
      %p109 = por %p107, %p108
      %p111 = scmp.ne.s32.totalorder %s96, %s110
      %p112 = scmp.eq.s32.totalorder %s23, 0
      %p113 = por %p111, %p112
      %s115 = sadd.s32 %s114, 1
      %p118 = scmp.eq.s32.totalorder %s17, 3
      %p119 = scmp.ne.s32.totalorder %s114, %s116
      %p120 = scmp.eq.s32.totalorder %s17, 0
      %p121 = por %p119, %p120
      %p122 = scmp.ne.s32.totalorder %s114, %s116
      %p123 = scmp.eq.s32.totalorder %s22, 3
      %p124 = por %p122, %p123
      %p125 = scmp.ne.s32.totalorder %s116, %s117
      %p126 = scmp.eq.s32.totalorder %s22, 0
      %p127 = por %p125, %p126
      %p128 = scmp.ne.s32.totalorder %s116, %s117
      %p129 = scmp.eq.s32.totalorder %s23, 3
      %p130 = por %p128, %p129
      %p132 = scmp.ne.s32.totalorder %s117, %s131
      %p133 = scmp.eq.s32.totalorder %s23, 0
      %p134 = por %p132, %p133
      %s136 = sadd.s32 %s135, 1
      %p139 = scmp.eq.s32.totalorder %s17, 3
      %p140 = scmp.ne.s32.totalorder %s135, %s137
      %p141 = scmp.eq.s32.totalorder %s17, 0
      %p142 = por %p140, %p141
      %p143 = scmp.ne.s32.totalorder %s135, %s137
      %p144 = scmp.eq.s32.totalorder %s22, 3
      %p145 = por %p143, %p144
      %p146 = scmp.ne.s32.totalorder %s137, %s138
      %p147 = scmp.eq.s32.totalorder %s22, 0
      %p148 = por %p146, %p147
      %p149 = scmp.ne.s32.totalorder %s137, %s138
      %p150 = scmp.eq.s32.totalorder %s23, 3
      %p151 = por %p149, %p150
      %p153 = scmp.ne.s32.totalorder %s138, %s152
      %p154 = scmp.eq.s32.totalorder %s23, 0
      %p155 = por %p153, %p154
      %s157 = sadd.s32 %s156, 1
      %p160 = scmp.eq.s32.totalorder %s17, 3
      %p161 = scmp.ne.s32.totalorder %s156, %s158
      %p162 = scmp.eq.s32.totalorder %s17, 0
      %p163 = por %p161, %p162
      %p164 = scmp.ne.s32.totalorder %s156, %s158
      %p165 = scmp.eq.s32.totalorder %s22, 3
      %p166 = por %p164, %p165
      %p167 = scmp.ne.s32.totalorder %s158, %s159
      %p168 = scmp.eq.s32.totalorder %s22, 0
      %p169 = por %p167, %p168
      %p170 = scmp.ne.s32.totalorder %s158, %s159
      %p171 = scmp.eq.s32.totalorder %s23, 3
      %p172 = por %p170, %p171
      %p174 = scmp.ne.s32.totalorder %s159, %s173
      %p175 = scmp.eq.s32.totalorder %s23, 0
      %p176 = por %p174, %p175
      %s178 = sadd.s32 %s177, 1
      %p181 = scmp.eq.s32.totalorder %s17, 3
      %p182 = scmp.ne.s32.totalorder %s177, %s179
      %p183 = scmp.eq.s32.totalorder %s17, 0
      %p184 = por %p182, %p183
      %p185 = scmp.ne.s32.totalorder %s177, %s179
      %p186 = scmp.eq.s32.totalorder %s22, 3
      %p187 = por %p185, %p186
      %p188 = scmp.ne.s32.totalorder %s179, %s180
      %p189 = scmp.eq.s32.totalorder %s22, 0
      %p190 = por %p188, %p189
      %p191 = scmp.ne.s32.totalorder %s179, %s180
      %p192 = scmp.eq.s32.totalorder %s23, 3
      %p193 = por %p191, %p192
      %p195 = scmp.ne.s32.totalorder %s180, %s194
      %p196 = scmp.eq.s32.totalorder %s23, 0
      %p197 = por %p195, %p196
      %s199 = sadd.s32 %s198, 1
      %p202 = scmp.eq.s32.totalorder %s17, 3
      %p203 = scmp.ne.s32.totalorder %s198, %s200
      %p204 = scmp.eq.s32.totalorder %s17, 0
      %p205 = por %p203, %p204
      %p206 = scmp.ne.s32.totalorder %s198, %s200
      %p207 = scmp.eq.s32.totalorder %s22, 3
      %p208 = por %p206, %p207
      %p209 = scmp.ne.s32.totalorder %s200, %s201
      %p210 = scmp.eq.s32.totalorder %s22, 0
      %p211 = por %p209, %p210
      %p212 = scmp.ne.s32.totalorder %s200, %s201
      %p213 = scmp.eq.s32.totalorder %s23, 3
      %p214 = por %p212, %p213
      %p216 = scmp.ne.s32.totalorder %s201, %s215
      %p217 = scmp.eq.s32.totalorder %s23, 0
      %p218 = por %p216, %p217
      %s220 = sadd.s32 %s219, 1
      %p223 = scmp.eq.s32.totalorder %s17, 3
      %p224 = scmp.ne.s32.totalorder %s219, %s221
      %p225 = scmp.eq.s32.totalorder %s17, 0
      %p226 = por %p224, %p225
      %p227 = scmp.ne.s32.totalorder %s219, %s221
      %p228 = scmp.eq.s32.totalorder %s22, 3
      %p229 = por %p227, %p228
      %p230 = scmp.ne.s32.totalorder %s221, %s222
      %p231 = scmp.eq.s32.totalorder %s22, 0
      %p232 = por %p230, %p231
      %p233 = scmp.ne.s32.totalorder %s221, %s222
      %p234 = scmp.eq.s32.totalorder %s23, 3
      %p235 = por %p233, %p234
      %p237 = scmp.ne.s32.totalorder %s222, %s236
      %p238 = scmp.eq.s32.totalorder %s23, 0
      %p239 = por %p237, %p238
      %s241 = sadd.s32 %s240, 1
      %p244 = scmp.eq.s32.totalorder %s17, 3
      %p245 = scmp.ne.s32.totalorder %s240, %s242
      %p246 = scmp.eq.s32.totalorder %s17, 0
      %p247 = por %p245, %p246
      %p248 = scmp.ne.s32.totalorder %s240, %s242
      %p249 = scmp.eq.s32.totalorder %s22, 3
      %p250 = por %p248, %p249
      %p251 = scmp.ne.s32.totalorder %s242, %s243
      %p252 = scmp.eq.s32.totalorder %s22, 0
      %p253 = por %p251, %p252
      %p254 = scmp.ne.s32.totalorder %s242, %s243
      %p255 = scmp.eq.s32.totalorder %s23, 3
      %p256 = por %p254, %p255
      %p258 = scmp.ne.s32.totalorder %s243, %s257
      %p259 = scmp.eq.s32.totalorder %s23, 0
      %p260 = por %p258, %p259
      %s262 = sadd.s32 %s261, 1
      %p265 = scmp.eq.s32.totalorder %s17, 3
      %p266 = scmp.ne.s32.totalorder %s261, %s263
      %p267 = scmp.eq.s32.totalorder %s17, 0
      %p268 = por %p266, %p267
      %p269 = scmp.ne.s32.totalorder %s261, %s263
      %p270 = scmp.eq.s32.totalorder %s22, 3
      %p271 = por %p269, %p270
      %p272 = scmp.ne.s32.totalorder %s263, %s264
      %p273 = scmp.eq.s32.totalorder %s22, 0
      %p274 = por %p272, %p273
      %p275 = scmp.ne.s32.totalorder %s263, %s264
      %p276 = scmp.eq.s32.totalorder %s23, 3
      %p277 = por %p275, %p276
      %p279 = scmp.ne.s32.totalorder %s264, %s278
      %p280 = scmp.eq.s32.totalorder %s23, 0
      %p281 = por %p279, %p280
      %p282 = scmp.le.s32.totalorder 1, %s17
      %p283 = scmp.lt.s32.totalorder %s17, 5
      %p284 = pnand %p282, %p283
      %p285 = pneg %p284
      // Predicated region
      $region9: #{_lambda_.3} parent=5 // pred_check
        _
      $region10: #{_lambda_.3} parent=5 // pred_check_branch
        %287 = sbr.rel (%p284) target = $region12
      $region11: #{_lambda_.3} parent=5 // pred_region
        %s288 = ssub.s32 %s17, 1
        // Predicated region
        $region13: #{_lambda_.3} parent=11 // pred_check
          %p289 = pneg %p85
        $region14: #{_lambda_.3} parent=11 // pred_check_branch
          %291 = sbr.rel (%p289) target = $region16
        $region15: #{_lambda_.3} parent=11 // pred_region
          _
        $region16: #{_lambda_.3} parent=11 // pred_fallthru
          _
        // Predicated region
        $region17: #{_lambda_.3} parent=11 // pred_check
          %p292 = pneg %p106
        $region18: #{_lambda_.3} parent=11 // pred_check_branch
          %294 = sbr.rel (%p292) target = $region20
        $region19: #{_lambda_.3} parent=11 // pred_region
          _
        $region20: #{_lambda_.3} parent=11 // pred_fallthru
          _
        // Predicated region
        $region21: #{_lambda_.3} parent=11 // pred_check
          %p295 = pneg %p127
        $region22: #{_lambda_.3} parent=11 // pred_check_branch
          %297 = sbr.rel (%p295) target = $region24
        $region23: #{_lambda_.3} parent=11 // pred_region
          %s299 = ssub.s32 8192, 8192
          %300 = vsyncadd [#allocation9], %s299
          %s301 = sshll.u32 [#allocation8], 4
          %s302 = int_to_ptr.vmem [resolvable:$true] %s301
          %307 = dma.hbm_to_vmem [thread:$0]  %s3, 8192, %s302, [#allocation9], 512, 512, 32
        $region24: #{_lambda_.3} parent=11 // pred_fallthru
          _
        // Predicated region
        $region25: #{_lambda_.3} parent=11 // pred_check
          %p308 = pneg %p148
        $region26: #{_lambda_.3} parent=11 // pred_check_branch
          %310 = sbr.rel (%p308) target = $region28
        $region27: #{_lambda_.3} parent=11 // pred_region
          _
        $region28: #{_lambda_.3} parent=11 // pred_fallthru
          _
        // Predicated region
        $region29: #{_lambda_.3} parent=11 // pred_check
          %p311 = pneg %p169
        $region30: #{_lambda_.3} parent=11 // pred_check_branch
          %313 = sbr.rel (%p311) target = $region32
        $region31: #{_lambda_.3} parent=11 // pred_region
          _
        $region32: #{_lambda_.3} parent=11 // pred_fallthru
          _
        // Predicated region
        $region33: #{_lambda_.3} parent=11 // pred_check
          %p314 = pneg %p190
        $region34: #{_lambda_.3} parent=11 // pred_check_branch
          %316 = sbr.rel (%p314) target = $region36
        $region35: #{_lambda_.3} parent=11 // pred_region
          _
        $region36: #{_lambda_.3} parent=11 // pred_fallthru
          _
        // Predicated region
        $region37: #{_lambda_.3} parent=11 // pred_check
          %p317 = pneg %p211
        $region38: #{_lambda_.3} parent=11 // pred_check_branch
          %319 = sbr.rel (%p317) target = $region40
        $region39: #{_lambda_.3} parent=11 // pred_region
          _
        $region40: #{_lambda_.3} parent=11 // pred_fallthru
          _
        // Predicated region
        $region41: #{_lambda_.3} parent=11 // pred_check
          %p320 = pneg %p232
        $region42: #{_lambda_.3} parent=11 // pred_check_branch
          %322 = sbr.rel (%p320) target = $region44
        $region43: #{_lambda_.3} parent=11 // pred_region
          _
        $region44: #{_lambda_.3} parent=11 // pred_fallthru
          _
        // Predicated region
        $region45: #{_lambda_.3} parent=11 // pred_check
          %p323 = pneg %p253
        $region46: #{_lambda_.3} parent=11 // pred_check_branch
          %325 = sbr.rel (%p323) target = $region48
        $region47: #{_lambda_.3} parent=11 // pred_region
          _
        $region48: #{_lambda_.3} parent=11 // pred_fallthru
          _
      $region12: #{_lambda_.3} parent=5 // pred_fallthru
        _
      %p326 = scmp.lt.s32.totalorder %s17, 4
      // Predicated region
      $region49: #{_lambda_.3} parent=5 // pred_check
        %p327 = pneg %p326
      $region50: #{_lambda_.3} parent=5 // pred_check_branch
        %329 = sbr.rel (%p327) target = $region52
      $region51: #{_lambda_.3} parent=5 // pred_region
        // Predicated region
        $region53: #{_lambda_.3} parent=51 // pred_check
          %p330 = pneg %p58
        $region54: #{_lambda_.3} parent=51 // pred_check_branch
          %332 = sbr.rel (%p330) target = $region56
        $region55: #{_lambda_.3} parent=51 // pred_region
          %s333 = smul.u32 16, %s26
          %p334 = scmp.lt.s32.totalorder %s25, 1
          %s335 = scalar_select %p334, %s25, 1
          %p336 = scmp.lt.s32.totalorder %s333, 15
          %s337 = scalar_select %p336, %s333, 15
          %s338 = smul.addr %s335, 16
          %s339 = sadd.s32 %s337, %s338
          %s340 = smul.addr %s339, 8
          %s341 = scalar_lea.vmem %s0, %s340
          %s342 = smul.u32 16, %s26
        $region56: #{_lambda_.3} parent=51 // pred_fallthru
          _
      $region52: #{_lambda_.3} parent=5 // pred_fallthru
        _
      %p343 = scmp.le.s32.totalorder 1, %s17
      %p344 = scmp.lt.s32.totalorder %s17, 5
      %p345 = pnand %p343, %p344
      %p346 = pneg %p345
      // Predicated region
      $region57: #{_lambda_.3} parent=5 // pred_check
        _
      $region58: #{_lambda_.3} parent=5 // pred_check_branch
        %348 = sbr.rel (%p345) target = $region60
      $region59: #{_lambda_.3} parent=5 // pred_region
        %s349 = ssub.s32 %s17, 1
        // Predicated region
        $region61: #{_lambda_.3} parent=59 // pred_check
          %p350 = pneg %p127
        $region62: #{_lambda_.3} parent=59 // pred_check_branch
          %352 = sbr.rel (%p350) target = $region64
        $region63: #{_lambda_.3} parent=59 // pred_region
          %353 = dma.done [#allocation9], 8192
        $region64: #{_lambda_.3} parent=59 // pred_fallthru
          _
        %s354 = smul.u32 16, %s29
        %p355 = scmp.lt.s32.totalorder %s28, 1
        %s356 = scalar_select %p355, %s28, 1
        %p357 = scmp.lt.s32.totalorder %s354, 15
        %s358 = scalar_select %p357, %s354, 15
        %s359 = smul.addr %s356, 16
        %s360 = sadd.s32 %s358, %s359
        %s361 = smul.addr %s360, 8
        %s362 = scalar_lea.vmem %s0, %s361
        %p363 = pneg %p64
        %p364 = pneg %p61
        %p365 = pneg %p85
        %p366 = pneg %p82
        %p367 = pneg %p106
        %p368 = pneg %p103
        %p369 = pneg %p127
        %p370 = pneg %p124
        %p371 = pneg %p148
        %p372 = pneg %p145
        %p373 = pneg %p169
        %p374 = pneg %p166
        %p375 = pneg %p190
        %p376 = pneg %p187
        %p377 = pneg %p211
        %p378 = pneg %p208
        %p379 = pneg %p232
        %p380 = pneg %p229
        %p381 = pneg %p253
        %p382 = pneg %p250
        %p383 = pneg %p274
        %p384 = pneg %p271
        %s385 = smul.u32 16, %s29
        %p386 = scmp.lt.s32.totalorder %s28, 1
        %s387 = scalar_select %p386, %s28, 1
        %p388 = scmp.lt.s32.totalorder %s385, 15
        %s389 = scalar_select %p388, %s385, 15
        %s390 = smul.addr %s387, 16
        %s391 = sadd.s32 %s389, %s390
        %s392 = smul.addr %s391, 8
        %s393 = scalar_lea.vmem %s0, %s392
        %s394 = smul.u32 16, %s29
        %p396 = scmp.eq.s32.totalorder %s27, 0
        %p397 = scmp.eq.s32.totalorder %s28, 0
        %p398 = pnand %p396, %p397
        %p399 = pneg %p398
        %p400 = scmp.eq.s32.totalorder %s29, 0
        %p401 = pnand %p399, %p400
        %p402 = pneg %p401
        // Predicated region
        $region65: #{_lambda_.3} parent=59 // pred_check
          _
        $region66: #{_lambda_.3} parent=59 // pred_check_branch
          %404 = sbr.rel (%p401) target = $region68
        $region67: #{_lambda_.3} parent=59 // pred_region
          %405 = vst [vmem:[#allocation2] sm:$0x1] 0.0
          %406 = vst [vmem:[#allocation3] sm:$0x1] 0.0
          %407 = vst [vmem:[#allocation4] sm:$0xff] 0.0
          %408 = vst [vmem:[#allocation5] sm:$0xff] 0.0
          %409 = vst [vmem:[#allocation6] sm:$0xff] -inf
          %410 = vst [vmem:[#allocation6 + $0x8] sm:$0xff] -inf
          %411 = vst [vmem:[#allocation7] sm:$0xff] inf
          %412 = vst [vmem:[#allocation7 + $0x8] sm:$0xff] inf
        $region68: #{_lambda_.3} parent=59 // pred_fallthru
          _
        %v413 = vld [vmem:[%s393] sm:$0xff]
        %v414 = vld [vmem:[%s393 + $0x8] sm:$0xff]
        %v415 = vld [vmem:[%s393 + $0x10] sm:$0xff]
        %v416 = vld [vmem:[%s393 + $0x18] sm:$0xff]
        %v417 = vld [vmem:[%s393 + $0x20] sm:$0xff]
        %v418 = vld [vmem:[%s393 + $0x28] sm:$0xff]
        %v419 = vld [vmem:[%s393 + $0x30] sm:$0xff]
        %v420 = vld [vmem:[%s393 + $0x38] sm:$0xff]
        %v421 = vld [vmem:[%s393 + $0x40] sm:$0xff]
        %v422 = vld [vmem:[%s393 + $0x48] sm:$0xff]
        %v423 = vld [vmem:[%s393 + $0x50] sm:$0xff]
        %v424 = vld [vmem:[%s393 + $0x58] sm:$0xff]
        %v425 = vld [vmem:[%s393 + $0x60] sm:$0xff]
        %v426 = vld [vmem:[%s393 + $0x68] sm:$0xff]
        %v427 = vld [vmem:[%s393 + $0x70] sm:$0xff]
        %v428 = vld [vmem:[%s393 + $0x78] sm:$0xff]
        %v429 = vld [vmem:[%s1] sm:$0x3]
        %431 = vset.pattern.permute.xlu0 0
        %432 = vperm.xlu0 %431, %v413
        %v433 = vpop.permute.xlu0 %432
        %436 = vset.pattern.permute.xlu0 0
        %437 = vperm.xlu0 %436, %v414
        %v438 = vpop.permute.xlu0 %437
        %441 = vset.pattern.permute.xlu0 0
        %442 = vperm.xlu0 %441, %v415
        %v443 = vpop.permute.xlu0 %442
        %446 = vset.pattern.permute.xlu0 0
        %447 = vperm.xlu0 %446, %v416
        %v448 = vpop.permute.xlu0 %447
        %451 = vset.pattern.permute.xlu0 0
        %452 = vperm.xlu0 %451, %v417
        %v453 = vpop.permute.xlu0 %452
        %456 = vset.pattern.permute.xlu0 0
        %457 = vperm.xlu0 %456, %v418
        %v458 = vpop.permute.xlu0 %457
        %461 = vset.pattern.permute.xlu0 0
        %462 = vperm.xlu0 %461, %v419
        %v463 = vpop.permute.xlu0 %462
        %466 = vset.pattern.permute.xlu0 0
        %467 = vperm.xlu0 %466, %v420
        %v468 = vpop.permute.xlu0 %467
        %471 = vset.pattern.permute.xlu0 0
        %472 = vperm.xlu0 %471, %v421
        %v473 = vpop.permute.xlu0 %472
        %476 = vset.pattern.permute.xlu0 0
        %477 = vperm.xlu0 %476, %v422
        %v478 = vpop.permute.xlu0 %477
        %481 = vset.pattern.permute.xlu0 0
        %482 = vperm.xlu0 %481, %v423
        %v483 = vpop.permute.xlu0 %482
        %486 = vset.pattern.permute.xlu0 0
        %487 = vperm.xlu0 %486, %v424
        %v488 = vpop.permute.xlu0 %487
        %491 = vset.pattern.permute.xlu0 0
        %492 = vperm.xlu0 %491, %v425
        %v493 = vpop.permute.xlu0 %492
        %496 = vset.pattern.permute.xlu0 0
        %497 = vperm.xlu0 %496, %v426
        %v498 = vpop.permute.xlu0 %497
        %501 = vset.pattern.permute.xlu0 0
        %502 = vperm.xlu0 %501, %v427
        %v503 = vpop.permute.xlu0 %502
        %506 = vset.pattern.permute.xlu0 0
        %507 = vperm.xlu0 %506, %v428
        %v508 = vpop.permute.xlu0 %507
        %v510 = vlaneseq
        %v511 = vshrl.u32 %v510, 7
        %v512 = vsub.s32 0, %v511
        %v513 = vrot.slane %v429, %v512
        %v514 = vmul.f32 %v433, %v513
        %v515 = vmul.f32 %v438, %v513
        %v516 = vmul.f32 %v443, %v513
        %v517 = vmul.f32 %v448, %v513
        %v518 = vmul.f32 %v453, %v513
        %v519 = vmul.f32 %v458, %v513
        %v520 = vmul.f32 %v463, %v513
        %v521 = vmul.f32 %v468, %v513
        %v522 = vmul.f32 %v473, %v513
        %v523 = vmul.f32 %v478, %v513
        %v524 = vmul.f32 %v483, %v513
        %v525 = vmul.f32 %v488, %v513
        %v526 = vmul.f32 %v493, %v513
        %v527 = vmul.f32 %v498, %v513
        %v528 = vmul.f32 %v503, %v513
        %v529 = vmul.f32 %v508, %v513
        %530 = vset.pattern.permute.xlu0 1
        %531 = vperm.xlu0 %530, %v413
        %v532 = vpop.permute.xlu0 %531
        %534 = vset.pattern.permute.xlu0 1
        %535 = vperm.xlu0 %534, %v414
        %v536 = vpop.permute.xlu0 %535
        %538 = vset.pattern.permute.xlu0 1
        %539 = vperm.xlu0 %538, %v415
        %v540 = vpop.permute.xlu0 %539
        %542 = vset.pattern.permute.xlu0 1
        %543 = vperm.xlu0 %542, %v416
        %v544 = vpop.permute.xlu0 %543
        %546 = vset.pattern.permute.xlu0 1
        %547 = vperm.xlu0 %546, %v417
        %v548 = vpop.permute.xlu0 %547
        %550 = vset.pattern.permute.xlu0 1
        %551 = vperm.xlu0 %550, %v418
        %v552 = vpop.permute.xlu0 %551
        %554 = vset.pattern.permute.xlu0 1
        %555 = vperm.xlu0 %554, %v419
        %v556 = vpop.permute.xlu0 %555
        %558 = vset.pattern.permute.xlu0 1
        %559 = vperm.xlu0 %558, %v420
        %v560 = vpop.permute.xlu0 %559
        %562 = vset.pattern.permute.xlu0 1
        %563 = vperm.xlu0 %562, %v421
        %v564 = vpop.permute.xlu0 %563
        %566 = vset.pattern.permute.xlu0 1
        %567 = vperm.xlu0 %566, %v422
        %v568 = vpop.permute.xlu0 %567
        %570 = vset.pattern.permute.xlu0 1
        %571 = vperm.xlu0 %570, %v423
        %v572 = vpop.permute.xlu0 %571
        %574 = vset.pattern.permute.xlu0 1
        %575 = vperm.xlu0 %574, %v424
        %v576 = vpop.permute.xlu0 %575
        %578 = vset.pattern.permute.xlu0 1
        %579 = vperm.xlu0 %578, %v425
        %v580 = vpop.permute.xlu0 %579
        %582 = vset.pattern.permute.xlu0 1
        %583 = vperm.xlu0 %582, %v426
        %v584 = vpop.permute.xlu0 %583
        %586 = vset.pattern.permute.xlu0 1
        %587 = vperm.xlu0 %586, %v427
        %v588 = vpop.permute.xlu0 %587
        %590 = vset.pattern.permute.xlu0 1
        %591 = vperm.xlu0 %590, %v428
        %v592 = vpop.permute.xlu0 %591
        %v594 = vlaneseq
        %v595 = vshrl.u32 %v594, 7
        %v596 = vsub.s32 1, %v595
        %v597 = vrot.slane %v429, %v596
        %v598 = vmul.f32 %v532, %v597
        %v599 = vmul.f32 %v536, %v597
        %v600 = vmul.f32 %v540, %v597
        %v601 = vmul.f32 %v544, %v597
        %v602 = vmul.f32 %v548, %v597
        %v603 = vmul.f32 %v552, %v597
        %v604 = vmul.f32 %v556, %v597
        %v605 = vmul.f32 %v560, %v597
        %v606 = vmul.f32 %v564, %v597
        %v607 = vmul.f32 %v568, %v597
        %v608 = vmul.f32 %v572, %v597
        %v609 = vmul.f32 %v576, %v597
        %v610 = vmul.f32 %v580, %v597
        %v611 = vmul.f32 %v584, %v597
        %v612 = vmul.f32 %v588, %v597
        %v613 = vmul.f32 %v592, %v597
        %v614 = vadd.f32 %v514, %v598
        %v615 = vadd.f32 %v515, %v599
        %v616 = vadd.f32 %v516, %v600
        %v617 = vadd.f32 %v517, %v601
        %v618 = vadd.f32 %v518, %v602
        %v619 = vadd.f32 %v519, %v603
        %v620 = vadd.f32 %v520, %v604
        %v621 = vadd.f32 %v521, %v605
        %v622 = vadd.f32 %v522, %v606
        %v623 = vadd.f32 %v523, %v607
        %v624 = vadd.f32 %v524, %v608
        %v625 = vadd.f32 %v525, %v609
        %v626 = vadd.f32 %v526, %v610
        %v627 = vadd.f32 %v527, %v611
        %v628 = vadd.f32 %v528, %v612
        %v629 = vadd.f32 %v529, %v613
        %v630 = vld [vmem:[%s4] sm:$0x1]
        %v632 = vlaneseq
        %v633 = vshrl.u32 %v632, 7
        %v634 = vsub.s32 0, %v633
        %v635 = vrot.slane %v630, %v634
        %v637 = vmul.f32 %v614, %v635
        %v638 = vmul.f32 %v615, %v635
        %v639 = vmul.f32 %v616, %v635
        %v640 = vmul.f32 %v617, %v635
        %v641 = vmul.f32 %v618, %v635
        %v642 = vmul.f32 %v619, %v635
        %v643 = vmul.f32 %v620, %v635
        %v644 = vmul.f32 %v621, %v635
        %v645 = vmul.f32 %v622, %v635
        %v646 = vmul.f32 %v623, %v635
        %v647 = vmul.f32 %v624, %v635
        %v648 = vmul.f32 %v625, %v635
        %v649 = vmul.f32 %v626, %v635
        %v650 = vmul.f32 %v627, %v635
        %v651 = vmul.f32 %v628, %v635
        %v652 = vmul.f32 %v629, %v635
        %v653 = vld [vmem:[%s5] sm:$0x1]
        %v655 = vlaneseq
        %v656 = vshrl.u32 %v655, 7
        %v657 = vsub.s32 0, %v656
        %v658 = vrot.slane %v653, %v657
        %v660 = vadd.f32 %v637, %v658
        %v661 = vadd.f32 %v638, %v658
        %v662 = vadd.f32 %v639, %v658
        %v663 = vadd.f32 %v640, %v658
        %v664 = vadd.f32 %v641, %v658
        %v665 = vadd.f32 %v642, %v658
        %v666 = vadd.f32 %v643, %v658
        %v667 = vadd.f32 %v644, %v658
        %v668 = vadd.f32 %v645, %v658
        %v669 = vadd.f32 %v646, %v658
        %v670 = vadd.f32 %v647, %v658
        %v671 = vadd.f32 %v648, %v658
        %v672 = vadd.f32 %v649, %v658
        %v673 = vadd.f32 %v650, %v658
        %v674 = vadd.f32 %v651, %v658
        %v675 = vadd.f32 %v652, %v658
        %v676 = vmax.f32 %v660, 0.0
        %v677 = vmax.f32 %v661, 0.0
        %v678 = vmax.f32 %v662, 0.0
        %v679 = vmax.f32 %v663, 0.0
        %v680 = vmax.f32 %v664, 0.0
        %v681 = vmax.f32 %v665, 0.0
        %v682 = vmax.f32 %v666, 0.0
        %v683 = vmax.f32 %v667, 0.0
        %v684 = vmax.f32 %v668, 0.0
        %v685 = vmax.f32 %v669, 0.0
        %v686 = vmax.f32 %v670, 0.0
        %v687 = vmax.f32 %v671, 0.0
        %v688 = vmax.f32 %v672, 0.0
        %v689 = vmax.f32 %v673, 0.0
        %v690 = vmax.f32 %v674, 0.0
        %v691 = vmax.f32 %v675, 0.0
        %v692 = vpack.c.bf16 %v677, %v676
        %v693 = vpack.c.bf16 %v679, %v678
        %v694 = vpack.c.bf16 %v681, %v680
        %v695 = vpack.c.bf16 %v683, %v682
        %v696 = vpack.c.bf16 %v685, %v684
        %v697 = vpack.c.bf16 %v687, %v686
        %v698 = vpack.c.bf16 %v689, %v688
        %v699 = vpack.c.bf16 %v691, %v690
        %v700 = vld [vmem:[%s2] sm:$0xf]
        %v701 = vld [vmem:[%s2 + $0x4] sm:$0xf]
        %v702 = vld [vmem:[%s2 + $0x8] sm:$0xf]
        %v703 = vld [vmem:[%s2 + $0xc] sm:$0xf]
        %v704 = vld [vmem:[%s2 + $0x10] sm:$0xf]
        %v705 = vld [vmem:[%s2 + $0x14] sm:$0xf]
        %v706 = vld [vmem:[%s2 + $0x18] sm:$0xf]
        %v707 = vld [vmem:[%s2 + $0x1c] sm:$0xf]
        %v716 = vunpack.c.l.b16 %v700
        %v717 = vunpack.c.l.b16 %v701
        %v718 = vunpack.c.l.b16 %v702
        %v719 = vunpack.c.l.b16 %v703
        %v720 = vunpack.c.l.b16 %v704
        %v721 = vunpack.c.l.b16 %v705
        %v722 = vunpack.c.l.b16 %v706
        %v723 = vunpack.c.l.b16 %v707
        %v724 = vpack.c.b16 %v717, %v716
        %v725 = vpack.c.b16 %v719, %v718
        %v726 = vpack.c.b16 %v721, %v720
        %v727 = vpack.c.b16 %v723, %v722
        %vm732 = vcmask 523264
        %v734 = vsel %vm732, %v692, 0
        %v737 = vsel %vm732, %v693, 0
        %v740 = vsel %vm732, %v694, 0
        %v743 = vsel %vm732, %v695, 0
        %v746 = vsel %vm732, %v696, 0
        %v749 = vsel %vm732, %v697, 0
        %v752 = vsel %vm732, %v698, 0
        %v755 = vsel %vm732, %v699, 0
        %757 = vmatprep.subr.bf16.mxu0 0
        %758 = vmatpush1.bf16.msra.mxu0 0
        %759 = vmatprep.subr.bf16.mxu0 0
        %760 = vmatpush1.bf16.msra.mxu0 0
        %761 = vmatprep.subr.bf16.mxu0 0
        %762 = vmatpush1.bf16.msra.mxu0 0
        %763 = vmatprep.subr.bf16.mxu0 0
        %764 = vmatpush1.bf16.msra.mxu0 0
        %765 = vmatprep.subr.bf16.mxu0 0
        %766 = vmatpush1.bf16.msra.mxu0 %v727
        %767 = vmatprep.subr.bf16.mxu0 0
        %768 = vmatpush1.bf16.msra.mxu0 %v726
        %769 = vmatprep.subr.bf16.mxu0 0
        %770 = vmatpush1.bf16.msra.mxu0 %v725
        %771 = vmatprep.subr.bf16.mxu0 0
        %772 = vmatpush1.bf16.msra.mxu0 %v724
        %773 = vmatprep.subr.bf16.mxu0 0
        %774 = vmatpush2.bf16.msra.mxu0 0
        %775 = vmatprep.subr.bf16.mxu0 0
        %776 = vmatpush2.bf16.msra.mxu0 0
        %777 = vmatprep.subr.bf16.mxu0 0
        %778 = vmatpush2.bf16.msra.mxu0 0
        %779 = vmatprep.subr.bf16.mxu0 0
        %780 = vmatpush2.bf16.msra.mxu0 0
        %781 = vmatprep.subr.bf16.mxu0 0
        %782 = vmatpush2.bf16.msra.mxu0 0
        %783 = vmatprep.subr.bf16.mxu0 0
        %784 = vmatpush2.bf16.msra.mxu0 0
        %785 = vmatprep.subr.bf16.mxu0 0
        %786 = vmatpush2.bf16.msra.mxu0 0
        %787 = vmatprep.subr.bf16.mxu0 0
        %788 = vmatpush2.bf16.msra.mxu0 0
        %789 = vmatprep.mubr.bf16.mxu0 0
        %790 = vmatmul.mubr.bf16.gmra.mxu0 %v734
        %v791 = vpop.f32.mrf.mxu0
        %v792 = vadd.f32 0.0, %v791
        %v793 = vpop.f32.mrf.mxu0
        %v794 = vpop.f32.mrf.mxu0
        %v795 = vadd.f32 0.0, %v794
        %v796 = vpop.f32.mrf.mxu0
        %797 = vmatprep.mubr.bf16.mxu0 0
        %798 = vmatmul.mubr.bf16.gmra.mxu0 %v737
        %v799 = vpop.f32.mrf.mxu0
        %v800 = vadd.f32 0.0, %v799
        %v801 = vpop.f32.mrf.mxu0
        %v802 = vpop.f32.mrf.mxu0
        %v803 = vadd.f32 0.0, %v802
        %v804 = vpop.f32.mrf.mxu0
        %805 = vmatprep.mubr.bf16.mxu0 0
        %806 = vmatmul.mubr.bf16.gmra.mxu0 %v740
        %v807 = vpop.f32.mrf.mxu0
        %v808 = vadd.f32 0.0, %v807
        %v809 = vpop.f32.mrf.mxu0
        %v810 = vpop.f32.mrf.mxu0
        %v811 = vadd.f32 0.0, %v810
        %v812 = vpop.f32.mrf.mxu0
        %813 = vmatprep.mubr.bf16.mxu0 0
        %814 = vmatmul.mubr.bf16.gmra.mxu0 %v743
        %v815 = vpop.f32.mrf.mxu0
        %v816 = vadd.f32 0.0, %v815
        %v817 = vpop.f32.mrf.mxu0
        %v818 = vpop.f32.mrf.mxu0
        %v819 = vadd.f32 0.0, %v818
        %v820 = vpop.f32.mrf.mxu0
        %821 = vmatprep.mubr.bf16.mxu0 0
        %822 = vmatmul.mubr.bf16.gmra.mxu0 %v746
        %v823 = vpop.f32.mrf.mxu0
        %v824 = vadd.f32 0.0, %v823
        %v825 = vpop.f32.mrf.mxu0
        %v826 = vpop.f32.mrf.mxu0
        %v827 = vadd.f32 0.0, %v826
        %v828 = vpop.f32.mrf.mxu0
        %829 = vmatprep.mubr.bf16.mxu0 0
        %830 = vmatmul.mubr.bf16.gmra.mxu0 %v749
        %v831 = vpop.f32.mrf.mxu0
        %v832 = vadd.f32 0.0, %v831
        %v833 = vpop.f32.mrf.mxu0
        %v834 = vpop.f32.mrf.mxu0
        %v835 = vadd.f32 0.0, %v834
        %v836 = vpop.f32.mrf.mxu0
        %837 = vmatprep.mubr.bf16.mxu0 0
        %838 = vmatmul.mubr.bf16.gmra.mxu0 %v752
        %v839 = vpop.f32.mrf.mxu0
        %v840 = vadd.f32 0.0, %v839
        %v841 = vpop.f32.mrf.mxu0
        %v842 = vpop.f32.mrf.mxu0
        %v843 = vadd.f32 0.0, %v842
        %v844 = vpop.f32.mrf.mxu0
        %845 = vmatprep.mubr.bf16.mxu0 0
        %846 = vmatmul.mubr.bf16.gmra.mxu0 %v755
        %v847 = vpop.f32.mrf.mxu0
        %v848 = vadd.f32 0.0, %v847
        %v849 = vpop.f32.mrf.mxu0
        %v850 = vpop.f32.mrf.mxu0
        %v851 = vadd.f32 0.0, %v850
        %v852 = vpop.f32.mrf.mxu0
        %853 = vdwg.mxu0
        // Predicated region
        $region69: #{_lambda_.3} parent=59 // pred_check
          %p854 = pneg %p396
        $region70: #{_lambda_.3} parent=59 // pred_check_branch
          %856 = sbr.rel (%p854) target = $region72
        $region71: #{_lambda_.3} parent=59 // pred_region
          %v857 = vld [vmem:[#allocation2] sm:$0x1]
          %v858 = vadd.f32 %v792, %v795
          %v859 = vadd.f32 %v858, %v800
          %v860 = vadd.f32 %v859, %v803
          %v861 = vadd.f32 %v860, %v808
          %v862 = vadd.f32 %v861, %v811
          %v863 = vadd.f32 %v862, %v816
          %v864 = vadd.f32 %v863, %v819
          %v865 = vadd.f32 %v864, %v824
          %v866 = vadd.f32 %v865, %v827
          %v867 = vadd.f32 %v866, %v832
          %v868 = vadd.f32 %v867, %v835
          %v869 = vadd.f32 %v868, %v840
          %v870 = vadd.f32 %v869, %v843
          %v871 = vadd.f32 %v870, %v848
          %v872 = vadd.f32 %v871, %v851
          %v873 = vrot.slane %v872, 4
          %v874 = vadd.f32 %v872, %v873
          %v875 = vrot.slane %v874, 2
          %v876 = vadd.f32 %v874, %v875
          %v877 = vrot.slane %v876, 1
          %v878 = vadd.f32 %v876, %v877
          %v879 = vadd.f32 %v857, %v878
          %880 = vst [vmem:[#allocation2] sm:$0x1] %v879
          %v881 = vld [vmem:[#allocation3] sm:$0x1]
          %v882 = vmul.f32 %v792, %v792
          %v883 = vmul.f32 %v795, %v795
          %v884 = vmul.f32 %v800, %v800
          %v885 = vmul.f32 %v803, %v803
          %v886 = vmul.f32 %v808, %v808
          %v887 = vmul.f32 %v811, %v811
          %v888 = vmul.f32 %v816, %v816
          %v889 = vmul.f32 %v819, %v819
          %v890 = vmul.f32 %v824, %v824
          %v891 = vmul.f32 %v827, %v827
          %v892 = vmul.f32 %v832, %v832
          %v893 = vmul.f32 %v835, %v835
          %v894 = vmul.f32 %v840, %v840
          %v895 = vmul.f32 %v843, %v843
          %v896 = vmul.f32 %v848, %v848
          %v897 = vmul.f32 %v851, %v851
          %v898 = vadd.f32 %v882, %v883
          %v899 = vadd.f32 %v898, %v884
          %v900 = vadd.f32 %v899, %v885
          %v901 = vadd.f32 %v900, %v886
          %v902 = vadd.f32 %v901, %v887
          %v903 = vadd.f32 %v902, %v888
          %v904 = vadd.f32 %v903, %v889
          %v905 = vadd.f32 %v904, %v890
          %v906 = vadd.f32 %v905, %v891
          %v907 = vadd.f32 %v906, %v892
          %v908 = vadd.f32 %v907, %v893
          %v909 = vadd.f32 %v908, %v894
          %v910 = vadd.f32 %v909, %v895
          %v911 = vadd.f32 %v910, %v896
          %v912 = vadd.f32 %v911, %v897
          %v913 = vrot.slane %v912, 4
          %v914 = vadd.f32 %v912, %v913
          %v915 = vrot.slane %v914, 2
          %v916 = vadd.f32 %v914, %v915
          %v917 = vrot.slane %v916, 1
          %v918 = vadd.f32 %v916, %v917
          %v919 = vadd.f32 %v881, %v918
          %920 = vst [vmem:[#allocation3] sm:$0x1] %v919
        $region72: #{_lambda_.3} parent=59 // pred_fallthru
          _
        %p921 = scmp.eq.s32.totalorder %s27, 1
        // Predicated region
        $region73: #{_lambda_.3} parent=59 // pred_check
          %p922 = pneg %p921
        $region74: #{_lambda_.3} parent=59 // pred_check_branch
          %924 = sbr.rel (%p922) target = $region76
        $region75: #{_lambda_.3} parent=59 // pred_region
          %v925 = vld [vmem:[#allocation2] sm:$0x1]
          %v926 = vmul.f32 %v925, 0.00390625
          %v927 = vld [vmem:[#allocation3] sm:$0x1]
          %v928 = vmul.f32 %v927, 0.00390625
          %v929 = vmul.f32 %v926, %v926
          %v930 = vsub.f32 %v928, %v929
          %v931 = vmax.f32 %v930, 0.0
          %v932 = vld [vmem:[%s6] sm:$0x1]
          %v933 = vadd.f32 %v931, 1e-05
          %v934 = vrsqrt.pop %v933
          %v935 = vmul.f32 %v932, %v934
          %v936 = vld [vmem:[%s7] sm:$0x1]
          %v937 = vmul.f32 %v926, %v935
          %v938 = vsub.f32 %v936, %v937
          %v940 = vlaneseq
          %v941 = vshrl.u32 %v940, 7
          %v942 = vsub.s32 0, %v941
          %v943 = vrot.slane %v935, %v942
          %v945 = vmul.f32 %v792, %v943
          %v946 = vmul.f32 %v795, %v943
          %v947 = vmul.f32 %v800, %v943
          %v948 = vmul.f32 %v803, %v943
          %v949 = vmul.f32 %v808, %v943
          %v950 = vmul.f32 %v811, %v943
          %v951 = vmul.f32 %v816, %v943
          %v952 = vmul.f32 %v819, %v943
          %v953 = vmul.f32 %v824, %v943
          %v954 = vmul.f32 %v827, %v943
          %v955 = vmul.f32 %v832, %v943
          %v956 = vmul.f32 %v835, %v943
          %v957 = vmul.f32 %v840, %v943
          %v958 = vmul.f32 %v843, %v943
          %v959 = vmul.f32 %v848, %v943
          %v960 = vmul.f32 %v851, %v943
          %v962 = vlaneseq
          %v963 = vshrl.u32 %v962, 7
          %v964 = vsub.s32 0, %v963
          %v965 = vrot.slane %v938, %v964
          %v967 = vadd.f32 %v945, %v965
          %v968 = vadd.f32 %v946, %v965
          %v969 = vadd.f32 %v947, %v965
          %v970 = vadd.f32 %v948, %v965
          %v971 = vadd.f32 %v949, %v965
          %v972 = vadd.f32 %v950, %v965
          %v973 = vadd.f32 %v951, %v965
          %v974 = vadd.f32 %v952, %v965
          %v975 = vadd.f32 %v953, %v965
          %v976 = vadd.f32 %v954, %v965
          %v977 = vadd.f32 %v955, %v965
          %v978 = vadd.f32 %v956, %v965
          %v979 = vadd.f32 %v957, %v965
          %v980 = vadd.f32 %v958, %v965
          %v981 = vadd.f32 %v959, %v965
          %v982 = vadd.f32 %v960, %v965
          %v983 = vmax.f32 %v967, 0.0
          %v984 = vmax.f32 %v968, 0.0
          %v985 = vmax.f32 %v969, 0.0
          %v986 = vmax.f32 %v970, 0.0
          %v987 = vmax.f32 %v971, 0.0
          %v988 = vmax.f32 %v972, 0.0
          %v989 = vmax.f32 %v973, 0.0
          %v990 = vmax.f32 %v974, 0.0
          %v991 = vmax.f32 %v975, 0.0
          %v992 = vmax.f32 %v976, 0.0
          %v993 = vmax.f32 %v977, 0.0
          %v994 = vmax.f32 %v978, 0.0
          %v995 = vmax.f32 %v979, 0.0
          %v996 = vmax.f32 %v980, 0.0
          %v997 = vmax.f32 %v981, 0.0
          %v998 = vmax.f32 %v982, 0.0
          %v999 = vpack.c.bf16 %v984, %v983
          %v1000 = vpack.c.bf16 %v986, %v985
          %v1001 = vpack.c.bf16 %v988, %v987
          %v1002 = vpack.c.bf16 %v990, %v989
          %v1003 = vpack.c.bf16 %v992, %v991
          %v1004 = vpack.c.bf16 %v994, %v993
          %v1005 = vpack.c.bf16 %v996, %v995
          %v1006 = vpack.c.bf16 %v998, %v997
          %v1007 = vld [vmem:[#allocation8] sm:$0xff]
          %v1008 = vld [vmem:[#allocation8 + $0x8] sm:$0xff]
          %v1009 = vld [vmem:[#allocation8 + $0x10] sm:$0xff]
          %v1010 = vld [vmem:[#allocation8 + $0x18] sm:$0xff]
          %v1011 = vld [vmem:[#allocation8 + $0x20] sm:$0xff]
          %v1012 = vld [vmem:[#allocation8 + $0x28] sm:$0xff]
          %v1013 = vld [vmem:[#allocation8 + $0x30] sm:$0xff]
          %v1014 = vld [vmem:[#allocation8 + $0x38] sm:$0xff]
          %v1015 = vld [vmem:[#allocation8 + $0x40] sm:$0xff]
          %v1016 = vld [vmem:[#allocation8 + $0x48] sm:$0xff]
          %v1017 = vld [vmem:[#allocation8 + $0x50] sm:$0xff]
          %v1018 = vld [vmem:[#allocation8 + $0x58] sm:$0xff]
          %v1019 = vld [vmem:[#allocation8 + $0x60] sm:$0xff]
          %v1020 = vld [vmem:[#allocation8 + $0x68] sm:$0xff]
          %v1021 = vld [vmem:[#allocation8 + $0x70] sm:$0xff]
          %v1022 = vld [vmem:[#allocation8 + $0x78] sm:$0xff]
          %v1023 = vld [vmem:[#allocation8 + $0x80] sm:$0xff]
          %v1024 = vld [vmem:[#allocation8 + $0x88] sm:$0xff]
          %v1025 = vld [vmem:[#allocation8 + $0x90] sm:$0xff]
          %v1026 = vld [vmem:[#allocation8 + $0x98] sm:$0xff]
          %v1027 = vld [vmem:[#allocation8 + $0xa0] sm:$0xff]
          %v1028 = vld [vmem:[#allocation8 + $0xa8] sm:$0xff]
          %v1029 = vld [vmem:[#allocation8 + $0xb0] sm:$0xff]
          %v1030 = vld [vmem:[#allocation8 + $0xb8] sm:$0xff]
          %v1031 = vld [vmem:[#allocation8 + $0xc0] sm:$0xff]
          %v1032 = vld [vmem:[#allocation8 + $0xc8] sm:$0xff]
          %v1033 = vld [vmem:[#allocation8 + $0xd0] sm:$0xff]
          %v1034 = vld [vmem:[#allocation8 + $0xd8] sm:$0xff]
          %v1035 = vld [vmem:[#allocation8 + $0xe0] sm:$0xff]
          %v1036 = vld [vmem:[#allocation8 + $0xe8] sm:$0xff]
          %v1037 = vld [vmem:[#allocation8 + $0xf0] sm:$0xff]
          %v1038 = vld [vmem:[#allocation8 + $0xf8] sm:$0xff]
          %v1039 = vld [vmem:[#allocation8 + $0x100] sm:$0xff]
          %v1040 = vld [vmem:[#allocation8 + $0x108] sm:$0xff]
          %v1041 = vld [vmem:[#allocation8 + $0x110] sm:$0xff]
          %v1042 = vld [vmem:[#allocation8 + $0x118] sm:$0xff]
          %v1043 = vld [vmem:[#allocation8 + $0x120] sm:$0xff]
          %v1044 = vld [vmem:[#allocation8 + $0x128] sm:$0xff]
          %v1045 = vld [vmem:[#allocation8 + $0x130] sm:$0xff]
          %v1046 = vld [vmem:[#allocation8 + $0x138] sm:$0xff]
          %v1047 = vld [vmem:[#allocation8 + $0x140] sm:$0xff]
          %v1048 = vld [vmem:[#allocation8 + $0x148] sm:$0xff]
          %v1049 = vld [vmem:[#allocation8 + $0x150] sm:$0xff]
          %v1050 = vld [vmem:[#allocation8 + $0x158] sm:$0xff]
          %v1051 = vld [vmem:[#allocation8 + $0x160] sm:$0xff]
          %v1052 = vld [vmem:[#allocation8 + $0x168] sm:$0xff]
          %v1053 = vld [vmem:[#allocation8 + $0x170] sm:$0xff]
          %v1054 = vld [vmem:[#allocation8 + $0x178] sm:$0xff]
          %v1055 = vld [vmem:[#allocation8 + $0x180] sm:$0xff]
          %v1056 = vld [vmem:[#allocation8 + $0x188] sm:$0xff]
          %v1057 = vld [vmem:[#allocation8 + $0x190] sm:$0xff]
          %v1058 = vld [vmem:[#allocation8 + $0x198] sm:$0xff]
          %v1059 = vld [vmem:[#allocation8 + $0x1a0] sm:$0xff]
          %v1060 = vld [vmem:[#allocation8 + $0x1a8] sm:$0xff]
          %v1061 = vld [vmem:[#allocation8 + $0x1b0] sm:$0xff]
          %v1062 = vld [vmem:[#allocation8 + $0x1b8] sm:$0xff]
          %v1063 = vld [vmem:[#allocation8 + $0x1c0] sm:$0xff]
          %v1064 = vld [vmem:[#allocation8 + $0x1c8] sm:$0xff]
          %v1065 = vld [vmem:[#allocation8 + $0x1d0] sm:$0xff]
          %v1066 = vld [vmem:[#allocation8 + $0x1d8] sm:$0xff]
          %v1067 = vld [vmem:[#allocation8 + $0x1e0] sm:$0xff]
          %v1068 = vld [vmem:[#allocation8 + $0x1e8] sm:$0xff]
          %v1069 = vld [vmem:[#allocation8 + $0x1f0] sm:$0xff]
          %v1070 = vld [vmem:[#allocation8 + $0x1f8] sm:$0xff]
          %v1135 = vunpack.c.l.b16 %v1007
          %v1136 = vunpack.c.h.b16 %v1007
          %v1137 = vunpack.c.l.b16 %v1008
          %v1138 = vunpack.c.h.b16 %v1008
          %v1139 = vunpack.c.l.b16 %v1009
          %v1140 = vunpack.c.h.b16 %v1009
          %v1141 = vunpack.c.l.b16 %v1010
          %v1142 = vunpack.c.h.b16 %v1010
          %v1143 = vunpack.c.l.b16 %v1011
          %v1144 = vunpack.c.h.b16 %v1011
          %v1145 = vunpack.c.l.b16 %v1012
          %v1146 = vunpack.c.h.b16 %v1012
          %v1147 = vunpack.c.l.b16 %v1013
          %v1148 = vunpack.c.h.b16 %v1013
          %v1149 = vunpack.c.l.b16 %v1014
          %v1150 = vunpack.c.h.b16 %v1014
          %v1151 = vunpack.c.l.b16 %v1015
          %v1152 = vunpack.c.h.b16 %v1015
          %v1153 = vunpack.c.l.b16 %v1016
          %v1154 = vunpack.c.h.b16 %v1016
          %v1155 = vunpack.c.l.b16 %v1017
          %v1156 = vunpack.c.h.b16 %v1017
          %v1157 = vunpack.c.l.b16 %v1018
          %v1158 = vunpack.c.h.b16 %v1018
          %v1159 = vunpack.c.l.b16 %v1019
          %v1160 = vunpack.c.h.b16 %v1019
          %v1161 = vunpack.c.l.b16 %v1020
          %v1162 = vunpack.c.h.b16 %v1020
          %v1163 = vunpack.c.l.b16 %v1021
          %v1164 = vunpack.c.h.b16 %v1021
          %v1165 = vunpack.c.l.b16 %v1022
          %v1166 = vunpack.c.h.b16 %v1022
          %v1167 = vunpack.c.l.b16 %v1023
          %v1168 = vunpack.c.h.b16 %v1023
          %v1169 = vunpack.c.l.b16 %v1024
          %v1170 = vunpack.c.h.b16 %v1024
          %v1171 = vunpack.c.l.b16 %v1025
          %v1172 = vunpack.c.h.b16 %v1025
          %v1173 = vunpack.c.l.b16 %v1026
          %v1174 = vunpack.c.h.b16 %v1026
          %v1175 = vunpack.c.l.b16 %v1027
          %v1176 = vunpack.c.h.b16 %v1027
          %v1177 = vunpack.c.l.b16 %v1028
          %v1178 = vunpack.c.h.b16 %v1028
          %v1179 = vunpack.c.l.b16 %v1029
          %v1180 = vunpack.c.h.b16 %v1029
          %v1181 = vunpack.c.l.b16 %v1030
          %v1182 = vunpack.c.h.b16 %v1030
          %v1183 = vunpack.c.l.b16 %v1031
          %v1184 = vunpack.c.h.b16 %v1031
          %v1185 = vunpack.c.l.b16 %v1032
          %v1186 = vunpack.c.h.b16 %v1032
          %v1187 = vunpack.c.l.b16 %v1033
          %v1188 = vunpack.c.h.b16 %v1033
          %v1189 = vunpack.c.l.b16 %v1034
          %v1190 = vunpack.c.h.b16 %v1034
          %v1191 = vunpack.c.l.b16 %v1035
          %v1192 = vunpack.c.h.b16 %v1035
          %v1193 = vunpack.c.l.b16 %v1036
          %v1194 = vunpack.c.h.b16 %v1036
          %v1195 = vunpack.c.l.b16 %v1037
          %v1196 = vunpack.c.h.b16 %v1037
          %v1197 = vunpack.c.l.b16 %v1038
          %v1198 = vunpack.c.h.b16 %v1038
          %v1199 = vunpack.c.l.b16 %v1039
          %v1200 = vunpack.c.h.b16 %v1039
          %v1201 = vunpack.c.l.b16 %v1040
          %v1202 = vunpack.c.h.b16 %v1040
          %v1203 = vunpack.c.l.b16 %v1041
          %v1204 = vunpack.c.h.b16 %v1041
          %v1205 = vunpack.c.l.b16 %v1042
          %v1206 = vunpack.c.h.b16 %v1042
          %v1207 = vunpack.c.l.b16 %v1043
          %v1208 = vunpack.c.h.b16 %v1043
          %v1209 = vunpack.c.l.b16 %v1044
          %v1210 = vunpack.c.h.b16 %v1044
          %v1211 = vunpack.c.l.b16 %v1045
          %v1212 = vunpack.c.h.b16 %v1045
          %v1213 = vunpack.c.l.b16 %v1046
          %v1214 = vunpack.c.h.b16 %v1046
          %v1215 = vunpack.c.l.b16 %v1047
          %v1216 = vunpack.c.h.b16 %v1047
          %v1217 = vunpack.c.l.b16 %v1048
          %v1218 = vunpack.c.h.b16 %v1048
          %v1219 = vunpack.c.l.b16 %v1049
          %v1220 = vunpack.c.h.b16 %v1049
          %v1221 = vunpack.c.l.b16 %v1050
          %v1222 = vunpack.c.h.b16 %v1050
          %v1223 = vunpack.c.l.b16 %v1051
          %v1224 = vunpack.c.h.b16 %v1051
          %v1225 = vunpack.c.l.b16 %v1052
          %v1226 = vunpack.c.h.b16 %v1052
          %v1227 = vunpack.c.l.b16 %v1053
          %v1228 = vunpack.c.h.b16 %v1053
          %v1229 = vunpack.c.l.b16 %v1054
          %v1230 = vunpack.c.h.b16 %v1054
          %v1231 = vunpack.c.l.b16 %v1055
          %v1232 = vunpack.c.h.b16 %v1055
          %v1233 = vunpack.c.l.b16 %v1056
          %v1234 = vunpack.c.h.b16 %v1056
          %v1235 = vunpack.c.l.b16 %v1057
          %v1236 = vunpack.c.h.b16 %v1057
          %v1237 = vunpack.c.l.b16 %v1058
          %v1238 = vunpack.c.h.b16 %v1058
          %v1239 = vunpack.c.l.b16 %v1059
          %v1240 = vunpack.c.h.b16 %v1059
          %v1241 = vunpack.c.l.b16 %v1060
          %v1242 = vunpack.c.h.b16 %v1060
          %v1243 = vunpack.c.l.b16 %v1061
          %v1244 = vunpack.c.h.b16 %v1061
          %v1245 = vunpack.c.l.b16 %v1062
          %v1246 = vunpack.c.h.b16 %v1062
          %v1247 = vunpack.c.l.b16 %v1063
          %v1248 = vunpack.c.h.b16 %v1063
          %v1249 = vunpack.c.l.b16 %v1064
          %v1250 = vunpack.c.h.b16 %v1064
          %v1251 = vunpack.c.l.b16 %v1065
          %v1252 = vunpack.c.h.b16 %v1065
          %v1253 = vunpack.c.l.b16 %v1066
          %v1254 = vunpack.c.h.b16 %v1066
          %v1255 = vunpack.c.l.b16 %v1067
          %v1256 = vunpack.c.h.b16 %v1067
          %v1257 = vunpack.c.l.b16 %v1068
          %v1258 = vunpack.c.h.b16 %v1068
          %v1259 = vunpack.c.l.b16 %v1069
          %v1260 = vunpack.c.h.b16 %v1069
          %v1261 = vunpack.c.l.b16 %v1070
          %v1262 = vunpack.c.h.b16 %v1070
          %v1263 = vpack.c.b16 %v1143, %v1135
          %v1264 = vpack.c.b16 %v1144, %v1136
          %v1265 = vpack.c.b16 %v1145, %v1137
          %v1266 = vpack.c.b16 %v1146, %v1138
          %v1267 = vpack.c.b16 %v1147, %v1139
          %v1268 = vpack.c.b16 %v1148, %v1140
          %v1269 = vpack.c.b16 %v1149, %v1141
          %v1270 = vpack.c.b16 %v1150, %v1142
          %v1271 = vpack.c.b16 %v1159, %v1151
          %v1272 = vpack.c.b16 %v1160, %v1152
          %v1273 = vpack.c.b16 %v1161, %v1153
          %v1274 = vpack.c.b16 %v1162, %v1154
          %v1275 = vpack.c.b16 %v1163, %v1155
          %v1276 = vpack.c.b16 %v1164, %v1156
          %v1277 = vpack.c.b16 %v1165, %v1157
          %v1278 = vpack.c.b16 %v1166, %v1158
          %v1279 = vpack.c.b16 %v1175, %v1167
          %v1280 = vpack.c.b16 %v1176, %v1168
          %v1281 = vpack.c.b16 %v1177, %v1169
          %v1282 = vpack.c.b16 %v1178, %v1170
          %v1283 = vpack.c.b16 %v1179, %v1171
          %v1284 = vpack.c.b16 %v1180, %v1172
          %v1285 = vpack.c.b16 %v1181, %v1173
          %v1286 = vpack.c.b16 %v1182, %v1174
          %v1287 = vpack.c.b16 %v1191, %v1183
          %v1288 = vpack.c.b16 %v1192, %v1184
          %v1289 = vpack.c.b16 %v1193, %v1185
          %v1290 = vpack.c.b16 %v1194, %v1186
          %v1291 = vpack.c.b16 %v1195, %v1187
          %v1292 = vpack.c.b16 %v1196, %v1188
          %v1293 = vpack.c.b16 %v1197, %v1189
          %v1294 = vpack.c.b16 %v1198, %v1190
          %v1295 = vpack.c.b16 %v1207, %v1199
          %v1296 = vpack.c.b16 %v1208, %v1200
          %v1297 = vpack.c.b16 %v1209, %v1201
          %v1298 = vpack.c.b16 %v1210, %v1202
          %v1299 = vpack.c.b16 %v1211, %v1203
          %v1300 = vpack.c.b16 %v1212, %v1204
          %v1301 = vpack.c.b16 %v1213, %v1205
          %v1302 = vpack.c.b16 %v1214, %v1206
          %v1303 = vpack.c.b16 %v1223, %v1215
          %v1304 = vpack.c.b16 %v1224, %v1216
          %v1305 = vpack.c.b16 %v1225, %v1217
          %v1306 = vpack.c.b16 %v1226, %v1218
          %v1307 = vpack.c.b16 %v1227, %v1219
          %v1308 = vpack.c.b16 %v1228, %v1220
          %v1309 = vpack.c.b16 %v1229, %v1221
          %v1310 = vpack.c.b16 %v1230, %v1222
          %v1311 = vpack.c.b16 %v1239, %v1231
          %v1312 = vpack.c.b16 %v1240, %v1232
          %v1313 = vpack.c.b16 %v1241, %v1233
          %v1314 = vpack.c.b16 %v1242, %v1234
          %v1315 = vpack.c.b16 %v1243, %v1235
          %v1316 = vpack.c.b16 %v1244, %v1236
          %v1317 = vpack.c.b16 %v1245, %v1237
          %v1318 = vpack.c.b16 %v1246, %v1238
          %v1319 = vpack.c.b16 %v1255, %v1247
          %v1320 = vpack.c.b16 %v1256, %v1248
          %v1321 = vpack.c.b16 %v1257, %v1249
          %v1322 = vpack.c.b16 %v1258, %v1250
          %v1323 = vpack.c.b16 %v1259, %v1251
          %v1324 = vpack.c.b16 %v1260, %v1252
          %v1325 = vpack.c.b16 %v1261, %v1253
          %v1326 = vpack.c.b16 %v1262, %v1254
          %1391 = vmatprep.subr.bf16.mxu0 %v1320
          %1392 = vmatpush1.bf16.msra.mxu0 %v1319
          %1393 = vmatprep.subr.bf16.mxu0 %v1312
          %1394 = vmatpush1.bf16.msra.mxu0 %v1311
          %1395 = vmatprep.subr.bf16.mxu0 %v1304
          %1396 = vmatpush1.bf16.msra.mxu0 %v1303
          %1397 = vmatprep.subr.bf16.mxu0 %v1296
          %1398 = vmatpush1.bf16.msra.mxu0 %v1295
          %1399 = vmatprep.subr.bf16.mxu0 %v1288
          %1400 = vmatpush1.bf16.msra.mxu0 %v1287
          %1401 = vmatprep.subr.bf16.mxu0 %v1280
          %1402 = vmatpush1.bf16.msra.mxu0 %v1279
          %1403 = vmatprep.subr.bf16.mxu0 %v1272
          %1404 = vmatpush1.bf16.msra.mxu0 %v1271
          %1405 = vmatprep.subr.bf16.mxu0 %v1264
          %1406 = vmatpush1.bf16.msra.mxu0 %v1263
          %1407 = vmatprep.subr.bf16.mxu0 0
          %1408 = vmatpush2.bf16.msra.mxu0 0
          %1409 = vmatprep.subr.bf16.mxu0 0
          %1410 = vmatpush2.bf16.msra.mxu0 0
          %1411 = vmatprep.subr.bf16.mxu0 0
          %1412 = vmatpush2.bf16.msra.mxu0 0
          %1413 = vmatprep.subr.bf16.mxu0 0
          %1414 = vmatpush2.bf16.msra.mxu0 0
          %1415 = vmatprep.subr.bf16.mxu0 0
          %1416 = vmatpush2.bf16.msra.mxu0 0
          %1417 = vmatprep.subr.bf16.mxu0 0
          %1418 = vmatpush2.bf16.msra.mxu0 0
          %1419 = vmatprep.subr.bf16.mxu0 0
          %1420 = vmatpush2.bf16.msra.mxu0 0
          %1421 = vmatprep.subr.bf16.mxu0 0
          %1422 = vmatpush2.bf16.msra.mxu0 0
          %1423 = vmatprep.mubr.bf16.mxu0 0
          %1424 = vmatmul.mubr.bf16.gmra.mxu0 %v999
          %v1425 = vpop.f32.mrf.mxu0
          %v1426 = vadd.f32 0.0, %v1425
          %v1427 = vpop.f32.mrf.mxu0
          %v1428 = vadd.f32 0.0, %v1427
          %v1429 = vpop.f32.mrf.mxu0
          %v1430 = vadd.f32 0.0, %v1429
          %v1431 = vpop.f32.mrf.mxu0
          %v1432 = vadd.f32 0.0, %v1431
          %1433 = vmatprep.mubr.bf16.mxu0 0
          %1434 = vmatmul.mubr.bf16.gmra.mxu0 %v1000
          %v1435 = vpop.f32.mrf.mxu0
          %v1436 = vadd.f32 0.0, %v1435
          %v1437 = vpop.f32.mrf.mxu0
          %v1438 = vadd.f32 0.0, %v1437
          %v1439 = vpop.f32.mrf.mxu0
          %v1440 = vadd.f32 0.0, %v1439
          %v1441 = vpop.f32.mrf.mxu0
          %v1442 = vadd.f32 0.0, %v1441
          %1443 = vmatprep.mubr.bf16.mxu0 0
          %1444 = vmatmul.mubr.bf16.gmra.mxu0 %v1001
          %v1445 = vpop.f32.mrf.mxu0
          %v1446 = vadd.f32 0.0, %v1445
          %v1447 = vpop.f32.mrf.mxu0
          %v1448 = vadd.f32 0.0, %v1447
          %v1449 = vpop.f32.mrf.mxu0
          %v1450 = vadd.f32 0.0, %v1449
          %v1451 = vpop.f32.mrf.mxu0
          %v1452 = vadd.f32 0.0, %v1451
          %1453 = vmatprep.mubr.bf16.mxu0 0
          %1454 = vmatmul.mubr.bf16.gmra.mxu0 %v1002
          %v1455 = vpop.f32.mrf.mxu0
          %v1456 = vadd.f32 0.0, %v1455
          %v1457 = vpop.f32.mrf.mxu0
          %v1458 = vadd.f32 0.0, %v1457
          %v1459 = vpop.f32.mrf.mxu0
          %v1460 = vadd.f32 0.0, %v1459
          %v1461 = vpop.f32.mrf.mxu0
          %v1462 = vadd.f32 0.0, %v1461
          %1463 = vmatprep.mubr.bf16.mxu0 0
          %1464 = vmatmul.mubr.bf16.gmra.mxu0 %v1003
          %v1465 = vpop.f32.mrf.mxu0
          %v1466 = vadd.f32 0.0, %v1465
          %v1467 = vpop.f32.mrf.mxu0
          %v1468 = vadd.f32 0.0, %v1467
          %v1469 = vpop.f32.mrf.mxu0
          %v1470 = vadd.f32 0.0, %v1469
          %v1471 = vpop.f32.mrf.mxu0
          %v1472 = vadd.f32 0.0, %v1471
          %1473 = vmatprep.mubr.bf16.mxu0 0
          %1474 = vmatmul.mubr.bf16.gmra.mxu0 %v1004
          %v1475 = vpop.f32.mrf.mxu0
          %v1476 = vadd.f32 0.0, %v1475
          %v1477 = vpop.f32.mrf.mxu0
          %v1478 = vadd.f32 0.0, %v1477
          %v1479 = vpop.f32.mrf.mxu0
          %v1480 = vadd.f32 0.0, %v1479
          %v1481 = vpop.f32.mrf.mxu0
          %v1482 = vadd.f32 0.0, %v1481
          %1483 = vmatprep.mubr.bf16.mxu0 0
          %1484 = vmatmul.mubr.bf16.gmra.mxu0 %v1005
          %v1485 = vpop.f32.mrf.mxu0
          %v1486 = vadd.f32 0.0, %v1485
          %v1487 = vpop.f32.mrf.mxu0
          %v1488 = vadd.f32 0.0, %v1487
          %v1489 = vpop.f32.mrf.mxu0
          %v1490 = vadd.f32 0.0, %v1489
          %v1491 = vpop.f32.mrf.mxu0
          %v1492 = vadd.f32 0.0, %v1491
          %1493 = vmatprep.mubr.bf16.mxu0 0
          %1494 = vmatmul.mubr.bf16.gmra.mxu0 %v1006
          %v1495 = vpop.f32.mrf.mxu0
          %v1496 = vadd.f32 0.0, %v1495
          %v1497 = vpop.f32.mrf.mxu0
          %v1498 = vadd.f32 0.0, %v1497
          %v1499 = vpop.f32.mrf.mxu0
          %v1500 = vadd.f32 0.0, %v1499
          %v1501 = vpop.f32.mrf.mxu0
          %v1502 = vadd.f32 0.0, %v1501
          %1503 = vdwg.mxu0
          %1504 = vmatprep.subr.bf16.mxu0 %v1322
          %1505 = vmatpush1.bf16.msra.mxu0 %v1321
          %1506 = vmatprep.subr.bf16.mxu0 %v1314
          %1507 = vmatpush1.bf16.msra.mxu0 %v1313
          %1508 = vmatprep.subr.bf16.mxu0 %v1306
          %1509 = vmatpush1.bf16.msra.mxu0 %v1305
          %1510 = vmatprep.subr.bf16.mxu0 %v1298
          %1511 = vmatpush1.bf16.msra.mxu0 %v1297
          %1512 = vmatprep.subr.bf16.mxu0 %v1290
          %1513 = vmatpush1.bf16.msra.mxu0 %v1289
          %1514 = vmatprep.subr.bf16.mxu0 %v1282
          %1515 = vmatpush1.bf16.msra.mxu0 %v1281
          %1516 = vmatprep.subr.bf16.mxu0 %v1274
          %1517 = vmatpush1.bf16.msra.mxu0 %v1273
          %1518 = vmatprep.subr.bf16.mxu0 %v1266
          %1519 = vmatpush1.bf16.msra.mxu0 %v1265
          %1520 = vmatprep.subr.bf16.mxu0 0
          %1521 = vmatpush2.bf16.msra.mxu0 0
          %1522 = vmatprep.subr.bf16.mxu0 0
          %1523 = vmatpush2.bf16.msra.mxu0 0
          %1524 = vmatprep.subr.bf16.mxu0 0
          %1525 = vmatpush2.bf16.msra.mxu0 0
          %1526 = vmatprep.subr.bf16.mxu0 0
          %1527 = vmatpush2.bf16.msra.mxu0 0
          %1528 = vmatprep.subr.bf16.mxu0 0
          %1529 = vmatpush2.bf16.msra.mxu0 0
          %1530 = vmatprep.subr.bf16.mxu0 0
          %1531 = vmatpush2.bf16.msra.mxu0 0
          %1532 = vmatprep.subr.bf16.mxu0 0
          %1533 = vmatpush2.bf16.msra.mxu0 0
          %1534 = vmatprep.subr.bf16.mxu0 0
          %1535 = vmatpush2.bf16.msra.mxu0 0
          %1536 = vmatprep.mubr.bf16.mxu0 0
          %1537 = vmatmul.mubr.bf16.gmra.mxu0 %v999
          %v1538 = vpop.f32.mrf.mxu0
          %v1539 = vadd.f32 0.0, %v1538
          %v1540 = vpop.f32.mrf.mxu0
          %v1541 = vadd.f32 0.0, %v1540
          %v1542 = vpop.f32.mrf.mxu0
          %v1543 = vadd.f32 0.0, %v1542
          %v1544 = vpop.f32.mrf.mxu0
          %v1545 = vadd.f32 0.0, %v1544
          %1546 = vmatprep.mubr.bf16.mxu0 0
          %1547 = vmatmul.mubr.bf16.gmra.mxu0 %v1000
          %v1548 = vpop.f32.mrf.mxu0
          %v1549 = vadd.f32 0.0, %v1548
          %v1550 = vpop.f32.mrf.mxu0
          %v1551 = vadd.f32 0.0, %v1550
          %v1552 = vpop.f32.mrf.mxu0
          %v1553 = vadd.f32 0.0, %v1552
          %v1554 = vpop.f32.mrf.mxu0
          %v1555 = vadd.f32 0.0, %v1554
          %1556 = vmatprep.mubr.bf16.mxu0 0
          %1557 = vmatmul.mubr.bf16.gmra.mxu0 %v1001
          %v1558 = vpop.f32.mrf.mxu0
          %v1559 = vadd.f32 0.0, %v1558
          %v1560 = vpop.f32.mrf.mxu0
          %v1561 = vadd.f32 0.0, %v1560
          %v1562 = vpop.f32.mrf.mxu0
          %v1563 = vadd.f32 0.0, %v1562
          %v1564 = vpop.f32.mrf.mxu0
          %v1565 = vadd.f32 0.0, %v1564
          %1566 = vmatprep.mubr.bf16.mxu0 0
          %1567 = vmatmul.mubr.bf16.gmra.mxu0 %v1002
          %v1568 = vpop.f32.mrf.mxu0
          %v1569 = vadd.f32 0.0, %v1568
          %v1570 = vpop.f32.mrf.mxu0
          %v1571 = vadd.f32 0.0, %v1570
          %v1572 = vpop.f32.mrf.mxu0
          %v1573 = vadd.f32 0.0, %v1572
          %v1574 = vpop.f32.mrf.mxu0
          %v1575 = vadd.f32 0.0, %v1574
          %1576 = vmatprep.mubr.bf16.mxu0 0
          %1577 = vmatmul.mubr.bf16.gmra.mxu0 %v1003
          %v1578 = vpop.f32.mrf.mxu0
          %v1579 = vadd.f32 0.0, %v1578
          %v1580 = vpop.f32.mrf.mxu0
          %v1581 = vadd.f32 0.0, %v1580
          %v1582 = vpop.f32.mrf.mxu0
          %v1583 = vadd.f32 0.0, %v1582
          %v1584 = vpop.f32.mrf.mxu0
          %v1585 = vadd.f32 0.0, %v1584
          %1586 = vmatprep.mubr.bf16.mxu0 0
          %1587 = vmatmul.mubr.bf16.gmra.mxu0 %v1004
          %v1588 = vpop.f32.mrf.mxu0
          %v1589 = vadd.f32 0.0, %v1588
          %v1590 = vpop.f32.mrf.mxu0
          %v1591 = vadd.f32 0.0, %v1590
          %v1592 = vpop.f32.mrf.mxu0
          %v1593 = vadd.f32 0.0, %v1592
          %v1594 = vpop.f32.mrf.mxu0
          %v1595 = vadd.f32 0.0, %v1594
          %1596 = vmatprep.mubr.bf16.mxu0 0
          %1597 = vmatmul.mubr.bf16.gmra.mxu0 %v1005
          %v1598 = vpop.f32.mrf.mxu0
          %v1599 = vadd.f32 0.0, %v1598
          %v1600 = vpop.f32.mrf.mxu0
          %v1601 = vadd.f32 0.0, %v1600
          %v1602 = vpop.f32.mrf.mxu0
          %v1603 = vadd.f32 0.0, %v1602
          %v1604 = vpop.f32.mrf.mxu0
          %v1605 = vadd.f32 0.0, %v1604
          %1606 = vmatprep.mubr.bf16.mxu0 0
          %1607 = vmatmul.mubr.bf16.gmra.mxu0 %v1006
          %v1608 = vpop.f32.mrf.mxu0
          %v1609 = vadd.f32 0.0, %v1608
          %v1610 = vpop.f32.mrf.mxu0
          %v1611 = vadd.f32 0.0, %v1610
          %v1612 = vpop.f32.mrf.mxu0
          %v1613 = vadd.f32 0.0, %v1612
          %v1614 = vpop.f32.mrf.mxu0
          %v1615 = vadd.f32 0.0, %v1614
          %1616 = vdwg.mxu0
          %1617 = vmatprep.subr.bf16.mxu0 %v1324
          %1618 = vmatpush1.bf16.msra.mxu0 %v1323
          %1619 = vmatprep.subr.bf16.mxu0 %v1316
          %1620 = vmatpush1.bf16.msra.mxu0 %v1315
          %1621 = vmatprep.subr.bf16.mxu0 %v1308
          %1622 = vmatpush1.bf16.msra.mxu0 %v1307
          %1623 = vmatprep.subr.bf16.mxu0 %v1300
          %1624 = vmatpush1.bf16.msra.mxu0 %v1299
          %1625 = vmatprep.subr.bf16.mxu0 %v1292
          %1626 = vmatpush1.bf16.msra.mxu0 %v1291
          %1627 = vmatprep.subr.bf16.mxu0 %v1284
          %1628 = vmatpush1.bf16.msra.mxu0 %v1283
          %1629 = vmatprep.subr.bf16.mxu0 %v1276
          %1630 = vmatpush1.bf16.msra.mxu0 %v1275
          %1631 = vmatprep.subr.bf16.mxu0 %v1268
          %1632 = vmatpush1.bf16.msra.mxu0 %v1267
          %1633 = vmatprep.subr.bf16.mxu0 0
          %1634 = vmatpush2.bf16.msra.mxu0 0
          %1635 = vmatprep.subr.bf16.mxu0 0
          %1636 = vmatpush2.bf16.msra.mxu0 0
          %1637 = vmatprep.subr.bf16.mxu0 0
          %1638 = vmatpush2.bf16.msra.mxu0 0
          %1639 = vmatprep.subr.bf16.mxu0 0
          %1640 = vmatpush2.bf16.msra.mxu0 0
          %1641 = vmatprep.subr.bf16.mxu0 0
          %1642 = vmatpush2.bf16.msra.mxu0 0
          %1643 = vmatprep.subr.bf16.mxu0 0
          %1644 = vmatpush2.bf16.msra.mxu0 0
          %1645 = vmatprep.subr.bf16.mxu0 0
          %1646 = vmatpush2.bf16.msra.mxu0 0
          %1647 = vmatprep.subr.bf16.mxu0 0
          %1648 = vmatpush2.bf16.msra.mxu0 0
          %1649 = vmatprep.mubr.bf16.mxu0 0
          %1650 = vmatmul.mubr.bf16.gmra.mxu0 %v999
          %v1651 = vpop.f32.mrf.mxu0
          %v1652 = vadd.f32 0.0, %v1651
          %v1653 = vpop.f32.mrf.mxu0
          %v1654 = vadd.f32 0.0, %v1653
          %v1655 = vpop.f32.mrf.mxu0
          %v1656 = vadd.f32 0.0, %v1655
          %v1657 = vpop.f32.mrf.mxu0
          %v1658 = vadd.f32 0.0, %v1657
          %1659 = vmatprep.mubr.bf16.mxu0 0
          %1660 = vmatmul.mubr.bf16.gmra.mxu0 %v1000
          %v1661 = vpop.f32.mrf.mxu0
          %v1662 = vadd.f32 0.0, %v1661
          %v1663 = vpop.f32.mrf.mxu0
          %v1664 = vadd.f32 0.0, %v1663
          %v1665 = vpop.f32.mrf.mxu0
          %v1666 = vadd.f32 0.0, %v1665
          %v1667 = vpop.f32.mrf.mxu0
          %v1668 = vadd.f32 0.0, %v1667
          %1669 = vmatprep.mubr.bf16.mxu0 0
          %1670 = vmatmul.mubr.bf16.gmra.mxu0 %v1001
          %v1671 = vpop.f32.mrf.mxu0
          %v1672 = vadd.f32 0.0, %v1671
          %v1673 = vpop.f32.mrf.mxu0
          %v1674 = vadd.f32 0.0, %v1673
          %v1675 = vpop.f32.mrf.mxu0
          %v1676 = vadd.f32 0.0, %v1675
          %v1677 = vpop.f32.mrf.mxu0
          %v1678 = vadd.f32 0.0, %v1677
          %1679 = vmatprep.mubr.bf16.mxu0 0
          %1680 = vmatmul.mubr.bf16.gmra.mxu0 %v1002
          %v1681 = vpop.f32.mrf.mxu0
          %v1682 = vadd.f32 0.0, %v1681
          %v1683 = vpop.f32.mrf.mxu0
          %v1684 = vadd.f32 0.0, %v1683
          %v1685 = vpop.f32.mrf.mxu0
          %v1686 = vadd.f32 0.0, %v1685
          %v1687 = vpop.f32.mrf.mxu0
          %v1688 = vadd.f32 0.0, %v1687
          %1689 = vmatprep.mubr.bf16.mxu0 0
          %1690 = vmatmul.mubr.bf16.gmra.mxu0 %v1003
          %v1691 = vpop.f32.mrf.mxu0
          %v1692 = vadd.f32 0.0, %v1691
          %v1693 = vpop.f32.mrf.mxu0
          %v1694 = vadd.f32 0.0, %v1693
          %v1695 = vpop.f32.mrf.mxu0
          %v1696 = vadd.f32 0.0, %v1695
          %v1697 = vpop.f32.mrf.mxu0
          %v1698 = vadd.f32 0.0, %v1697
          %1699 = vmatprep.mubr.bf16.mxu0 0
          %1700 = vmatmul.mubr.bf16.gmra.mxu0 %v1004
          %v1701 = vpop.f32.mrf.mxu0
          %v1702 = vadd.f32 0.0, %v1701
          %v1703 = vpop.f32.mrf.mxu0
          %v1704 = vadd.f32 0.0, %v1703
          %v1705 = vpop.f32.mrf.mxu0
          %v1706 = vadd.f32 0.0, %v1705
          %v1707 = vpop.f32.mrf.mxu0
          %v1708 = vadd.f32 0.0, %v1707
          %1709 = vmatprep.mubr.bf16.mxu0 0
          %1710 = vmatmul.mubr.bf16.gmra.mxu0 %v1005
          %v1711 = vpop.f32.mrf.mxu0
          %v1712 = vadd.f32 0.0, %v1711
          %v1713 = vpop.f32.mrf.mxu0
          %v1714 = vadd.f32 0.0, %v1713
          %v1715 = vpop.f32.mrf.mxu0
          %v1716 = vadd.f32 0.0, %v1715
          %v1717 = vpop.f32.mrf.mxu0
          %v1718 = vadd.f32 0.0, %v1717
          %1719 = vmatprep.mubr.bf16.mxu0 0
          %1720 = vmatmul.mubr.bf16.gmra.mxu0 %v1006
          %v1721 = vpop.f32.mrf.mxu0
          %v1722 = vadd.f32 0.0, %v1721
          %v1723 = vpop.f32.mrf.mxu0
          %v1724 = vadd.f32 0.0, %v1723
          %v1725 = vpop.f32.mrf.mxu0
          %v1726 = vadd.f32 0.0, %v1725
          %v1727 = vpop.f32.mrf.mxu0
          %v1728 = vadd.f32 0.0, %v1727
          %1729 = vdwg.mxu0
          %1730 = vmatprep.subr.bf16.mxu0 %v1326
          %1731 = vmatpush1.bf16.msra.mxu0 %v1325
          %1732 = vmatprep.subr.bf16.mxu0 %v1318
          %1733 = vmatpush1.bf16.msra.mxu0 %v1317
          %1734 = vmatprep.subr.bf16.mxu0 %v1310
          %1735 = vmatpush1.bf16.msra.mxu0 %v1309
          %1736 = vmatprep.subr.bf16.mxu0 %v1302
          %1737 = vmatpush1.bf16.msra.mxu0 %v1301
          %1738 = vmatprep.subr.bf16.mxu0 %v1294
          %1739 = vmatpush1.bf16.msra.mxu0 %v1293
          %1740 = vmatprep.subr.bf16.mxu0 %v1286
          %1741 = vmatpush1.bf16.msra.mxu0 %v1285
          %1742 = vmatprep.subr.bf16.mxu0 %v1278
          %1743 = vmatpush1.bf16.msra.mxu0 %v1277
          %1744 = vmatprep.subr.bf16.mxu0 %v1270
          %1745 = vmatpush1.bf16.msra.mxu0 %v1269
          %1746 = vmatprep.subr.bf16.mxu0 0
          %1747 = vmatpush2.bf16.msra.mxu0 0
          %1748 = vmatprep.subr.bf16.mxu0 0
          %1749 = vmatpush2.bf16.msra.mxu0 0
          %1750 = vmatprep.subr.bf16.mxu0 0
          %1751 = vmatpush2.bf16.msra.mxu0 0
          %1752 = vmatprep.subr.bf16.mxu0 0
          %1753 = vmatpush2.bf16.msra.mxu0 0
          %1754 = vmatprep.subr.bf16.mxu0 0
          %1755 = vmatpush2.bf16.msra.mxu0 0
          %1756 = vmatprep.subr.bf16.mxu0 0
          %1757 = vmatpush2.bf16.msra.mxu0 0
          %1758 = vmatprep.subr.bf16.mxu0 0
          %1759 = vmatpush2.bf16.msra.mxu0 0
          %1760 = vmatprep.subr.bf16.mxu0 0
          %1761 = vmatpush2.bf16.msra.mxu0 0
          %1762 = vmatprep.mubr.bf16.mxu0 0
          %1763 = vmatmul.mubr.bf16.gmra.mxu0 %v999
          %v1764 = vpop.f32.mrf.mxu0
          %v1765 = vadd.f32 0.0, %v1764
          %v1766 = vpop.f32.mrf.mxu0
          %v1767 = vadd.f32 0.0, %v1766
          %v1768 = vpop.f32.mrf.mxu0
          %v1769 = vadd.f32 0.0, %v1768
          %v1770 = vpop.f32.mrf.mxu0
          %v1771 = vadd.f32 0.0, %v1770
          %1772 = vmatprep.mubr.bf16.mxu0 0
          %1773 = vmatmul.mubr.bf16.gmra.mxu0 %v1000
          %v1774 = vpop.f32.mrf.mxu0
          %v1775 = vadd.f32 0.0, %v1774
          %v1776 = vpop.f32.mrf.mxu0
          %v1777 = vadd.f32 0.0, %v1776
          %v1778 = vpop.f32.mrf.mxu0
          %v1779 = vadd.f32 0.0, %v1778
          %v1780 = vpop.f32.mrf.mxu0
          %v1781 = vadd.f32 0.0, %v1780
          %1782 = vmatprep.mubr.bf16.mxu0 0
          %1783 = vmatmul.mubr.bf16.gmra.mxu0 %v1001
          %v1784 = vpop.f32.mrf.mxu0
          %v1785 = vadd.f32 0.0, %v1784
          %v1786 = vpop.f32.mrf.mxu0
          %v1787 = vadd.f32 0.0, %v1786
          %v1788 = vpop.f32.mrf.mxu0
          %v1789 = vadd.f32 0.0, %v1788
          %v1790 = vpop.f32.mrf.mxu0
          %v1791 = vadd.f32 0.0, %v1790
          %1792 = vmatprep.mubr.bf16.mxu0 0
          %1793 = vmatmul.mubr.bf16.gmra.mxu0 %v1002
          %v1794 = vpop.f32.mrf.mxu0
          %v1795 = vadd.f32 0.0, %v1794
          %v1796 = vpop.f32.mrf.mxu0
          %v1797 = vadd.f32 0.0, %v1796
          %v1798 = vpop.f32.mrf.mxu0
          %v1799 = vadd.f32 0.0, %v1798
          %v1800 = vpop.f32.mrf.mxu0
          %v1801 = vadd.f32 0.0, %v1800
          %1802 = vmatprep.mubr.bf16.mxu0 0
          %1803 = vmatmul.mubr.bf16.gmra.mxu0 %v1003
          %v1804 = vpop.f32.mrf.mxu0
          %v1805 = vadd.f32 0.0, %v1804
          %v1806 = vpop.f32.mrf.mxu0
          %v1807 = vadd.f32 0.0, %v1806
          %v1808 = vpop.f32.mrf.mxu0
          %v1809 = vadd.f32 0.0, %v1808
          %v1810 = vpop.f32.mrf.mxu0
          %v1811 = vadd.f32 0.0, %v1810
          %1812 = vmatprep.mubr.bf16.mxu0 0
          %1813 = vmatmul.mubr.bf16.gmra.mxu0 %v1004
          %v1814 = vpop.f32.mrf.mxu0
          %v1815 = vadd.f32 0.0, %v1814
          %v1816 = vpop.f32.mrf.mxu0
          %v1817 = vadd.f32 0.0, %v1816
          %v1818 = vpop.f32.mrf.mxu0
          %v1819 = vadd.f32 0.0, %v1818
          %v1820 = vpop.f32.mrf.mxu0
          %v1821 = vadd.f32 0.0, %v1820
          %1822 = vmatprep.mubr.bf16.mxu0 0
          %1823 = vmatmul.mubr.bf16.gmra.mxu0 %v1005
          %v1824 = vpop.f32.mrf.mxu0
          %v1825 = vadd.f32 0.0, %v1824
          %v1826 = vpop.f32.mrf.mxu0
          %v1827 = vadd.f32 0.0, %v1826
          %v1828 = vpop.f32.mrf.mxu0
          %v1829 = vadd.f32 0.0, %v1828
          %v1830 = vpop.f32.mrf.mxu0
          %v1831 = vadd.f32 0.0, %v1830
          %1832 = vmatprep.mubr.bf16.mxu0 0
          %1833 = vmatmul.mubr.bf16.gmra.mxu0 %v1006
          %v1834 = vpop.f32.mrf.mxu0
          %v1835 = vadd.f32 0.0, %v1834
          %v1836 = vpop.f32.mrf.mxu0
          %v1837 = vadd.f32 0.0, %v1836
          %v1838 = vpop.f32.mrf.mxu0
          %v1839 = vadd.f32 0.0, %v1838
          %v1840 = vpop.f32.mrf.mxu0
          %v1841 = vadd.f32 0.0, %v1840
          %1842 = vdwg.mxu0
          %v1843 = vadd.f32 %v1426, 0.0
          %v1844 = vadd.f32 %v1428, 0.0
          %v1845 = vadd.f32 %v1539, 0.0
          %v1846 = vadd.f32 %v1541, 0.0
          %v1847 = vadd.f32 %v1652, 0.0
          %v1848 = vadd.f32 %v1654, 0.0
          %v1849 = vadd.f32 %v1765, 0.0
          %v1850 = vadd.f32 %v1767, 0.0
          %v1851 = vmul.f32 %v1426, %v1426
          %v1852 = vmul.f32 %v1428, %v1428
          %v1853 = vmul.f32 %v1539, %v1539
          %v1854 = vmul.f32 %v1541, %v1541
          %v1855 = vmul.f32 %v1652, %v1652
          %v1856 = vmul.f32 %v1654, %v1654
          %v1857 = vmul.f32 %v1765, %v1765
          %v1858 = vmul.f32 %v1767, %v1767
          %v1859 = vadd.f32 %v1851, 0.0
          %v1860 = vadd.f32 %v1852, 0.0
          %v1861 = vadd.f32 %v1853, 0.0
          %v1862 = vadd.f32 %v1854, 0.0
          %v1863 = vadd.f32 %v1855, 0.0
          %v1864 = vadd.f32 %v1856, 0.0
          %v1865 = vadd.f32 %v1857, 0.0
          %v1866 = vadd.f32 %v1858, 0.0
          %v1867 = vadd.f32 %v1843, %v1430
          %v1868 = vadd.f32 %v1844, %v1432
          %v1869 = vadd.f32 %v1845, %v1543
          %v1870 = vadd.f32 %v1846, %v1545
          %v1871 = vadd.f32 %v1847, %v1656
          %v1872 = vadd.f32 %v1848, %v1658
          %v1873 = vadd.f32 %v1849, %v1769
          %v1874 = vadd.f32 %v1850, %v1771
          %v1875 = vmul.f32 %v1430, %v1430
          %v1876 = vmul.f32 %v1432, %v1432
          %v1877 = vmul.f32 %v1543, %v1543
          %v1878 = vmul.f32 %v1545, %v1545
          %v1879 = vmul.f32 %v1656, %v1656
          %v1880 = vmul.f32 %v1658, %v1658
          %v1881 = vmul.f32 %v1769, %v1769
          %v1882 = vmul.f32 %v1771, %v1771
          %v1883 = vadd.f32 %v1859, %v1875
          %v1884 = vadd.f32 %v1860, %v1876
          %v1885 = vadd.f32 %v1861, %v1877
          %v1886 = vadd.f32 %v1862, %v1878
          %v1887 = vadd.f32 %v1863, %v1879
          %v1888 = vadd.f32 %v1864, %v1880
          %v1889 = vadd.f32 %v1865, %v1881
          %v1890 = vadd.f32 %v1866, %v1882
          %v1891 = vmax.f32 %v1426, %v1430
          %v1892 = vmax.f32 %v1428, %v1432
          %v1893 = vmax.f32 %v1539, %v1543
          %v1894 = vmax.f32 %v1541, %v1545
          %v1895 = vmax.f32 %v1652, %v1656
          %v1896 = vmax.f32 %v1654, %v1658
          %v1897 = vmax.f32 %v1765, %v1769
          %v1898 = vmax.f32 %v1767, %v1771
          %v1899 = vmin.f32 %v1426, %v1430
          %v1900 = vmin.f32 %v1428, %v1432
          %v1901 = vmin.f32 %v1539, %v1543
          %v1902 = vmin.f32 %v1541, %v1545
          %v1903 = vmin.f32 %v1652, %v1656
          %v1904 = vmin.f32 %v1654, %v1658
          %v1905 = vmin.f32 %v1765, %v1769
          %v1906 = vmin.f32 %v1767, %v1771
          %v1907 = vadd.f32 %v1867, %v1436
          %v1908 = vadd.f32 %v1868, %v1438
          %v1909 = vadd.f32 %v1869, %v1549
          %v1910 = vadd.f32 %v1870, %v1551
          %v1911 = vadd.f32 %v1871, %v1662
          %v1912 = vadd.f32 %v1872, %v1664
          %v1913 = vadd.f32 %v1873, %v1775
          %v1914 = vadd.f32 %v1874, %v1777
          %v1915 = vmul.f32 %v1436, %v1436
          %v1916 = vmul.f32 %v1438, %v1438
          %v1917 = vmul.f32 %v1549, %v1549
          %v1918 = vmul.f32 %v1551, %v1551
          %v1919 = vmul.f32 %v1662, %v1662
          %v1920 = vmul.f32 %v1664, %v1664
          %v1921 = vmul.f32 %v1775, %v1775
          %v1922 = vmul.f32 %v1777, %v1777
          %v1923 = vadd.f32 %v1883, %v1915
          %v1924 = vadd.f32 %v1884, %v1916
          %v1925 = vadd.f32 %v1885, %v1917
          %v1926 = vadd.f32 %v1886, %v1918
          %v1927 = vadd.f32 %v1887, %v1919
          %v1928 = vadd.f32 %v1888, %v1920
          %v1929 = vadd.f32 %v1889, %v1921
          %v1930 = vadd.f32 %v1890, %v1922
          %v1931 = vmax.f32 %v1891, %v1436
          %v1932 = vmax.f32 %v1892, %v1438
          %v1933 = vmax.f32 %v1893, %v1549
          %v1934 = vmax.f32 %v1894, %v1551
          %v1935 = vmax.f32 %v1895, %v1662
          %v1936 = vmax.f32 %v1896, %v1664
          %v1937 = vmax.f32 %v1897, %v1775
          %v1938 = vmax.f32 %v1898, %v1777
          %v1939 = vmin.f32 %v1899, %v1436
          %v1940 = vmin.f32 %v1900, %v1438
          %v1941 = vmin.f32 %v1901, %v1549
          %v1942 = vmin.f32 %v1902, %v1551
          %v1943 = vmin.f32 %v1903, %v1662
          %v1944 = vmin.f32 %v1904, %v1664
          %v1945 = vmin.f32 %v1905, %v1775
          %v1946 = vmin.f32 %v1906, %v1777
          %v1947 = vadd.f32 %v1907, %v1440
          %v1948 = vadd.f32 %v1908, %v1442
          %v1949 = vadd.f32 %v1909, %v1553
          %v1950 = vadd.f32 %v1910, %v1555
          %v1951 = vadd.f32 %v1911, %v1666
          %v1952 = vadd.f32 %v1912, %v1668
          %v1953 = vadd.f32 %v1913, %v1779
          %v1954 = vadd.f32 %v1914, %v1781
          %v1955 = vmul.f32 %v1440, %v1440
          %v1956 = vmul.f32 %v1442, %v1442
          %v1957 = vmul.f32 %v1553, %v1553
          %v1958 = vmul.f32 %v1555, %v1555
          %v1959 = vmul.f32 %v1666, %v1666
          %v1960 = vmul.f32 %v1668, %v1668
          %v1961 = vmul.f32 %v1779, %v1779
          %v1962 = vmul.f32 %v1781, %v1781
          %v1963 = vadd.f32 %v1923, %v1955
          %v1964 = vadd.f32 %v1924, %v1956
          %v1965 = vadd.f32 %v1925, %v1957
          %v1966 = vadd.f32 %v1926, %v1958
          %v1967 = vadd.f32 %v1927, %v1959
          %v1968 = vadd.f32 %v1928, %v1960
          %v1969 = vadd.f32 %v1929, %v1961
          %v1970 = vadd.f32 %v1930, %v1962
          %v1971 = vmax.f32 %v1931, %v1440
          %v1972 = vmax.f32 %v1932, %v1442
          %v1973 = vmax.f32 %v1933, %v1553
          %v1974 = vmax.f32 %v1934, %v1555
          %v1975 = vmax.f32 %v1935, %v1666
          %v1976 = vmax.f32 %v1936, %v1668
          %v1977 = vmax.f32 %v1937, %v1779
          %v1978 = vmax.f32 %v1938, %v1781
          %v1979 = vmin.f32 %v1939, %v1440
          %v1980 = vmin.f32 %v1940, %v1442
          %v1981 = vmin.f32 %v1941, %v1553
          %v1982 = vmin.f32 %v1942, %v1555
          %v1983 = vmin.f32 %v1943, %v1666
          %v1984 = vmin.f32 %v1944, %v1668
          %v1985 = vmin.f32 %v1945, %v1779
          %v1986 = vmin.f32 %v1946, %v1781
          %v1987 = vadd.f32 %v1947, %v1446
          %v1988 = vadd.f32 %v1948, %v1448
          %v1989 = vadd.f32 %v1949, %v1559
          %v1990 = vadd.f32 %v1950, %v1561
          %v1991 = vadd.f32 %v1951, %v1672
          %v1992 = vadd.f32 %v1952, %v1674
          %v1993 = vadd.f32 %v1953, %v1785
          %v1994 = vadd.f32 %v1954, %v1787
          %v1995 = vmul.f32 %v1446, %v1446
          %v1996 = vmul.f32 %v1448, %v1448
          %v1997 = vmul.f32 %v1559, %v1559
          %v1998 = vmul.f32 %v1561, %v1561
          %v1999 = vmul.f32 %v1672, %v1672
          %v2000 = vmul.f32 %v1674, %v1674
          %v2001 = vmul.f32 %v1785, %v1785
          %v2002 = vmul.f32 %v1787, %v1787
          %v2003 = vadd.f32 %v1963, %v1995
          %v2004 = vadd.f32 %v1964, %v1996
          %v2005 = vadd.f32 %v1965, %v1997
          %v2006 = vadd.f32 %v1966, %v1998
          %v2007 = vadd.f32 %v1967, %v1999
          %v2008 = vadd.f32 %v1968, %v2000
          %v2009 = vadd.f32 %v1969, %v2001
          %v2010 = vadd.f32 %v1970, %v2002
          %v2011 = vmax.f32 %v1971, %v1446
          %v2012 = vmax.f32 %v1972, %v1448
          %v2013 = vmax.f32 %v1973, %v1559
          %v2014 = vmax.f32 %v1974, %v1561
          %v2015 = vmax.f32 %v1975, %v1672
          %v2016 = vmax.f32 %v1976, %v1674
          %v2017 = vmax.f32 %v1977, %v1785
          %v2018 = vmax.f32 %v1978, %v1787
          %v2019 = vmin.f32 %v1979, %v1446
          %v2020 = vmin.f32 %v1980, %v1448
          %v2021 = vmin.f32 %v1981, %v1559
          %v2022 = vmin.f32 %v1982, %v1561
          %v2023 = vmin.f32 %v1983, %v1672
          %v2024 = vmin.f32 %v1984, %v1674
          %v2025 = vmin.f32 %v1985, %v1785
          %v2026 = vmin.f32 %v1986, %v1787
          %v2027 = vadd.f32 %v1987, %v1450
          %v2028 = vadd.f32 %v1988, %v1452
          %v2029 = vadd.f32 %v1989, %v1563
          %v2030 = vadd.f32 %v1990, %v1565
          %v2031 = vadd.f32 %v1991, %v1676
          %v2032 = vadd.f32 %v1992, %v1678
          %v2033 = vadd.f32 %v1993, %v1789
          %v2034 = vadd.f32 %v1994, %v1791
          %v2035 = vmul.f32 %v1450, %v1450
          %v2036 = vmul.f32 %v1452, %v1452
          %v2037 = vmul.f32 %v1563, %v1563
          %v2038 = vmul.f32 %v1565, %v1565
          %v2039 = vmul.f32 %v1676, %v1676
          %v2040 = vmul.f32 %v1678, %v1678
          %v2041 = vmul.f32 %v1789, %v1789
          %v2042 = vmul.f32 %v1791, %v1791
          %v2043 = vadd.f32 %v2003, %v2035
          %v2044 = vadd.f32 %v2004, %v2036
          %v2045 = vadd.f32 %v2005, %v2037
          %v2046 = vadd.f32 %v2006, %v2038
          %v2047 = vadd.f32 %v2007, %v2039
          %v2048 = vadd.f32 %v2008, %v2040
          %v2049 = vadd.f32 %v2009, %v2041
          %v2050 = vadd.f32 %v2010, %v2042
          %v2051 = vmax.f32 %v2011, %v1450
          %v2052 = vmax.f32 %v2012, %v1452
          %v2053 = vmax.f32 %v2013, %v1563
          %v2054 = vmax.f32 %v2014, %v1565
          %v2055 = vmax.f32 %v2015, %v1676
          %v2056 = vmax.f32 %v2016, %v1678
          %v2057 = vmax.f32 %v2017, %v1789
          %v2058 = vmax.f32 %v2018, %v1791
          %v2059 = vmin.f32 %v2019, %v1450
          %v2060 = vmin.f32 %v2020, %v1452
          %v2061 = vmin.f32 %v2021, %v1563
          %v2062 = vmin.f32 %v2022, %v1565
          %v2063 = vmin.f32 %v2023, %v1676
          %v2064 = vmin.f32 %v2024, %v1678
          %v2065 = vmin.f32 %v2025, %v1789
          %v2066 = vmin.f32 %v2026, %v1791
          %v2067 = vadd.f32 %v2027, %v1456
          %v2068 = vadd.f32 %v2028, %v1458
          %v2069 = vadd.f32 %v2029, %v1569
          %v2070 = vadd.f32 %v2030, %v1571
          %v2071 = vadd.f32 %v2031, %v1682
          %v2072 = vadd.f32 %v2032, %v1684
          %v2073 = vadd.f32 %v2033, %v1795
          %v2074 = vadd.f32 %v2034, %v1797
          %v2075 = vmul.f32 %v1456, %v1456
          %v2076 = vmul.f32 %v1458, %v1458
          %v2077 = vmul.f32 %v1569, %v1569
          %v2078 = vmul.f32 %v1571, %v1571
          %v2079 = vmul.f32 %v1682, %v1682
          %v2080 = vmul.f32 %v1684, %v1684
          %v2081 = vmul.f32 %v1795, %v1795
          %v2082 = vmul.f32 %v1797, %v1797
          %v2083 = vadd.f32 %v2043, %v2075
          %v2084 = vadd.f32 %v2044, %v2076
          %v2085 = vadd.f32 %v2045, %v2077
          %v2086 = vadd.f32 %v2046, %v2078
          %v2087 = vadd.f32 %v2047, %v2079
          %v2088 = vadd.f32 %v2048, %v2080
          %v2089 = vadd.f32 %v2049, %v2081
          %v2090 = vadd.f32 %v2050, %v2082
          %v2091 = vmax.f32 %v2051, %v1456
          %v2092 = vmax.f32 %v2052, %v1458
          %v2093 = vmax.f32 %v2053, %v1569
          %v2094 = vmax.f32 %v2054, %v1571
          %v2095 = vmax.f32 %v2055, %v1682
          %v2096 = vmax.f32 %v2056, %v1684
          %v2097 = vmax.f32 %v2057, %v1795
          %v2098 = vmax.f32 %v2058, %v1797
          %v2099 = vmin.f32 %v2059, %v1456
          %v2100 = vmin.f32 %v2060, %v1458
          %v2101 = vmin.f32 %v2061, %v1569
          %v2102 = vmin.f32 %v2062, %v1571
          %v2103 = vmin.f32 %v2063, %v1682
          %v2104 = vmin.f32 %v2064, %v1684
          %v2105 = vmin.f32 %v2065, %v1795
          %v2106 = vmin.f32 %v2066, %v1797
          %v2107 = vadd.f32 %v2067, %v1460
          %v2108 = vadd.f32 %v2068, %v1462
          %v2109 = vadd.f32 %v2069, %v1573
          %v2110 = vadd.f32 %v2070, %v1575
          %v2111 = vadd.f32 %v2071, %v1686
          %v2112 = vadd.f32 %v2072, %v1688
          %v2113 = vadd.f32 %v2073, %v1799
          %v2114 = vadd.f32 %v2074, %v1801
          %v2115 = vmul.f32 %v1460, %v1460
          %v2116 = vmul.f32 %v1462, %v1462
          %v2117 = vmul.f32 %v1573, %v1573
          %v2118 = vmul.f32 %v1575, %v1575
          %v2119 = vmul.f32 %v1686, %v1686
          %v2120 = vmul.f32 %v1688, %v1688
          %v2121 = vmul.f32 %v1799, %v1799
          %v2122 = vmul.f32 %v1801, %v1801
          %v2123 = vadd.f32 %v2083, %v2115
          %v2124 = vadd.f32 %v2084, %v2116
          %v2125 = vadd.f32 %v2085, %v2117
          %v2126 = vadd.f32 %v2086, %v2118
          %v2127 = vadd.f32 %v2087, %v2119
          %v2128 = vadd.f32 %v2088, %v2120
          %v2129 = vadd.f32 %v2089, %v2121
          %v2130 = vadd.f32 %v2090, %v2122
          %v2131 = vmax.f32 %v2091, %v1460
          %v2132 = vmax.f32 %v2092, %v1462
          %v2133 = vmax.f32 %v2093, %v1573
          %v2134 = vmax.f32 %v2094, %v1575
          %v2135 = vmax.f32 %v2095, %v1686
          %v2136 = vmax.f32 %v2096, %v1688
          %v2137 = vmax.f32 %v2097, %v1799
          %v2138 = vmax.f32 %v2098, %v1801
          %v2139 = vmin.f32 %v2099, %v1460
          %v2140 = vmin.f32 %v2100, %v1462
          %v2141 = vmin.f32 %v2101, %v1573
          %v2142 = vmin.f32 %v2102, %v1575
          %v2143 = vmin.f32 %v2103, %v1686
          %v2144 = vmin.f32 %v2104, %v1688
          %v2145 = vmin.f32 %v2105, %v1799
          %v2146 = vmin.f32 %v2106, %v1801
          %v2147 = vadd.f32 %v2107, %v1466
          %v2148 = vadd.f32 %v2108, %v1468
          %v2149 = vadd.f32 %v2109, %v1579
          %v2150 = vadd.f32 %v2110, %v1581
          %v2151 = vadd.f32 %v2111, %v1692
          %v2152 = vadd.f32 %v2112, %v1694
          %v2153 = vadd.f32 %v2113, %v1805
          %v2154 = vadd.f32 %v2114, %v1807
          %v2155 = vmul.f32 %v1466, %v1466
          %v2156 = vmul.f32 %v1468, %v1468
          %v2157 = vmul.f32 %v1579, %v1579
          %v2158 = vmul.f32 %v1581, %v1581
          %v2159 = vmul.f32 %v1692, %v1692
          %v2160 = vmul.f32 %v1694, %v1694
          %v2161 = vmul.f32 %v1805, %v1805
          %v2162 = vmul.f32 %v1807, %v1807
          %v2163 = vadd.f32 %v2123, %v2155
          %v2164 = vadd.f32 %v2124, %v2156
          %v2165 = vadd.f32 %v2125, %v2157
          %v2166 = vadd.f32 %v2126, %v2158
          %v2167 = vadd.f32 %v2127, %v2159
          %v2168 = vadd.f32 %v2128, %v2160
          %v2169 = vadd.f32 %v2129, %v2161
          %v2170 = vadd.f32 %v2130, %v2162
          %v2171 = vmax.f32 %v2131, %v1466
          %v2172 = vmax.f32 %v2132, %v1468
          %v2173 = vmax.f32 %v2133, %v1579
          %v2174 = vmax.f32 %v2134, %v1581
          %v2175 = vmax.f32 %v2135, %v1692
          %v2176 = vmax.f32 %v2136, %v1694
          %v2177 = vmax.f32 %v2137, %v1805
          %v2178 = vmax.f32 %v2138, %v1807
          %v2179 = vmin.f32 %v2139, %v1466
          %v2180 = vmin.f32 %v2140, %v1468
          %v2181 = vmin.f32 %v2141, %v1579
          %v2182 = vmin.f32 %v2142, %v1581
          %v2183 = vmin.f32 %v2143, %v1692
          %v2184 = vmin.f32 %v2144, %v1694
          %v2185 = vmin.f32 %v2145, %v1805
          %v2186 = vmin.f32 %v2146, %v1807
          %v2187 = vadd.f32 %v2147, %v1470
          %v2188 = vadd.f32 %v2148, %v1472
          %v2189 = vadd.f32 %v2149, %v1583
          %v2190 = vadd.f32 %v2150, %v1585
          %v2191 = vadd.f32 %v2151, %v1696
          %v2192 = vadd.f32 %v2152, %v1698
          %v2193 = vadd.f32 %v2153, %v1809
          %v2194 = vadd.f32 %v2154, %v1811
          %v2195 = vmul.f32 %v1470, %v1470
          %v2196 = vmul.f32 %v1472, %v1472
          %v2197 = vmul.f32 %v1583, %v1583
          %v2198 = vmul.f32 %v1585, %v1585
          %v2199 = vmul.f32 %v1696, %v1696
          %v2200 = vmul.f32 %v1698, %v1698
          %v2201 = vmul.f32 %v1809, %v1809
          %v2202 = vmul.f32 %v1811, %v1811
          %v2203 = vadd.f32 %v2163, %v2195
          %v2204 = vadd.f32 %v2164, %v2196
          %v2205 = vadd.f32 %v2165, %v2197
          %v2206 = vadd.f32 %v2166, %v2198
          %v2207 = vadd.f32 %v2167, %v2199
          %v2208 = vadd.f32 %v2168, %v2200
          %v2209 = vadd.f32 %v2169, %v2201
          %v2210 = vadd.f32 %v2170, %v2202
          %v2211 = vmax.f32 %v2171, %v1470
          %v2212 = vmax.f32 %v2172, %v1472
          %v2213 = vmax.f32 %v2173, %v1583
          %v2214 = vmax.f32 %v2174, %v1585
          %v2215 = vmax.f32 %v2175, %v1696
          %v2216 = vmax.f32 %v2176, %v1698
          %v2217 = vmax.f32 %v2177, %v1809
          %v2218 = vmax.f32 %v2178, %v1811
          %v2219 = vmin.f32 %v2179, %v1470
          %v2220 = vmin.f32 %v2180, %v1472
          %v2221 = vmin.f32 %v2181, %v1583
          %v2222 = vmin.f32 %v2182, %v1585
          %v2223 = vmin.f32 %v2183, %v1696
          %v2224 = vmin.f32 %v2184, %v1698
          %v2225 = vmin.f32 %v2185, %v1809
          %v2226 = vmin.f32 %v2186, %v1811
          %v2227 = vadd.f32 %v2187, %v1476
          %v2228 = vadd.f32 %v2188, %v1478
          %v2229 = vadd.f32 %v2189, %v1589
          %v2230 = vadd.f32 %v2190, %v1591
          %v2231 = vadd.f32 %v2191, %v1702
          %v2232 = vadd.f32 %v2192, %v1704
          %v2233 = vadd.f32 %v2193, %v1815
          %v2234 = vadd.f32 %v2194, %v1817
          %v2235 = vmul.f32 %v1476, %v1476
          %v2236 = vmul.f32 %v1478, %v1478
          %v2237 = vmul.f32 %v1589, %v1589
          %v2238 = vmul.f32 %v1591, %v1591
          %v2239 = vmul.f32 %v1702, %v1702
          %v2240 = vmul.f32 %v1704, %v1704
          %v2241 = vmul.f32 %v1815, %v1815
          %v2242 = vmul.f32 %v1817, %v1817
          %v2243 = vadd.f32 %v2203, %v2235
          %v2244 = vadd.f32 %v2204, %v2236
          %v2245 = vadd.f32 %v2205, %v2237
          %v2246 = vadd.f32 %v2206, %v2238
          %v2247 = vadd.f32 %v2207, %v2239
          %v2248 = vadd.f32 %v2208, %v2240
          %v2249 = vadd.f32 %v2209, %v2241
          %v2250 = vadd.f32 %v2210, %v2242
          %v2251 = vmax.f32 %v2211, %v1476
          %v2252 = vmax.f32 %v2212, %v1478
          %v2253 = vmax.f32 %v2213, %v1589
          %v2254 = vmax.f32 %v2214, %v1591
          %v2255 = vmax.f32 %v2215, %v1702
          %v2256 = vmax.f32 %v2216, %v1704
          %v2257 = vmax.f32 %v2217, %v1815
          %v2258 = vmax.f32 %v2218, %v1817
          %v2259 = vmin.f32 %v2219, %v1476
          %v2260 = vmin.f32 %v2220, %v1478
          %v2261 = vmin.f32 %v2221, %v1589
          %v2262 = vmin.f32 %v2222, %v1591
          %v2263 = vmin.f32 %v2223, %v1702
          %v2264 = vmin.f32 %v2224, %v1704
          %v2265 = vmin.f32 %v2225, %v1815
          %v2266 = vmin.f32 %v2226, %v1817
          %v2267 = vadd.f32 %v2227, %v1480
          %v2268 = vadd.f32 %v2228, %v1482
          %v2269 = vadd.f32 %v2229, %v1593
          %v2270 = vadd.f32 %v2230, %v1595
          %v2271 = vadd.f32 %v2231, %v1706
          %v2272 = vadd.f32 %v2232, %v1708
          %v2273 = vadd.f32 %v2233, %v1819
          %v2274 = vadd.f32 %v2234, %v1821
          %v2275 = vmul.f32 %v1480, %v1480
          %v2276 = vmul.f32 %v1482, %v1482
          %v2277 = vmul.f32 %v1593, %v1593
          %v2278 = vmul.f32 %v1595, %v1595
          %v2279 = vmul.f32 %v1706, %v1706
          %v2280 = vmul.f32 %v1708, %v1708
          %v2281 = vmul.f32 %v1819, %v1819
          %v2282 = vmul.f32 %v1821, %v1821
          %v2283 = vadd.f32 %v2243, %v2275
          %v2284 = vadd.f32 %v2244, %v2276
          %v2285 = vadd.f32 %v2245, %v2277
          %v2286 = vadd.f32 %v2246, %v2278
          %v2287 = vadd.f32 %v2247, %v2279
          %v2288 = vadd.f32 %v2248, %v2280
          %v2289 = vadd.f32 %v2249, %v2281
          %v2290 = vadd.f32 %v2250, %v2282
          %v2291 = vmax.f32 %v2251, %v1480
          %v2292 = vmax.f32 %v2252, %v1482
          %v2293 = vmax.f32 %v2253, %v1593
          %v2294 = vmax.f32 %v2254, %v1595
          %v2295 = vmax.f32 %v2255, %v1706
          %v2296 = vmax.f32 %v2256, %v1708
          %v2297 = vmax.f32 %v2257, %v1819
          %v2298 = vmax.f32 %v2258, %v1821
          %v2299 = vmin.f32 %v2259, %v1480
          %v2300 = vmin.f32 %v2260, %v1482
          %v2301 = vmin.f32 %v2261, %v1593
          %v2302 = vmin.f32 %v2262, %v1595
          %v2303 = vmin.f32 %v2263, %v1706
          %v2304 = vmin.f32 %v2264, %v1708
          %v2305 = vmin.f32 %v2265, %v1819
          %v2306 = vmin.f32 %v2266, %v1821
          %v2307 = vadd.f32 %v2267, %v1486
          %v2308 = vadd.f32 %v2268, %v1488
          %v2309 = vadd.f32 %v2269, %v1599
          %v2310 = vadd.f32 %v2270, %v1601
          %v2311 = vadd.f32 %v2271, %v1712
          %v2312 = vadd.f32 %v2272, %v1714
          %v2313 = vadd.f32 %v2273, %v1825
          %v2314 = vadd.f32 %v2274, %v1827
          %v2315 = vmul.f32 %v1486, %v1486
          %v2316 = vmul.f32 %v1488, %v1488
          %v2317 = vmul.f32 %v1599, %v1599
          %v2318 = vmul.f32 %v1601, %v1601
          %v2319 = vmul.f32 %v1712, %v1712
          %v2320 = vmul.f32 %v1714, %v1714
          %v2321 = vmul.f32 %v1825, %v1825
          %v2322 = vmul.f32 %v1827, %v1827
          %v2323 = vadd.f32 %v2283, %v2315
          %v2324 = vadd.f32 %v2284, %v2316
          %v2325 = vadd.f32 %v2285, %v2317
          %v2326 = vadd.f32 %v2286, %v2318
          %v2327 = vadd.f32 %v2287, %v2319
          %v2328 = vadd.f32 %v2288, %v2320
          %v2329 = vadd.f32 %v2289, %v2321
          %v2330 = vadd.f32 %v2290, %v2322
          %v2331 = vmax.f32 %v2291, %v1486
          %v2332 = vmax.f32 %v2292, %v1488
          %v2333 = vmax.f32 %v2293, %v1599
          %v2334 = vmax.f32 %v2294, %v1601
          %v2335 = vmax.f32 %v2295, %v1712
          %v2336 = vmax.f32 %v2296, %v1714
          %v2337 = vmax.f32 %v2297, %v1825
          %v2338 = vmax.f32 %v2298, %v1827
          %v2339 = vmin.f32 %v2299, %v1486
          %v2340 = vmin.f32 %v2300, %v1488
          %v2341 = vmin.f32 %v2301, %v1599
          %v2342 = vmin.f32 %v2302, %v1601
          %v2343 = vmin.f32 %v2303, %v1712
          %v2344 = vmin.f32 %v2304, %v1714
          %v2345 = vmin.f32 %v2305, %v1825
          %v2346 = vmin.f32 %v2306, %v1827
          %v2347 = vadd.f32 %v2307, %v1490
          %v2348 = vadd.f32 %v2308, %v1492
          %v2349 = vadd.f32 %v2309, %v1603
          %v2350 = vadd.f32 %v2310, %v1605
          %v2351 = vadd.f32 %v2311, %v1716
          %v2352 = vadd.f32 %v2312, %v1718
          %v2353 = vadd.f32 %v2313, %v1829
          %v2354 = vadd.f32 %v2314, %v1831
          %v2355 = vmul.f32 %v1490, %v1490
          %v2356 = vmul.f32 %v1492, %v1492
          %v2357 = vmul.f32 %v1603, %v1603
          %v2358 = vmul.f32 %v1605, %v1605
          %v2359 = vmul.f32 %v1716, %v1716
          %v2360 = vmul.f32 %v1718, %v1718
          %v2361 = vmul.f32 %v1829, %v1829
          %v2362 = vmul.f32 %v1831, %v1831
          %v2363 = vadd.f32 %v2323, %v2355
          %v2364 = vadd.f32 %v2324, %v2356
          %v2365 = vadd.f32 %v2325, %v2357
          %v2366 = vadd.f32 %v2326, %v2358
          %v2367 = vadd.f32 %v2327, %v2359
          %v2368 = vadd.f32 %v2328, %v2360
          %v2369 = vadd.f32 %v2329, %v2361
          %v2370 = vadd.f32 %v2330, %v2362
          %v2371 = vmax.f32 %v2331, %v1490
          %v2372 = vmax.f32 %v2332, %v1492
          %v2373 = vmax.f32 %v2333, %v1603
          %v2374 = vmax.f32 %v2334, %v1605
          %v2375 = vmax.f32 %v2335, %v1716
          %v2376 = vmax.f32 %v2336, %v1718
          %v2377 = vmax.f32 %v2337, %v1829
          %v2378 = vmax.f32 %v2338, %v1831
          %v2379 = vmin.f32 %v2339, %v1490
          %v2380 = vmin.f32 %v2340, %v1492
          %v2381 = vmin.f32 %v2341, %v1603
          %v2382 = vmin.f32 %v2342, %v1605
          %v2383 = vmin.f32 %v2343, %v1716
          %v2384 = vmin.f32 %v2344, %v1718
          %v2385 = vmin.f32 %v2345, %v1829
          %v2386 = vmin.f32 %v2346, %v1831
          %v2387 = vadd.f32 %v2347, %v1496
          %v2388 = vadd.f32 %v2348, %v1498
          %v2389 = vadd.f32 %v2349, %v1609
          %v2390 = vadd.f32 %v2350, %v1611
          %v2391 = vadd.f32 %v2351, %v1722
          %v2392 = vadd.f32 %v2352, %v1724
          %v2393 = vadd.f32 %v2353, %v1835
          %v2394 = vadd.f32 %v2354, %v1837
          %v2395 = vmul.f32 %v1496, %v1496
          %v2396 = vmul.f32 %v1498, %v1498
          %v2397 = vmul.f32 %v1609, %v1609
          %v2398 = vmul.f32 %v1611, %v1611
          %v2399 = vmul.f32 %v1722, %v1722
          %v2400 = vmul.f32 %v1724, %v1724
          %v2401 = vmul.f32 %v1835, %v1835
          %v2402 = vmul.f32 %v1837, %v1837
          %v2403 = vadd.f32 %v2363, %v2395
          %v2404 = vadd.f32 %v2364, %v2396
          %v2405 = vadd.f32 %v2365, %v2397
          %v2406 = vadd.f32 %v2366, %v2398
          %v2407 = vadd.f32 %v2367, %v2399
          %v2408 = vadd.f32 %v2368, %v2400
          %v2409 = vadd.f32 %v2369, %v2401
          %v2410 = vadd.f32 %v2370, %v2402
          %v2411 = vmax.f32 %v2371, %v1496
          %v2412 = vmax.f32 %v2372, %v1498
          %v2413 = vmax.f32 %v2373, %v1609
          %v2414 = vmax.f32 %v2374, %v1611
          %v2415 = vmax.f32 %v2375, %v1722
          %v2416 = vmax.f32 %v2376, %v1724
          %v2417 = vmax.f32 %v2377, %v1835
          %v2418 = vmax.f32 %v2378, %v1837
          %v2419 = vmin.f32 %v2379, %v1496
          %v2420 = vmin.f32 %v2380, %v1498
          %v2421 = vmin.f32 %v2381, %v1609
          %v2422 = vmin.f32 %v2382, %v1611
          %v2423 = vmin.f32 %v2383, %v1722
          %v2424 = vmin.f32 %v2384, %v1724
          %v2425 = vmin.f32 %v2385, %v1835
          %v2426 = vmin.f32 %v2386, %v1837
          %v2427 = vadd.f32 %v2387, %v1500
          %v2428 = vadd.f32 %v2388, %v1502
          %v2429 = vadd.f32 %v2389, %v1613
          %v2430 = vadd.f32 %v2390, %v1615
          %v2431 = vadd.f32 %v2391, %v1726
          %v2432 = vadd.f32 %v2392, %v1728
          %v2433 = vadd.f32 %v2393, %v1839
          %v2434 = vadd.f32 %v2394, %v1841
          %v2435 = vmul.f32 %v1500, %v1500
          %v2436 = vmul.f32 %v1502, %v1502
          %v2437 = vmul.f32 %v1613, %v1613
          %v2438 = vmul.f32 %v1615, %v1615
          %v2439 = vmul.f32 %v1726, %v1726
          %v2440 = vmul.f32 %v1728, %v1728
          %v2441 = vmul.f32 %v1839, %v1839
          %v2442 = vmul.f32 %v1841, %v1841
          %v2443 = vadd.f32 %v2403, %v2435
          %v2444 = vadd.f32 %v2404, %v2436
          %v2445 = vadd.f32 %v2405, %v2437
          %v2446 = vadd.f32 %v2406, %v2438
          %v2447 = vadd.f32 %v2407, %v2439
          %v2448 = vadd.f32 %v2408, %v2440
          %v2449 = vadd.f32 %v2409, %v2441
          %v2450 = vadd.f32 %v2410, %v2442
          %v2451 = vmax.f32 %v2411, %v1500
          %v2452 = vmax.f32 %v2412, %v1502
          %v2453 = vmax.f32 %v2413, %v1613
          %v2454 = vmax.f32 %v2414, %v1615
          %v2455 = vmax.f32 %v2415, %v1726
          %v2456 = vmax.f32 %v2416, %v1728
          %v2457 = vmax.f32 %v2417, %v1839
          %v2458 = vmax.f32 %v2418, %v1841
          %v2459 = vmin.f32 %v2419, %v1500
          %v2460 = vmin.f32 %v2420, %v1502
          %v2461 = vmin.f32 %v2421, %v1613
          %v2462 = vmin.f32 %v2422, %v1615
          %v2463 = vmin.f32 %v2423, %v1726
          %v2464 = vmin.f32 %v2424, %v1728
          %v2465 = vmin.f32 %v2425, %v1839
          %v2466 = vmin.f32 %v2426, %v1841
          %v2467 = vrot.slane %v2427, 4
          %v2468 = vadd.f32 %v2427, %v2467
          %v2469 = vrot.slane %v2468, 2
          %v2470 = vadd.f32 %v2468, %v2469
          %v2471 = vrot.slane %v2470, 1
          %v2472 = vadd.f32 %v2470, %v2471
          %v2473 = vrot.slane %v2428, 4
          %v2474 = vadd.f32 %v2428, %v2473
          %v2475 = vrot.slane %v2474, 2
          %v2476 = vadd.f32 %v2474, %v2475
          %v2477 = vrot.slane %v2476, 1
          %v2478 = vadd.f32 %v2476, %v2477
          %v2479 = vrot.slane %v2429, 4
          %v2480 = vadd.f32 %v2429, %v2479
          %v2481 = vrot.slane %v2480, 2
          %v2482 = vadd.f32 %v2480, %v2481
          %v2483 = vrot.slane %v2482, 1
          %v2484 = vadd.f32 %v2482, %v2483
          %v2485 = vrot.slane %v2430, 4
          %v2486 = vadd.f32 %v2430, %v2485
          %v2487 = vrot.slane %v2486, 2
          %v2488 = vadd.f32 %v2486, %v2487
          %v2489 = vrot.slane %v2488, 1
          %v2490 = vadd.f32 %v2488, %v2489
          %v2491 = vrot.slane %v2431, 4
          %v2492 = vadd.f32 %v2431, %v2491
          %v2493 = vrot.slane %v2492, 2
          %v2494 = vadd.f32 %v2492, %v2493
          %v2495 = vrot.slane %v2494, 1
          %v2496 = vadd.f32 %v2494, %v2495
          %v2497 = vrot.slane %v2432, 4
          %v2498 = vadd.f32 %v2432, %v2497
          %v2499 = vrot.slane %v2498, 2
          %v2500 = vadd.f32 %v2498, %v2499
          %v2501 = vrot.slane %v2500, 1
          %v2502 = vadd.f32 %v2500, %v2501
          %v2503 = vrot.slane %v2433, 4
          %v2504 = vadd.f32 %v2433, %v2503
          %v2505 = vrot.slane %v2504, 2
          %v2506 = vadd.f32 %v2504, %v2505
          %v2507 = vrot.slane %v2506, 1
          %v2508 = vadd.f32 %v2506, %v2507
          %v2509 = vrot.slane %v2434, 4
          %v2510 = vadd.f32 %v2434, %v2509
          %v2511 = vrot.slane %v2510, 2
          %v2512 = vadd.f32 %v2510, %v2511
          %v2513 = vrot.slane %v2512, 1
          %v2514 = vadd.f32 %v2512, %v2513
          %v2515 = vrot.slane %v2443, 4
          %v2516 = vadd.f32 %v2443, %v2515
          %v2517 = vrot.slane %v2516, 2
          %v2518 = vadd.f32 %v2516, %v2517
          %v2519 = vrot.slane %v2518, 1
          %v2520 = vadd.f32 %v2518, %v2519
          %v2521 = vrot.slane %v2444, 4
          %v2522 = vadd.f32 %v2444, %v2521
          %v2523 = vrot.slane %v2522, 2
          %v2524 = vadd.f32 %v2522, %v2523
          %v2525 = vrot.slane %v2524, 1
          %v2526 = vadd.f32 %v2524, %v2525
          %v2527 = vrot.slane %v2445, 4
          %v2528 = vadd.f32 %v2445, %v2527
          %v2529 = vrot.slane %v2528, 2
          %v2530 = vadd.f32 %v2528, %v2529
          %v2531 = vrot.slane %v2530, 1
          %v2532 = vadd.f32 %v2530, %v2531
          %v2533 = vrot.slane %v2446, 4
          %v2534 = vadd.f32 %v2446, %v2533
          %v2535 = vrot.slane %v2534, 2
          %v2536 = vadd.f32 %v2534, %v2535
          %v2537 = vrot.slane %v2536, 1
          %v2538 = vadd.f32 %v2536, %v2537
          %v2539 = vrot.slane %v2447, 4
          %v2540 = vadd.f32 %v2447, %v2539
          %v2541 = vrot.slane %v2540, 2
          %v2542 = vadd.f32 %v2540, %v2541
          %v2543 = vrot.slane %v2542, 1
          %v2544 = vadd.f32 %v2542, %v2543
          %v2545 = vrot.slane %v2448, 4
          %v2546 = vadd.f32 %v2448, %v2545
          %v2547 = vrot.slane %v2546, 2
          %v2548 = vadd.f32 %v2546, %v2547
          %v2549 = vrot.slane %v2548, 1
          %v2550 = vadd.f32 %v2548, %v2549
          %v2551 = vrot.slane %v2449, 4
          %v2552 = vadd.f32 %v2449, %v2551
          %v2553 = vrot.slane %v2552, 2
          %v2554 = vadd.f32 %v2552, %v2553
          %v2555 = vrot.slane %v2554, 1
          %v2556 = vadd.f32 %v2554, %v2555
          %v2557 = vrot.slane %v2450, 4
          %v2558 = vadd.f32 %v2450, %v2557
          %v2559 = vrot.slane %v2558, 2
          %v2560 = vadd.f32 %v2558, %v2559
          %v2561 = vrot.slane %v2560, 1
          %v2562 = vadd.f32 %v2560, %v2561
          %v2563 = vrot.slane %v2451, 4
          %v2564 = vmax.f32 %v2451, %v2563
          %v2565 = vrot.slane %v2564, 2
          %v2566 = vmax.f32 %v2564, %v2565
          %v2567 = vrot.slane %v2566, 1
          %v2568 = vmax.f32 %v2566, %v2567
          %v2569 = vrot.slane %v2452, 4
          %v2570 = vmax.f32 %v2452, %v2569
          %v2571 = vrot.slane %v2570, 2
          %v2572 = vmax.f32 %v2570, %v2571
          %v2573 = vrot.slane %v2572, 1
          %v2574 = vmax.f32 %v2572, %v2573
          %v2575 = vrot.slane %v2453, 4
          %v2576 = vmax.f32 %v2453, %v2575
          %v2577 = vrot.slane %v2576, 2
          %v2578 = vmax.f32 %v2576, %v2577
          %v2579 = vrot.slane %v2578, 1
          %v2580 = vmax.f32 %v2578, %v2579
          %v2581 = vrot.slane %v2454, 4
          %v2582 = vmax.f32 %v2454, %v2581
          %v2583 = vrot.slane %v2582, 2
          %v2584 = vmax.f32 %v2582, %v2583
          %v2585 = vrot.slane %v2584, 1
          %v2586 = vmax.f32 %v2584, %v2585
          %v2587 = vrot.slane %v2455, 4
          %v2588 = vmax.f32 %v2455, %v2587
          %v2589 = vrot.slane %v2588, 2
          %v2590 = vmax.f32 %v2588, %v2589
          %v2591 = vrot.slane %v2590, 1
          %v2592 = vmax.f32 %v2590, %v2591
          %v2593 = vrot.slane %v2456, 4
          %v2594 = vmax.f32 %v2456, %v2593
          %v2595 = vrot.slane %v2594, 2
          %v2596 = vmax.f32 %v2594, %v2595
          %v2597 = vrot.slane %v2596, 1
          %v2598 = vmax.f32 %v2596, %v2597
          %v2599 = vrot.slane %v2457, 4
          %v2600 = vmax.f32 %v2457, %v2599
          %v2601 = vrot.slane %v2600, 2
          %v2602 = vmax.f32 %v2600, %v2601
          %v2603 = vrot.slane %v2602, 1
          %v2604 = vmax.f32 %v2602, %v2603
          %v2605 = vrot.slane %v2458, 4
          %v2606 = vmax.f32 %v2458, %v2605
          %v2607 = vrot.slane %v2606, 2
          %v2608 = vmax.f32 %v2606, %v2607
          %v2609 = vrot.slane %v2608, 1
          %v2610 = vmax.f32 %v2608, %v2609
          %v2611 = vrot.slane %v2459, 4
          %v2612 = vmin.f32 %v2459, %v2611
          %v2613 = vrot.slane %v2612, 2
          %v2614 = vmin.f32 %v2612, %v2613
          %v2615 = vrot.slane %v2614, 1
          %v2616 = vmin.f32 %v2614, %v2615
          %v2617 = vrot.slane %v2460, 4
          %v2618 = vmin.f32 %v2460, %v2617
          %v2619 = vrot.slane %v2618, 2
          %v2620 = vmin.f32 %v2618, %v2619
          %v2621 = vrot.slane %v2620, 1
          %v2622 = vmin.f32 %v2620, %v2621
          %v2623 = vrot.slane %v2461, 4
          %v2624 = vmin.f32 %v2461, %v2623
          %v2625 = vrot.slane %v2624, 2
          %v2626 = vmin.f32 %v2624, %v2625
          %v2627 = vrot.slane %v2626, 1
          %v2628 = vmin.f32 %v2626, %v2627
          %v2629 = vrot.slane %v2462, 4
          %v2630 = vmin.f32 %v2462, %v2629
          %v2631 = vrot.slane %v2630, 2
          %v2632 = vmin.f32 %v2630, %v2631
          %v2633 = vrot.slane %v2632, 1
          %v2634 = vmin.f32 %v2632, %v2633
          %v2635 = vrot.slane %v2463, 4
          %v2636 = vmin.f32 %v2463, %v2635
          %v2637 = vrot.slane %v2636, 2
          %v2638 = vmin.f32 %v2636, %v2637
          %v2639 = vrot.slane %v2638, 1
          %v2640 = vmin.f32 %v2638, %v2639
          %v2641 = vrot.slane %v2464, 4
          %v2642 = vmin.f32 %v2464, %v2641
          %v2643 = vrot.slane %v2642, 2
          %v2644 = vmin.f32 %v2642, %v2643
          %v2645 = vrot.slane %v2644, 1
          %v2646 = vmin.f32 %v2644, %v2645
          %v2647 = vrot.slane %v2465, 4
          %v2648 = vmin.f32 %v2465, %v2647
          %v2649 = vrot.slane %v2648, 2
          %v2650 = vmin.f32 %v2648, %v2649
          %v2651 = vrot.slane %v2650, 1
          %v2652 = vmin.f32 %v2650, %v2651
          %v2653 = vrot.slane %v2466, 4
          %v2654 = vmin.f32 %v2466, %v2653
          %v2655 = vrot.slane %v2654, 2
          %v2656 = vmin.f32 %v2654, %v2655
          %v2657 = vrot.slane %v2656, 1
          %v2658 = vmin.f32 %v2656, %v2657
          %v2659 = vld [vmem:[#allocation4] sm:$0xff]
          %v2668 = vcombine.low %v2472, %v2478
          %v2669 = vcombine.low %v2484, %v2490
          %v2670 = vcombine.low %v2496, %v2502
          %v2671 = vcombine.low %v2508, %v2514
          %v2673 = vunpack.c.l.s4 1966171168
          %v2674 = vunpack.c.0.s8 %v2673
          %v2675 = vlaneseq
          %v2676 = vshrl.u32 %v2675, 7
          %v2677 = vsub.s32 %v2674, %v2676
          %v2678 = vrot.slane %v2668, %v2677
          %v2680 = vunpack.c.l.s4 1966171168
          %v2681 = vunpack.c.0.s8 %v2680
          %v2682 = vlaneseq
          %v2683 = vshrl.u32 %v2682, 7
          %v2684 = vsub.s32 %v2681, %v2683
          %v2685 = vrot.slane %v2669, %v2684
          %v2687 = vunpack.c.l.s4 1966171168
          %v2688 = vunpack.c.0.s8 %v2687
          %v2689 = vlaneseq
          %v2690 = vshrl.u32 %v2689, 7
          %v2691 = vsub.s32 %v2688, %v2690
          %v2692 = vrot.slane %v2670, %v2691
          %v2694 = vunpack.c.l.s4 1966171168
          %v2695 = vunpack.c.0.s8 %v2694
          %v2696 = vlaneseq
          %v2697 = vshrl.u32 %v2696, 7
          %v2698 = vsub.s32 %v2695, %v2697
          %v2699 = vrot.slane %v2671, %v2698
          %v2700 = vcombine.low %v2678, %v2685
          %v2701 = vcombine.low %v2692, %v2699
          %v2703 = vunpack.c.l.s4 1966171168
          %v2704 = vunpack.c.0.s8 %v2703
          %v2705 = vlaneseq
          %v2706 = vshrl.u32 %v2705, 7
          %v2707 = vsub.s32 %v2704, %v2706
          %v2708 = vrot.slane %v2700, %v2707
          %v2710 = vunpack.c.l.s4 1966171168
          %v2711 = vunpack.c.0.s8 %v2710
          %v2712 = vlaneseq
          %v2713 = vshrl.u32 %v2712, 7
          %v2714 = vsub.s32 %v2711, %v2713
          %v2715 = vrot.slane %v2701, %v2714
          %v2716 = vcombine.low %v2708, %v2715
          %v2718 = vadd.f32 %v2659, %v2716
          %2719 = vst [vmem:[#allocation4] sm:$0xff] %v2718
          %v2720 = vld [vmem:[#allocation5] sm:$0xff]
          %v2729 = vcombine.low %v2520, %v2526
          %v2730 = vcombine.low %v2532, %v2538
          %v2731 = vcombine.low %v2544, %v2550
          %v2732 = vcombine.low %v2556, %v2562
          %v2734 = vunpack.c.l.s4 1966171168
          %v2735 = vunpack.c.0.s8 %v2734
          %v2736 = vlaneseq
          %v2737 = vshrl.u32 %v2736, 7
          %v2738 = vsub.s32 %v2735, %v2737
          %v2739 = vrot.slane %v2729, %v2738
          %v2741 = vunpack.c.l.s4 1966171168
          %v2742 = vunpack.c.0.s8 %v2741
          %v2743 = vlaneseq
          %v2744 = vshrl.u32 %v2743, 7
          %v2745 = vsub.s32 %v2742, %v2744
          %v2746 = vrot.slane %v2730, %v2745
          %v2748 = vunpack.c.l.s4 1966171168
          %v2749 = vunpack.c.0.s8 %v2748
          %v2750 = vlaneseq
          %v2751 = vshrl.u32 %v2750, 7
          %v2752 = vsub.s32 %v2749, %v2751
          %v2753 = vrot.slane %v2731, %v2752
          %v2755 = vunpack.c.l.s4 1966171168
          %v2756 = vunpack.c.0.s8 %v2755
          %v2757 = vlaneseq
          %v2758 = vshrl.u32 %v2757, 7
          %v2759 = vsub.s32 %v2756, %v2758
          %v2760 = vrot.slane %v2732, %v2759
          %v2761 = vcombine.low %v2739, %v2746
          %v2762 = vcombine.low %v2753, %v2760
          %v2764 = vunpack.c.l.s4 1966171168
          %v2765 = vunpack.c.0.s8 %v2764
          %v2766 = vlaneseq
          %v2767 = vshrl.u32 %v2766, 7
          %v2768 = vsub.s32 %v2765, %v2767
          %v2769 = vrot.slane %v2761, %v2768
          %v2771 = vunpack.c.l.s4 1966171168
          %v2772 = vunpack.c.0.s8 %v2771
          %v2773 = vlaneseq
          %v2774 = vshrl.u32 %v2773, 7
          %v2775 = vsub.s32 %v2772, %v2774
          %v2776 = vrot.slane %v2762, %v2775
          %v2777 = vcombine.low %v2769, %v2776
          %v2779 = vadd.f32 %v2720, %v2777
          %2780 = vst [vmem:[#allocation5] sm:$0xff] %v2779
          %s2781 = sshra.s32 %s28, 1
          %s2782 = sand.u32 %s28, 1
          %s2783 = sshra.s32 %s28, 1
          %s2784 = sand.u32 %s28, 1
          %s2785 = smul.u32 %s2781, 8
          %s2786 = smul.u32 %s2785, 2
          %s2787 = sadd.s32 %s2786, %s2784
          %s2788 = scalar_lea.vmem [#allocation6], %s2787
          %v2789 = vld [vmem:[%s2788] ss:$2 sm:$0xff]
          %v2798 = vcombine.low %v2568, %v2574
          %v2799 = vcombine.low %v2580, %v2586
          %v2800 = vcombine.low %v2592, %v2598
          %v2801 = vcombine.low %v2604, %v2610
          %v2803 = vunpack.c.l.s4 1966171168
          %v2804 = vunpack.c.0.s8 %v2803
          %v2805 = vlaneseq
          %v2806 = vshrl.u32 %v2805, 7
          %v2807 = vsub.s32 %v2804, %v2806
          %v2808 = vrot.slane %v2798, %v2807
          %v2810 = vunpack.c.l.s4 1966171168
          %v2811 = vunpack.c.0.s8 %v2810
          %v2812 = vlaneseq
          %v2813 = vshrl.u32 %v2812, 7
          %v2814 = vsub.s32 %v2811, %v2813
          %v2815 = vrot.slane %v2799, %v2814
          %v2817 = vunpack.c.l.s4 1966171168
          %v2818 = vunpack.c.0.s8 %v2817
          %v2819 = vlaneseq
          %v2820 = vshrl.u32 %v2819, 7
          %v2821 = vsub.s32 %v2818, %v2820
          %v2822 = vrot.slane %v2800, %v2821
          %v2824 = vunpack.c.l.s4 1966171168
          %v2825 = vunpack.c.0.s8 %v2824
          %v2826 = vlaneseq
          %v2827 = vshrl.u32 %v2826, 7
          %v2828 = vsub.s32 %v2825, %v2827
          %v2829 = vrot.slane %v2801, %v2828
          %v2830 = vcombine.low %v2808, %v2815
          %v2831 = vcombine.low %v2822, %v2829
          %v2833 = vunpack.c.l.s4 1966171168
          %v2834 = vunpack.c.0.s8 %v2833
          %v2835 = vlaneseq
          %v2836 = vshrl.u32 %v2835, 7
          %v2837 = vsub.s32 %v2834, %v2836
          %v2838 = vrot.slane %v2830, %v2837
          %v2840 = vunpack.c.l.s4 1966171168
          %v2841 = vunpack.c.0.s8 %v2840
          %v2842 = vlaneseq
          %v2843 = vshrl.u32 %v2842, 7
          %v2844 = vsub.s32 %v2841, %v2843
          %v2845 = vrot.slane %v2831, %v2844
          %v2846 = vcombine.low %v2838, %v2845
          %v2848 = vmax.f32 %v2789, %v2846
          %2849 = vst [vmem:[%s2788] ss:$2 sm:$0xff] %v2848
          %s2850 = scalar_lea.vmem [#allocation7], %s2787
          %v2851 = vld [vmem:[%s2850] ss:$2 sm:$0xff]
          %v2860 = vcombine.low %v2616, %v2622
          %v2861 = vcombine.low %v2628, %v2634
          %v2862 = vcombine.low %v2640, %v2646
          %v2863 = vcombine.low %v2652, %v2658
          %v2865 = vunpack.c.l.s4 1966171168
          %v2866 = vunpack.c.0.s8 %v2865
          %v2867 = vlaneseq
          %v2868 = vshrl.u32 %v2867, 7
          %v2869 = vsub.s32 %v2866, %v2868
          %v2870 = vrot.slane %v2860, %v2869
          %v2872 = vunpack.c.l.s4 1966171168
          %v2873 = vunpack.c.0.s8 %v2872
          %v2874 = vlaneseq
          %v2875 = vshrl.u32 %v2874, 7
          %v2876 = vsub.s32 %v2873, %v2875
          %v2877 = vrot.slane %v2861, %v2876
          %v2879 = vunpack.c.l.s4 1966171168
          %v2880 = vunpack.c.0.s8 %v2879
          %v2881 = vlaneseq
          %v2882 = vshrl.u32 %v2881, 7
          %v2883 = vsub.s32 %v2880, %v2882
          %v2884 = vrot.slane %v2862, %v2883
          %v2886 = vunpack.c.l.s4 1966171168
          %v2887 = vunpack.c.0.s8 %v2886
          %v2888 = vlaneseq
          %v2889 = vshrl.u32 %v2888, 7
          %v2890 = vsub.s32 %v2887, %v2889
          %v2891 = vrot.slane %v2863, %v2890
          %v2892 = vcombine.low %v2870, %v2877
          %v2893 = vcombine.low %v2884, %v2891
          %v2895 = vunpack.c.l.s4 1966171168
          %v2896 = vunpack.c.0.s8 %v2895
          %v2897 = vlaneseq
          %v2898 = vshrl.u32 %v2897, 7
          %v2899 = vsub.s32 %v2896, %v2898
          %v2900 = vrot.slane %v2892, %v2899
          %v2902 = vunpack.c.l.s4 1966171168
          %v2903 = vunpack.c.0.s8 %v2902
          %v2904 = vlaneseq
          %v2905 = vshrl.u32 %v2904, 7
          %v2906 = vsub.s32 %v2903, %v2905
          %v2907 = vrot.slane %v2893, %v2906
          %v2908 = vcombine.low %v2900, %v2907
          %v2910 = vmin.f32 %v2851, %v2908
          %2911 = vst [vmem:[%s2850] ss:$2 sm:$0xff] %v2910
        $region76: #{_lambda_.3} parent=59 // pred_fallthru
          _
        %p2912 = scmp.eq.s32.totalorder %s28, 1
        %p2913 = pnand %p921, %p2912
        %p2914 = pneg %p2913
        %p2915 = pnand %p2914, %p400
        %p2916 = pneg %p2915
        // Predicated region
        $region77: #{_lambda_.3} parent=59 // pred_check
          _
        $region78: #{_lambda_.3} parent=59 // pred_check_branch
          %2918 = sbr.rel (%p2915) target = $region80
        $region79: #{_lambda_.3} parent=59 // pred_region
          %v2919 = vld [vmem:[#allocation4] sm:$0xff]
          %v2920 = vmul.f32 %v2919, 0.00390625
          %v2921 = vld [vmem:[#allocation5] sm:$0xff]
          %v2922 = vmul.f32 %v2921, 0.00390625
          %v2923 = vmul.f32 %v2920, %v2920
          %v2924 = vsub.f32 %v2922, %v2923
          %v2925 = vmax.f32 %v2924, 0.0
          %v2926 = vld [vmem:[%s8] sm:$0xff]
          %v2927 = vadd.f32 %v2925, 1e-05
          %v2928 = vrsqrt.pop %v2927
          %v2929 = vmul.f32 %v2926, %v2928
          %v2930 = vld [vmem:[%s9] sm:$0xff]
          %v2931 = vmul.f32 %v2920, %v2929
          %v2932 = vsub.f32 %v2930, %v2931
          %vm2933 = vcmp.ge.f32.partialorder %v2929, 0.0
          %v2934 = vld [vmem:[#allocation6] sm:$0xff]
          %v2935 = vld [vmem:[#allocation6 + $0x8] sm:$0xff]
          %v2936 = vld [vmem:[#allocation7] sm:$0xff]
          %v2937 = vld [vmem:[#allocation7 + $0x8] sm:$0xff]
          %v2938 = vsel %vm2933, 1, 0
          %v2939 = vlaneseq
          %v2940 = vshrl.u32 %v2939, 7
          %v2941 = vsub.s32 0, %v2940
          %v2942 = vrot.slane %v2938, %v2941
          %v2943 = vlaneseq
          %v2944 = vshrl.u32 %v2943, 7
          %v2945 = vsub.s32 1, %v2944
          %v2946 = vrot.slane %v2938, %v2945
          %v2947 = vlaneseq
          %v2948 = vshrl.u32 %v2947, 7
          %v2949 = vsub.s32 2, %v2948
          %v2950 = vrot.slane %v2938, %v2949
          %v2951 = vlaneseq
          %v2952 = vshrl.u32 %v2951, 7
          %v2953 = vsub.s32 3, %v2952
          %v2954 = vrot.slane %v2938, %v2953
          %v2955 = vlaneseq
          %v2956 = vshrl.u32 %v2955, 7
          %v2957 = vsub.s32 4, %v2956
          %v2958 = vrot.slane %v2938, %v2957
          %v2959 = vlaneseq
          %v2960 = vshrl.u32 %v2959, 7
          %v2961 = vsub.s32 5, %v2960
          %v2962 = vrot.slane %v2938, %v2961
          %v2963 = vlaneseq
          %v2964 = vshrl.u32 %v2963, 7
          %v2965 = vsub.s32 6, %v2964
          %v2966 = vrot.slane %v2938, %v2965
          %v2967 = vlaneseq
          %v2968 = vshrl.u32 %v2967, 7
          %v2969 = vsub.s32 7, %v2968
          %v2970 = vrot.slane %v2938, %v2969
          %vm2971 = vcmp.eq.s32.totalorder %v2942, 1
          %vm2972 = vcmp.eq.s32.totalorder %v2946, 1
          %vm2973 = vcmp.eq.s32.totalorder %v2950, 1
          %vm2974 = vcmp.eq.s32.totalorder %v2954, 1
          %vm2975 = vcmp.eq.s32.totalorder %v2958, 1
          %vm2976 = vcmp.eq.s32.totalorder %v2962, 1
          %vm2977 = vcmp.eq.s32.totalorder %v2966, 1
          %vm2978 = vcmp.eq.s32.totalorder %v2970, 1
          %v2981 = vcombine.high %v2934, %v2934
          %v2983 = vunpack.c.l.s4 1983009808
          %v2984 = vunpack.c.0.s8 %v2983
          %v2985 = vlaneseq
          %v2986 = vshrl.u32 %v2985, 7
          %v2987 = vsub.s32 %v2984, %v2986
          %v2988 = vrot.slane %v2934, %v2987
          %v2990 = vunpack.c.l.s4 1983009808
          %v2991 = vunpack.c.0.s8 %v2990
          %v2992 = vlaneseq
          %v2993 = vshrl.u32 %v2992, 7
          %v2994 = vsub.s32 %v2991, %v2993
          %v2995 = vrot.slane %v2981, %v2994
          %v2996 = vcombine.high %v2988, %v2988
          %v2997 = vcombine.high %v2995, %v2995
          %v2998 = vcombine.high %v2935, %v2935
          %v3000 = vunpack.c.l.s4 1983009808
          %v3001 = vunpack.c.0.s8 %v3000
          %v3002 = vlaneseq
          %v3003 = vshrl.u32 %v3002, 7
          %v3004 = vsub.s32 %v3001, %v3003
          %v3005 = vrot.slane %v2935, %v3004
          %v3007 = vunpack.c.l.s4 1983009808
          %v3008 = vunpack.c.0.s8 %v3007
          %v3009 = vlaneseq
          %v3010 = vshrl.u32 %v3009, 7
          %v3011 = vsub.s32 %v3008, %v3010
          %v3012 = vrot.slane %v2998, %v3011
          %v3013 = vcombine.high %v3005, %v3005
          %v3014 = vcombine.high %v3012, %v3012
          %v3025 = vcombine.high %v2936, %v2936
          %v3027 = vunpack.c.l.s4 1983009808
          %v3028 = vunpack.c.0.s8 %v3027
          %v3029 = vlaneseq
          %v3030 = vshrl.u32 %v3029, 7
          %v3031 = vsub.s32 %v3028, %v3030
          %v3032 = vrot.slane %v2936, %v3031
          %v3034 = vunpack.c.l.s4 1983009808
          %v3035 = vunpack.c.0.s8 %v3034
          %v3036 = vlaneseq
          %v3037 = vshrl.u32 %v3036, 7
          %v3038 = vsub.s32 %v3035, %v3037
          %v3039 = vrot.slane %v3025, %v3038
          %v3040 = vcombine.high %v3032, %v3032
          %v3041 = vcombine.high %v3039, %v3039
          %v3042 = vcombine.high %v2937, %v2937
          %v3044 = vunpack.c.l.s4 1983009808
          %v3045 = vunpack.c.0.s8 %v3044
          %v3046 = vlaneseq
          %v3047 = vshrl.u32 %v3046, 7
          %v3048 = vsub.s32 %v3045, %v3047
          %v3049 = vrot.slane %v2937, %v3048
          %v3051 = vunpack.c.l.s4 1983009808
          %v3052 = vunpack.c.0.s8 %v3051
          %v3053 = vlaneseq
          %v3054 = vshrl.u32 %v3053, 7
          %v3055 = vsub.s32 %v3052, %v3054
          %v3056 = vrot.slane %v3042, %v3055
          %v3057 = vcombine.high %v3049, %v3049
          %v3058 = vcombine.high %v3056, %v3056
          %v3067 = vsel %vm2971, %v2988, %v3032
          %v3068 = vsel %vm2972, %v2996, %v3040
          %v3069 = vsel %vm2973, %v2995, %v3039
          %v3070 = vsel %vm2974, %v2997, %v3041
          %v3071 = vsel %vm2975, %v3005, %v3049
          %v3072 = vsel %vm2976, %v3013, %v3057
          %v3073 = vsel %vm2977, %v3012, %v3056
          %v3074 = vsel %vm2978, %v3014, %v3058
          %v3076 = vlaneseq
          %v3077 = vshrl.u32 %v3076, 7
          %v3078 = vsub.s32 0, %v3077
          %v3079 = vrot.slane %v2929, %v3078
          %v3080 = vlaneseq
          %v3081 = vshrl.u32 %v3080, 7
          %v3082 = vsub.s32 1, %v3081
          %v3083 = vrot.slane %v2929, %v3082
          %v3084 = vlaneseq
          %v3085 = vshrl.u32 %v3084, 7
          %v3086 = vsub.s32 2, %v3085
          %v3087 = vrot.slane %v2929, %v3086
          %v3088 = vlaneseq
          %v3089 = vshrl.u32 %v3088, 7
          %v3090 = vsub.s32 3, %v3089
          %v3091 = vrot.slane %v2929, %v3090
          %v3092 = vlaneseq
          %v3093 = vshrl.u32 %v3092, 7
          %v3094 = vsub.s32 4, %v3093
          %v3095 = vrot.slane %v2929, %v3094
          %v3096 = vlaneseq
          %v3097 = vshrl.u32 %v3096, 7
          %v3098 = vsub.s32 5, %v3097
          %v3099 = vrot.slane %v2929, %v3098
          %v3100 = vlaneseq
          %v3101 = vshrl.u32 %v3100, 7
          %v3102 = vsub.s32 6, %v3101
          %v3103 = vrot.slane %v2929, %v3102
          %v3104 = vlaneseq
          %v3105 = vshrl.u32 %v3104, 7
          %v3106 = vsub.s32 7, %v3105
          %v3107 = vrot.slane %v2929, %v3106
          %v3116 = vmul.f32 %v3067, %v3079
          %v3117 = vmul.f32 %v3068, %v3083
          %v3118 = vmul.f32 %v3069, %v3087
          %v3119 = vmul.f32 %v3070, %v3091
          %v3120 = vmul.f32 %v3071, %v3095
          %v3121 = vmul.f32 %v3072, %v3099
          %v3122 = vmul.f32 %v3073, %v3103
          %v3123 = vmul.f32 %v3074, %v3107
          %v3125 = vlaneseq
          %v3126 = vshrl.u32 %v3125, 7
          %v3127 = vsub.s32 0, %v3126
          %v3128 = vrot.slane %v2932, %v3127
          %v3129 = vlaneseq
          %v3130 = vshrl.u32 %v3129, 7
          %v3131 = vsub.s32 1, %v3130
          %v3132 = vrot.slane %v2932, %v3131
          %v3133 = vlaneseq
          %v3134 = vshrl.u32 %v3133, 7
          %v3135 = vsub.s32 2, %v3134
          %v3136 = vrot.slane %v2932, %v3135
          %v3137 = vlaneseq
          %v3138 = vshrl.u32 %v3137, 7
          %v3139 = vsub.s32 3, %v3138
          %v3140 = vrot.slane %v2932, %v3139
          %v3141 = vlaneseq
          %v3142 = vshrl.u32 %v3141, 7
          %v3143 = vsub.s32 4, %v3142
          %v3144 = vrot.slane %v2932, %v3143
          %v3145 = vlaneseq
          %v3146 = vshrl.u32 %v3145, 7
          %v3147 = vsub.s32 5, %v3146
          %v3148 = vrot.slane %v2932, %v3147
          %v3149 = vlaneseq
          %v3150 = vshrl.u32 %v3149, 7
          %v3151 = vsub.s32 6, %v3150
          %v3152 = vrot.slane %v2932, %v3151
          %v3153 = vlaneseq
          %v3154 = vshrl.u32 %v3153, 7
          %v3155 = vsub.s32 7, %v3154
          %v3156 = vrot.slane %v2932, %v3155
          %v3165 = vadd.f32 %v3116, %v3128
          %v3166 = vadd.f32 %v3117, %v3132
          %v3167 = vadd.f32 %v3118, %v3136
          %v3168 = vadd.f32 %v3119, %v3140
          %v3169 = vadd.f32 %v3120, %v3144
          %v3170 = vadd.f32 %v3121, %v3148
          %v3171 = vadd.f32 %v3122, %v3152
          %v3172 = vadd.f32 %v3123, %v3156
          %v3173 = vmax.f32 %v3165, 0.0
          %v3174 = vmax.f32 %v3166, 0.0
          %v3175 = vmax.f32 %v3167, 0.0
          %v3176 = vmax.f32 %v3168, 0.0
          %v3177 = vmax.f32 %v3169, 0.0
          %v3178 = vmax.f32 %v3170, 0.0
          %v3179 = vmax.f32 %v3171, 0.0
          %v3180 = vmax.f32 %v3172, 0.0
          %v3189 = vcombine.low %v3173, %v3174
          %v3190 = vcombine.low %v3175, %v3176
          %v3192 = vunpack.c.l.s4 1983009808
          %v3193 = vunpack.c.0.s8 %v3192
          %v3194 = vlaneseq
          %v3195 = vshrl.u32 %v3194, 7
          %v3196 = vsub.s32 %v3193, %v3195
          %v3197 = vrot.slane %v3189, %v3196
          %v3199 = vunpack.c.l.s4 1983009808
          %v3200 = vunpack.c.0.s8 %v3199
          %v3201 = vlaneseq
          %v3202 = vshrl.u32 %v3201, 7
          %v3203 = vsub.s32 %v3200, %v3202
          %v3204 = vrot.slane %v3190, %v3203
          %v3205 = vcombine.low %v3197, %v3204
          %v3206 = vcombine.low %v3177, %v3178
          %v3207 = vcombine.low %v3179, %v3180
          %v3209 = vunpack.c.l.s4 1983009808
          %v3210 = vunpack.c.0.s8 %v3209
          %v3211 = vlaneseq
          %v3212 = vshrl.u32 %v3211, 7
          %v3213 = vsub.s32 %v3210, %v3212
          %v3214 = vrot.slane %v3206, %v3213
          %v3216 = vunpack.c.l.s4 1983009808
          %v3217 = vunpack.c.0.s8 %v3216
          %v3218 = vlaneseq
          %v3219 = vshrl.u32 %v3218, 7
          %v3220 = vsub.s32 %v3217, %v3219
          %v3221 = vrot.slane %v3207, %v3220
          %v3222 = vcombine.low %v3214, %v3221
          %3225 = vst [vmem:[%s10] sm:$0xff] %v3205
          %3226 = vst [vmem:[%s10 + $0x8] sm:$0xff] %v3222
        $region80: #{_lambda_.3} parent=59 // pred_fallthru
          _
        // Predicated region
        $region81: #{_lambda_.3} parent=59 // pred_check
          %p3227 = pneg %p271
        $region82: #{_lambda_.3} parent=59 // pred_check_branch
          %3229 = sbr.rel (%p3227) target = $region84
        $region83: #{_lambda_.3} parent=59 // pred_region
          _
        $region84: #{_lambda_.3} parent=59 // pred_fallthru
          _
        // Predicated region
        $region85: #{_lambda_.3} parent=59 // pred_check
          %p3230 = pneg %p271
        $region86: #{_lambda_.3} parent=59 // pred_check_branch
          %3232 = sbr.rel (%p3230) target = $region88
        $region87: #{_lambda_.3} parent=59 // pred_region
          _
        $region88: #{_lambda_.3} parent=59 // pred_fallthru
          _
      $region60: #{_lambda_.3} parent=5 // pred_fallthru
        _
      %p3233 = scmp.le.s32.totalorder 2, %s17
      // Predicated region
      $region89: #{_lambda_.3} parent=5 // pred_check
        %p3234 = pneg %p3233
      $region90: #{_lambda_.3} parent=5 // pred_check_branch
        %3236 = sbr.rel (%p3234) target = $region92
      $region91: #{_lambda_.3} parent=5 // pred_region
        %s3237 = ssub.s32 %s17, 2
      $region92: #{_lambda_.3} parent=5 // pred_fallthru
        _
    $region6: #{_lambda_.3} parent=1 // loop_footer
      %s21 = sadd.s32 1, %s17
    $region7: #{_lambda_.3} parent=1 // loop_footer_branch
      %16 = sbr.rel target = $region3
    $region8: #{_lambda_.3} parent=1 // loop_exit
      _
    %3238 = vsyncpa [#allocation9], 1
    %s3239 = scalar_lea.sflag [#allocation9], 1
    %3240 = vsyncpa %s3239, 1

// kernel: _lambda_.5
$region0: #{_lambda_.5}
  #allocation0 [shape = 'u32[]', space=smem, size = 0x4, offset = 0x4, fixed_abs, tag = 'smem constant byte address 0x4 - core index']
  #allocation1 [shape = 'u32[144,128]{1,0:T(1,128)}', space=vmem, size = 0x12000, scoped, tag = 'internal scratch']
  #allocation2 [shape = 'f32[1,128]{1,0:T(1,128)}', space=vmem, size = 0x200, scoped, tag = 'scratch operand']
  #allocation3 [shape = 'f32[1,128]{1,0:T(1,128)}', space=vmem, size = 0x200, scoped, tag = 'scratch operand']
  #allocation4 [shape = 'f32[1,1024]{1,0:T(1,128)}', space=vmem, size = 0x1000, scoped, tag = 'scratch operand']
  #allocation5 [shape = 'f32[1,1024]{1,0:T(1,128)}', space=vmem, size = 0x1000, scoped, tag = 'scratch operand']
  #allocation6 [shape = 'f32[2,1024]{1,0:T(2,128)}', space=vmem, size = 0x2000, scoped, tag = 'scratch operand']
  #allocation7 [shape = 'f32[2,1024]{1,0:T(2,128)}', space=vmem, size = 0x2000, scoped, tag = 'scratch operand']
  %s0 = inlined_call_operand.vmem [shape: f32[2,128,2], index: 0, kind: input, shape index: {}]
  %s1 = inlined_call_operand.vmem [shape: f32[2,2,64], index: 1, kind: input, shape index: {}]
  %s2 = inlined_call_operand.vmem [shape: bf16[64,128], index: 2, kind: input, shape index: {}]
  %s3 = inlined_call_operand.vmem [shape: bf16[128,1024], index: 3, kind: input, shape index: {}]
  %s4 = inlined_call_operand.vmem [shape: f32[1,64], index: 4, kind: input, shape index: {}]
  %s5 = inlined_call_operand.vmem [shape: f32[1,64], index: 5, kind: input, shape index: {}]
  %s6 = inlined_call_operand.vmem [shape: f32[1,128], index: 6, kind: input, shape index: {}]
  %s7 = inlined_call_operand.vmem [shape: f32[1,128], index: 7, kind: input, shape index: {}]
  %s8 = inlined_call_operand.vmem [shape: f32[1,1024], index: 8, kind: input, shape index: {}]
  %s9 = inlined_call_operand.vmem [shape: f32[1,1024], index: 9, kind: input, shape index: {}]
  %s10 = inlined_call_operand.hbm [shape: f32[2,1024], index: 10, kind: output, shape index: {}]
  %s11 = sld [smem:[#allocation0]]
  $region89: #{_lambda_.5} parent=0
    _
  %s13 = ssub.s32 1, %s11
  %s14 = scalar_select 0, %s13, %s11
  $region1: #{_lambda_.5} parent=0
    #allocation8 [shape = 'u8[8192]{0}', space=vmem, size = 0x2000, scoped, tag = 'output window, operand 0, single buffered']
    #allocation9 [shape = 's32[2]{0}', space=sflag, size = 0x8, scoped, tag = 'scoped memory for _lambda_.5']
    %15 = vsyncpa [#allocation9], 0
    loop: start=0, step=1, limit=6
    $region2: #{_lambda_.5} parent=1 // loop_pre_header
      _
    $region3: #{_lambda_.5} parent=1 // loop_header
      %s17 = sphi 0, %s21
      %p18 = scmp.ge.s32.totalorder %s17, 6
      %s24 = sphi 0, %s43
      %s25 = sphi 0, %s39
      %s26 = sphi 0, %s35
      %s27 = sphi 0, %s24
      %s28 = sphi 0, %s25
      %s29 = sphi 0, %s26
      %s30 = sphi 0, %s27
      %s31 = sphi 0, %s28
      %s32 = sphi 0, %s29
      %s48 = sphi 0, %s50
      %s51 = sphi 0, %s48
      %s52 = sphi 0, %s51
      %s68 = sphi 0, %s52
      %s74 = sphi 0, %s76
      %s77 = sphi 0, %s74
      %s78 = sphi 0, %s77
      %s94 = sphi 0, %s78
      %s98 = sphi 0, %s98
      %s100 = sphi 0, %s98
      %s101 = sphi 0, %s100
      %s115 = sphi 0, %s101
      %s119 = sphi 0, %s119
      %s121 = sphi 0, %s119
      %s122 = sphi 0, %s121
      %s136 = sphi 0, %s122
      %s140 = sphi 0, %s140
      %s142 = sphi 0, %s140
      %s143 = sphi 0, %s142
      %s157 = sphi 0, %s143
      %s161 = sphi 0, %s161
      %s163 = sphi 0, %s161
      %s164 = sphi 0, %s163
      %s178 = sphi 0, %s164
      %s182 = sphi 0, %s182
      %s184 = sphi 0, %s182
      %s185 = sphi 0, %s184
      %s199 = sphi 0, %s185
      %s203 = sphi 0, %s203
      %s205 = sphi 0, %s203
      %s206 = sphi 0, %s205
      %s220 = sphi 0, %s206
      %s224 = sphi 0, %s224
      %s226 = sphi 0, %s224
      %s227 = sphi 0, %s226
      %s241 = sphi 0, %s227
      %s245 = sphi 0, %s245
      %s247 = sphi 0, %s245
      %s248 = sphi 0, %s247
      %s262 = sphi 0, %s248
      %s266 = sphi 0, %s266
      %s268 = sphi 0, %s266
      %s269 = sphi 0, %s268
      %s283 = sphi 0, %s269
    $region4: #{_lambda_.5} parent=1 // loop_header_branch
      %20 = sbr.rel (%p18) target = $region8
    $region5: #{_lambda_.5} parent=1 // loop_body
      %s22 = ssub.s32 %s17, 1
      %s23 = ssub.s32 %s17, 2
      %s33 = sadd.s32 1, %s26
      %p34 = scmp.ge.s32.totalorder %s33, 1
      %s35 = scalar_select %p34, 0, %s33
      %s36 = sadd.s32 1, %s25
      %s37 = scalar_select %p34, %s36, %s25
      %p38 = scmp.ge.s32.totalorder %s37, 2
      %s39 = scalar_select %p38, 0, %s37
      %s40 = sadd.s32 1, %s24
      %s41 = scalar_select %p38, %s40, %s24
      %p42 = scmp.ge.s32.totalorder %s41, 2
      %s43 = scalar_select %p42, 0, %s41
      %s44 = ssub.s32 %s25, %s39
      %s45 = ssub.s32 %s26, %s35
      %s46 = sor.u32 %s44, %s45
      %p47 = scmp.eq.s32.totalorder %s46, 0
      %s49 = sadd.s32 %s48, 1
      %s50 = scalar_select %p47, %s48, %s49
      %p53 = pneg %p47
      %p54 = scmp.eq.s32.totalorder %s17, 3
      %p55 = por %p53, %p54
      %p56 = scmp.ne.s32.totalorder %s48, %s51
      %p57 = scmp.eq.s32.totalorder %s17, 0
      %p58 = por %p56, %p57
      %p59 = scmp.ne.s32.totalorder %s48, %s51
      %p60 = scmp.eq.s32.totalorder %s22, 3
      %p61 = por %p59, %p60
      %p62 = scmp.ne.s32.totalorder %s51, %s52
      %p63 = scmp.eq.s32.totalorder %s22, 0
      %p64 = por %p62, %p63
      %p65 = scmp.ne.s32.totalorder %s51, %s52
      %p66 = scmp.eq.s32.totalorder %s23, 3
      %p67 = por %p65, %p66
      %p69 = scmp.ne.s32.totalorder %s52, %s68
      %p70 = scmp.eq.s32.totalorder %s23, 0
      %p71 = por %p69, %p70
      %s72 = ssub.s32 %s25, %s39
      %p73 = scmp.eq.s32.totalorder %s72, 0
      %s75 = sadd.s32 %s74, 1
      %s76 = scalar_select %p73, %s74, %s75
      %p79 = pneg %p73
      %p80 = scmp.eq.s32.totalorder %s17, 3
      %p81 = por %p79, %p80
      %p82 = scmp.ne.s32.totalorder %s74, %s77
      %p83 = scmp.eq.s32.totalorder %s17, 0
      %p84 = por %p82, %p83
      %p85 = scmp.ne.s32.totalorder %s74, %s77
      %p86 = scmp.eq.s32.totalorder %s22, 3
      %p87 = por %p85, %p86
      %p88 = scmp.ne.s32.totalorder %s77, %s78
      %p89 = scmp.eq.s32.totalorder %s22, 0
      %p90 = por %p88, %p89
      %p91 = scmp.ne.s32.totalorder %s77, %s78
      %p92 = scmp.eq.s32.totalorder %s23, 3
      %p93 = por %p91, %p92
      %p95 = scmp.ne.s32.totalorder %s78, %s94
      %p96 = scmp.eq.s32.totalorder %s23, 0
      %p97 = por %p95, %p96
      %s99 = sadd.s32 %s98, 1
      %p102 = scmp.eq.s32.totalorder %s17, 3
      %p103 = scmp.ne.s32.totalorder %s98, %s100
      %p104 = scmp.eq.s32.totalorder %s17, 0
      %p105 = por %p103, %p104
      %p106 = scmp.ne.s32.totalorder %s98, %s100
      %p107 = scmp.eq.s32.totalorder %s22, 3
      %p108 = por %p106, %p107
      %p109 = scmp.ne.s32.totalorder %s100, %s101
      %p110 = scmp.eq.s32.totalorder %s22, 0
      %p111 = por %p109, %p110
      %p112 = scmp.ne.s32.totalorder %s100, %s101
      %p113 = scmp.eq.s32.totalorder %s23, 3
      %p114 = por %p112, %p113
      %p116 = scmp.ne.s32.totalorder %s101, %s115
      %p117 = scmp.eq.s32.totalorder %s23, 0
      %p118 = por %p116, %p117
      %s120 = sadd.s32 %s119, 1
      %p123 = scmp.eq.s32.totalorder %s17, 3
      %p124 = scmp.ne.s32.totalorder %s119, %s121
      %p125 = scmp.eq.s32.totalorder %s17, 0
      %p126 = por %p124, %p125
      %p127 = scmp.ne.s32.totalorder %s119, %s121
      %p128 = scmp.eq.s32.totalorder %s22, 3
      %p129 = por %p127, %p128
      %p130 = scmp.ne.s32.totalorder %s121, %s122
      %p131 = scmp.eq.s32.totalorder %s22, 0
      %p132 = por %p130, %p131
      %p133 = scmp.ne.s32.totalorder %s121, %s122
      %p134 = scmp.eq.s32.totalorder %s23, 3
      %p135 = por %p133, %p134
      %p137 = scmp.ne.s32.totalorder %s122, %s136
      %p138 = scmp.eq.s32.totalorder %s23, 0
      %p139 = por %p137, %p138
      %s141 = sadd.s32 %s140, 1
      %p144 = scmp.eq.s32.totalorder %s17, 3
      %p145 = scmp.ne.s32.totalorder %s140, %s142
      %p146 = scmp.eq.s32.totalorder %s17, 0
      %p147 = por %p145, %p146
      %p148 = scmp.ne.s32.totalorder %s140, %s142
      %p149 = scmp.eq.s32.totalorder %s22, 3
      %p150 = por %p148, %p149
      %p151 = scmp.ne.s32.totalorder %s142, %s143
      %p152 = scmp.eq.s32.totalorder %s22, 0
      %p153 = por %p151, %p152
      %p154 = scmp.ne.s32.totalorder %s142, %s143
      %p155 = scmp.eq.s32.totalorder %s23, 3
      %p156 = por %p154, %p155
      %p158 = scmp.ne.s32.totalorder %s143, %s157
      %p159 = scmp.eq.s32.totalorder %s23, 0
      %p160 = por %p158, %p159
      %s162 = sadd.s32 %s161, 1
      %p165 = scmp.eq.s32.totalorder %s17, 3
      %p166 = scmp.ne.s32.totalorder %s161, %s163
      %p167 = scmp.eq.s32.totalorder %s17, 0
      %p168 = por %p166, %p167
      %p169 = scmp.ne.s32.totalorder %s161, %s163
      %p170 = scmp.eq.s32.totalorder %s22, 3
      %p171 = por %p169, %p170
      %p172 = scmp.ne.s32.totalorder %s163, %s164
      %p173 = scmp.eq.s32.totalorder %s22, 0
      %p174 = por %p172, %p173
      %p175 = scmp.ne.s32.totalorder %s163, %s164
      %p176 = scmp.eq.s32.totalorder %s23, 3
      %p177 = por %p175, %p176
      %p179 = scmp.ne.s32.totalorder %s164, %s178
      %p180 = scmp.eq.s32.totalorder %s23, 0
      %p181 = por %p179, %p180
      %s183 = sadd.s32 %s182, 1
      %p186 = scmp.eq.s32.totalorder %s17, 3
      %p187 = scmp.ne.s32.totalorder %s182, %s184
      %p188 = scmp.eq.s32.totalorder %s17, 0
      %p189 = por %p187, %p188
      %p190 = scmp.ne.s32.totalorder %s182, %s184
      %p191 = scmp.eq.s32.totalorder %s22, 3
      %p192 = por %p190, %p191
      %p193 = scmp.ne.s32.totalorder %s184, %s185
      %p194 = scmp.eq.s32.totalorder %s22, 0
      %p195 = por %p193, %p194
      %p196 = scmp.ne.s32.totalorder %s184, %s185
      %p197 = scmp.eq.s32.totalorder %s23, 3
      %p198 = por %p196, %p197
      %p200 = scmp.ne.s32.totalorder %s185, %s199
      %p201 = scmp.eq.s32.totalorder %s23, 0
      %p202 = por %p200, %p201
      %s204 = sadd.s32 %s203, 1
      %p207 = scmp.eq.s32.totalorder %s17, 3
      %p208 = scmp.ne.s32.totalorder %s203, %s205
      %p209 = scmp.eq.s32.totalorder %s17, 0
      %p210 = por %p208, %p209
      %p211 = scmp.ne.s32.totalorder %s203, %s205
      %p212 = scmp.eq.s32.totalorder %s22, 3
      %p213 = por %p211, %p212
      %p214 = scmp.ne.s32.totalorder %s205, %s206
      %p215 = scmp.eq.s32.totalorder %s22, 0
      %p216 = por %p214, %p215
      %p217 = scmp.ne.s32.totalorder %s205, %s206
      %p218 = scmp.eq.s32.totalorder %s23, 3
      %p219 = por %p217, %p218
      %p221 = scmp.ne.s32.totalorder %s206, %s220
      %p222 = scmp.eq.s32.totalorder %s23, 0
      %p223 = por %p221, %p222
      %s225 = sadd.s32 %s224, 1
      %p228 = scmp.eq.s32.totalorder %s17, 3
      %p229 = scmp.ne.s32.totalorder %s224, %s226
      %p230 = scmp.eq.s32.totalorder %s17, 0
      %p231 = por %p229, %p230
      %p232 = scmp.ne.s32.totalorder %s224, %s226
      %p233 = scmp.eq.s32.totalorder %s22, 3
      %p234 = por %p232, %p233
      %p235 = scmp.ne.s32.totalorder %s226, %s227
      %p236 = scmp.eq.s32.totalorder %s22, 0
      %p237 = por %p235, %p236
      %p238 = scmp.ne.s32.totalorder %s226, %s227
      %p239 = scmp.eq.s32.totalorder %s23, 3
      %p240 = por %p238, %p239
      %p242 = scmp.ne.s32.totalorder %s227, %s241
      %p243 = scmp.eq.s32.totalorder %s23, 0
      %p244 = por %p242, %p243
      %s246 = sadd.s32 %s245, 1
      %p249 = scmp.eq.s32.totalorder %s17, 3
      %p250 = scmp.ne.s32.totalorder %s245, %s247
      %p251 = scmp.eq.s32.totalorder %s17, 0
      %p252 = por %p250, %p251
      %p253 = scmp.ne.s32.totalorder %s245, %s247
      %p254 = scmp.eq.s32.totalorder %s22, 3
      %p255 = por %p253, %p254
      %p256 = scmp.ne.s32.totalorder %s247, %s248
      %p257 = scmp.eq.s32.totalorder %s22, 0
      %p258 = por %p256, %p257
      %p259 = scmp.ne.s32.totalorder %s247, %s248
      %p260 = scmp.eq.s32.totalorder %s23, 3
      %p261 = por %p259, %p260
      %p263 = scmp.ne.s32.totalorder %s248, %s262
      %p264 = scmp.eq.s32.totalorder %s23, 0
      %p265 = por %p263, %p264
      %s267 = sadd.s32 %s266, 1
      %p270 = scmp.eq.s32.totalorder %s17, 3
      %p271 = scmp.ne.s32.totalorder %s266, %s268
      %p272 = scmp.eq.s32.totalorder %s17, 0
      %p273 = por %p271, %p272
      %p274 = scmp.ne.s32.totalorder %s266, %s268
      %p275 = scmp.eq.s32.totalorder %s22, 3
      %p276 = por %p274, %p275
      %p277 = scmp.ne.s32.totalorder %s268, %s269
      %p278 = scmp.eq.s32.totalorder %s22, 0
      %p279 = por %p277, %p278
      %p280 = scmp.ne.s32.totalorder %s268, %s269
      %p281 = scmp.eq.s32.totalorder %s23, 3
      %p282 = por %p280, %p281
      %p284 = scmp.ne.s32.totalorder %s269, %s283
      %p285 = scmp.eq.s32.totalorder %s23, 0
      %p286 = por %p284, %p285
      %p287 = scmp.le.s32.totalorder 1, %s17
      %p288 = scmp.lt.s32.totalorder %s17, 5
      %p289 = pnand %p287, %p288
      %p290 = pneg %p289
      // Predicated region
      $region9: #{_lambda_.5} parent=5 // pred_check
        _
      $region10: #{_lambda_.5} parent=5 // pred_check_branch
        %292 = sbr.rel (%p289) target = $region12
      $region11: #{_lambda_.5} parent=5 // pred_region
        %s293 = ssub.s32 %s17, 1
        // Predicated region
        $region13: #{_lambda_.5} parent=11 // pred_check
          %p294 = pneg %p111
        $region14: #{_lambda_.5} parent=11 // pred_check_branch
          %296 = sbr.rel (%p294) target = $region16
        $region15: #{_lambda_.5} parent=11 // pred_region
          _
        $region16: #{_lambda_.5} parent=11 // pred_fallthru
          _
        // Predicated region
        $region17: #{_lambda_.5} parent=11 // pred_check
          %p297 = pneg %p132
        $region18: #{_lambda_.5} parent=11 // pred_check_branch
          %299 = sbr.rel (%p297) target = $region20
        $region19: #{_lambda_.5} parent=11 // pred_region
          _
        $region20: #{_lambda_.5} parent=11 // pred_fallthru
          _
        // Predicated region
        $region21: #{_lambda_.5} parent=11 // pred_check
          %p300 = pneg %p153
        $region22: #{_lambda_.5} parent=11 // pred_check_branch
          %302 = sbr.rel (%p300) target = $region24
        $region23: #{_lambda_.5} parent=11 // pred_region
          _
        $region24: #{_lambda_.5} parent=11 // pred_fallthru
          _
        // Predicated region
        $region25: #{_lambda_.5} parent=11 // pred_check
          %p303 = pneg %p174
        $region26: #{_lambda_.5} parent=11 // pred_check_branch
          %305 = sbr.rel (%p303) target = $region28
        $region27: #{_lambda_.5} parent=11 // pred_region
          _
        $region28: #{_lambda_.5} parent=11 // pred_fallthru
          _
        // Predicated region
        $region29: #{_lambda_.5} parent=11 // pred_check
          %p306 = pneg %p195
        $region30: #{_lambda_.5} parent=11 // pred_check_branch
          %308 = sbr.rel (%p306) target = $region32
        $region31: #{_lambda_.5} parent=11 // pred_region
          _
        $region32: #{_lambda_.5} parent=11 // pred_fallthru
          _
        // Predicated region
        $region33: #{_lambda_.5} parent=11 // pred_check
          %p309 = pneg %p216
        $region34: #{_lambda_.5} parent=11 // pred_check_branch
          %311 = sbr.rel (%p309) target = $region36
        $region35: #{_lambda_.5} parent=11 // pred_region
          _
        $region36: #{_lambda_.5} parent=11 // pred_fallthru
          _
        // Predicated region
        $region37: #{_lambda_.5} parent=11 // pred_check
          %p312 = pneg %p237
        $region38: #{_lambda_.5} parent=11 // pred_check_branch
          %314 = sbr.rel (%p312) target = $region40
        $region39: #{_lambda_.5} parent=11 // pred_region
          _
        $region40: #{_lambda_.5} parent=11 // pred_fallthru
          _
        // Predicated region
        $region41: #{_lambda_.5} parent=11 // pred_check
          %p315 = pneg %p258
        $region42: #{_lambda_.5} parent=11 // pred_check_branch
          %317 = sbr.rel (%p315) target = $region44
        $region43: #{_lambda_.5} parent=11 // pred_region
          _
        $region44: #{_lambda_.5} parent=11 // pred_fallthru
          _
      $region12: #{_lambda_.5} parent=5 // pred_fallthru
        _
      %p318 = scmp.lt.s32.totalorder %s17, 4
      // Predicated region
      $region45: #{_lambda_.5} parent=5 // pred_check
        %p319 = pneg %p318
      $region46: #{_lambda_.5} parent=5 // pred_check_branch
        %321 = sbr.rel (%p319) target = $region48
      $region47: #{_lambda_.5} parent=5 // pred_region
        // Predicated region
        $region49: #{_lambda_.5} parent=47 // pred_check
          %p322 = pneg %p58
        $region50: #{_lambda_.5} parent=47 // pred_check_branch
          %324 = sbr.rel (%p322) target = $region52
        $region51: #{_lambda_.5} parent=47 // pred_region
          %s325 = smul.u32 16, %s26
          %p326 = scmp.lt.s32.totalorder %s25, 1
          %s327 = scalar_select %p326, %s25, 1
          %p328 = scmp.lt.s32.totalorder %s325, 15
          %s329 = scalar_select %p328, %s325, 15
          %s330 = smul.addr %s327, 16
          %s331 = sadd.s32 %s329, %s330
          %s332 = smul.addr %s331, 8
          %s333 = scalar_lea.vmem %s0, %s332
          %s334 = smul.u32 16, %s26
        $region52: #{_lambda_.5} parent=47 // pred_fallthru
          _
        // Predicated region
        $region53: #{_lambda_.5} parent=47 // pred_check
          %p335 = pneg %p84
        $region54: #{_lambda_.5} parent=47 // pred_check_branch
          %337 = sbr.rel (%p335) target = $region56
        $region55: #{_lambda_.5} parent=47 // pred_region
          %p338 = scmp.lt.s32.totalorder %s25, 1
          %s339 = scalar_select %p338, %s25, 1
          %s340 = smul.addr %s339, 2
          %s341 = scalar_lea.vmem %s1, %s340
        $region56: #{_lambda_.5} parent=47 // pred_fallthru
          _
      $region48: #{_lambda_.5} parent=5 // pred_fallthru
        _
      %p342 = scmp.le.s32.totalorder 1, %s17
      %p343 = scmp.lt.s32.totalorder %s17, 5
      %p344 = pnand %p342, %p343
      %p345 = pneg %p344
      // Predicated region
      $region57: #{_lambda_.5} parent=5 // pred_check
        _
      $region58: #{_lambda_.5} parent=5 // pred_check_branch
        %347 = sbr.rel (%p344) target = $region60
      $region59: #{_lambda_.5} parent=5 // pred_region
        %s348 = ssub.s32 %s17, 1
        %s349 = smul.u32 16, %s29
        %p350 = scmp.lt.s32.totalorder %s28, 1
        %s351 = scalar_select %p350, %s28, 1
        %p352 = scmp.lt.s32.totalorder %s349, 15
        %s353 = scalar_select %p352, %s349, 15
        %s354 = smul.addr %s351, 16
        %s355 = sadd.s32 %s353, %s354
        %s356 = smul.addr %s355, 8
        %s357 = scalar_lea.vmem %s0, %s356
        %p358 = pneg %p64
        %p359 = pneg %p61
        %p360 = scmp.lt.s32.totalorder %s28, 1
        %s361 = scalar_select %p360, %s28, 1
        %s362 = smul.addr %s361, 2
        %s363 = scalar_lea.vmem %s1, %s362
        %p364 = pneg %p90
        %p365 = pneg %p87
        %p366 = pneg %p111
        %p367 = pneg %p108
        %p368 = pneg %p132
        %p369 = pneg %p129
        %p370 = pneg %p153
        %p371 = pneg %p150
        %p372 = pneg %p174
        %p373 = pneg %p171
        %p374 = pneg %p195
        %p375 = pneg %p192
        %p376 = pneg %p216
        %p377 = pneg %p213
        %p378 = pneg %p237
        %p379 = pneg %p234
        %p380 = pneg %p258
        %p381 = pneg %p255
        %p382 = pneg %p279
        %p383 = pneg %p276
        %s384 = smul.u32 16, %s29
        %p385 = scmp.lt.s32.totalorder %s28, 1
        %s386 = scalar_select %p385, %s28, 1
        %p387 = scmp.lt.s32.totalorder %s384, 15
        %s388 = scalar_select %p387, %s384, 15
        %s389 = smul.addr %s386, 16
        %s390 = sadd.s32 %s388, %s389
        %s391 = smul.addr %s390, 8
        %s392 = scalar_lea.vmem %s0, %s391
        %s393 = smul.u32 16, %s29
        %p394 = scmp.lt.s32.totalorder %s28, 1
        %s395 = scalar_select %p394, %s28, 1
        %s396 = smul.addr %s395, 2
        %s397 = scalar_lea.vmem %s1, %s396
        %p399 = scmp.eq.s32.totalorder %s27, 0
        %p400 = scmp.eq.s32.totalorder %s28, 0
        %p401 = pnand %p399, %p400
        %p402 = pneg %p401
        %p403 = scmp.eq.s32.totalorder %s29, 0
        %p404 = pnand %p402, %p403
        %p405 = pneg %p404
        // Predicated region
        $region61: #{_lambda_.5} parent=59 // pred_check
          _
        $region62: #{_lambda_.5} parent=59 // pred_check_branch
          %407 = sbr.rel (%p404) target = $region64
        $region63: #{_lambda_.5} parent=59 // pred_region
          %408 = vst [vmem:[#allocation2] sm:$0x1] 0.0
          %409 = vst [vmem:[#allocation3] sm:$0x1] 0.0
          %410 = vst [vmem:[#allocation4] sm:$0xff] 0.0
          %411 = vst [vmem:[#allocation5] sm:$0xff] 0.0
          %412 = vst [vmem:[#allocation6] sm:$0xff] -inf
          %413 = vst [vmem:[#allocation6 + $0x8] sm:$0xff] -inf
          %414 = vst [vmem:[#allocation7] sm:$0xff] inf
          %415 = vst [vmem:[#allocation7 + $0x8] sm:$0xff] inf
        $region64: #{_lambda_.5} parent=59 // pred_fallthru
          _
        %v416 = vld [vmem:[%s392] sm:$0xff]
        %v417 = vld [vmem:[%s392 + $0x8] sm:$0xff]
        %v418 = vld [vmem:[%s392 + $0x10] sm:$0xff]
        %v419 = vld [vmem:[%s392 + $0x18] sm:$0xff]
        %v420 = vld [vmem:[%s392 + $0x20] sm:$0xff]
        %v421 = vld [vmem:[%s392 + $0x28] sm:$0xff]
        %v422 = vld [vmem:[%s392 + $0x30] sm:$0xff]
        %v423 = vld [vmem:[%s392 + $0x38] sm:$0xff]
        %v424 = vld [vmem:[%s392 + $0x40] sm:$0xff]
        %v425 = vld [vmem:[%s392 + $0x48] sm:$0xff]
        %v426 = vld [vmem:[%s392 + $0x50] sm:$0xff]
        %v427 = vld [vmem:[%s392 + $0x58] sm:$0xff]
        %v428 = vld [vmem:[%s392 + $0x60] sm:$0xff]
        %v429 = vld [vmem:[%s392 + $0x68] sm:$0xff]
        %v430 = vld [vmem:[%s392 + $0x70] sm:$0xff]
        %v431 = vld [vmem:[%s392 + $0x78] sm:$0xff]
        %v432 = vld [vmem:[%s397] sm:$0x3]
        %434 = vset.pattern.permute.xlu0 0
        %435 = vperm.xlu0 %434, %v416
        %v436 = vpop.permute.xlu0 %435
        %439 = vset.pattern.permute.xlu0 0
        %440 = vperm.xlu0 %439, %v417
        %v441 = vpop.permute.xlu0 %440
        %444 = vset.pattern.permute.xlu0 0
        %445 = vperm.xlu0 %444, %v418
        %v446 = vpop.permute.xlu0 %445
        %449 = vset.pattern.permute.xlu0 0
        %450 = vperm.xlu0 %449, %v419
        %v451 = vpop.permute.xlu0 %450
        %454 = vset.pattern.permute.xlu0 0
        %455 = vperm.xlu0 %454, %v420
        %v456 = vpop.permute.xlu0 %455
        %459 = vset.pattern.permute.xlu0 0
        %460 = vperm.xlu0 %459, %v421
        %v461 = vpop.permute.xlu0 %460
        %464 = vset.pattern.permute.xlu0 0
        %465 = vperm.xlu0 %464, %v422
        %v466 = vpop.permute.xlu0 %465
        %469 = vset.pattern.permute.xlu0 0
        %470 = vperm.xlu0 %469, %v423
        %v471 = vpop.permute.xlu0 %470
        %474 = vset.pattern.permute.xlu0 0
        %475 = vperm.xlu0 %474, %v424
        %v476 = vpop.permute.xlu0 %475
        %479 = vset.pattern.permute.xlu0 0
        %480 = vperm.xlu0 %479, %v425
        %v481 = vpop.permute.xlu0 %480
        %484 = vset.pattern.permute.xlu0 0
        %485 = vperm.xlu0 %484, %v426
        %v486 = vpop.permute.xlu0 %485
        %489 = vset.pattern.permute.xlu0 0
        %490 = vperm.xlu0 %489, %v427
        %v491 = vpop.permute.xlu0 %490
        %494 = vset.pattern.permute.xlu0 0
        %495 = vperm.xlu0 %494, %v428
        %v496 = vpop.permute.xlu0 %495
        %499 = vset.pattern.permute.xlu0 0
        %500 = vperm.xlu0 %499, %v429
        %v501 = vpop.permute.xlu0 %500
        %504 = vset.pattern.permute.xlu0 0
        %505 = vperm.xlu0 %504, %v430
        %v506 = vpop.permute.xlu0 %505
        %509 = vset.pattern.permute.xlu0 0
        %510 = vperm.xlu0 %509, %v431
        %v511 = vpop.permute.xlu0 %510
        %v513 = vlaneseq
        %v514 = vshrl.u32 %v513, 7
        %v515 = vsub.s32 0, %v514
        %v516 = vrot.slane %v432, %v515
        %v517 = vmul.f32 %v436, %v516
        %v518 = vmul.f32 %v441, %v516
        %v519 = vmul.f32 %v446, %v516
        %v520 = vmul.f32 %v451, %v516
        %v521 = vmul.f32 %v456, %v516
        %v522 = vmul.f32 %v461, %v516
        %v523 = vmul.f32 %v466, %v516
        %v524 = vmul.f32 %v471, %v516
        %v525 = vmul.f32 %v476, %v516
        %v526 = vmul.f32 %v481, %v516
        %v527 = vmul.f32 %v486, %v516
        %v528 = vmul.f32 %v491, %v516
        %v529 = vmul.f32 %v496, %v516
        %v530 = vmul.f32 %v501, %v516
        %v531 = vmul.f32 %v506, %v516
        %v532 = vmul.f32 %v511, %v516
        %533 = vset.pattern.permute.xlu0 1
        %534 = vperm.xlu0 %533, %v416
        %v535 = vpop.permute.xlu0 %534
        %537 = vset.pattern.permute.xlu0 1
        %538 = vperm.xlu0 %537, %v417
        %v539 = vpop.permute.xlu0 %538
        %541 = vset.pattern.permute.xlu0 1
        %542 = vperm.xlu0 %541, %v418
        %v543 = vpop.permute.xlu0 %542
        %545 = vset.pattern.permute.xlu0 1
        %546 = vperm.xlu0 %545, %v419
        %v547 = vpop.permute.xlu0 %546
        %549 = vset.pattern.permute.xlu0 1
        %550 = vperm.xlu0 %549, %v420
        %v551 = vpop.permute.xlu0 %550
        %553 = vset.pattern.permute.xlu0 1
        %554 = vperm.xlu0 %553, %v421
        %v555 = vpop.permute.xlu0 %554
        %557 = vset.pattern.permute.xlu0 1
        %558 = vperm.xlu0 %557, %v422
        %v559 = vpop.permute.xlu0 %558
        %561 = vset.pattern.permute.xlu0 1
        %562 = vperm.xlu0 %561, %v423
        %v563 = vpop.permute.xlu0 %562
        %565 = vset.pattern.permute.xlu0 1
        %566 = vperm.xlu0 %565, %v424
        %v567 = vpop.permute.xlu0 %566
        %569 = vset.pattern.permute.xlu0 1
        %570 = vperm.xlu0 %569, %v425
        %v571 = vpop.permute.xlu0 %570
        %573 = vset.pattern.permute.xlu0 1
        %574 = vperm.xlu0 %573, %v426
        %v575 = vpop.permute.xlu0 %574
        %577 = vset.pattern.permute.xlu0 1
        %578 = vperm.xlu0 %577, %v427
        %v579 = vpop.permute.xlu0 %578
        %581 = vset.pattern.permute.xlu0 1
        %582 = vperm.xlu0 %581, %v428
        %v583 = vpop.permute.xlu0 %582
        %585 = vset.pattern.permute.xlu0 1
        %586 = vperm.xlu0 %585, %v429
        %v587 = vpop.permute.xlu0 %586
        %589 = vset.pattern.permute.xlu0 1
        %590 = vperm.xlu0 %589, %v430
        %v591 = vpop.permute.xlu0 %590
        %593 = vset.pattern.permute.xlu0 1
        %594 = vperm.xlu0 %593, %v431
        %v595 = vpop.permute.xlu0 %594
        %v597 = vlaneseq
        %v598 = vshrl.u32 %v597, 7
        %v599 = vsub.s32 1, %v598
        %v600 = vrot.slane %v432, %v599
        %v601 = vmul.f32 %v535, %v600
        %v602 = vmul.f32 %v539, %v600
        %v603 = vmul.f32 %v543, %v600
        %v604 = vmul.f32 %v547, %v600
        %v605 = vmul.f32 %v551, %v600
        %v606 = vmul.f32 %v555, %v600
        %v607 = vmul.f32 %v559, %v600
        %v608 = vmul.f32 %v563, %v600
        %v609 = vmul.f32 %v567, %v600
        %v610 = vmul.f32 %v571, %v600
        %v611 = vmul.f32 %v575, %v600
        %v612 = vmul.f32 %v579, %v600
        %v613 = vmul.f32 %v583, %v600
        %v614 = vmul.f32 %v587, %v600
        %v615 = vmul.f32 %v591, %v600
        %v616 = vmul.f32 %v595, %v600
        %v617 = vadd.f32 %v517, %v601
        %v618 = vadd.f32 %v518, %v602
        %v619 = vadd.f32 %v519, %v603
        %v620 = vadd.f32 %v520, %v604
        %v621 = vadd.f32 %v521, %v605
        %v622 = vadd.f32 %v522, %v606
        %v623 = vadd.f32 %v523, %v607
        %v624 = vadd.f32 %v524, %v608
        %v625 = vadd.f32 %v525, %v609
        %v626 = vadd.f32 %v526, %v610
        %v627 = vadd.f32 %v527, %v611
        %v628 = vadd.f32 %v528, %v612
        %v629 = vadd.f32 %v529, %v613
        %v630 = vadd.f32 %v530, %v614
        %v631 = vadd.f32 %v531, %v615
        %v632 = vadd.f32 %v532, %v616
        %v633 = vld [vmem:[%s4] sm:$0x1]
        %v635 = vlaneseq
        %v636 = vshrl.u32 %v635, 7
        %v637 = vsub.s32 0, %v636
        %v638 = vrot.slane %v633, %v637
        %v640 = vmul.f32 %v617, %v638
        %v641 = vmul.f32 %v618, %v638
        %v642 = vmul.f32 %v619, %v638
        %v643 = vmul.f32 %v620, %v638
        %v644 = vmul.f32 %v621, %v638
        %v645 = vmul.f32 %v622, %v638
        %v646 = vmul.f32 %v623, %v638
        %v647 = vmul.f32 %v624, %v638
        %v648 = vmul.f32 %v625, %v638
        %v649 = vmul.f32 %v626, %v638
        %v650 = vmul.f32 %v627, %v638
        %v651 = vmul.f32 %v628, %v638
        %v652 = vmul.f32 %v629, %v638
        %v653 = vmul.f32 %v630, %v638
        %v654 = vmul.f32 %v631, %v638
        %v655 = vmul.f32 %v632, %v638
        %v656 = vld [vmem:[%s5] sm:$0x1]
        %v658 = vlaneseq
        %v659 = vshrl.u32 %v658, 7
        %v660 = vsub.s32 0, %v659
        %v661 = vrot.slane %v656, %v660
        %v663 = vadd.f32 %v640, %v661
        %v664 = vadd.f32 %v641, %v661
        %v665 = vadd.f32 %v642, %v661
        %v666 = vadd.f32 %v643, %v661
        %v667 = vadd.f32 %v644, %v661
        %v668 = vadd.f32 %v645, %v661
        %v669 = vadd.f32 %v646, %v661
        %v670 = vadd.f32 %v647, %v661
        %v671 = vadd.f32 %v648, %v661
        %v672 = vadd.f32 %v649, %v661
        %v673 = vadd.f32 %v650, %v661
        %v674 = vadd.f32 %v651, %v661
        %v675 = vadd.f32 %v652, %v661
        %v676 = vadd.f32 %v653, %v661
        %v677 = vadd.f32 %v654, %v661
        %v678 = vadd.f32 %v655, %v661
        %v679 = vmax.f32 %v663, 0.0
        %v680 = vmax.f32 %v664, 0.0
        %v681 = vmax.f32 %v665, 0.0
        %v682 = vmax.f32 %v666, 0.0
        %v683 = vmax.f32 %v667, 0.0
        %v684 = vmax.f32 %v668, 0.0
        %v685 = vmax.f32 %v669, 0.0
        %v686 = vmax.f32 %v670, 0.0
        %v687 = vmax.f32 %v671, 0.0
        %v688 = vmax.f32 %v672, 0.0
        %v689 = vmax.f32 %v673, 0.0
        %v690 = vmax.f32 %v674, 0.0
        %v691 = vmax.f32 %v675, 0.0
        %v692 = vmax.f32 %v676, 0.0
        %v693 = vmax.f32 %v677, 0.0
        %v694 = vmax.f32 %v678, 0.0
        %v695 = vpack.c.bf16 %v680, %v679
        %v696 = vpack.c.bf16 %v682, %v681
        %v697 = vpack.c.bf16 %v684, %v683
        %v698 = vpack.c.bf16 %v686, %v685
        %v699 = vpack.c.bf16 %v688, %v687
        %v700 = vpack.c.bf16 %v690, %v689
        %v701 = vpack.c.bf16 %v692, %v691
        %v702 = vpack.c.bf16 %v694, %v693
        %v703 = vld [vmem:[%s2] sm:$0xf]
        %v704 = vld [vmem:[%s2 + $0x4] sm:$0xf]
        %v705 = vld [vmem:[%s2 + $0x8] sm:$0xf]
        %v706 = vld [vmem:[%s2 + $0xc] sm:$0xf]
        %v707 = vld [vmem:[%s2 + $0x10] sm:$0xf]
        %v708 = vld [vmem:[%s2 + $0x14] sm:$0xf]
        %v709 = vld [vmem:[%s2 + $0x18] sm:$0xf]
        %v710 = vld [vmem:[%s2 + $0x1c] sm:$0xf]
        %v719 = vunpack.c.l.b16 %v703
        %v720 = vunpack.c.l.b16 %v704
        %v721 = vunpack.c.l.b16 %v705
        %v722 = vunpack.c.l.b16 %v706
        %v723 = vunpack.c.l.b16 %v707
        %v724 = vunpack.c.l.b16 %v708
        %v725 = vunpack.c.l.b16 %v709
        %v726 = vunpack.c.l.b16 %v710
        %v727 = vpack.c.b16 %v720, %v719
        %v728 = vpack.c.b16 %v722, %v721
        %v729 = vpack.c.b16 %v724, %v723
        %v730 = vpack.c.b16 %v726, %v725
        %vm735 = vcmask 523264
        %v737 = vsel %vm735, %v695, 0
        %v740 = vsel %vm735, %v696, 0
        %v743 = vsel %vm735, %v697, 0
        %v746 = vsel %vm735, %v698, 0
        %v749 = vsel %vm735, %v699, 0
        %v752 = vsel %vm735, %v700, 0
        %v755 = vsel %vm735, %v701, 0
        %v758 = vsel %vm735, %v702, 0
        %760 = vmatprep.subr.bf16.mxu0 0
        %761 = vmatpush1.bf16.msra.mxu0 0
        %762 = vmatprep.subr.bf16.mxu0 0
        %763 = vmatpush1.bf16.msra.mxu0 0
        %764 = vmatprep.subr.bf16.mxu0 0
        %765 = vmatpush1.bf16.msra.mxu0 0
        %766 = vmatprep.subr.bf16.mxu0 0
        %767 = vmatpush1.bf16.msra.mxu0 0
        %768 = vmatprep.subr.bf16.mxu0 0
        %769 = vmatpush1.bf16.msra.mxu0 %v730
        %770 = vmatprep.subr.bf16.mxu0 0
        %771 = vmatpush1.bf16.msra.mxu0 %v729
        %772 = vmatprep.subr.bf16.mxu0 0
        %773 = vmatpush1.bf16.msra.mxu0 %v728
        %774 = vmatprep.subr.bf16.mxu0 0
        %775 = vmatpush1.bf16.msra.mxu0 %v727
        %776 = vmatprep.subr.bf16.mxu0 0
        %777 = vmatpush2.bf16.msra.mxu0 0
        %778 = vmatprep.subr.bf16.mxu0 0
        %779 = vmatpush2.bf16.msra.mxu0 0
        %780 = vmatprep.subr.bf16.mxu0 0
        %781 = vmatpush2.bf16.msra.mxu0 0
        %782 = vmatprep.subr.bf16.mxu0 0
        %783 = vmatpush2.bf16.msra.mxu0 0
        %784 = vmatprep.subr.bf16.mxu0 0
        %785 = vmatpush2.bf16.msra.mxu0 0
        %786 = vmatprep.subr.bf16.mxu0 0
        %787 = vmatpush2.bf16.msra.mxu0 0
        %788 = vmatprep.subr.bf16.mxu0 0
        %789 = vmatpush2.bf16.msra.mxu0 0
        %790 = vmatprep.subr.bf16.mxu0 0
        %791 = vmatpush2.bf16.msra.mxu0 0
        %792 = vmatprep.mubr.bf16.mxu0 0
        %793 = vmatmul.mubr.bf16.gmra.mxu0 %v737
        %v794 = vpop.f32.mrf.mxu0
        %v795 = vadd.f32 0.0, %v794
        %v796 = vpop.f32.mrf.mxu0
        %v797 = vpop.f32.mrf.mxu0
        %v798 = vadd.f32 0.0, %v797
        %v799 = vpop.f32.mrf.mxu0
        %800 = vmatprep.mubr.bf16.mxu0 0
        %801 = vmatmul.mubr.bf16.gmra.mxu0 %v740
        %v802 = vpop.f32.mrf.mxu0
        %v803 = vadd.f32 0.0, %v802
        %v804 = vpop.f32.mrf.mxu0
        %v805 = vpop.f32.mrf.mxu0
        %v806 = vadd.f32 0.0, %v805
        %v807 = vpop.f32.mrf.mxu0
        %808 = vmatprep.mubr.bf16.mxu0 0
        %809 = vmatmul.mubr.bf16.gmra.mxu0 %v743
        %v810 = vpop.f32.mrf.mxu0
        %v811 = vadd.f32 0.0, %v810
        %v812 = vpop.f32.mrf.mxu0
        %v813 = vpop.f32.mrf.mxu0
        %v814 = vadd.f32 0.0, %v813
        %v815 = vpop.f32.mrf.mxu0
        %816 = vmatprep.mubr.bf16.mxu0 0
        %817 = vmatmul.mubr.bf16.gmra.mxu0 %v746
        %v818 = vpop.f32.mrf.mxu0
        %v819 = vadd.f32 0.0, %v818
        %v820 = vpop.f32.mrf.mxu0
        %v821 = vpop.f32.mrf.mxu0
        %v822 = vadd.f32 0.0, %v821
        %v823 = vpop.f32.mrf.mxu0
        %824 = vmatprep.mubr.bf16.mxu0 0
        %825 = vmatmul.mubr.bf16.gmra.mxu0 %v749
        %v826 = vpop.f32.mrf.mxu0
        %v827 = vadd.f32 0.0, %v826
        %v828 = vpop.f32.mrf.mxu0
        %v829 = vpop.f32.mrf.mxu0
        %v830 = vadd.f32 0.0, %v829
        %v831 = vpop.f32.mrf.mxu0
        %832 = vmatprep.mubr.bf16.mxu0 0
        %833 = vmatmul.mubr.bf16.gmra.mxu0 %v752
        %v834 = vpop.f32.mrf.mxu0
        %v835 = vadd.f32 0.0, %v834
        %v836 = vpop.f32.mrf.mxu0
        %v837 = vpop.f32.mrf.mxu0
        %v838 = vadd.f32 0.0, %v837
        %v839 = vpop.f32.mrf.mxu0
        %840 = vmatprep.mubr.bf16.mxu0 0
        %841 = vmatmul.mubr.bf16.gmra.mxu0 %v755
        %v842 = vpop.f32.mrf.mxu0
        %v843 = vadd.f32 0.0, %v842
        %v844 = vpop.f32.mrf.mxu0
        %v845 = vpop.f32.mrf.mxu0
        %v846 = vadd.f32 0.0, %v845
        %v847 = vpop.f32.mrf.mxu0
        %848 = vmatprep.mubr.bf16.mxu0 0
        %849 = vmatmul.mubr.bf16.gmra.mxu0 %v758
        %v850 = vpop.f32.mrf.mxu0
        %v851 = vadd.f32 0.0, %v850
        %v852 = vpop.f32.mrf.mxu0
        %v853 = vpop.f32.mrf.mxu0
        %v854 = vadd.f32 0.0, %v853
        %v855 = vpop.f32.mrf.mxu0
        %856 = vdwg.mxu0
        // Predicated region
        $region65: #{_lambda_.5} parent=59 // pred_check
          %p857 = pneg %p399
        $region66: #{_lambda_.5} parent=59 // pred_check_branch
          %859 = sbr.rel (%p857) target = $region68
        $region67: #{_lambda_.5} parent=59 // pred_region
          %v860 = vld [vmem:[#allocation2] sm:$0x1]
          %v861 = vadd.f32 %v795, %v798
          %v862 = vadd.f32 %v861, %v803
          %v863 = vadd.f32 %v862, %v806
          %v864 = vadd.f32 %v863, %v811
          %v865 = vadd.f32 %v864, %v814
          %v866 = vadd.f32 %v865, %v819
          %v867 = vadd.f32 %v866, %v822
          %v868 = vadd.f32 %v867, %v827
          %v869 = vadd.f32 %v868, %v830
          %v870 = vadd.f32 %v869, %v835
          %v871 = vadd.f32 %v870, %v838
          %v872 = vadd.f32 %v871, %v843
          %v873 = vadd.f32 %v872, %v846
          %v874 = vadd.f32 %v873, %v851
          %v875 = vadd.f32 %v874, %v854
          %v876 = vrot.slane %v875, 4
          %v877 = vadd.f32 %v875, %v876
          %v878 = vrot.slane %v877, 2
          %v879 = vadd.f32 %v877, %v878
          %v880 = vrot.slane %v879, 1
          %v881 = vadd.f32 %v879, %v880
          %v882 = vadd.f32 %v860, %v881
          %883 = vst [vmem:[#allocation2] sm:$0x1] %v882
          %v884 = vld [vmem:[#allocation3] sm:$0x1]
          %v885 = vmul.f32 %v795, %v795
          %v886 = vmul.f32 %v798, %v798
          %v887 = vmul.f32 %v803, %v803
          %v888 = vmul.f32 %v806, %v806
          %v889 = vmul.f32 %v811, %v811
          %v890 = vmul.f32 %v814, %v814
          %v891 = vmul.f32 %v819, %v819
          %v892 = vmul.f32 %v822, %v822
          %v893 = vmul.f32 %v827, %v827
          %v894 = vmul.f32 %v830, %v830
          %v895 = vmul.f32 %v835, %v835
          %v896 = vmul.f32 %v838, %v838
          %v897 = vmul.f32 %v843, %v843
          %v898 = vmul.f32 %v846, %v846
          %v899 = vmul.f32 %v851, %v851
          %v900 = vmul.f32 %v854, %v854
          %v901 = vadd.f32 %v885, %v886
          %v902 = vadd.f32 %v901, %v887
          %v903 = vadd.f32 %v902, %v888
          %v904 = vadd.f32 %v903, %v889
          %v905 = vadd.f32 %v904, %v890
          %v906 = vadd.f32 %v905, %v891
          %v907 = vadd.f32 %v906, %v892
          %v908 = vadd.f32 %v907, %v893
          %v909 = vadd.f32 %v908, %v894
          %v910 = vadd.f32 %v909, %v895
          %v911 = vadd.f32 %v910, %v896
          %v912 = vadd.f32 %v911, %v897
          %v913 = vadd.f32 %v912, %v898
          %v914 = vadd.f32 %v913, %v899
          %v915 = vadd.f32 %v914, %v900
          %v916 = vrot.slane %v915, 4
          %v917 = vadd.f32 %v915, %v916
          %v918 = vrot.slane %v917, 2
          %v919 = vadd.f32 %v917, %v918
          %v920 = vrot.slane %v919, 1
          %v921 = vadd.f32 %v919, %v920
          %v922 = vadd.f32 %v884, %v921
          %923 = vst [vmem:[#allocation3] sm:$0x1] %v922
        $region68: #{_lambda_.5} parent=59 // pred_fallthru
          _
        %p924 = scmp.eq.s32.totalorder %s27, 1
        // Predicated region
        $region69: #{_lambda_.5} parent=59 // pred_check
          %p925 = pneg %p924
        $region70: #{_lambda_.5} parent=59 // pred_check_branch
          %927 = sbr.rel (%p925) target = $region72
        $region71: #{_lambda_.5} parent=59 // pred_region
          %v928 = vld [vmem:[#allocation2] sm:$0x1]
          %v929 = vmul.f32 %v928, 0.00390625
          %v930 = vld [vmem:[#allocation3] sm:$0x1]
          %v931 = vmul.f32 %v930, 0.00390625
          %v932 = vmul.f32 %v929, %v929
          %v933 = vsub.f32 %v931, %v932
          %v934 = vmax.f32 %v933, 0.0
          %v935 = vld [vmem:[%s6] sm:$0x1]
          %v936 = vadd.f32 %v934, 1e-05
          %v937 = vrsqrt.pop %v936
          %v938 = vmul.f32 %v935, %v937
          %v939 = vld [vmem:[%s7] sm:$0x1]
          %v940 = vmul.f32 %v929, %v938
          %v941 = vsub.f32 %v939, %v940
          %v943 = vlaneseq
          %v944 = vshrl.u32 %v943, 7
          %v945 = vsub.s32 0, %v944
          %v946 = vrot.slane %v938, %v945
          %v948 = vmul.f32 %v795, %v946
          %v949 = vmul.f32 %v798, %v946
          %v950 = vmul.f32 %v803, %v946
          %v951 = vmul.f32 %v806, %v946
          %v952 = vmul.f32 %v811, %v946
          %v953 = vmul.f32 %v814, %v946
          %v954 = vmul.f32 %v819, %v946
          %v955 = vmul.f32 %v822, %v946
          %v956 = vmul.f32 %v827, %v946
          %v957 = vmul.f32 %v830, %v946
          %v958 = vmul.f32 %v835, %v946
          %v959 = vmul.f32 %v838, %v946
          %v960 = vmul.f32 %v843, %v946
          %v961 = vmul.f32 %v846, %v946
          %v962 = vmul.f32 %v851, %v946
          %v963 = vmul.f32 %v854, %v946
          %v965 = vlaneseq
          %v966 = vshrl.u32 %v965, 7
          %v967 = vsub.s32 0, %v966
          %v968 = vrot.slane %v941, %v967
          %v970 = vadd.f32 %v948, %v968
          %v971 = vadd.f32 %v949, %v968
          %v972 = vadd.f32 %v950, %v968
          %v973 = vadd.f32 %v951, %v968
          %v974 = vadd.f32 %v952, %v968
          %v975 = vadd.f32 %v953, %v968
          %v976 = vadd.f32 %v954, %v968
          %v977 = vadd.f32 %v955, %v968
          %v978 = vadd.f32 %v956, %v968
          %v979 = vadd.f32 %v957, %v968
          %v980 = vadd.f32 %v958, %v968
          %v981 = vadd.f32 %v959, %v968
          %v982 = vadd.f32 %v960, %v968
          %v983 = vadd.f32 %v961, %v968
          %v984 = vadd.f32 %v962, %v968
          %v985 = vadd.f32 %v963, %v968
          %v986 = vmax.f32 %v970, 0.0
          %v987 = vmax.f32 %v971, 0.0
          %v988 = vmax.f32 %v972, 0.0
          %v989 = vmax.f32 %v973, 0.0
          %v990 = vmax.f32 %v974, 0.0
          %v991 = vmax.f32 %v975, 0.0
          %v992 = vmax.f32 %v976, 0.0
          %v993 = vmax.f32 %v977, 0.0
          %v994 = vmax.f32 %v978, 0.0
          %v995 = vmax.f32 %v979, 0.0
          %v996 = vmax.f32 %v980, 0.0
          %v997 = vmax.f32 %v981, 0.0
          %v998 = vmax.f32 %v982, 0.0
          %v999 = vmax.f32 %v983, 0.0
          %v1000 = vmax.f32 %v984, 0.0
          %v1001 = vmax.f32 %v985, 0.0
          %v1002 = vpack.c.bf16 %v987, %v986
          %v1003 = vpack.c.bf16 %v989, %v988
          %v1004 = vpack.c.bf16 %v991, %v990
          %v1005 = vpack.c.bf16 %v993, %v992
          %v1006 = vpack.c.bf16 %v995, %v994
          %v1007 = vpack.c.bf16 %v997, %v996
          %v1008 = vpack.c.bf16 %v999, %v998
          %v1009 = vpack.c.bf16 %v1001, %v1000
          %v1010 = vld [vmem:[%s3] sm:$0xff]
          %v1011 = vld [vmem:[%s3 + $0x8] sm:$0xff]
          %v1012 = vld [vmem:[%s3 + $0x10] sm:$0xff]
          %v1013 = vld [vmem:[%s3 + $0x18] sm:$0xff]
          %v1014 = vld [vmem:[%s3 + $0x20] sm:$0xff]
          %v1015 = vld [vmem:[%s3 + $0x28] sm:$0xff]
          %v1016 = vld [vmem:[%s3 + $0x30] sm:$0xff]
          %v1017 = vld [vmem:[%s3 + $0x38] sm:$0xff]
          %v1018 = vld [vmem:[%s3 + $0x40] sm:$0xff]
          %v1019 = vld [vmem:[%s3 + $0x48] sm:$0xff]
          %v1020 = vld [vmem:[%s3 + $0x50] sm:$0xff]
          %v1021 = vld [vmem:[%s3 + $0x58] sm:$0xff]
          %v1022 = vld [vmem:[%s3 + $0x60] sm:$0xff]
          %v1023 = vld [vmem:[%s3 + $0x68] sm:$0xff]
          %v1024 = vld [vmem:[%s3 + $0x70] sm:$0xff]
          %v1025 = vld [vmem:[%s3 + $0x78] sm:$0xff]
          %v1026 = vld [vmem:[%s3 + $0x80] sm:$0xff]
          %v1027 = vld [vmem:[%s3 + $0x88] sm:$0xff]
          %v1028 = vld [vmem:[%s3 + $0x90] sm:$0xff]
          %v1029 = vld [vmem:[%s3 + $0x98] sm:$0xff]
          %v1030 = vld [vmem:[%s3 + $0xa0] sm:$0xff]
          %v1031 = vld [vmem:[%s3 + $0xa8] sm:$0xff]
          %v1032 = vld [vmem:[%s3 + $0xb0] sm:$0xff]
          %v1033 = vld [vmem:[%s3 + $0xb8] sm:$0xff]
          %v1034 = vld [vmem:[%s3 + $0xc0] sm:$0xff]
          %v1035 = vld [vmem:[%s3 + $0xc8] sm:$0xff]
          %v1036 = vld [vmem:[%s3 + $0xd0] sm:$0xff]
          %v1037 = vld [vmem:[%s3 + $0xd8] sm:$0xff]
          %v1038 = vld [vmem:[%s3 + $0xe0] sm:$0xff]
          %v1039 = vld [vmem:[%s3 + $0xe8] sm:$0xff]
          %v1040 = vld [vmem:[%s3 + $0xf0] sm:$0xff]
          %v1041 = vld [vmem:[%s3 + $0xf8] sm:$0xff]
          %v1042 = vld [vmem:[%s3 + $0x100] sm:$0xff]
          %v1043 = vld [vmem:[%s3 + $0x108] sm:$0xff]
          %v1044 = vld [vmem:[%s3 + $0x110] sm:$0xff]
          %v1045 = vld [vmem:[%s3 + $0x118] sm:$0xff]
          %v1046 = vld [vmem:[%s3 + $0x120] sm:$0xff]
          %v1047 = vld [vmem:[%s3 + $0x128] sm:$0xff]
          %v1048 = vld [vmem:[%s3 + $0x130] sm:$0xff]
          %v1049 = vld [vmem:[%s3 + $0x138] sm:$0xff]
          %v1050 = vld [vmem:[%s3 + $0x140] sm:$0xff]
          %v1051 = vld [vmem:[%s3 + $0x148] sm:$0xff]
          %v1052 = vld [vmem:[%s3 + $0x150] sm:$0xff]
          %v1053 = vld [vmem:[%s3 + $0x158] sm:$0xff]
          %v1054 = vld [vmem:[%s3 + $0x160] sm:$0xff]
          %v1055 = vld [vmem:[%s3 + $0x168] sm:$0xff]
          %v1056 = vld [vmem:[%s3 + $0x170] sm:$0xff]
          %v1057 = vld [vmem:[%s3 + $0x178] sm:$0xff]
          %v1058 = vld [vmem:[%s3 + $0x180] sm:$0xff]
          %v1059 = vld [vmem:[%s3 + $0x188] sm:$0xff]
          %v1060 = vld [vmem:[%s3 + $0x190] sm:$0xff]
          %v1061 = vld [vmem:[%s3 + $0x198] sm:$0xff]
          %v1062 = vld [vmem:[%s3 + $0x1a0] sm:$0xff]
          %v1063 = vld [vmem:[%s3 + $0x1a8] sm:$0xff]
          %v1064 = vld [vmem:[%s3 + $0x1b0] sm:$0xff]
          %v1065 = vld [vmem:[%s3 + $0x1b8] sm:$0xff]
          %v1066 = vld [vmem:[%s3 + $0x1c0] sm:$0xff]
          %v1067 = vld [vmem:[%s3 + $0x1c8] sm:$0xff]
          %v1068 = vld [vmem:[%s3 + $0x1d0] sm:$0xff]
          %v1069 = vld [vmem:[%s3 + $0x1d8] sm:$0xff]
          %v1070 = vld [vmem:[%s3 + $0x1e0] sm:$0xff]
          %v1071 = vld [vmem:[%s3 + $0x1e8] sm:$0xff]
          %v1072 = vld [vmem:[%s3 + $0x1f0] sm:$0xff]
          %v1073 = vld [vmem:[%s3 + $0x1f8] sm:$0xff]
          %v1138 = vunpack.c.l.b16 %v1010
          %v1139 = vunpack.c.h.b16 %v1010
          %v1140 = vunpack.c.l.b16 %v1011
          %v1141 = vunpack.c.h.b16 %v1011
          %v1142 = vunpack.c.l.b16 %v1012
          %v1143 = vunpack.c.h.b16 %v1012
          %v1144 = vunpack.c.l.b16 %v1013
          %v1145 = vunpack.c.h.b16 %v1013
          %v1146 = vunpack.c.l.b16 %v1014
          %v1147 = vunpack.c.h.b16 %v1014
          %v1148 = vunpack.c.l.b16 %v1015
          %v1149 = vunpack.c.h.b16 %v1015
          %v1150 = vunpack.c.l.b16 %v1016
          %v1151 = vunpack.c.h.b16 %v1016
          %v1152 = vunpack.c.l.b16 %v1017
          %v1153 = vunpack.c.h.b16 %v1017
          %v1154 = vunpack.c.l.b16 %v1018
          %v1155 = vunpack.c.h.b16 %v1018
          %v1156 = vunpack.c.l.b16 %v1019
          %v1157 = vunpack.c.h.b16 %v1019
          %v1158 = vunpack.c.l.b16 %v1020
          %v1159 = vunpack.c.h.b16 %v1020
          %v1160 = vunpack.c.l.b16 %v1021
          %v1161 = vunpack.c.h.b16 %v1021
          %v1162 = vunpack.c.l.b16 %v1022
          %v1163 = vunpack.c.h.b16 %v1022
          %v1164 = vunpack.c.l.b16 %v1023
          %v1165 = vunpack.c.h.b16 %v1023
          %v1166 = vunpack.c.l.b16 %v1024
          %v1167 = vunpack.c.h.b16 %v1024
          %v1168 = vunpack.c.l.b16 %v1025
          %v1169 = vunpack.c.h.b16 %v1025
          %v1170 = vunpack.c.l.b16 %v1026
          %v1171 = vunpack.c.h.b16 %v1026
          %v1172 = vunpack.c.l.b16 %v1027
          %v1173 = vunpack.c.h.b16 %v1027
          %v1174 = vunpack.c.l.b16 %v1028
          %v1175 = vunpack.c.h.b16 %v1028
          %v1176 = vunpack.c.l.b16 %v1029
          %v1177 = vunpack.c.h.b16 %v1029
          %v1178 = vunpack.c.l.b16 %v1030
          %v1179 = vunpack.c.h.b16 %v1030
          %v1180 = vunpack.c.l.b16 %v1031
          %v1181 = vunpack.c.h.b16 %v1031
          %v1182 = vunpack.c.l.b16 %v1032
          %v1183 = vunpack.c.h.b16 %v1032
          %v1184 = vunpack.c.l.b16 %v1033
          %v1185 = vunpack.c.h.b16 %v1033
          %v1186 = vunpack.c.l.b16 %v1034
          %v1187 = vunpack.c.h.b16 %v1034
          %v1188 = vunpack.c.l.b16 %v1035
          %v1189 = vunpack.c.h.b16 %v1035
          %v1190 = vunpack.c.l.b16 %v1036
          %v1191 = vunpack.c.h.b16 %v1036
          %v1192 = vunpack.c.l.b16 %v1037
          %v1193 = vunpack.c.h.b16 %v1037
          %v1194 = vunpack.c.l.b16 %v1038
          %v1195 = vunpack.c.h.b16 %v1038
          %v1196 = vunpack.c.l.b16 %v1039
          %v1197 = vunpack.c.h.b16 %v1039
          %v1198 = vunpack.c.l.b16 %v1040
          %v1199 = vunpack.c.h.b16 %v1040
          %v1200 = vunpack.c.l.b16 %v1041
          %v1201 = vunpack.c.h.b16 %v1041
          %v1202 = vunpack.c.l.b16 %v1042
          %v1203 = vunpack.c.h.b16 %v1042
          %v1204 = vunpack.c.l.b16 %v1043
          %v1205 = vunpack.c.h.b16 %v1043
          %v1206 = vunpack.c.l.b16 %v1044
          %v1207 = vunpack.c.h.b16 %v1044
          %v1208 = vunpack.c.l.b16 %v1045
          %v1209 = vunpack.c.h.b16 %v1045
          %v1210 = vunpack.c.l.b16 %v1046
          %v1211 = vunpack.c.h.b16 %v1046
          %v1212 = vunpack.c.l.b16 %v1047
          %v1213 = vunpack.c.h.b16 %v1047
          %v1214 = vunpack.c.l.b16 %v1048
          %v1215 = vunpack.c.h.b16 %v1048
          %v1216 = vunpack.c.l.b16 %v1049
          %v1217 = vunpack.c.h.b16 %v1049
          %v1218 = vunpack.c.l.b16 %v1050
          %v1219 = vunpack.c.h.b16 %v1050
          %v1220 = vunpack.c.l.b16 %v1051
          %v1221 = vunpack.c.h.b16 %v1051
          %v1222 = vunpack.c.l.b16 %v1052
          %v1223 = vunpack.c.h.b16 %v1052
          %v1224 = vunpack.c.l.b16 %v1053
          %v1225 = vunpack.c.h.b16 %v1053
          %v1226 = vunpack.c.l.b16 %v1054
          %v1227 = vunpack.c.h.b16 %v1054
          %v1228 = vunpack.c.l.b16 %v1055
          %v1229 = vunpack.c.h.b16 %v1055
          %v1230 = vunpack.c.l.b16 %v1056
          %v1231 = vunpack.c.h.b16 %v1056
          %v1232 = vunpack.c.l.b16 %v1057
          %v1233 = vunpack.c.h.b16 %v1057
          %v1234 = vunpack.c.l.b16 %v1058
          %v1235 = vunpack.c.h.b16 %v1058
          %v1236 = vunpack.c.l.b16 %v1059
          %v1237 = vunpack.c.h.b16 %v1059
          %v1238 = vunpack.c.l.b16 %v1060
          %v1239 = vunpack.c.h.b16 %v1060
          %v1240 = vunpack.c.l.b16 %v1061
          %v1241 = vunpack.c.h.b16 %v1061
          %v1242 = vunpack.c.l.b16 %v1062
          %v1243 = vunpack.c.h.b16 %v1062
          %v1244 = vunpack.c.l.b16 %v1063
          %v1245 = vunpack.c.h.b16 %v1063
          %v1246 = vunpack.c.l.b16 %v1064
          %v1247 = vunpack.c.h.b16 %v1064
          %v1248 = vunpack.c.l.b16 %v1065
          %v1249 = vunpack.c.h.b16 %v1065
          %v1250 = vunpack.c.l.b16 %v1066
          %v1251 = vunpack.c.h.b16 %v1066
          %v1252 = vunpack.c.l.b16 %v1067
          %v1253 = vunpack.c.h.b16 %v1067
          %v1254 = vunpack.c.l.b16 %v1068
          %v1255 = vunpack.c.h.b16 %v1068
          %v1256 = vunpack.c.l.b16 %v1069
          %v1257 = vunpack.c.h.b16 %v1069
          %v1258 = vunpack.c.l.b16 %v1070
          %v1259 = vunpack.c.h.b16 %v1070
          %v1260 = vunpack.c.l.b16 %v1071
          %v1261 = vunpack.c.h.b16 %v1071
          %v1262 = vunpack.c.l.b16 %v1072
          %v1263 = vunpack.c.h.b16 %v1072
          %v1264 = vunpack.c.l.b16 %v1073
          %v1265 = vunpack.c.h.b16 %v1073
          %v1266 = vpack.c.b16 %v1146, %v1138
          %v1267 = vpack.c.b16 %v1147, %v1139
          %v1268 = vpack.c.b16 %v1148, %v1140
          %v1269 = vpack.c.b16 %v1149, %v1141
          %v1270 = vpack.c.b16 %v1150, %v1142
          %v1271 = vpack.c.b16 %v1151, %v1143
          %v1272 = vpack.c.b16 %v1152, %v1144
          %v1273 = vpack.c.b16 %v1153, %v1145
          %v1274 = vpack.c.b16 %v1162, %v1154
          %v1275 = vpack.c.b16 %v1163, %v1155
          %v1276 = vpack.c.b16 %v1164, %v1156
          %v1277 = vpack.c.b16 %v1165, %v1157
          %v1278 = vpack.c.b16 %v1166, %v1158
          %v1279 = vpack.c.b16 %v1167, %v1159
          %v1280 = vpack.c.b16 %v1168, %v1160
          %v1281 = vpack.c.b16 %v1169, %v1161
          %v1282 = vpack.c.b16 %v1178, %v1170
          %v1283 = vpack.c.b16 %v1179, %v1171
          %v1284 = vpack.c.b16 %v1180, %v1172
          %v1285 = vpack.c.b16 %v1181, %v1173
          %v1286 = vpack.c.b16 %v1182, %v1174
          %v1287 = vpack.c.b16 %v1183, %v1175
          %v1288 = vpack.c.b16 %v1184, %v1176
          %v1289 = vpack.c.b16 %v1185, %v1177
          %v1290 = vpack.c.b16 %v1194, %v1186
          %v1291 = vpack.c.b16 %v1195, %v1187
          %v1292 = vpack.c.b16 %v1196, %v1188
          %v1293 = vpack.c.b16 %v1197, %v1189
          %v1294 = vpack.c.b16 %v1198, %v1190
          %v1295 = vpack.c.b16 %v1199, %v1191
          %v1296 = vpack.c.b16 %v1200, %v1192
          %v1297 = vpack.c.b16 %v1201, %v1193
          %v1298 = vpack.c.b16 %v1210, %v1202
          %v1299 = vpack.c.b16 %v1211, %v1203
          %v1300 = vpack.c.b16 %v1212, %v1204
          %v1301 = vpack.c.b16 %v1213, %v1205
          %v1302 = vpack.c.b16 %v1214, %v1206
          %v1303 = vpack.c.b16 %v1215, %v1207
          %v1304 = vpack.c.b16 %v1216, %v1208
          %v1305 = vpack.c.b16 %v1217, %v1209
          %v1306 = vpack.c.b16 %v1226, %v1218
          %v1307 = vpack.c.b16 %v1227, %v1219
          %v1308 = vpack.c.b16 %v1228, %v1220
          %v1309 = vpack.c.b16 %v1229, %v1221
          %v1310 = vpack.c.b16 %v1230, %v1222
          %v1311 = vpack.c.b16 %v1231, %v1223
          %v1312 = vpack.c.b16 %v1232, %v1224
          %v1313 = vpack.c.b16 %v1233, %v1225
          %v1314 = vpack.c.b16 %v1242, %v1234
          %v1315 = vpack.c.b16 %v1243, %v1235
          %v1316 = vpack.c.b16 %v1244, %v1236
          %v1317 = vpack.c.b16 %v1245, %v1237
          %v1318 = vpack.c.b16 %v1246, %v1238
          %v1319 = vpack.c.b16 %v1247, %v1239
          %v1320 = vpack.c.b16 %v1248, %v1240
          %v1321 = vpack.c.b16 %v1249, %v1241
          %v1322 = vpack.c.b16 %v1258, %v1250
          %v1323 = vpack.c.b16 %v1259, %v1251
          %v1324 = vpack.c.b16 %v1260, %v1252
          %v1325 = vpack.c.b16 %v1261, %v1253
          %v1326 = vpack.c.b16 %v1262, %v1254
          %v1327 = vpack.c.b16 %v1263, %v1255
          %v1328 = vpack.c.b16 %v1264, %v1256
          %v1329 = vpack.c.b16 %v1265, %v1257
          %1394 = vmatprep.subr.bf16.mxu0 %v1323
          %1395 = vmatpush1.bf16.msra.mxu0 %v1322
          %1396 = vmatprep.subr.bf16.mxu0 %v1315
          %1397 = vmatpush1.bf16.msra.mxu0 %v1314
          %1398 = vmatprep.subr.bf16.mxu0 %v1307
          %1399 = vmatpush1.bf16.msra.mxu0 %v1306
          %1400 = vmatprep.subr.bf16.mxu0 %v1299
          %1401 = vmatpush1.bf16.msra.mxu0 %v1298
          %1402 = vmatprep.subr.bf16.mxu0 %v1291
          %1403 = vmatpush1.bf16.msra.mxu0 %v1290
          %1404 = vmatprep.subr.bf16.mxu0 %v1283
          %1405 = vmatpush1.bf16.msra.mxu0 %v1282
          %1406 = vmatprep.subr.bf16.mxu0 %v1275
          %1407 = vmatpush1.bf16.msra.mxu0 %v1274
          %1408 = vmatprep.subr.bf16.mxu0 %v1267
          %1409 = vmatpush1.bf16.msra.mxu0 %v1266
          %1410 = vmatprep.subr.bf16.mxu0 0
          %1411 = vmatpush2.bf16.msra.mxu0 0
          %1412 = vmatprep.subr.bf16.mxu0 0
          %1413 = vmatpush2.bf16.msra.mxu0 0
          %1414 = vmatprep.subr.bf16.mxu0 0
          %1415 = vmatpush2.bf16.msra.mxu0 0
          %1416 = vmatprep.subr.bf16.mxu0 0
          %1417 = vmatpush2.bf16.msra.mxu0 0
          %1418 = vmatprep.subr.bf16.mxu0 0
          %1419 = vmatpush2.bf16.msra.mxu0 0
          %1420 = vmatprep.subr.bf16.mxu0 0
          %1421 = vmatpush2.bf16.msra.mxu0 0
          %1422 = vmatprep.subr.bf16.mxu0 0
          %1423 = vmatpush2.bf16.msra.mxu0 0
          %1424 = vmatprep.subr.bf16.mxu0 0
          %1425 = vmatpush2.bf16.msra.mxu0 0
          %1426 = vmatprep.mubr.bf16.mxu0 0
          %1427 = vmatmul.mubr.bf16.gmra.mxu0 %v1002
          %v1428 = vpop.f32.mrf.mxu0
          %v1429 = vadd.f32 0.0, %v1428
          %v1430 = vpop.f32.mrf.mxu0
          %v1431 = vadd.f32 0.0, %v1430
          %v1432 = vpop.f32.mrf.mxu0
          %v1433 = vadd.f32 0.0, %v1432
          %v1434 = vpop.f32.mrf.mxu0
          %v1435 = vadd.f32 0.0, %v1434
          %1436 = vmatprep.mubr.bf16.mxu0 0
          %1437 = vmatmul.mubr.bf16.gmra.mxu0 %v1003
          %v1438 = vpop.f32.mrf.mxu0
          %v1439 = vadd.f32 0.0, %v1438
          %v1440 = vpop.f32.mrf.mxu0
          %v1441 = vadd.f32 0.0, %v1440
          %v1442 = vpop.f32.mrf.mxu0
          %v1443 = vadd.f32 0.0, %v1442
          %v1444 = vpop.f32.mrf.mxu0
          %v1445 = vadd.f32 0.0, %v1444
          %1446 = vmatprep.mubr.bf16.mxu0 0
          %1447 = vmatmul.mubr.bf16.gmra.mxu0 %v1004
          %v1448 = vpop.f32.mrf.mxu0
          %v1449 = vadd.f32 0.0, %v1448
          %v1450 = vpop.f32.mrf.mxu0
          %v1451 = vadd.f32 0.0, %v1450
          %v1452 = vpop.f32.mrf.mxu0
          %v1453 = vadd.f32 0.0, %v1452
          %v1454 = vpop.f32.mrf.mxu0
          %v1455 = vadd.f32 0.0, %v1454
          %1456 = vmatprep.mubr.bf16.mxu0 0
          %1457 = vmatmul.mubr.bf16.gmra.mxu0 %v1005
          %v1458 = vpop.f32.mrf.mxu0
          %v1459 = vadd.f32 0.0, %v1458
          %v1460 = vpop.f32.mrf.mxu0
          %v1461 = vadd.f32 0.0, %v1460
          %v1462 = vpop.f32.mrf.mxu0
          %v1463 = vadd.f32 0.0, %v1462
          %v1464 = vpop.f32.mrf.mxu0
          %v1465 = vadd.f32 0.0, %v1464
          %1466 = vmatprep.mubr.bf16.mxu0 0
          %1467 = vmatmul.mubr.bf16.gmra.mxu0 %v1006
          %v1468 = vpop.f32.mrf.mxu0
          %v1469 = vadd.f32 0.0, %v1468
          %v1470 = vpop.f32.mrf.mxu0
          %v1471 = vadd.f32 0.0, %v1470
          %v1472 = vpop.f32.mrf.mxu0
          %v1473 = vadd.f32 0.0, %v1472
          %v1474 = vpop.f32.mrf.mxu0
          %v1475 = vadd.f32 0.0, %v1474
          %1476 = vmatprep.mubr.bf16.mxu0 0
          %1477 = vmatmul.mubr.bf16.gmra.mxu0 %v1007
          %v1478 = vpop.f32.mrf.mxu0
          %v1479 = vadd.f32 0.0, %v1478
          %v1480 = vpop.f32.mrf.mxu0
          %v1481 = vadd.f32 0.0, %v1480
          %v1482 = vpop.f32.mrf.mxu0
          %v1483 = vadd.f32 0.0, %v1482
          %v1484 = vpop.f32.mrf.mxu0
          %v1485 = vadd.f32 0.0, %v1484
          %1486 = vmatprep.mubr.bf16.mxu0 0
          %1487 = vmatmul.mubr.bf16.gmra.mxu0 %v1008
          %v1488 = vpop.f32.mrf.mxu0
          %v1489 = vadd.f32 0.0, %v1488
          %v1490 = vpop.f32.mrf.mxu0
          %v1491 = vadd.f32 0.0, %v1490
          %v1492 = vpop.f32.mrf.mxu0
          %v1493 = vadd.f32 0.0, %v1492
          %v1494 = vpop.f32.mrf.mxu0
          %v1495 = vadd.f32 0.0, %v1494
          %1496 = vmatprep.mubr.bf16.mxu0 0
          %1497 = vmatmul.mubr.bf16.gmra.mxu0 %v1009
          %v1498 = vpop.f32.mrf.mxu0
          %v1499 = vadd.f32 0.0, %v1498
          %v1500 = vpop.f32.mrf.mxu0
          %v1501 = vadd.f32 0.0, %v1500
          %v1502 = vpop.f32.mrf.mxu0
          %v1503 = vadd.f32 0.0, %v1502
          %v1504 = vpop.f32.mrf.mxu0
          %v1505 = vadd.f32 0.0, %v1504
          %1506 = vdwg.mxu0
          %1507 = vmatprep.subr.bf16.mxu0 %v1325
          %1508 = vmatpush1.bf16.msra.mxu0 %v1324
          %1509 = vmatprep.subr.bf16.mxu0 %v1317
          %1510 = vmatpush1.bf16.msra.mxu0 %v1316
          %1511 = vmatprep.subr.bf16.mxu0 %v1309
          %1512 = vmatpush1.bf16.msra.mxu0 %v1308
          %1513 = vmatprep.subr.bf16.mxu0 %v1301
          %1514 = vmatpush1.bf16.msra.mxu0 %v1300
          %1515 = vmatprep.subr.bf16.mxu0 %v1293
          %1516 = vmatpush1.bf16.msra.mxu0 %v1292
          %1517 = vmatprep.subr.bf16.mxu0 %v1285
          %1518 = vmatpush1.bf16.msra.mxu0 %v1284
          %1519 = vmatprep.subr.bf16.mxu0 %v1277
          %1520 = vmatpush1.bf16.msra.mxu0 %v1276
          %1521 = vmatprep.subr.bf16.mxu0 %v1269
          %1522 = vmatpush1.bf16.msra.mxu0 %v1268
          %1523 = vmatprep.subr.bf16.mxu0 0
          %1524 = vmatpush2.bf16.msra.mxu0 0
          %1525 = vmatprep.subr.bf16.mxu0 0
          %1526 = vmatpush2.bf16.msra.mxu0 0
          %1527 = vmatprep.subr.bf16.mxu0 0
          %1528 = vmatpush2.bf16.msra.mxu0 0
          %1529 = vmatprep.subr.bf16.mxu0 0
          %1530 = vmatpush2.bf16.msra.mxu0 0
          %1531 = vmatprep.subr.bf16.mxu0 0
          %1532 = vmatpush2.bf16.msra.mxu0 0
          %1533 = vmatprep.subr.bf16.mxu0 0
          %1534 = vmatpush2.bf16.msra.mxu0 0
          %1535 = vmatprep.subr.bf16.mxu0 0
          %1536 = vmatpush2.bf16.msra.mxu0 0
          %1537 = vmatprep.subr.bf16.mxu0 0
          %1538 = vmatpush2.bf16.msra.mxu0 0
          %1539 = vmatprep.mubr.bf16.mxu0 0
          %1540 = vmatmul.mubr.bf16.gmra.mxu0 %v1002
          %v1541 = vpop.f32.mrf.mxu0
          %v1542 = vadd.f32 0.0, %v1541
          %v1543 = vpop.f32.mrf.mxu0
          %v1544 = vadd.f32 0.0, %v1543
          %v1545 = vpop.f32.mrf.mxu0
          %v1546 = vadd.f32 0.0, %v1545
          %v1547 = vpop.f32.mrf.mxu0
          %v1548 = vadd.f32 0.0, %v1547
          %1549 = vmatprep.mubr.bf16.mxu0 0
          %1550 = vmatmul.mubr.bf16.gmra.mxu0 %v1003
          %v1551 = vpop.f32.mrf.mxu0
          %v1552 = vadd.f32 0.0, %v1551
          %v1553 = vpop.f32.mrf.mxu0
          %v1554 = vadd.f32 0.0, %v1553
          %v1555 = vpop.f32.mrf.mxu0
          %v1556 = vadd.f32 0.0, %v1555
          %v1557 = vpop.f32.mrf.mxu0
          %v1558 = vadd.f32 0.0, %v1557
          %1559 = vmatprep.mubr.bf16.mxu0 0
          %1560 = vmatmul.mubr.bf16.gmra.mxu0 %v1004
          %v1561 = vpop.f32.mrf.mxu0
          %v1562 = vadd.f32 0.0, %v1561
          %v1563 = vpop.f32.mrf.mxu0
          %v1564 = vadd.f32 0.0, %v1563
          %v1565 = vpop.f32.mrf.mxu0
          %v1566 = vadd.f32 0.0, %v1565
          %v1567 = vpop.f32.mrf.mxu0
          %v1568 = vadd.f32 0.0, %v1567
          %1569 = vmatprep.mubr.bf16.mxu0 0
          %1570 = vmatmul.mubr.bf16.gmra.mxu0 %v1005
          %v1571 = vpop.f32.mrf.mxu0
          %v1572 = vadd.f32 0.0, %v1571
          %v1573 = vpop.f32.mrf.mxu0
          %v1574 = vadd.f32 0.0, %v1573
          %v1575 = vpop.f32.mrf.mxu0
          %v1576 = vadd.f32 0.0, %v1575
          %v1577 = vpop.f32.mrf.mxu0
          %v1578 = vadd.f32 0.0, %v1577
          %1579 = vmatprep.mubr.bf16.mxu0 0
          %1580 = vmatmul.mubr.bf16.gmra.mxu0 %v1006
          %v1581 = vpop.f32.mrf.mxu0
          %v1582 = vadd.f32 0.0, %v1581
          %v1583 = vpop.f32.mrf.mxu0
          %v1584 = vadd.f32 0.0, %v1583
          %v1585 = vpop.f32.mrf.mxu0
          %v1586 = vadd.f32 0.0, %v1585
          %v1587 = vpop.f32.mrf.mxu0
          %v1588 = vadd.f32 0.0, %v1587
          %1589 = vmatprep.mubr.bf16.mxu0 0
          %1590 = vmatmul.mubr.bf16.gmra.mxu0 %v1007
          %v1591 = vpop.f32.mrf.mxu0
          %v1592 = vadd.f32 0.0, %v1591
          %v1593 = vpop.f32.mrf.mxu0
          %v1594 = vadd.f32 0.0, %v1593
          %v1595 = vpop.f32.mrf.mxu0
          %v1596 = vadd.f32 0.0, %v1595
          %v1597 = vpop.f32.mrf.mxu0
          %v1598 = vadd.f32 0.0, %v1597
          %1599 = vmatprep.mubr.bf16.mxu0 0
          %1600 = vmatmul.mubr.bf16.gmra.mxu0 %v1008
          %v1601 = vpop.f32.mrf.mxu0
          %v1602 = vadd.f32 0.0, %v1601
          %v1603 = vpop.f32.mrf.mxu0
          %v1604 = vadd.f32 0.0, %v1603
          %v1605 = vpop.f32.mrf.mxu0
          %v1606 = vadd.f32 0.0, %v1605
          %v1607 = vpop.f32.mrf.mxu0
          %v1608 = vadd.f32 0.0, %v1607
          %1609 = vmatprep.mubr.bf16.mxu0 0
          %1610 = vmatmul.mubr.bf16.gmra.mxu0 %v1009
          %v1611 = vpop.f32.mrf.mxu0
          %v1612 = vadd.f32 0.0, %v1611
          %v1613 = vpop.f32.mrf.mxu0
          %v1614 = vadd.f32 0.0, %v1613
          %v1615 = vpop.f32.mrf.mxu0
          %v1616 = vadd.f32 0.0, %v1615
          %v1617 = vpop.f32.mrf.mxu0
          %v1618 = vadd.f32 0.0, %v1617
          %1619 = vdwg.mxu0
          %1620 = vmatprep.subr.bf16.mxu0 %v1327
          %1621 = vmatpush1.bf16.msra.mxu0 %v1326
          %1622 = vmatprep.subr.bf16.mxu0 %v1319
          %1623 = vmatpush1.bf16.msra.mxu0 %v1318
          %1624 = vmatprep.subr.bf16.mxu0 %v1311
          %1625 = vmatpush1.bf16.msra.mxu0 %v1310
          %1626 = vmatprep.subr.bf16.mxu0 %v1303
          %1627 = vmatpush1.bf16.msra.mxu0 %v1302
          %1628 = vmatprep.subr.bf16.mxu0 %v1295
          %1629 = vmatpush1.bf16.msra.mxu0 %v1294
          %1630 = vmatprep.subr.bf16.mxu0 %v1287
          %1631 = vmatpush1.bf16.msra.mxu0 %v1286
          %1632 = vmatprep.subr.bf16.mxu0 %v1279
          %1633 = vmatpush1.bf16.msra.mxu0 %v1278
          %1634 = vmatprep.subr.bf16.mxu0 %v1271
          %1635 = vmatpush1.bf16.msra.mxu0 %v1270
          %1636 = vmatprep.subr.bf16.mxu0 0
          %1637 = vmatpush2.bf16.msra.mxu0 0
          %1638 = vmatprep.subr.bf16.mxu0 0
          %1639 = vmatpush2.bf16.msra.mxu0 0
          %1640 = vmatprep.subr.bf16.mxu0 0
          %1641 = vmatpush2.bf16.msra.mxu0 0
          %1642 = vmatprep.subr.bf16.mxu0 0
          %1643 = vmatpush2.bf16.msra.mxu0 0
          %1644 = vmatprep.subr.bf16.mxu0 0
          %1645 = vmatpush2.bf16.msra.mxu0 0
          %1646 = vmatprep.subr.bf16.mxu0 0
          %1647 = vmatpush2.bf16.msra.mxu0 0
          %1648 = vmatprep.subr.bf16.mxu0 0
          %1649 = vmatpush2.bf16.msra.mxu0 0
          %1650 = vmatprep.subr.bf16.mxu0 0
          %1651 = vmatpush2.bf16.msra.mxu0 0
          %1652 = vmatprep.mubr.bf16.mxu0 0
          %1653 = vmatmul.mubr.bf16.gmra.mxu0 %v1002
          %v1654 = vpop.f32.mrf.mxu0
          %v1655 = vadd.f32 0.0, %v1654
          %v1656 = vpop.f32.mrf.mxu0
          %v1657 = vadd.f32 0.0, %v1656
          %v1658 = vpop.f32.mrf.mxu0
          %v1659 = vadd.f32 0.0, %v1658
          %v1660 = vpop.f32.mrf.mxu0
          %v1661 = vadd.f32 0.0, %v1660
          %1662 = vmatprep.mubr.bf16.mxu0 0
          %1663 = vmatmul.mubr.bf16.gmra.mxu0 %v1003
          %v1664 = vpop.f32.mrf.mxu0
          %v1665 = vadd.f32 0.0, %v1664
          %v1666 = vpop.f32.mrf.mxu0
          %v1667 = vadd.f32 0.0, %v1666
          %v1668 = vpop.f32.mrf.mxu0
          %v1669 = vadd.f32 0.0, %v1668
          %v1670 = vpop.f32.mrf.mxu0
          %v1671 = vadd.f32 0.0, %v1670
          %1672 = vmatprep.mubr.bf16.mxu0 0
          %1673 = vmatmul.mubr.bf16.gmra.mxu0 %v1004
          %v1674 = vpop.f32.mrf.mxu0
          %v1675 = vadd.f32 0.0, %v1674
          %v1676 = vpop.f32.mrf.mxu0
          %v1677 = vadd.f32 0.0, %v1676
          %v1678 = vpop.f32.mrf.mxu0
          %v1679 = vadd.f32 0.0, %v1678
          %v1680 = vpop.f32.mrf.mxu0
          %v1681 = vadd.f32 0.0, %v1680
          %1682 = vmatprep.mubr.bf16.mxu0 0
          %1683 = vmatmul.mubr.bf16.gmra.mxu0 %v1005
          %v1684 = vpop.f32.mrf.mxu0
          %v1685 = vadd.f32 0.0, %v1684
          %v1686 = vpop.f32.mrf.mxu0
          %v1687 = vadd.f32 0.0, %v1686
          %v1688 = vpop.f32.mrf.mxu0
          %v1689 = vadd.f32 0.0, %v1688
          %v1690 = vpop.f32.mrf.mxu0
          %v1691 = vadd.f32 0.0, %v1690
          %1692 = vmatprep.mubr.bf16.mxu0 0
          %1693 = vmatmul.mubr.bf16.gmra.mxu0 %v1006
          %v1694 = vpop.f32.mrf.mxu0
          %v1695 = vadd.f32 0.0, %v1694
          %v1696 = vpop.f32.mrf.mxu0
          %v1697 = vadd.f32 0.0, %v1696
          %v1698 = vpop.f32.mrf.mxu0
          %v1699 = vadd.f32 0.0, %v1698
          %v1700 = vpop.f32.mrf.mxu0
          %v1701 = vadd.f32 0.0, %v1700
          %1702 = vmatprep.mubr.bf16.mxu0 0
          %1703 = vmatmul.mubr.bf16.gmra.mxu0 %v1007
          %v1704 = vpop.f32.mrf.mxu0
          %v1705 = vadd.f32 0.0, %v1704
          %v1706 = vpop.f32.mrf.mxu0
          %v1707 = vadd.f32 0.0, %v1706
          %v1708 = vpop.f32.mrf.mxu0
          %v1709 = vadd.f32 0.0, %v1708
          %v1710 = vpop.f32.mrf.mxu0
          %v1711 = vadd.f32 0.0, %v1710
          %1712 = vmatprep.mubr.bf16.mxu0 0
          %1713 = vmatmul.mubr.bf16.gmra.mxu0 %v1008
          %v1714 = vpop.f32.mrf.mxu0
          %v1715 = vadd.f32 0.0, %v1714
          %v1716 = vpop.f32.mrf.mxu0
          %v1717 = vadd.f32 0.0, %v1716
          %v1718 = vpop.f32.mrf.mxu0
          %v1719 = vadd.f32 0.0, %v1718
          %v1720 = vpop.f32.mrf.mxu0
          %v1721 = vadd.f32 0.0, %v1720
          %1722 = vmatprep.mubr.bf16.mxu0 0
          %1723 = vmatmul.mubr.bf16.gmra.mxu0 %v1009
          %v1724 = vpop.f32.mrf.mxu0
          %v1725 = vadd.f32 0.0, %v1724
          %v1726 = vpop.f32.mrf.mxu0
          %v1727 = vadd.f32 0.0, %v1726
          %v1728 = vpop.f32.mrf.mxu0
          %v1729 = vadd.f32 0.0, %v1728
          %v1730 = vpop.f32.mrf.mxu0
          %v1731 = vadd.f32 0.0, %v1730
          %1732 = vdwg.mxu0
          %1733 = vmatprep.subr.bf16.mxu0 %v1329
          %1734 = vmatpush1.bf16.msra.mxu0 %v1328
          %1735 = vmatprep.subr.bf16.mxu0 %v1321
          %1736 = vmatpush1.bf16.msra.mxu0 %v1320
          %1737 = vmatprep.subr.bf16.mxu0 %v1313
          %1738 = vmatpush1.bf16.msra.mxu0 %v1312
          %1739 = vmatprep.subr.bf16.mxu0 %v1305
          %1740 = vmatpush1.bf16.msra.mxu0 %v1304
          %1741 = vmatprep.subr.bf16.mxu0 %v1297
          %1742 = vmatpush1.bf16.msra.mxu0 %v1296
          %1743 = vmatprep.subr.bf16.mxu0 %v1289
          %1744 = vmatpush1.bf16.msra.mxu0 %v1288
          %1745 = vmatprep.subr.bf16.mxu0 %v1281
          %1746 = vmatpush1.bf16.msra.mxu0 %v1280
          %1747 = vmatprep.subr.bf16.mxu0 %v1273
          %1748 = vmatpush1.bf16.msra.mxu0 %v1272
          %1749 = vmatprep.subr.bf16.mxu0 0
          %1750 = vmatpush2.bf16.msra.mxu0 0
          %1751 = vmatprep.subr.bf16.mxu0 0
          %1752 = vmatpush2.bf16.msra.mxu0 0
          %1753 = vmatprep.subr.bf16.mxu0 0
          %1754 = vmatpush2.bf16.msra.mxu0 0
          %1755 = vmatprep.subr.bf16.mxu0 0
          %1756 = vmatpush2.bf16.msra.mxu0 0
          %1757 = vmatprep.subr.bf16.mxu0 0
          %1758 = vmatpush2.bf16.msra.mxu0 0
          %1759 = vmatprep.subr.bf16.mxu0 0
          %1760 = vmatpush2.bf16.msra.mxu0 0
          %1761 = vmatprep.subr.bf16.mxu0 0
          %1762 = vmatpush2.bf16.msra.mxu0 0
          %1763 = vmatprep.subr.bf16.mxu0 0
          %1764 = vmatpush2.bf16.msra.mxu0 0
          %1765 = vmatprep.mubr.bf16.mxu0 0
          %1766 = vmatmul.mubr.bf16.gmra.mxu0 %v1002
          %v1767 = vpop.f32.mrf.mxu0
          %v1768 = vadd.f32 0.0, %v1767
          %v1769 = vpop.f32.mrf.mxu0
          %v1770 = vadd.f32 0.0, %v1769
          %v1771 = vpop.f32.mrf.mxu0
          %v1772 = vadd.f32 0.0, %v1771
          %v1773 = vpop.f32.mrf.mxu0
          %v1774 = vadd.f32 0.0, %v1773
          %1775 = vmatprep.mubr.bf16.mxu0 0
          %1776 = vmatmul.mubr.bf16.gmra.mxu0 %v1003
          %v1777 = vpop.f32.mrf.mxu0
          %v1778 = vadd.f32 0.0, %v1777
          %v1779 = vpop.f32.mrf.mxu0
          %v1780 = vadd.f32 0.0, %v1779
          %v1781 = vpop.f32.mrf.mxu0
          %v1782 = vadd.f32 0.0, %v1781
          %v1783 = vpop.f32.mrf.mxu0
          %v1784 = vadd.f32 0.0, %v1783
          %1785 = vmatprep.mubr.bf16.mxu0 0
          %1786 = vmatmul.mubr.bf16.gmra.mxu0 %v1004
          %v1787 = vpop.f32.mrf.mxu0
          %v1788 = vadd.f32 0.0, %v1787
          %v1789 = vpop.f32.mrf.mxu0
          %v1790 = vadd.f32 0.0, %v1789
          %v1791 = vpop.f32.mrf.mxu0
          %v1792 = vadd.f32 0.0, %v1791
          %v1793 = vpop.f32.mrf.mxu0
          %v1794 = vadd.f32 0.0, %v1793
          %1795 = vmatprep.mubr.bf16.mxu0 0
          %1796 = vmatmul.mubr.bf16.gmra.mxu0 %v1005
          %v1797 = vpop.f32.mrf.mxu0
          %v1798 = vadd.f32 0.0, %v1797
          %v1799 = vpop.f32.mrf.mxu0
          %v1800 = vadd.f32 0.0, %v1799
          %v1801 = vpop.f32.mrf.mxu0
          %v1802 = vadd.f32 0.0, %v1801
          %v1803 = vpop.f32.mrf.mxu0
          %v1804 = vadd.f32 0.0, %v1803
          %1805 = vmatprep.mubr.bf16.mxu0 0
          %1806 = vmatmul.mubr.bf16.gmra.mxu0 %v1006
          %v1807 = vpop.f32.mrf.mxu0
          %v1808 = vadd.f32 0.0, %v1807
          %v1809 = vpop.f32.mrf.mxu0
          %v1810 = vadd.f32 0.0, %v1809
          %v1811 = vpop.f32.mrf.mxu0
          %v1812 = vadd.f32 0.0, %v1811
          %v1813 = vpop.f32.mrf.mxu0
          %v1814 = vadd.f32 0.0, %v1813
          %1815 = vmatprep.mubr.bf16.mxu0 0
          %1816 = vmatmul.mubr.bf16.gmra.mxu0 %v1007
          %v1817 = vpop.f32.mrf.mxu0
          %v1818 = vadd.f32 0.0, %v1817
          %v1819 = vpop.f32.mrf.mxu0
          %v1820 = vadd.f32 0.0, %v1819
          %v1821 = vpop.f32.mrf.mxu0
          %v1822 = vadd.f32 0.0, %v1821
          %v1823 = vpop.f32.mrf.mxu0
          %v1824 = vadd.f32 0.0, %v1823
          %1825 = vmatprep.mubr.bf16.mxu0 0
          %1826 = vmatmul.mubr.bf16.gmra.mxu0 %v1008
          %v1827 = vpop.f32.mrf.mxu0
          %v1828 = vadd.f32 0.0, %v1827
          %v1829 = vpop.f32.mrf.mxu0
          %v1830 = vadd.f32 0.0, %v1829
          %v1831 = vpop.f32.mrf.mxu0
          %v1832 = vadd.f32 0.0, %v1831
          %v1833 = vpop.f32.mrf.mxu0
          %v1834 = vadd.f32 0.0, %v1833
          %1835 = vmatprep.mubr.bf16.mxu0 0
          %1836 = vmatmul.mubr.bf16.gmra.mxu0 %v1009
          %v1837 = vpop.f32.mrf.mxu0
          %v1838 = vadd.f32 0.0, %v1837
          %v1839 = vpop.f32.mrf.mxu0
          %v1840 = vadd.f32 0.0, %v1839
          %v1841 = vpop.f32.mrf.mxu0
          %v1842 = vadd.f32 0.0, %v1841
          %v1843 = vpop.f32.mrf.mxu0
          %v1844 = vadd.f32 0.0, %v1843
          %1845 = vdwg.mxu0
          %v1846 = vadd.f32 %v1429, 0.0
          %v1847 = vadd.f32 %v1431, 0.0
          %v1848 = vadd.f32 %v1542, 0.0
          %v1849 = vadd.f32 %v1544, 0.0
          %v1850 = vadd.f32 %v1655, 0.0
          %v1851 = vadd.f32 %v1657, 0.0
          %v1852 = vadd.f32 %v1768, 0.0
          %v1853 = vadd.f32 %v1770, 0.0
          %v1854 = vmul.f32 %v1429, %v1429
          %v1855 = vmul.f32 %v1431, %v1431
          %v1856 = vmul.f32 %v1542, %v1542
          %v1857 = vmul.f32 %v1544, %v1544
          %v1858 = vmul.f32 %v1655, %v1655
          %v1859 = vmul.f32 %v1657, %v1657
          %v1860 = vmul.f32 %v1768, %v1768
          %v1861 = vmul.f32 %v1770, %v1770
          %v1862 = vadd.f32 %v1854, 0.0
          %v1863 = vadd.f32 %v1855, 0.0
          %v1864 = vadd.f32 %v1856, 0.0
          %v1865 = vadd.f32 %v1857, 0.0
          %v1866 = vadd.f32 %v1858, 0.0
          %v1867 = vadd.f32 %v1859, 0.0
          %v1868 = vadd.f32 %v1860, 0.0
          %v1869 = vadd.f32 %v1861, 0.0
          %v1870 = vadd.f32 %v1846, %v1433
          %v1871 = vadd.f32 %v1847, %v1435
          %v1872 = vadd.f32 %v1848, %v1546
          %v1873 = vadd.f32 %v1849, %v1548
          %v1874 = vadd.f32 %v1850, %v1659
          %v1875 = vadd.f32 %v1851, %v1661
          %v1876 = vadd.f32 %v1852, %v1772
          %v1877 = vadd.f32 %v1853, %v1774
          %v1878 = vmul.f32 %v1433, %v1433
          %v1879 = vmul.f32 %v1435, %v1435
          %v1880 = vmul.f32 %v1546, %v1546
          %v1881 = vmul.f32 %v1548, %v1548
          %v1882 = vmul.f32 %v1659, %v1659
          %v1883 = vmul.f32 %v1661, %v1661
          %v1884 = vmul.f32 %v1772, %v1772
          %v1885 = vmul.f32 %v1774, %v1774
          %v1886 = vadd.f32 %v1862, %v1878
          %v1887 = vadd.f32 %v1863, %v1879
          %v1888 = vadd.f32 %v1864, %v1880
          %v1889 = vadd.f32 %v1865, %v1881
          %v1890 = vadd.f32 %v1866, %v1882
          %v1891 = vadd.f32 %v1867, %v1883
          %v1892 = vadd.f32 %v1868, %v1884
          %v1893 = vadd.f32 %v1869, %v1885
          %v1894 = vmax.f32 %v1429, %v1433
          %v1895 = vmax.f32 %v1431, %v1435
          %v1896 = vmax.f32 %v1542, %v1546
          %v1897 = vmax.f32 %v1544, %v1548
          %v1898 = vmax.f32 %v1655, %v1659
          %v1899 = vmax.f32 %v1657, %v1661
          %v1900 = vmax.f32 %v1768, %v1772
          %v1901 = vmax.f32 %v1770, %v1774
          %v1902 = vmin.f32 %v1429, %v1433
          %v1903 = vmin.f32 %v1431, %v1435
          %v1904 = vmin.f32 %v1542, %v1546
          %v1905 = vmin.f32 %v1544, %v1548
          %v1906 = vmin.f32 %v1655, %v1659
          %v1907 = vmin.f32 %v1657, %v1661
          %v1908 = vmin.f32 %v1768, %v1772
          %v1909 = vmin.f32 %v1770, %v1774
          %v1910 = vadd.f32 %v1870, %v1439
          %v1911 = vadd.f32 %v1871, %v1441
          %v1912 = vadd.f32 %v1872, %v1552
          %v1913 = vadd.f32 %v1873, %v1554
          %v1914 = vadd.f32 %v1874, %v1665
          %v1915 = vadd.f32 %v1875, %v1667
          %v1916 = vadd.f32 %v1876, %v1778
          %v1917 = vadd.f32 %v1877, %v1780
          %v1918 = vmul.f32 %v1439, %v1439
          %v1919 = vmul.f32 %v1441, %v1441
          %v1920 = vmul.f32 %v1552, %v1552
          %v1921 = vmul.f32 %v1554, %v1554
          %v1922 = vmul.f32 %v1665, %v1665
          %v1923 = vmul.f32 %v1667, %v1667
          %v1924 = vmul.f32 %v1778, %v1778
          %v1925 = vmul.f32 %v1780, %v1780
          %v1926 = vadd.f32 %v1886, %v1918
          %v1927 = vadd.f32 %v1887, %v1919
          %v1928 = vadd.f32 %v1888, %v1920
          %v1929 = vadd.f32 %v1889, %v1921
          %v1930 = vadd.f32 %v1890, %v1922
          %v1931 = vadd.f32 %v1891, %v1923
          %v1932 = vadd.f32 %v1892, %v1924
          %v1933 = vadd.f32 %v1893, %v1925
          %v1934 = vmax.f32 %v1894, %v1439
          %v1935 = vmax.f32 %v1895, %v1441
          %v1936 = vmax.f32 %v1896, %v1552
          %v1937 = vmax.f32 %v1897, %v1554
          %v1938 = vmax.f32 %v1898, %v1665
          %v1939 = vmax.f32 %v1899, %v1667
          %v1940 = vmax.f32 %v1900, %v1778
          %v1941 = vmax.f32 %v1901, %v1780
          %v1942 = vmin.f32 %v1902, %v1439
          %v1943 = vmin.f32 %v1903, %v1441
          %v1944 = vmin.f32 %v1904, %v1552
          %v1945 = vmin.f32 %v1905, %v1554
          %v1946 = vmin.f32 %v1906, %v1665
          %v1947 = vmin.f32 %v1907, %v1667
          %v1948 = vmin.f32 %v1908, %v1778
          %v1949 = vmin.f32 %v1909, %v1780
          %v1950 = vadd.f32 %v1910, %v1443
          %v1951 = vadd.f32 %v1911, %v1445
          %v1952 = vadd.f32 %v1912, %v1556
          %v1953 = vadd.f32 %v1913, %v1558
          %v1954 = vadd.f32 %v1914, %v1669
          %v1955 = vadd.f32 %v1915, %v1671
          %v1956 = vadd.f32 %v1916, %v1782
          %v1957 = vadd.f32 %v1917, %v1784
          %v1958 = vmul.f32 %v1443, %v1443
          %v1959 = vmul.f32 %v1445, %v1445
          %v1960 = vmul.f32 %v1556, %v1556
          %v1961 = vmul.f32 %v1558, %v1558
          %v1962 = vmul.f32 %v1669, %v1669
          %v1963 = vmul.f32 %v1671, %v1671
          %v1964 = vmul.f32 %v1782, %v1782
          %v1965 = vmul.f32 %v1784, %v1784
          %v1966 = vadd.f32 %v1926, %v1958
          %v1967 = vadd.f32 %v1927, %v1959
          %v1968 = vadd.f32 %v1928, %v1960
          %v1969 = vadd.f32 %v1929, %v1961
          %v1970 = vadd.f32 %v1930, %v1962
          %v1971 = vadd.f32 %v1931, %v1963
          %v1972 = vadd.f32 %v1932, %v1964
          %v1973 = vadd.f32 %v1933, %v1965
          %v1974 = vmax.f32 %v1934, %v1443
          %v1975 = vmax.f32 %v1935, %v1445
          %v1976 = vmax.f32 %v1936, %v1556
          %v1977 = vmax.f32 %v1937, %v1558
          %v1978 = vmax.f32 %v1938, %v1669
          %v1979 = vmax.f32 %v1939, %v1671
          %v1980 = vmax.f32 %v1940, %v1782
          %v1981 = vmax.f32 %v1941, %v1784
          %v1982 = vmin.f32 %v1942, %v1443
          %v1983 = vmin.f32 %v1943, %v1445
          %v1984 = vmin.f32 %v1944, %v1556
          %v1985 = vmin.f32 %v1945, %v1558
          %v1986 = vmin.f32 %v1946, %v1669
          %v1987 = vmin.f32 %v1947, %v1671
          %v1988 = vmin.f32 %v1948, %v1782
          %v1989 = vmin.f32 %v1949, %v1784
          %v1990 = vadd.f32 %v1950, %v1449
          %v1991 = vadd.f32 %v1951, %v1451
          %v1992 = vadd.f32 %v1952, %v1562
          %v1993 = vadd.f32 %v1953, %v1564
          %v1994 = vadd.f32 %v1954, %v1675
          %v1995 = vadd.f32 %v1955, %v1677
          %v1996 = vadd.f32 %v1956, %v1788
          %v1997 = vadd.f32 %v1957, %v1790
          %v1998 = vmul.f32 %v1449, %v1449
          %v1999 = vmul.f32 %v1451, %v1451
          %v2000 = vmul.f32 %v1562, %v1562
          %v2001 = vmul.f32 %v1564, %v1564
          %v2002 = vmul.f32 %v1675, %v1675
          %v2003 = vmul.f32 %v1677, %v1677
          %v2004 = vmul.f32 %v1788, %v1788
          %v2005 = vmul.f32 %v1790, %v1790
          %v2006 = vadd.f32 %v1966, %v1998
          %v2007 = vadd.f32 %v1967, %v1999
          %v2008 = vadd.f32 %v1968, %v2000
          %v2009 = vadd.f32 %v1969, %v2001
          %v2010 = vadd.f32 %v1970, %v2002
          %v2011 = vadd.f32 %v1971, %v2003
          %v2012 = vadd.f32 %v1972, %v2004
          %v2013 = vadd.f32 %v1973, %v2005
          %v2014 = vmax.f32 %v1974, %v1449
          %v2015 = vmax.f32 %v1975, %v1451
          %v2016 = vmax.f32 %v1976, %v1562
          %v2017 = vmax.f32 %v1977, %v1564
          %v2018 = vmax.f32 %v1978, %v1675
          %v2019 = vmax.f32 %v1979, %v1677
          %v2020 = vmax.f32 %v1980, %v1788
          %v2021 = vmax.f32 %v1981, %v1790
          %v2022 = vmin.f32 %v1982, %v1449
          %v2023 = vmin.f32 %v1983, %v1451
          %v2024 = vmin.f32 %v1984, %v1562
          %v2025 = vmin.f32 %v1985, %v1564
          %v2026 = vmin.f32 %v1986, %v1675
          %v2027 = vmin.f32 %v1987, %v1677
          %v2028 = vmin.f32 %v1988, %v1788
          %v2029 = vmin.f32 %v1989, %v1790
          %v2030 = vadd.f32 %v1990, %v1453
          %v2031 = vadd.f32 %v1991, %v1455
          %v2032 = vadd.f32 %v1992, %v1566
          %v2033 = vadd.f32 %v1993, %v1568
          %v2034 = vadd.f32 %v1994, %v1679
          %v2035 = vadd.f32 %v1995, %v1681
          %v2036 = vadd.f32 %v1996, %v1792
          %v2037 = vadd.f32 %v1997, %v1794
          %v2038 = vmul.f32 %v1453, %v1453
          %v2039 = vmul.f32 %v1455, %v1455
          %v2040 = vmul.f32 %v1566, %v1566
          %v2041 = vmul.f32 %v1568, %v1568
          %v2042 = vmul.f32 %v1679, %v1679
          %v2043 = vmul.f32 %v1681, %v1681
          %v2044 = vmul.f32 %v1792, %v1792
          %v2045 = vmul.f32 %v1794, %v1794
          %v2046 = vadd.f32 %v2006, %v2038
          %v2047 = vadd.f32 %v2007, %v2039
          %v2048 = vadd.f32 %v2008, %v2040
          %v2049 = vadd.f32 %v2009, %v2041
          %v2050 = vadd.f32 %v2010, %v2042
          %v2051 = vadd.f32 %v2011, %v2043
          %v2052 = vadd.f32 %v2012, %v2044
          %v2053 = vadd.f32 %v2013, %v2045
          %v2054 = vmax.f32 %v2014, %v1453
          %v2055 = vmax.f32 %v2015, %v1455
          %v2056 = vmax.f32 %v2016, %v1566
          %v2057 = vmax.f32 %v2017, %v1568
          %v2058 = vmax.f32 %v2018, %v1679
          %v2059 = vmax.f32 %v2019, %v1681
          %v2060 = vmax.f32 %v2020, %v1792
          %v2061 = vmax.f32 %v2021, %v1794
          %v2062 = vmin.f32 %v2022, %v1453
          %v2063 = vmin.f32 %v2023, %v1455
          %v2064 = vmin.f32 %v2024, %v1566
          %v2065 = vmin.f32 %v2025, %v1568
          %v2066 = vmin.f32 %v2026, %v1679
          %v2067 = vmin.f32 %v2027, %v1681
          %v2068 = vmin.f32 %v2028, %v1792
          %v2069 = vmin.f32 %v2029, %v1794
          %v2070 = vadd.f32 %v2030, %v1459
          %v2071 = vadd.f32 %v2031, %v1461
          %v2072 = vadd.f32 %v2032, %v1572
          %v2073 = vadd.f32 %v2033, %v1574
          %v2074 = vadd.f32 %v2034, %v1685
          %v2075 = vadd.f32 %v2035, %v1687
          %v2076 = vadd.f32 %v2036, %v1798
          %v2077 = vadd.f32 %v2037, %v1800
          %v2078 = vmul.f32 %v1459, %v1459
          %v2079 = vmul.f32 %v1461, %v1461
          %v2080 = vmul.f32 %v1572, %v1572
          %v2081 = vmul.f32 %v1574, %v1574
          %v2082 = vmul.f32 %v1685, %v1685
          %v2083 = vmul.f32 %v1687, %v1687
          %v2084 = vmul.f32 %v1798, %v1798
          %v2085 = vmul.f32 %v1800, %v1800
          %v2086 = vadd.f32 %v2046, %v2078
          %v2087 = vadd.f32 %v2047, %v2079
          %v2088 = vadd.f32 %v2048, %v2080
          %v2089 = vadd.f32 %v2049, %v2081
          %v2090 = vadd.f32 %v2050, %v2082
          %v2091 = vadd.f32 %v2051, %v2083
          %v2092 = vadd.f32 %v2052, %v2084
          %v2093 = vadd.f32 %v2053, %v2085
          %v2094 = vmax.f32 %v2054, %v1459
          %v2095 = vmax.f32 %v2055, %v1461
          %v2096 = vmax.f32 %v2056, %v1572
          %v2097 = vmax.f32 %v2057, %v1574
          %v2098 = vmax.f32 %v2058, %v1685
          %v2099 = vmax.f32 %v2059, %v1687
          %v2100 = vmax.f32 %v2060, %v1798
          %v2101 = vmax.f32 %v2061, %v1800
          %v2102 = vmin.f32 %v2062, %v1459
          %v2103 = vmin.f32 %v2063, %v1461
          %v2104 = vmin.f32 %v2064, %v1572
          %v2105 = vmin.f32 %v2065, %v1574
          %v2106 = vmin.f32 %v2066, %v1685
          %v2107 = vmin.f32 %v2067, %v1687
          %v2108 = vmin.f32 %v2068, %v1798
          %v2109 = vmin.f32 %v2069, %v1800
          %v2110 = vadd.f32 %v2070, %v1463
          %v2111 = vadd.f32 %v2071, %v1465
          %v2112 = vadd.f32 %v2072, %v1576
          %v2113 = vadd.f32 %v2073, %v1578
          %v2114 = vadd.f32 %v2074, %v1689
          %v2115 = vadd.f32 %v2075, %v1691
          %v2116 = vadd.f32 %v2076, %v1802
          %v2117 = vadd.f32 %v2077, %v1804
          %v2118 = vmul.f32 %v1463, %v1463
          %v2119 = vmul.f32 %v1465, %v1465
          %v2120 = vmul.f32 %v1576, %v1576
          %v2121 = vmul.f32 %v1578, %v1578
          %v2122 = vmul.f32 %v1689, %v1689
          %v2123 = vmul.f32 %v1691, %v1691
          %v2124 = vmul.f32 %v1802, %v1802
          %v2125 = vmul.f32 %v1804, %v1804
          %v2126 = vadd.f32 %v2086, %v2118
          %v2127 = vadd.f32 %v2087, %v2119
          %v2128 = vadd.f32 %v2088, %v2120
          %v2129 = vadd.f32 %v2089, %v2121
          %v2130 = vadd.f32 %v2090, %v2122
          %v2131 = vadd.f32 %v2091, %v2123
          %v2132 = vadd.f32 %v2092, %v2124
          %v2133 = vadd.f32 %v2093, %v2125
          %v2134 = vmax.f32 %v2094, %v1463
          %v2135 = vmax.f32 %v2095, %v1465
          %v2136 = vmax.f32 %v2096, %v1576
          %v2137 = vmax.f32 %v2097, %v1578
          %v2138 = vmax.f32 %v2098, %v1689
          %v2139 = vmax.f32 %v2099, %v1691
          %v2140 = vmax.f32 %v2100, %v1802
          %v2141 = vmax.f32 %v2101, %v1804
          %v2142 = vmin.f32 %v2102, %v1463
          %v2143 = vmin.f32 %v2103, %v1465
          %v2144 = vmin.f32 %v2104, %v1576
          %v2145 = vmin.f32 %v2105, %v1578
          %v2146 = vmin.f32 %v2106, %v1689
          %v2147 = vmin.f32 %v2107, %v1691
          %v2148 = vmin.f32 %v2108, %v1802
          %v2149 = vmin.f32 %v2109, %v1804
          %v2150 = vadd.f32 %v2110, %v1469
          %v2151 = vadd.f32 %v2111, %v1471
          %v2152 = vadd.f32 %v2112, %v1582
          %v2153 = vadd.f32 %v2113, %v1584
          %v2154 = vadd.f32 %v2114, %v1695
          %v2155 = vadd.f32 %v2115, %v1697
          %v2156 = vadd.f32 %v2116, %v1808
          %v2157 = vadd.f32 %v2117, %v1810
          %v2158 = vmul.f32 %v1469, %v1469
          %v2159 = vmul.f32 %v1471, %v1471
          %v2160 = vmul.f32 %v1582, %v1582
          %v2161 = vmul.f32 %v1584, %v1584
          %v2162 = vmul.f32 %v1695, %v1695
          %v2163 = vmul.f32 %v1697, %v1697
          %v2164 = vmul.f32 %v1808, %v1808
          %v2165 = vmul.f32 %v1810, %v1810
          %v2166 = vadd.f32 %v2126, %v2158
          %v2167 = vadd.f32 %v2127, %v2159
          %v2168 = vadd.f32 %v2128, %v2160
          %v2169 = vadd.f32 %v2129, %v2161
          %v2170 = vadd.f32 %v2130, %v2162
          %v2171 = vadd.f32 %v2131, %v2163
          %v2172 = vadd.f32 %v2132, %v2164
          %v2173 = vadd.f32 %v2133, %v2165
          %v2174 = vmax.f32 %v2134, %v1469
          %v2175 = vmax.f32 %v2135, %v1471
          %v2176 = vmax.f32 %v2136, %v1582
          %v2177 = vmax.f32 %v2137, %v1584
          %v2178 = vmax.f32 %v2138, %v1695
          %v2179 = vmax.f32 %v2139, %v1697
          %v2180 = vmax.f32 %v2140, %v1808
          %v2181 = vmax.f32 %v2141, %v1810
          %v2182 = vmin.f32 %v2142, %v1469
          %v2183 = vmin.f32 %v2143, %v1471
          %v2184 = vmin.f32 %v2144, %v1582
          %v2185 = vmin.f32 %v2145, %v1584
          %v2186 = vmin.f32 %v2146, %v1695
          %v2187 = vmin.f32 %v2147, %v1697
          %v2188 = vmin.f32 %v2148, %v1808
          %v2189 = vmin.f32 %v2149, %v1810
          %v2190 = vadd.f32 %v2150, %v1473
          %v2191 = vadd.f32 %v2151, %v1475
          %v2192 = vadd.f32 %v2152, %v1586
          %v2193 = vadd.f32 %v2153, %v1588
          %v2194 = vadd.f32 %v2154, %v1699
          %v2195 = vadd.f32 %v2155, %v1701
          %v2196 = vadd.f32 %v2156, %v1812
          %v2197 = vadd.f32 %v2157, %v1814
          %v2198 = vmul.f32 %v1473, %v1473
          %v2199 = vmul.f32 %v1475, %v1475
          %v2200 = vmul.f32 %v1586, %v1586
          %v2201 = vmul.f32 %v1588, %v1588
          %v2202 = vmul.f32 %v1699, %v1699
          %v2203 = vmul.f32 %v1701, %v1701
          %v2204 = vmul.f32 %v1812, %v1812
          %v2205 = vmul.f32 %v1814, %v1814
          %v2206 = vadd.f32 %v2166, %v2198
          %v2207 = vadd.f32 %v2167, %v2199
          %v2208 = vadd.f32 %v2168, %v2200
          %v2209 = vadd.f32 %v2169, %v2201
          %v2210 = vadd.f32 %v2170, %v2202
          %v2211 = vadd.f32 %v2171, %v2203
          %v2212 = vadd.f32 %v2172, %v2204
          %v2213 = vadd.f32 %v2173, %v2205
          %v2214 = vmax.f32 %v2174, %v1473
          %v2215 = vmax.f32 %v2175, %v1475
          %v2216 = vmax.f32 %v2176, %v1586
          %v2217 = vmax.f32 %v2177, %v1588
          %v2218 = vmax.f32 %v2178, %v1699
          %v2219 = vmax.f32 %v2179, %v1701
          %v2220 = vmax.f32 %v2180, %v1812
          %v2221 = vmax.f32 %v2181, %v1814
          %v2222 = vmin.f32 %v2182, %v1473
          %v2223 = vmin.f32 %v2183, %v1475
          %v2224 = vmin.f32 %v2184, %v1586
          %v2225 = vmin.f32 %v2185, %v1588
          %v2226 = vmin.f32 %v2186, %v1699
          %v2227 = vmin.f32 %v2187, %v1701
          %v2228 = vmin.f32 %v2188, %v1812
          %v2229 = vmin.f32 %v2189, %v1814
          %v2230 = vadd.f32 %v2190, %v1479
          %v2231 = vadd.f32 %v2191, %v1481
          %v2232 = vadd.f32 %v2192, %v1592
          %v2233 = vadd.f32 %v2193, %v1594
          %v2234 = vadd.f32 %v2194, %v1705
          %v2235 = vadd.f32 %v2195, %v1707
          %v2236 = vadd.f32 %v2196, %v1818
          %v2237 = vadd.f32 %v2197, %v1820
          %v2238 = vmul.f32 %v1479, %v1479
          %v2239 = vmul.f32 %v1481, %v1481
          %v2240 = vmul.f32 %v1592, %v1592
          %v2241 = vmul.f32 %v1594, %v1594
          %v2242 = vmul.f32 %v1705, %v1705
          %v2243 = vmul.f32 %v1707, %v1707
          %v2244 = vmul.f32 %v1818, %v1818
          %v2245 = vmul.f32 %v1820, %v1820
          %v2246 = vadd.f32 %v2206, %v2238
          %v2247 = vadd.f32 %v2207, %v2239
          %v2248 = vadd.f32 %v2208, %v2240
          %v2249 = vadd.f32 %v2209, %v2241
          %v2250 = vadd.f32 %v2210, %v2242
          %v2251 = vadd.f32 %v2211, %v2243
          %v2252 = vadd.f32 %v2212, %v2244
          %v2253 = vadd.f32 %v2213, %v2245
          %v2254 = vmax.f32 %v2214, %v1479
          %v2255 = vmax.f32 %v2215, %v1481
          %v2256 = vmax.f32 %v2216, %v1592
          %v2257 = vmax.f32 %v2217, %v1594
          %v2258 = vmax.f32 %v2218, %v1705
          %v2259 = vmax.f32 %v2219, %v1707
          %v2260 = vmax.f32 %v2220, %v1818
          %v2261 = vmax.f32 %v2221, %v1820
          %v2262 = vmin.f32 %v2222, %v1479
          %v2263 = vmin.f32 %v2223, %v1481
          %v2264 = vmin.f32 %v2224, %v1592
          %v2265 = vmin.f32 %v2225, %v1594
          %v2266 = vmin.f32 %v2226, %v1705
          %v2267 = vmin.f32 %v2227, %v1707
          %v2268 = vmin.f32 %v2228, %v1818
          %v2269 = vmin.f32 %v2229, %v1820
          %v2270 = vadd.f32 %v2230, %v1483
          %v2271 = vadd.f32 %v2231, %v1485
          %v2272 = vadd.f32 %v2232, %v1596
          %v2273 = vadd.f32 %v2233, %v1598
          %v2274 = vadd.f32 %v2234, %v1709
          %v2275 = vadd.f32 %v2235, %v1711
          %v2276 = vadd.f32 %v2236, %v1822
          %v2277 = vadd.f32 %v2237, %v1824
          %v2278 = vmul.f32 %v1483, %v1483
          %v2279 = vmul.f32 %v1485, %v1485
          %v2280 = vmul.f32 %v1596, %v1596
          %v2281 = vmul.f32 %v1598, %v1598
          %v2282 = vmul.f32 %v1709, %v1709
          %v2283 = vmul.f32 %v1711, %v1711
          %v2284 = vmul.f32 %v1822, %v1822
          %v2285 = vmul.f32 %v1824, %v1824
          %v2286 = vadd.f32 %v2246, %v2278
          %v2287 = vadd.f32 %v2247, %v2279
          %v2288 = vadd.f32 %v2248, %v2280
          %v2289 = vadd.f32 %v2249, %v2281
          %v2290 = vadd.f32 %v2250, %v2282
          %v2291 = vadd.f32 %v2251, %v2283
          %v2292 = vadd.f32 %v2252, %v2284
          %v2293 = vadd.f32 %v2253, %v2285
          %v2294 = vmax.f32 %v2254, %v1483
          %v2295 = vmax.f32 %v2255, %v1485
          %v2296 = vmax.f32 %v2256, %v1596
          %v2297 = vmax.f32 %v2257, %v1598
          %v2298 = vmax.f32 %v2258, %v1709
          %v2299 = vmax.f32 %v2259, %v1711
          %v2300 = vmax.f32 %v2260, %v1822
          %v2301 = vmax.f32 %v2261, %v1824
          %v2302 = vmin.f32 %v2262, %v1483
          %v2303 = vmin.f32 %v2263, %v1485
          %v2304 = vmin.f32 %v2264, %v1596
          %v2305 = vmin.f32 %v2265, %v1598
          %v2306 = vmin.f32 %v2266, %v1709
          %v2307 = vmin.f32 %v2267, %v1711
          %v2308 = vmin.f32 %v2268, %v1822
          %v2309 = vmin.f32 %v2269, %v1824
          %v2310 = vadd.f32 %v2270, %v1489
          %v2311 = vadd.f32 %v2271, %v1491
          %v2312 = vadd.f32 %v2272, %v1602
          %v2313 = vadd.f32 %v2273, %v1604
          %v2314 = vadd.f32 %v2274, %v1715
          %v2315 = vadd.f32 %v2275, %v1717
          %v2316 = vadd.f32 %v2276, %v1828
          %v2317 = vadd.f32 %v2277, %v1830
          %v2318 = vmul.f32 %v1489, %v1489
          %v2319 = vmul.f32 %v1491, %v1491
          %v2320 = vmul.f32 %v1602, %v1602
          %v2321 = vmul.f32 %v1604, %v1604
          %v2322 = vmul.f32 %v1715, %v1715
          %v2323 = vmul.f32 %v1717, %v1717
          %v2324 = vmul.f32 %v1828, %v1828
          %v2325 = vmul.f32 %v1830, %v1830
          %v2326 = vadd.f32 %v2286, %v2318
          %v2327 = vadd.f32 %v2287, %v2319
          %v2328 = vadd.f32 %v2288, %v2320
          %v2329 = vadd.f32 %v2289, %v2321
          %v2330 = vadd.f32 %v2290, %v2322
          %v2331 = vadd.f32 %v2291, %v2323
          %v2332 = vadd.f32 %v2292, %v2324
          %v2333 = vadd.f32 %v2293, %v2325
          %v2334 = vmax.f32 %v2294, %v1489
          %v2335 = vmax.f32 %v2295, %v1491
          %v2336 = vmax.f32 %v2296, %v1602
          %v2337 = vmax.f32 %v2297, %v1604
          %v2338 = vmax.f32 %v2298, %v1715
          %v2339 = vmax.f32 %v2299, %v1717
          %v2340 = vmax.f32 %v2300, %v1828
          %v2341 = vmax.f32 %v2301, %v1830
          %v2342 = vmin.f32 %v2302, %v1489
          %v2343 = vmin.f32 %v2303, %v1491
          %v2344 = vmin.f32 %v2304, %v1602
          %v2345 = vmin.f32 %v2305, %v1604
          %v2346 = vmin.f32 %v2306, %v1715
          %v2347 = vmin.f32 %v2307, %v1717
          %v2348 = vmin.f32 %v2308, %v1828
          %v2349 = vmin.f32 %v2309, %v1830
          %v2350 = vadd.f32 %v2310, %v1493
          %v2351 = vadd.f32 %v2311, %v1495
          %v2352 = vadd.f32 %v2312, %v1606
          %v2353 = vadd.f32 %v2313, %v1608
          %v2354 = vadd.f32 %v2314, %v1719
          %v2355 = vadd.f32 %v2315, %v1721
          %v2356 = vadd.f32 %v2316, %v1832
          %v2357 = vadd.f32 %v2317, %v1834
          %v2358 = vmul.f32 %v1493, %v1493
          %v2359 = vmul.f32 %v1495, %v1495
          %v2360 = vmul.f32 %v1606, %v1606
          %v2361 = vmul.f32 %v1608, %v1608
          %v2362 = vmul.f32 %v1719, %v1719
          %v2363 = vmul.f32 %v1721, %v1721
          %v2364 = vmul.f32 %v1832, %v1832
          %v2365 = vmul.f32 %v1834, %v1834
          %v2366 = vadd.f32 %v2326, %v2358
          %v2367 = vadd.f32 %v2327, %v2359
          %v2368 = vadd.f32 %v2328, %v2360
          %v2369 = vadd.f32 %v2329, %v2361
          %v2370 = vadd.f32 %v2330, %v2362
          %v2371 = vadd.f32 %v2331, %v2363
          %v2372 = vadd.f32 %v2332, %v2364
          %v2373 = vadd.f32 %v2333, %v2365
          %v2374 = vmax.f32 %v2334, %v1493
          %v2375 = vmax.f32 %v2335, %v1495
          %v2376 = vmax.f32 %v2336, %v1606
          %v2377 = vmax.f32 %v2337, %v1608
          %v2378 = vmax.f32 %v2338, %v1719
          %v2379 = vmax.f32 %v2339, %v1721
          %v2380 = vmax.f32 %v2340, %v1832
          %v2381 = vmax.f32 %v2341, %v1834
          %v2382 = vmin.f32 %v2342, %v1493
          %v2383 = vmin.f32 %v2343, %v1495
          %v2384 = vmin.f32 %v2344, %v1606
          %v2385 = vmin.f32 %v2345, %v1608
          %v2386 = vmin.f32 %v2346, %v1719
          %v2387 = vmin.f32 %v2347, %v1721
          %v2388 = vmin.f32 %v2348, %v1832
          %v2389 = vmin.f32 %v2349, %v1834
          %v2390 = vadd.f32 %v2350, %v1499
          %v2391 = vadd.f32 %v2351, %v1501
          %v2392 = vadd.f32 %v2352, %v1612
          %v2393 = vadd.f32 %v2353, %v1614
          %v2394 = vadd.f32 %v2354, %v1725
          %v2395 = vadd.f32 %v2355, %v1727
          %v2396 = vadd.f32 %v2356, %v1838
          %v2397 = vadd.f32 %v2357, %v1840
          %v2398 = vmul.f32 %v1499, %v1499
          %v2399 = vmul.f32 %v1501, %v1501
          %v2400 = vmul.f32 %v1612, %v1612
          %v2401 = vmul.f32 %v1614, %v1614
          %v2402 = vmul.f32 %v1725, %v1725
          %v2403 = vmul.f32 %v1727, %v1727
          %v2404 = vmul.f32 %v1838, %v1838
          %v2405 = vmul.f32 %v1840, %v1840
          %v2406 = vadd.f32 %v2366, %v2398
          %v2407 = vadd.f32 %v2367, %v2399
          %v2408 = vadd.f32 %v2368, %v2400
          %v2409 = vadd.f32 %v2369, %v2401
          %v2410 = vadd.f32 %v2370, %v2402
          %v2411 = vadd.f32 %v2371, %v2403
          %v2412 = vadd.f32 %v2372, %v2404
          %v2413 = vadd.f32 %v2373, %v2405
          %v2414 = vmax.f32 %v2374, %v1499
          %v2415 = vmax.f32 %v2375, %v1501
          %v2416 = vmax.f32 %v2376, %v1612
          %v2417 = vmax.f32 %v2377, %v1614
          %v2418 = vmax.f32 %v2378, %v1725
          %v2419 = vmax.f32 %v2379, %v1727
          %v2420 = vmax.f32 %v2380, %v1838
          %v2421 = vmax.f32 %v2381, %v1840
          %v2422 = vmin.f32 %v2382, %v1499
          %v2423 = vmin.f32 %v2383, %v1501
          %v2424 = vmin.f32 %v2384, %v1612
          %v2425 = vmin.f32 %v2385, %v1614
          %v2426 = vmin.f32 %v2386, %v1725
          %v2427 = vmin.f32 %v2387, %v1727
          %v2428 = vmin.f32 %v2388, %v1838
          %v2429 = vmin.f32 %v2389, %v1840
          %v2430 = vadd.f32 %v2390, %v1503
          %v2431 = vadd.f32 %v2391, %v1505
          %v2432 = vadd.f32 %v2392, %v1616
          %v2433 = vadd.f32 %v2393, %v1618
          %v2434 = vadd.f32 %v2394, %v1729
          %v2435 = vadd.f32 %v2395, %v1731
          %v2436 = vadd.f32 %v2396, %v1842
          %v2437 = vadd.f32 %v2397, %v1844
          %v2438 = vmul.f32 %v1503, %v1503
          %v2439 = vmul.f32 %v1505, %v1505
          %v2440 = vmul.f32 %v1616, %v1616
          %v2441 = vmul.f32 %v1618, %v1618
          %v2442 = vmul.f32 %v1729, %v1729
          %v2443 = vmul.f32 %v1731, %v1731
          %v2444 = vmul.f32 %v1842, %v1842
          %v2445 = vmul.f32 %v1844, %v1844
          %v2446 = vadd.f32 %v2406, %v2438
          %v2447 = vadd.f32 %v2407, %v2439
          %v2448 = vadd.f32 %v2408, %v2440
          %v2449 = vadd.f32 %v2409, %v2441
          %v2450 = vadd.f32 %v2410, %v2442
          %v2451 = vadd.f32 %v2411, %v2443
          %v2452 = vadd.f32 %v2412, %v2444
          %v2453 = vadd.f32 %v2413, %v2445
          %v2454 = vmax.f32 %v2414, %v1503
          %v2455 = vmax.f32 %v2415, %v1505
          %v2456 = vmax.f32 %v2416, %v1616
          %v2457 = vmax.f32 %v2417, %v1618
          %v2458 = vmax.f32 %v2418, %v1729
          %v2459 = vmax.f32 %v2419, %v1731
          %v2460 = vmax.f32 %v2420, %v1842
          %v2461 = vmax.f32 %v2421, %v1844
          %v2462 = vmin.f32 %v2422, %v1503
          %v2463 = vmin.f32 %v2423, %v1505
          %v2464 = vmin.f32 %v2424, %v1616
          %v2465 = vmin.f32 %v2425, %v1618
          %v2466 = vmin.f32 %v2426, %v1729
          %v2467 = vmin.f32 %v2427, %v1731
          %v2468 = vmin.f32 %v2428, %v1842
          %v2469 = vmin.f32 %v2429, %v1844
          %v2470 = vrot.slane %v2430, 4
          %v2471 = vadd.f32 %v2430, %v2470
          %v2472 = vrot.slane %v2471, 2
          %v2473 = vadd.f32 %v2471, %v2472
          %v2474 = vrot.slane %v2473, 1
          %v2475 = vadd.f32 %v2473, %v2474
          %v2476 = vrot.slane %v2431, 4
          %v2477 = vadd.f32 %v2431, %v2476
          %v2478 = vrot.slane %v2477, 2
          %v2479 = vadd.f32 %v2477, %v2478
          %v2480 = vrot.slane %v2479, 1
          %v2481 = vadd.f32 %v2479, %v2480
          %v2482 = vrot.slane %v2432, 4
          %v2483 = vadd.f32 %v2432, %v2482
          %v2484 = vrot.slane %v2483, 2
          %v2485 = vadd.f32 %v2483, %v2484
          %v2486 = vrot.slane %v2485, 1
          %v2487 = vadd.f32 %v2485, %v2486
          %v2488 = vrot.slane %v2433, 4
          %v2489 = vadd.f32 %v2433, %v2488
          %v2490 = vrot.slane %v2489, 2
          %v2491 = vadd.f32 %v2489, %v2490
          %v2492 = vrot.slane %v2491, 1
          %v2493 = vadd.f32 %v2491, %v2492
          %v2494 = vrot.slane %v2434, 4
          %v2495 = vadd.f32 %v2434, %v2494
          %v2496 = vrot.slane %v2495, 2
          %v2497 = vadd.f32 %v2495, %v2496
          %v2498 = vrot.slane %v2497, 1
          %v2499 = vadd.f32 %v2497, %v2498
          %v2500 = vrot.slane %v2435, 4
          %v2501 = vadd.f32 %v2435, %v2500
          %v2502 = vrot.slane %v2501, 2
          %v2503 = vadd.f32 %v2501, %v2502
          %v2504 = vrot.slane %v2503, 1
          %v2505 = vadd.f32 %v2503, %v2504
          %v2506 = vrot.slane %v2436, 4
          %v2507 = vadd.f32 %v2436, %v2506
          %v2508 = vrot.slane %v2507, 2
          %v2509 = vadd.f32 %v2507, %v2508
          %v2510 = vrot.slane %v2509, 1
          %v2511 = vadd.f32 %v2509, %v2510
          %v2512 = vrot.slane %v2437, 4
          %v2513 = vadd.f32 %v2437, %v2512
          %v2514 = vrot.slane %v2513, 2
          %v2515 = vadd.f32 %v2513, %v2514
          %v2516 = vrot.slane %v2515, 1
          %v2517 = vadd.f32 %v2515, %v2516
          %v2518 = vrot.slane %v2446, 4
          %v2519 = vadd.f32 %v2446, %v2518
          %v2520 = vrot.slane %v2519, 2
          %v2521 = vadd.f32 %v2519, %v2520
          %v2522 = vrot.slane %v2521, 1
          %v2523 = vadd.f32 %v2521, %v2522
          %v2524 = vrot.slane %v2447, 4
          %v2525 = vadd.f32 %v2447, %v2524
          %v2526 = vrot.slane %v2525, 2
          %v2527 = vadd.f32 %v2525, %v2526
          %v2528 = vrot.slane %v2527, 1
          %v2529 = vadd.f32 %v2527, %v2528
          %v2530 = vrot.slane %v2448, 4
          %v2531 = vadd.f32 %v2448, %v2530
          %v2532 = vrot.slane %v2531, 2
          %v2533 = vadd.f32 %v2531, %v2532
          %v2534 = vrot.slane %v2533, 1
          %v2535 = vadd.f32 %v2533, %v2534
          %v2536 = vrot.slane %v2449, 4
          %v2537 = vadd.f32 %v2449, %v2536
          %v2538 = vrot.slane %v2537, 2
          %v2539 = vadd.f32 %v2537, %v2538
          %v2540 = vrot.slane %v2539, 1
          %v2541 = vadd.f32 %v2539, %v2540
          %v2542 = vrot.slane %v2450, 4
          %v2543 = vadd.f32 %v2450, %v2542
          %v2544 = vrot.slane %v2543, 2
          %v2545 = vadd.f32 %v2543, %v2544
          %v2546 = vrot.slane %v2545, 1
          %v2547 = vadd.f32 %v2545, %v2546
          %v2548 = vrot.slane %v2451, 4
          %v2549 = vadd.f32 %v2451, %v2548
          %v2550 = vrot.slane %v2549, 2
          %v2551 = vadd.f32 %v2549, %v2550
          %v2552 = vrot.slane %v2551, 1
          %v2553 = vadd.f32 %v2551, %v2552
          %v2554 = vrot.slane %v2452, 4
          %v2555 = vadd.f32 %v2452, %v2554
          %v2556 = vrot.slane %v2555, 2
          %v2557 = vadd.f32 %v2555, %v2556
          %v2558 = vrot.slane %v2557, 1
          %v2559 = vadd.f32 %v2557, %v2558
          %v2560 = vrot.slane %v2453, 4
          %v2561 = vadd.f32 %v2453, %v2560
          %v2562 = vrot.slane %v2561, 2
          %v2563 = vadd.f32 %v2561, %v2562
          %v2564 = vrot.slane %v2563, 1
          %v2565 = vadd.f32 %v2563, %v2564
          %v2566 = vrot.slane %v2454, 4
          %v2567 = vmax.f32 %v2454, %v2566
          %v2568 = vrot.slane %v2567, 2
          %v2569 = vmax.f32 %v2567, %v2568
          %v2570 = vrot.slane %v2569, 1
          %v2571 = vmax.f32 %v2569, %v2570
          %v2572 = vrot.slane %v2455, 4
          %v2573 = vmax.f32 %v2455, %v2572
          %v2574 = vrot.slane %v2573, 2
          %v2575 = vmax.f32 %v2573, %v2574
          %v2576 = vrot.slane %v2575, 1
          %v2577 = vmax.f32 %v2575, %v2576
          %v2578 = vrot.slane %v2456, 4
          %v2579 = vmax.f32 %v2456, %v2578
          %v2580 = vrot.slane %v2579, 2
          %v2581 = vmax.f32 %v2579, %v2580
          %v2582 = vrot.slane %v2581, 1
          %v2583 = vmax.f32 %v2581, %v2582
          %v2584 = vrot.slane %v2457, 4
          %v2585 = vmax.f32 %v2457, %v2584
          %v2586 = vrot.slane %v2585, 2
          %v2587 = vmax.f32 %v2585, %v2586
          %v2588 = vrot.slane %v2587, 1
          %v2589 = vmax.f32 %v2587, %v2588
          %v2590 = vrot.slane %v2458, 4
          %v2591 = vmax.f32 %v2458, %v2590
          %v2592 = vrot.slane %v2591, 2
          %v2593 = vmax.f32 %v2591, %v2592
          %v2594 = vrot.slane %v2593, 1
          %v2595 = vmax.f32 %v2593, %v2594
          %v2596 = vrot.slane %v2459, 4
          %v2597 = vmax.f32 %v2459, %v2596
          %v2598 = vrot.slane %v2597, 2
          %v2599 = vmax.f32 %v2597, %v2598
          %v2600 = vrot.slane %v2599, 1
          %v2601 = vmax.f32 %v2599, %v2600
          %v2602 = vrot.slane %v2460, 4
          %v2603 = vmax.f32 %v2460, %v2602
          %v2604 = vrot.slane %v2603, 2
          %v2605 = vmax.f32 %v2603, %v2604
          %v2606 = vrot.slane %v2605, 1
          %v2607 = vmax.f32 %v2605, %v2606
          %v2608 = vrot.slane %v2461, 4
          %v2609 = vmax.f32 %v2461, %v2608
          %v2610 = vrot.slane %v2609, 2
          %v2611 = vmax.f32 %v2609, %v2610
          %v2612 = vrot.slane %v2611, 1
          %v2613 = vmax.f32 %v2611, %v2612
          %v2614 = vrot.slane %v2462, 4
          %v2615 = vmin.f32 %v2462, %v2614
          %v2616 = vrot.slane %v2615, 2
          %v2617 = vmin.f32 %v2615, %v2616
          %v2618 = vrot.slane %v2617, 1
          %v2619 = vmin.f32 %v2617, %v2618
          %v2620 = vrot.slane %v2463, 4
          %v2621 = vmin.f32 %v2463, %v2620
          %v2622 = vrot.slane %v2621, 2
          %v2623 = vmin.f32 %v2621, %v2622
          %v2624 = vrot.slane %v2623, 1
          %v2625 = vmin.f32 %v2623, %v2624
          %v2626 = vrot.slane %v2464, 4
          %v2627 = vmin.f32 %v2464, %v2626
          %v2628 = vrot.slane %v2627, 2
          %v2629 = vmin.f32 %v2627, %v2628
          %v2630 = vrot.slane %v2629, 1
          %v2631 = vmin.f32 %v2629, %v2630
          %v2632 = vrot.slane %v2465, 4
          %v2633 = vmin.f32 %v2465, %v2632
          %v2634 = vrot.slane %v2633, 2
          %v2635 = vmin.f32 %v2633, %v2634
          %v2636 = vrot.slane %v2635, 1
          %v2637 = vmin.f32 %v2635, %v2636
          %v2638 = vrot.slane %v2466, 4
          %v2639 = vmin.f32 %v2466, %v2638
          %v2640 = vrot.slane %v2639, 2
          %v2641 = vmin.f32 %v2639, %v2640
          %v2642 = vrot.slane %v2641, 1
          %v2643 = vmin.f32 %v2641, %v2642
          %v2644 = vrot.slane %v2467, 4
          %v2645 = vmin.f32 %v2467, %v2644
          %v2646 = vrot.slane %v2645, 2
          %v2647 = vmin.f32 %v2645, %v2646
          %v2648 = vrot.slane %v2647, 1
          %v2649 = vmin.f32 %v2647, %v2648
          %v2650 = vrot.slane %v2468, 4
          %v2651 = vmin.f32 %v2468, %v2650
          %v2652 = vrot.slane %v2651, 2
          %v2653 = vmin.f32 %v2651, %v2652
          %v2654 = vrot.slane %v2653, 1
          %v2655 = vmin.f32 %v2653, %v2654
          %v2656 = vrot.slane %v2469, 4
          %v2657 = vmin.f32 %v2469, %v2656
          %v2658 = vrot.slane %v2657, 2
          %v2659 = vmin.f32 %v2657, %v2658
          %v2660 = vrot.slane %v2659, 1
          %v2661 = vmin.f32 %v2659, %v2660
          %v2662 = vld [vmem:[#allocation4] sm:$0xff]
          %v2671 = vcombine.low %v2475, %v2481
          %v2672 = vcombine.low %v2487, %v2493
          %v2673 = vcombine.low %v2499, %v2505
          %v2674 = vcombine.low %v2511, %v2517
          %v2676 = vunpack.c.l.s4 1966171168
          %v2677 = vunpack.c.0.s8 %v2676
          %v2678 = vlaneseq
          %v2679 = vshrl.u32 %v2678, 7
          %v2680 = vsub.s32 %v2677, %v2679
          %v2681 = vrot.slane %v2671, %v2680
          %v2683 = vunpack.c.l.s4 1966171168
          %v2684 = vunpack.c.0.s8 %v2683
          %v2685 = vlaneseq
          %v2686 = vshrl.u32 %v2685, 7
          %v2687 = vsub.s32 %v2684, %v2686
          %v2688 = vrot.slane %v2672, %v2687
          %v2690 = vunpack.c.l.s4 1966171168
          %v2691 = vunpack.c.0.s8 %v2690
          %v2692 = vlaneseq
          %v2693 = vshrl.u32 %v2692, 7
          %v2694 = vsub.s32 %v2691, %v2693
          %v2695 = vrot.slane %v2673, %v2694
          %v2697 = vunpack.c.l.s4 1966171168
          %v2698 = vunpack.c.0.s8 %v2697
          %v2699 = vlaneseq
          %v2700 = vshrl.u32 %v2699, 7
          %v2701 = vsub.s32 %v2698, %v2700
          %v2702 = vrot.slane %v2674, %v2701
          %v2703 = vcombine.low %v2681, %v2688
          %v2704 = vcombine.low %v2695, %v2702
          %v2706 = vunpack.c.l.s4 1966171168
          %v2707 = vunpack.c.0.s8 %v2706
          %v2708 = vlaneseq
          %v2709 = vshrl.u32 %v2708, 7
          %v2710 = vsub.s32 %v2707, %v2709
          %v2711 = vrot.slane %v2703, %v2710
          %v2713 = vunpack.c.l.s4 1966171168
          %v2714 = vunpack.c.0.s8 %v2713
          %v2715 = vlaneseq
          %v2716 = vshrl.u32 %v2715, 7
          %v2717 = vsub.s32 %v2714, %v2716
          %v2718 = vrot.slane %v2704, %v2717
          %v2719 = vcombine.low %v2711, %v2718
          %v2721 = vadd.f32 %v2662, %v2719
          %2722 = vst [vmem:[#allocation4] sm:$0xff] %v2721
          %v2723 = vld [vmem:[#allocation5] sm:$0xff]
          %v2732 = vcombine.low %v2523, %v2529
          %v2733 = vcombine.low %v2535, %v2541
          %v2734 = vcombine.low %v2547, %v2553
          %v2735 = vcombine.low %v2559, %v2565
          %v2737 = vunpack.c.l.s4 1966171168
          %v2738 = vunpack.c.0.s8 %v2737
          %v2739 = vlaneseq
          %v2740 = vshrl.u32 %v2739, 7
          %v2741 = vsub.s32 %v2738, %v2740
          %v2742 = vrot.slane %v2732, %v2741
          %v2744 = vunpack.c.l.s4 1966171168
          %v2745 = vunpack.c.0.s8 %v2744
          %v2746 = vlaneseq
          %v2747 = vshrl.u32 %v2746, 7
          %v2748 = vsub.s32 %v2745, %v2747
          %v2749 = vrot.slane %v2733, %v2748
          %v2751 = vunpack.c.l.s4 1966171168
          %v2752 = vunpack.c.0.s8 %v2751
          %v2753 = vlaneseq
          %v2754 = vshrl.u32 %v2753, 7
          %v2755 = vsub.s32 %v2752, %v2754
          %v2756 = vrot.slane %v2734, %v2755
          %v2758 = vunpack.c.l.s4 1966171168
          %v2759 = vunpack.c.0.s8 %v2758
          %v2760 = vlaneseq
          %v2761 = vshrl.u32 %v2760, 7
          %v2762 = vsub.s32 %v2759, %v2761
          %v2763 = vrot.slane %v2735, %v2762
          %v2764 = vcombine.low %v2742, %v2749
          %v2765 = vcombine.low %v2756, %v2763
          %v2767 = vunpack.c.l.s4 1966171168
          %v2768 = vunpack.c.0.s8 %v2767
          %v2769 = vlaneseq
          %v2770 = vshrl.u32 %v2769, 7
          %v2771 = vsub.s32 %v2768, %v2770
          %v2772 = vrot.slane %v2764, %v2771
          %v2774 = vunpack.c.l.s4 1966171168
          %v2775 = vunpack.c.0.s8 %v2774
          %v2776 = vlaneseq
          %v2777 = vshrl.u32 %v2776, 7
          %v2778 = vsub.s32 %v2775, %v2777
          %v2779 = vrot.slane %v2765, %v2778
          %v2780 = vcombine.low %v2772, %v2779
          %v2782 = vadd.f32 %v2723, %v2780
          %2783 = vst [vmem:[#allocation5] sm:$0xff] %v2782
          %s2784 = sshra.s32 %s28, 1
          %s2785 = sand.u32 %s28, 1
          %s2786 = sshra.s32 %s28, 1
          %s2787 = sand.u32 %s28, 1
          %s2788 = smul.u32 %s2784, 8
          %s2789 = smul.u32 %s2788, 2
          %s2790 = sadd.s32 %s2789, %s2787
          %s2791 = scalar_lea.vmem [#allocation6], %s2790
          %v2792 = vld [vmem:[%s2791] ss:$2 sm:$0xff]
          %v2801 = vcombine.low %v2571, %v2577
          %v2802 = vcombine.low %v2583, %v2589
          %v2803 = vcombine.low %v2595, %v2601
          %v2804 = vcombine.low %v2607, %v2613
          %v2806 = vunpack.c.l.s4 1966171168
          %v2807 = vunpack.c.0.s8 %v2806
          %v2808 = vlaneseq
          %v2809 = vshrl.u32 %v2808, 7
          %v2810 = vsub.s32 %v2807, %v2809
          %v2811 = vrot.slane %v2801, %v2810
          %v2813 = vunpack.c.l.s4 1966171168
          %v2814 = vunpack.c.0.s8 %v2813
          %v2815 = vlaneseq
          %v2816 = vshrl.u32 %v2815, 7
          %v2817 = vsub.s32 %v2814, %v2816
          %v2818 = vrot.slane %v2802, %v2817
          %v2820 = vunpack.c.l.s4 1966171168
          %v2821 = vunpack.c.0.s8 %v2820
          %v2822 = vlaneseq
          %v2823 = vshrl.u32 %v2822, 7
          %v2824 = vsub.s32 %v2821, %v2823
          %v2825 = vrot.slane %v2803, %v2824
          %v2827 = vunpack.c.l.s4 1966171168
          %v2828 = vunpack.c.0.s8 %v2827
          %v2829 = vlaneseq
          %v2830 = vshrl.u32 %v2829, 7
          %v2831 = vsub.s32 %v2828, %v2830
          %v2832 = vrot.slane %v2804, %v2831
          %v2833 = vcombine.low %v2811, %v2818
          %v2834 = vcombine.low %v2825, %v2832
          %v2836 = vunpack.c.l.s4 1966171168
          %v2837 = vunpack.c.0.s8 %v2836
          %v2838 = vlaneseq
          %v2839 = vshrl.u32 %v2838, 7
          %v2840 = vsub.s32 %v2837, %v2839
          %v2841 = vrot.slane %v2833, %v2840
          %v2843 = vunpack.c.l.s4 1966171168
          %v2844 = vunpack.c.0.s8 %v2843
          %v2845 = vlaneseq
          %v2846 = vshrl.u32 %v2845, 7
          %v2847 = vsub.s32 %v2844, %v2846
          %v2848 = vrot.slane %v2834, %v2847
          %v2849 = vcombine.low %v2841, %v2848
          %v2851 = vmax.f32 %v2792, %v2849
          %2852 = vst [vmem:[%s2791] ss:$2 sm:$0xff] %v2851
          %s2853 = scalar_lea.vmem [#allocation7], %s2790
          %v2854 = vld [vmem:[%s2853] ss:$2 sm:$0xff]
          %v2863 = vcombine.low %v2619, %v2625
          %v2864 = vcombine.low %v2631, %v2637
          %v2865 = vcombine.low %v2643, %v2649
          %v2866 = vcombine.low %v2655, %v2661
          %v2868 = vunpack.c.l.s4 1966171168
          %v2869 = vunpack.c.0.s8 %v2868
          %v2870 = vlaneseq
          %v2871 = vshrl.u32 %v2870, 7
          %v2872 = vsub.s32 %v2869, %v2871
          %v2873 = vrot.slane %v2863, %v2872
          %v2875 = vunpack.c.l.s4 1966171168
          %v2876 = vunpack.c.0.s8 %v2875
          %v2877 = vlaneseq
          %v2878 = vshrl.u32 %v2877, 7
          %v2879 = vsub.s32 %v2876, %v2878
          %v2880 = vrot.slane %v2864, %v2879
          %v2882 = vunpack.c.l.s4 1966171168
          %v2883 = vunpack.c.0.s8 %v2882
          %v2884 = vlaneseq
          %v2885 = vshrl.u32 %v2884, 7
          %v2886 = vsub.s32 %v2883, %v2885
          %v2887 = vrot.slane %v2865, %v2886
          %v2889 = vunpack.c.l.s4 1966171168
          %v2890 = vunpack.c.0.s8 %v2889
          %v2891 = vlaneseq
          %v2892 = vshrl.u32 %v2891, 7
          %v2893 = vsub.s32 %v2890, %v2892
          %v2894 = vrot.slane %v2866, %v2893
          %v2895 = vcombine.low %v2873, %v2880
          %v2896 = vcombine.low %v2887, %v2894
          %v2898 = vunpack.c.l.s4 1966171168
          %v2899 = vunpack.c.0.s8 %v2898
          %v2900 = vlaneseq
          %v2901 = vshrl.u32 %v2900, 7
          %v2902 = vsub.s32 %v2899, %v2901
          %v2903 = vrot.slane %v2895, %v2902
          %v2905 = vunpack.c.l.s4 1966171168
          %v2906 = vunpack.c.0.s8 %v2905
          %v2907 = vlaneseq
          %v2908 = vshrl.u32 %v2907, 7
          %v2909 = vsub.s32 %v2906, %v2908
          %v2910 = vrot.slane %v2896, %v2909
          %v2911 = vcombine.low %v2903, %v2910
          %v2913 = vmin.f32 %v2854, %v2911
          %2914 = vst [vmem:[%s2853] ss:$2 sm:$0xff] %v2913
        $region72: #{_lambda_.5} parent=59 // pred_fallthru
          _
        %p2915 = scmp.eq.s32.totalorder %s28, 1
        %p2916 = pnand %p924, %p2915
        %p2917 = pneg %p2916
        %p2918 = pnand %p2917, %p403
        %p2919 = pneg %p2918
        // Predicated region
        $region73: #{_lambda_.5} parent=59 // pred_check
          _
        $region74: #{_lambda_.5} parent=59 // pred_check_branch
          %2921 = sbr.rel (%p2918) target = $region76
        $region75: #{_lambda_.5} parent=59 // pred_region
          %v2922 = vld [vmem:[#allocation4] sm:$0xff]
          %v2923 = vmul.f32 %v2922, 0.00390625
          %v2924 = vld [vmem:[#allocation5] sm:$0xff]
          %v2925 = vmul.f32 %v2924, 0.00390625
          %v2926 = vmul.f32 %v2923, %v2923
          %v2927 = vsub.f32 %v2925, %v2926
          %v2928 = vmax.f32 %v2927, 0.0
          %v2929 = vld [vmem:[%s8] sm:$0xff]
          %v2930 = vadd.f32 %v2928, 1e-05
          %v2931 = vrsqrt.pop %v2930
          %v2932 = vmul.f32 %v2929, %v2931
          %v2933 = vld [vmem:[%s9] sm:$0xff]
          %v2934 = vmul.f32 %v2923, %v2932
          %v2935 = vsub.f32 %v2933, %v2934
          %vm2936 = vcmp.ge.f32.partialorder %v2932, 0.0
          %v2937 = vld [vmem:[#allocation6] sm:$0xff]
          %v2938 = vld [vmem:[#allocation6 + $0x8] sm:$0xff]
          %v2939 = vld [vmem:[#allocation7] sm:$0xff]
          %v2940 = vld [vmem:[#allocation7 + $0x8] sm:$0xff]
          %v2941 = vsel %vm2936, 1, 0
          %v2942 = vlaneseq
          %v2943 = vshrl.u32 %v2942, 7
          %v2944 = vsub.s32 0, %v2943
          %v2945 = vrot.slane %v2941, %v2944
          %v2946 = vlaneseq
          %v2947 = vshrl.u32 %v2946, 7
          %v2948 = vsub.s32 1, %v2947
          %v2949 = vrot.slane %v2941, %v2948
          %v2950 = vlaneseq
          %v2951 = vshrl.u32 %v2950, 7
          %v2952 = vsub.s32 2, %v2951
          %v2953 = vrot.slane %v2941, %v2952
          %v2954 = vlaneseq
          %v2955 = vshrl.u32 %v2954, 7
          %v2956 = vsub.s32 3, %v2955
          %v2957 = vrot.slane %v2941, %v2956
          %v2958 = vlaneseq
          %v2959 = vshrl.u32 %v2958, 7
          %v2960 = vsub.s32 4, %v2959
          %v2961 = vrot.slane %v2941, %v2960
          %v2962 = vlaneseq
          %v2963 = vshrl.u32 %v2962, 7
          %v2964 = vsub.s32 5, %v2963
          %v2965 = vrot.slane %v2941, %v2964
          %v2966 = vlaneseq
          %v2967 = vshrl.u32 %v2966, 7
          %v2968 = vsub.s32 6, %v2967
          %v2969 = vrot.slane %v2941, %v2968
          %v2970 = vlaneseq
          %v2971 = vshrl.u32 %v2970, 7
          %v2972 = vsub.s32 7, %v2971
          %v2973 = vrot.slane %v2941, %v2972
          %vm2974 = vcmp.eq.s32.totalorder %v2945, 1
          %vm2975 = vcmp.eq.s32.totalorder %v2949, 1
          %vm2976 = vcmp.eq.s32.totalorder %v2953, 1
          %vm2977 = vcmp.eq.s32.totalorder %v2957, 1
          %vm2978 = vcmp.eq.s32.totalorder %v2961, 1
          %vm2979 = vcmp.eq.s32.totalorder %v2965, 1
          %vm2980 = vcmp.eq.s32.totalorder %v2969, 1
          %vm2981 = vcmp.eq.s32.totalorder %v2973, 1
          %v2984 = vcombine.high %v2937, %v2937
          %v2986 = vunpack.c.l.s4 1983009808
          %v2987 = vunpack.c.0.s8 %v2986
          %v2988 = vlaneseq
          %v2989 = vshrl.u32 %v2988, 7
          %v2990 = vsub.s32 %v2987, %v2989
          %v2991 = vrot.slane %v2937, %v2990
          %v2993 = vunpack.c.l.s4 1983009808
          %v2994 = vunpack.c.0.s8 %v2993
          %v2995 = vlaneseq
          %v2996 = vshrl.u32 %v2995, 7
          %v2997 = vsub.s32 %v2994, %v2996
          %v2998 = vrot.slane %v2984, %v2997
          %v2999 = vcombine.high %v2991, %v2991
          %v3000 = vcombine.high %v2998, %v2998
          %v3001 = vcombine.high %v2938, %v2938
          %v3003 = vunpack.c.l.s4 1983009808
          %v3004 = vunpack.c.0.s8 %v3003
          %v3005 = vlaneseq
          %v3006 = vshrl.u32 %v3005, 7
          %v3007 = vsub.s32 %v3004, %v3006
          %v3008 = vrot.slane %v2938, %v3007
          %v3010 = vunpack.c.l.s4 1983009808
          %v3011 = vunpack.c.0.s8 %v3010
          %v3012 = vlaneseq
          %v3013 = vshrl.u32 %v3012, 7
          %v3014 = vsub.s32 %v3011, %v3013
          %v3015 = vrot.slane %v3001, %v3014
          %v3016 = vcombine.high %v3008, %v3008
          %v3017 = vcombine.high %v3015, %v3015
          %v3028 = vcombine.high %v2939, %v2939
          %v3030 = vunpack.c.l.s4 1983009808
          %v3031 = vunpack.c.0.s8 %v3030
          %v3032 = vlaneseq
          %v3033 = vshrl.u32 %v3032, 7
          %v3034 = vsub.s32 %v3031, %v3033
          %v3035 = vrot.slane %v2939, %v3034
          %v3037 = vunpack.c.l.s4 1983009808
          %v3038 = vunpack.c.0.s8 %v3037
          %v3039 = vlaneseq
          %v3040 = vshrl.u32 %v3039, 7
          %v3041 = vsub.s32 %v3038, %v3040
          %v3042 = vrot.slane %v3028, %v3041
          %v3043 = vcombine.high %v3035, %v3035
          %v3044 = vcombine.high %v3042, %v3042
          %v3045 = vcombine.high %v2940, %v2940
          %v3047 = vunpack.c.l.s4 1983009808
          %v3048 = vunpack.c.0.s8 %v3047
          %v3049 = vlaneseq
          %v3050 = vshrl.u32 %v3049, 7
          %v3051 = vsub.s32 %v3048, %v3050
          %v3052 = vrot.slane %v2940, %v3051
          %v3054 = vunpack.c.l.s4 1983009808
          %v3055 = vunpack.c.0.s8 %v3054
          %v3056 = vlaneseq
          %v3057 = vshrl.u32 %v3056, 7
          %v3058 = vsub.s32 %v3055, %v3057
          %v3059 = vrot.slane %v3045, %v3058
          %v3060 = vcombine.high %v3052, %v3052
          %v3061 = vcombine.high %v3059, %v3059
          %v3070 = vsel %vm2974, %v2991, %v3035
          %v3071 = vsel %vm2975, %v2999, %v3043
          %v3072 = vsel %vm2976, %v2998, %v3042
          %v3073 = vsel %vm2977, %v3000, %v3044
          %v3074 = vsel %vm2978, %v3008, %v3052
          %v3075 = vsel %vm2979, %v3016, %v3060
          %v3076 = vsel %vm2980, %v3015, %v3059
          %v3077 = vsel %vm2981, %v3017, %v3061
          %v3079 = vlaneseq
          %v3080 = vshrl.u32 %v3079, 7
          %v3081 = vsub.s32 0, %v3080
          %v3082 = vrot.slane %v2932, %v3081
          %v3083 = vlaneseq
          %v3084 = vshrl.u32 %v3083, 7
          %v3085 = vsub.s32 1, %v3084
          %v3086 = vrot.slane %v2932, %v3085
          %v3087 = vlaneseq
          %v3088 = vshrl.u32 %v3087, 7
          %v3089 = vsub.s32 2, %v3088
          %v3090 = vrot.slane %v2932, %v3089
          %v3091 = vlaneseq
          %v3092 = vshrl.u32 %v3091, 7
          %v3093 = vsub.s32 3, %v3092
          %v3094 = vrot.slane %v2932, %v3093
          %v3095 = vlaneseq
          %v3096 = vshrl.u32 %v3095, 7
          %v3097 = vsub.s32 4, %v3096
          %v3098 = vrot.slane %v2932, %v3097
          %v3099 = vlaneseq
          %v3100 = vshrl.u32 %v3099, 7
          %v3101 = vsub.s32 5, %v3100
          %v3102 = vrot.slane %v2932, %v3101
          %v3103 = vlaneseq
          %v3104 = vshrl.u32 %v3103, 7
          %v3105 = vsub.s32 6, %v3104
          %v3106 = vrot.slane %v2932, %v3105
          %v3107 = vlaneseq
          %v3108 = vshrl.u32 %v3107, 7
          %v3109 = vsub.s32 7, %v3108
          %v3110 = vrot.slane %v2932, %v3109
          %v3119 = vmul.f32 %v3070, %v3082
          %v3120 = vmul.f32 %v3071, %v3086
          %v3121 = vmul.f32 %v3072, %v3090
          %v3122 = vmul.f32 %v3073, %v3094
          %v3123 = vmul.f32 %v3074, %v3098
          %v3124 = vmul.f32 %v3075, %v3102
          %v3125 = vmul.f32 %v3076, %v3106
          %v3126 = vmul.f32 %v3077, %v3110
          %v3128 = vlaneseq
          %v3129 = vshrl.u32 %v3128, 7
          %v3130 = vsub.s32 0, %v3129
          %v3131 = vrot.slane %v2935, %v3130
          %v3132 = vlaneseq
          %v3133 = vshrl.u32 %v3132, 7
          %v3134 = vsub.s32 1, %v3133
          %v3135 = vrot.slane %v2935, %v3134
          %v3136 = vlaneseq
          %v3137 = vshrl.u32 %v3136, 7
          %v3138 = vsub.s32 2, %v3137
          %v3139 = vrot.slane %v2935, %v3138
          %v3140 = vlaneseq
          %v3141 = vshrl.u32 %v3140, 7
          %v3142 = vsub.s32 3, %v3141
          %v3143 = vrot.slane %v2935, %v3142
          %v3144 = vlaneseq
          %v3145 = vshrl.u32 %v3144, 7
          %v3146 = vsub.s32 4, %v3145
          %v3147 = vrot.slane %v2935, %v3146
          %v3148 = vlaneseq
          %v3149 = vshrl.u32 %v3148, 7
          %v3150 = vsub.s32 5, %v3149
          %v3151 = vrot.slane %v2935, %v3150
          %v3152 = vlaneseq
          %v3153 = vshrl.u32 %v3152, 7
          %v3154 = vsub.s32 6, %v3153
          %v3155 = vrot.slane %v2935, %v3154
          %v3156 = vlaneseq
          %v3157 = vshrl.u32 %v3156, 7
          %v3158 = vsub.s32 7, %v3157
          %v3159 = vrot.slane %v2935, %v3158
          %v3168 = vadd.f32 %v3119, %v3131
          %v3169 = vadd.f32 %v3120, %v3135
          %v3170 = vadd.f32 %v3121, %v3139
          %v3171 = vadd.f32 %v3122, %v3143
          %v3172 = vadd.f32 %v3123, %v3147
          %v3173 = vadd.f32 %v3124, %v3151
          %v3174 = vadd.f32 %v3125, %v3155
          %v3175 = vadd.f32 %v3126, %v3159
          %v3184 = vcombine.low %v3168, %v3169
          %v3185 = vcombine.low %v3170, %v3171
          %v3187 = vunpack.c.l.s4 1983009808
          %v3188 = vunpack.c.0.s8 %v3187
          %v3189 = vlaneseq
          %v3190 = vshrl.u32 %v3189, 7
          %v3191 = vsub.s32 %v3188, %v3190
          %v3192 = vrot.slane %v3184, %v3191
          %v3194 = vunpack.c.l.s4 1983009808
          %v3195 = vunpack.c.0.s8 %v3194
          %v3196 = vlaneseq
          %v3197 = vshrl.u32 %v3196, 7
          %v3198 = vsub.s32 %v3195, %v3197
          %v3199 = vrot.slane %v3185, %v3198
          %v3200 = vcombine.low %v3192, %v3199
          %v3201 = vcombine.low %v3172, %v3173
          %v3202 = vcombine.low %v3174, %v3175
          %v3204 = vunpack.c.l.s4 1983009808
          %v3205 = vunpack.c.0.s8 %v3204
          %v3206 = vlaneseq
          %v3207 = vshrl.u32 %v3206, 7
          %v3208 = vsub.s32 %v3205, %v3207
          %v3209 = vrot.slane %v3201, %v3208
          %v3211 = vunpack.c.l.s4 1983009808
          %v3212 = vunpack.c.0.s8 %v3211
          %v3213 = vlaneseq
          %v3214 = vshrl.u32 %v3213, 7
          %v3215 = vsub.s32 %v3212, %v3214
          %v3216 = vrot.slane %v3202, %v3215
          %v3217 = vcombine.low %v3209, %v3216
          %3220 = vst [vmem:[#allocation8] sm:$0xff] %v3200
          %3221 = vst [vmem:[#allocation8 + $0x8] sm:$0xff] %v3217
        $region76: #{_lambda_.5} parent=59 // pred_fallthru
          _
        // Predicated region
        $region77: #{_lambda_.5} parent=59 // pred_check
          %p3222 = pneg %p276
        $region78: #{_lambda_.5} parent=59 // pred_check_branch
          %3224 = sbr.rel (%p3222) target = $region80
        $region79: #{_lambda_.5} parent=59 // pred_region
          %s3226 = ssub.s32 256, 256
          %3227 = vsyncadd [#allocation9], %s3226
          %s3229 = sshll.u32 [#allocation8], 4
          %s3230 = int_to_ptr.vmem [resolvable:$true] %s3229
          %3232 = dma.vmem_to_hbm [thread:$0]  %s3230, 256, %s10, [#allocation9]
        $region80: #{_lambda_.5} parent=59 // pred_fallthru
          _
        // Predicated region
        $region81: #{_lambda_.5} parent=59 // pred_check
          %p3233 = pneg %p276
        $region82: #{_lambda_.5} parent=59 // pred_check_branch
          %3235 = sbr.rel (%p3233) target = $region84
        $region83: #{_lambda_.5} parent=59 // pred_region
          %3236 = dma.done [#allocation9], 256
        $region84: #{_lambda_.5} parent=59 // pred_fallthru
          _
      $region60: #{_lambda_.5} parent=5 // pred_fallthru
        _
      %p3237 = scmp.le.s32.totalorder 2, %s17
      // Predicated region
      $region85: #{_lambda_.5} parent=5 // pred_check
        %p3238 = pneg %p3237
      $region86: #{_lambda_.5} parent=5 // pred_check_branch
        %3240 = sbr.rel (%p3238) target = $region88
      $region87: #{_lambda_.5} parent=5 // pred_region
        %s3241 = ssub.s32 %s17, 2
      $region88: #{_lambda_.5} parent=5 // pred_fallthru
        _
    $region6: #{_lambda_.5} parent=1 // loop_footer
      %s21 = sadd.s32 1, %s17
    $region7: #{_lambda_.5} parent=1 // loop_footer_branch
      %16 = sbr.rel target = $region3
    $region8: #{_lambda_.5} parent=1 // loop_exit
      _
    %3242 = vsyncpa [#allocation9], 1
    %s3243 = scalar_lea.sflag [#allocation9], 1
    %3244 = vsyncpa %s3243, 1

// kernel: _lambda_.4
$region0: #{_lambda_.4}
  #allocation0 [shape = 'u32[]', space=smem, size = 0x4, offset = 0x4, fixed_abs, tag = 'smem constant byte address 0x4 - core index']
  #allocation1 [shape = 'u32[144,128]{1,0:T(1,128)}', space=vmem, size = 0x12000, scoped, tag = 'internal scratch']
  %s0 = inlined_call_operand.vmem [shape: f32[2,1024], index: 0, kind: input, shape index: {}]
  %s1 = inlined_call_operand.hbm [shape: bf16[1024,512], index: 1, kind: input, shape index: {}]
  %s2 = inlined_call_operand.vmem [shape: bf16[512,256], index: 2, kind: input, shape index: {}]
  %s3 = inlined_call_operand.vmem [shape: f32[256,4], index: 3, kind: input, shape index: {}]
  %s4 = inlined_call_operand.vmem [shape: f32[1,4], index: 4, kind: input, shape index: {}]
  %s5 = inlined_call_operand.vmem [shape: f32[1,512], index: 5, kind: input, shape index: {}]
  %s6 = inlined_call_operand.vmem [shape: f32[1,512], index: 6, kind: input, shape index: {}]
  %s7 = inlined_call_operand.vmem [shape: f32[1,256], index: 7, kind: input, shape index: {}]
  %s8 = inlined_call_operand.vmem [shape: f32[1,256], index: 8, kind: input, shape index: {}]
  %s9 = inlined_call_operand.vmem [shape: f32[2,4], index: 9, kind: output, shape index: {}]
  %s10 = sld [smem:[#allocation0]]
  $region50: #{_lambda_.4} parent=0
    _
  %s12 = ssub.s32 1, %s10
  %s13 = scalar_select 0, %s12, %s10
  $region1: #{_lambda_.4} parent=0
    #allocation2 [shape = 'u8[1048576]{0}', space=vmem, size = 0x100000, scoped, tag = 'input window, operand 1, single buffered']
    #allocation3 [shape = 's32[1]{0}', space=sflag, size = 0x4, scoped, tag = 'scoped memory for _lambda_.4']
    %14 = vsyncpa [#allocation3], 0
    // Predicated region
    $region2: #{_lambda_.4} parent=1 // pred_check
      _
    $region3: #{_lambda_.4} parent=1 // pred_check_branch
      %16 = sbr.rel (0) target = $region5
    $region4: #{_lambda_.4} parent=1 // pred_region
      _
    $region5: #{_lambda_.4} parent=1 // pred_fallthru
      _
    // Predicated region
    $region6: #{_lambda_.4} parent=1 // pred_check
      _
    $region7: #{_lambda_.4} parent=1 // pred_check_branch
      %18 = sbr.rel (0) target = $region9
    $region8: #{_lambda_.4} parent=1 // pred_region
      %s20 = ssub.s32 32768, 32768
      %21 = vsyncadd [#allocation3], %s20
      %s22 = sshll.u32 [#allocation2], 4
      %s23 = int_to_ptr.vmem [resolvable:$true] %s22
      %28 = dma.hbm_to_vmem [thread:$0]  %s1, 32768, %s23, [#allocation3], 256, 256, 16
    $region9: #{_lambda_.4} parent=1 // pred_fallthru
      _
    // Predicated region
    $region10: #{_lambda_.4} parent=1 // pred_check
      _
    $region11: #{_lambda_.4} parent=1 // pred_check_branch
      %30 = sbr.rel (0) target = $region13
    $region12: #{_lambda_.4} parent=1 // pred_region
      _
    $region13: #{_lambda_.4} parent=1 // pred_fallthru
      _
    // Predicated region
    $region14: #{_lambda_.4} parent=1 // pred_check
      _
    $region15: #{_lambda_.4} parent=1 // pred_check_branch
      %32 = sbr.rel (0) target = $region17
    $region16: #{_lambda_.4} parent=1 // pred_region
      _
    $region17: #{_lambda_.4} parent=1 // pred_fallthru
      _
    // Predicated region
    $region18: #{_lambda_.4} parent=1 // pred_check
      _
    $region19: #{_lambda_.4} parent=1 // pred_check_branch
      %34 = sbr.rel (0) target = $region21
    $region20: #{_lambda_.4} parent=1 // pred_region
      _
    $region21: #{_lambda_.4} parent=1 // pred_fallthru
      _
    // Predicated region
    $region22: #{_lambda_.4} parent=1 // pred_check
      _
    $region23: #{_lambda_.4} parent=1 // pred_check_branch
      %36 = sbr.rel (0) target = $region25
    $region24: #{_lambda_.4} parent=1 // pred_region
      _
    $region25: #{_lambda_.4} parent=1 // pred_fallthru
      _
    // Predicated region
    $region26: #{_lambda_.4} parent=1 // pred_check
      _
    $region27: #{_lambda_.4} parent=1 // pred_check_branch
      %38 = sbr.rel (0) target = $region29
    $region28: #{_lambda_.4} parent=1 // pred_region
      _
    $region29: #{_lambda_.4} parent=1 // pred_fallthru
      _
    // Predicated region
    $region30: #{_lambda_.4} parent=1 // pred_check
      _
    $region31: #{_lambda_.4} parent=1 // pred_check_branch
      %40 = sbr.rel (0) target = $region33
    $region32: #{_lambda_.4} parent=1 // pred_region
      _
    $region33: #{_lambda_.4} parent=1 // pred_fallthru
      _
    // Predicated region
    $region34: #{_lambda_.4} parent=1 // pred_check
      _
    $region35: #{_lambda_.4} parent=1 // pred_check_branch
      %42 = sbr.rel (0) target = $region37
    $region36: #{_lambda_.4} parent=1 // pred_region
      _
    $region37: #{_lambda_.4} parent=1 // pred_fallthru
      _
    // Predicated region
    $region38: #{_lambda_.4} parent=1 // pred_check
      _
    $region39: #{_lambda_.4} parent=1 // pred_check_branch
      %44 = sbr.rel (0) target = $region41
    $region40: #{_lambda_.4} parent=1 // pred_region
      %45 = dma.done [#allocation3], 32768
    $region41: #{_lambda_.4} parent=1 // pred_fallthru
      _
    %v46 = vld [vmem:[%s0] sm:$0xff]
    %v47 = vld [vmem:[%s0 + $0x8] sm:$0xff]
    %v50 = vcombine.high %v46, %v46
    %v52 = vunpack.c.l.s4 1983009808
    %v53 = vunpack.c.0.s8 %v52
    %v54 = vlaneseq
    %v55 = vshrl.u32 %v54, 7
    %v56 = vsub.s32 %v53, %v55
    %v57 = vrot.slane %v46, %v56
    %v59 = vunpack.c.l.s4 1983009808
    %v60 = vunpack.c.0.s8 %v59
    %v61 = vlaneseq
    %v62 = vshrl.u32 %v61, 7
    %v63 = vsub.s32 %v60, %v62
    %v64 = vrot.slane %v50, %v63
    %v65 = vcombine.high %v57, %v57
    %v66 = vcombine.high %v64, %v64
    %v67 = vcombine.high %v47, %v47
    %v69 = vunpack.c.l.s4 1983009808
    %v70 = vunpack.c.0.s8 %v69
    %v71 = vlaneseq
    %v72 = vshrl.u32 %v71, 7
    %v73 = vsub.s32 %v70, %v72
    %v74 = vrot.slane %v47, %v73
    %v76 = vunpack.c.l.s4 1983009808
    %v77 = vunpack.c.0.s8 %v76
    %v78 = vlaneseq
    %v79 = vshrl.u32 %v78, 7
    %v80 = vsub.s32 %v77, %v79
    %v81 = vrot.slane %v67, %v80
    %v82 = vcombine.high %v74, %v74
    %v83 = vcombine.high %v81, %v81
    %v92 = vpack.c.bf16 %v57, %v57
    %v93 = vpack.c.bf16 %v65, %v65
    %v94 = vpack.c.bf16 %v64, %v64
    %v95 = vpack.c.bf16 %v66, %v66
    %v96 = vpack.c.bf16 %v74, %v74
    %v97 = vpack.c.bf16 %v82, %v82
    %v98 = vpack.c.bf16 %v81, %v81
    %v99 = vpack.c.bf16 %v83, %v83
    %v100 = vld [vmem:[#allocation2] sm:$0xff]
    %v101 = vld [vmem:[#allocation2 + $0x8] sm:$0xff]
    %v102 = vld [vmem:[#allocation2 + $0x10] sm:$0xff]
    %v103 = vld [vmem:[#allocation2 + $0x18] sm:$0xff]
    %v104 = vld [vmem:[#allocation2 + $0x20] sm:$0xff]
    %v105 = vld [vmem:[#allocation2 + $0x28] sm:$0xff]
    %v106 = vld [vmem:[#allocation2 + $0x30] sm:$0xff]
    %v107 = vld [vmem:[#allocation2 + $0x38] sm:$0xff]
    %v108 = vld [vmem:[#allocation2 + $0x40] sm:$0xff]
    %v109 = vld [vmem:[#allocation2 + $0x48] sm:$0xff]
    %v110 = vld [vmem:[#allocation2 + $0x50] sm:$0xff]
    %v111 = vld [vmem:[#allocation2 + $0x58] sm:$0xff]
    %v112 = vld [vmem:[#allocation2 + $0x60] sm:$0xff]
    %v113 = vld [vmem:[#allocation2 + $0x68] sm:$0xff]
    %v114 = vld [vmem:[#allocation2 + $0x70] sm:$0xff]
    %v115 = vld [vmem:[#allocation2 + $0x78] sm:$0xff]
    %v116 = vld [vmem:[#allocation2 + $0x80] sm:$0xff]
    %v117 = vld [vmem:[#allocation2 + $0x88] sm:$0xff]
    %v118 = vld [vmem:[#allocation2 + $0x90] sm:$0xff]
    %v119 = vld [vmem:[#allocation2 + $0x98] sm:$0xff]
    %v120 = vld [vmem:[#allocation2 + $0xa0] sm:$0xff]
    %v121 = vld [vmem:[#allocation2 + $0xa8] sm:$0xff]
    %v122 = vld [vmem:[#allocation2 + $0xb0] sm:$0xff]
    %v123 = vld [vmem:[#allocation2 + $0xb8] sm:$0xff]
    %v124 = vld [vmem:[#allocation2 + $0xc0] sm:$0xff]
    %v125 = vld [vmem:[#allocation2 + $0xc8] sm:$0xff]
    %v126 = vld [vmem:[#allocation2 + $0xd0] sm:$0xff]
    %v127 = vld [vmem:[#allocation2 + $0xd8] sm:$0xff]
    %v128 = vld [vmem:[#allocation2 + $0xe0] sm:$0xff]
    %v129 = vld [vmem:[#allocation2 + $0xe8] sm:$0xff]
    %v130 = vld [vmem:[#allocation2 + $0xf0] sm:$0xff]
    %v131 = vld [vmem:[#allocation2 + $0xf8] sm:$0xff]
    %v132 = vld [vmem:[#allocation2 + $0x100] sm:$0xff]
    %v133 = vld [vmem:[#allocation2 + $0x108] sm:$0xff]
    %v134 = vld [vmem:[#allocation2 + $0x110] sm:$0xff]
    %v135 = vld [vmem:[#allocation2 + $0x118] sm:$0xff]
    %v136 = vld [vmem:[#allocation2 + $0x120] sm:$0xff]
    %v137 = vld [vmem:[#allocation2 + $0x128] sm:$0xff]
    %v138 = vld [vmem:[#allocation2 + $0x130] sm:$0xff]
    %v139 = vld [vmem:[#allocation2 + $0x138] sm:$0xff]
    %v140 = vld [vmem:[#allocation2 + $0x140] sm:$0xff]
    %v141 = vld [vmem:[#allocation2 + $0x148] sm:$0xff]
    %v142 = vld [vmem:[#allocation2 + $0x150] sm:$0xff]
    %v143 = vld [vmem:[#allocation2 + $0x158] sm:$0xff]
    %v144 = vld [vmem:[#allocation2 + $0x160] sm:$0xff]
    %v145 = vld [vmem:[#allocation2 + $0x168] sm:$0xff]
    %v146 = vld [vmem:[#allocation2 + $0x170] sm:$0xff]
    %v147 = vld [vmem:[#allocation2 + $0x178] sm:$0xff]
    %v148 = vld [vmem:[#allocation2 + $0x180] sm:$0xff]
    %v149 = vld [vmem:[#allocation2 + $0x188] sm:$0xff]
    %v150 = vld [vmem:[#allocation2 + $0x190] sm:$0xff]
    %v151 = vld [vmem:[#allocation2 + $0x198] sm:$0xff]
    %v152 = vld [vmem:[#allocation2 + $0x1a0] sm:$0xff]
    %v153 = vld [vmem:[#allocation2 + $0x1a8] sm:$0xff]
    %v154 = vld [vmem:[#allocation2 + $0x1b0] sm:$0xff]
    %v155 = vld [vmem:[#allocation2 + $0x1b8] sm:$0xff]
    %v156 = vld [vmem:[#allocation2 + $0x1c0] sm:$0xff]
    %v157 = vld [vmem:[#allocation2 + $0x1c8] sm:$0xff]
    %v158 = vld [vmem:[#allocation2 + $0x1d0] sm:$0xff]
    %v159 = vld [vmem:[#allocation2 + $0x1d8] sm:$0xff]
    %v160 = vld [vmem:[#allocation2 + $0x1e0] sm:$0xff]
    %v161 = vld [vmem:[#allocation2 + $0x1e8] sm:$0xff]
    %v162 = vld [vmem:[#allocation2 + $0x1f0] sm:$0xff]
    %v163 = vld [vmem:[#allocation2 + $0x1f8] sm:$0xff]
    %v164 = vld [vmem:[#allocation2 + $0x200] sm:$0xff]
    %v165 = vld [vmem:[#allocation2 + $0x208] sm:$0xff]
    %v166 = vld [vmem:[#allocation2 + $0x210] sm:$0xff]
    %v167 = vld [vmem:[#allocation2 + $0x218] sm:$0xff]
    %v168 = vld [vmem:[#allocation2 + $0x220] sm:$0xff]
    %v169 = vld [vmem:[#allocation2 + $0x228] sm:$0xff]
    %v170 = vld [vmem:[#allocation2 + $0x230] sm:$0xff]
    %v171 = vld [vmem:[#allocation2 + $0x238] sm:$0xff]
    %v172 = vld [vmem:[#allocation2 + $0x240] sm:$0xff]
    %v173 = vld [vmem:[#allocation2 + $0x248] sm:$0xff]
    %v174 = vld [vmem:[#allocation2 + $0x250] sm:$0xff]
    %v175 = vld [vmem:[#allocation2 + $0x258] sm:$0xff]
    %v176 = vld [vmem:[#allocation2 + $0x260] sm:$0xff]
    %v177 = vld [vmem:[#allocation2 + $0x268] sm:$0xff]
    %v178 = vld [vmem:[#allocation2 + $0x270] sm:$0xff]
    %v179 = vld [vmem:[#allocation2 + $0x278] sm:$0xff]
    %v180 = vld [vmem:[#allocation2 + $0x280] sm:$0xff]
    %v181 = vld [vmem:[#allocation2 + $0x288] sm:$0xff]
    %v182 = vld [vmem:[#allocation2 + $0x290] sm:$0xff]
    %v183 = vld [vmem:[#allocation2 + $0x298] sm:$0xff]
    %v184 = vld [vmem:[#allocation2 + $0x2a0] sm:$0xff]
    %v185 = vld [vmem:[#allocation2 + $0x2a8] sm:$0xff]
    %v186 = vld [vmem:[#allocation2 + $0x2b0] sm:$0xff]
    %v187 = vld [vmem:[#allocation2 + $0x2b8] sm:$0xff]
    %v188 = vld [vmem:[#allocation2 + $0x2c0] sm:$0xff]
    %v189 = vld [vmem:[#allocation2 + $0x2c8] sm:$0xff]
    %v190 = vld [vmem:[#allocation2 + $0x2d0] sm:$0xff]
    %v191 = vld [vmem:[#allocation2 + $0x2d8] sm:$0xff]
    %v192 = vld [vmem:[#allocation2 + $0x2e0] sm:$0xff]
    %v193 = vld [vmem:[#allocation2 + $0x2e8] sm:$0xff]
    %v194 = vld [vmem:[#allocation2 + $0x2f0] sm:$0xff]
    %v195 = vld [vmem:[#allocation2 + $0x2f8] sm:$0xff]
    %v196 = vld [vmem:[#allocation2 + $0x300] sm:$0xff]
    %v197 = vld [vmem:[#allocation2 + $0x308] sm:$0xff]
    %v198 = vld [vmem:[#allocation2 + $0x310] sm:$0xff]
    %v199 = vld [vmem:[#allocation2 + $0x318] sm:$0xff]
    %v200 = vld [vmem:[#allocation2 + $0x320] sm:$0xff]
    %v201 = vld [vmem:[#allocation2 + $0x328] sm:$0xff]
    %v202 = vld [vmem:[#allocation2 + $0x330] sm:$0xff]
    %v203 = vld [vmem:[#allocation2 + $0x338] sm:$0xff]
    %v204 = vld [vmem:[#allocation2 + $0x340] sm:$0xff]
    %v205 = vld [vmem:[#allocation2 + $0x348] sm:$0xff]
    %v206 = vld [vmem:[#allocation2 + $0x350] sm:$0xff]
    %v207 = vld [vmem:[#allocation2 + $0x358] sm:$0xff]
    %v208 = vld [vmem:[#allocation2 + $0x360] sm:$0xff]
    %v209 = vld [vmem:[#allocation2 + $0x368] sm:$0xff]
    %v210 = vld [vmem:[#allocation2 + $0x370] sm:$0xff]
    %v211 = vld [vmem:[#allocation2 + $0x378] sm:$0xff]
    %v212 = vld [vmem:[#allocation2 + $0x380] sm:$0xff]
    %v213 = vld [vmem:[#allocation2 + $0x388] sm:$0xff]
    %v214 = vld [vmem:[#allocation2 + $0x390] sm:$0xff]
    %v215 = vld [vmem:[#allocation2 + $0x398] sm:$0xff]
    %v216 = vld [vmem:[#allocation2 + $0x3a0] sm:$0xff]
    %v217 = vld [vmem:[#allocation2 + $0x3a8] sm:$0xff]
    %v218 = vld [vmem:[#allocation2 + $0x3b0] sm:$0xff]
    %v219 = vld [vmem:[#allocation2 + $0x3b8] sm:$0xff]
    %v220 = vld [vmem:[#allocation2 + $0x3c0] sm:$0xff]
    %v221 = vld [vmem:[#allocation2 + $0x3c8] sm:$0xff]
    %v222 = vld [vmem:[#allocation2 + $0x3d0] sm:$0xff]
    %v223 = vld [vmem:[#allocation2 + $0x3d8] sm:$0xff]
    %v224 = vld [vmem:[#allocation2 + $0x3e0] sm:$0xff]
    %v225 = vld [vmem:[#allocation2 + $0x3e8] sm:$0xff]
    %v226 = vld [vmem:[#allocation2 + $0x3f0] sm:$0xff]
    %v227 = vld [vmem:[#allocation2 + $0x3f8] sm:$0xff]
    %v228 = vld [vmem:[#allocation2 + $0x400] sm:$0xff]
    %v229 = vld [vmem:[#allocation2 + $0x408] sm:$0xff]
    %v230 = vld [vmem:[#allocation2 + $0x410] sm:$0xff]
    %v231 = vld [vmem:[#allocation2 + $0x418] sm:$0xff]
    %v232 = vld [vmem:[#allocation2 + $0x420] sm:$0xff]
    %v233 = vld [vmem:[#allocation2 + $0x428] sm:$0xff]
    %v234 = vld [vmem:[#allocation2 + $0x430] sm:$0xff]
    %v235 = vld [vmem:[#allocation2 + $0x438] sm:$0xff]
    %v236 = vld [vmem:[#allocation2 + $0x440] sm:$0xff]
    %v237 = vld [vmem:[#allocation2 + $0x448] sm:$0xff]
    %v238 = vld [vmem:[#allocation2 + $0x450] sm:$0xff]
    %v239 = vld [vmem:[#allocation2 + $0x458] sm:$0xff]
    %v240 = vld [vmem:[#allocation2 + $0x460] sm:$0xff]
    %v241 = vld [vmem:[#allocation2 + $0x468] sm:$0xff]
    %v242 = vld [vmem:[#allocation2 + $0x470] sm:$0xff]
    %v243 = vld [vmem:[#allocation2 + $0x478] sm:$0xff]
    %v244 = vld [vmem:[#allocation2 + $0x480] sm:$0xff]
    %v245 = vld [vmem:[#allocation2 + $0x488] sm:$0xff]
    %v246 = vld [vmem:[#allocation2 + $0x490] sm:$0xff]
    %v247 = vld [vmem:[#allocation2 + $0x498] sm:$0xff]
    %v248 = vld [vmem:[#allocation2 + $0x4a0] sm:$0xff]
    %v249 = vld [vmem:[#allocation2 + $0x4a8] sm:$0xff]
    %v250 = vld [vmem:[#allocation2 + $0x4b0] sm:$0xff]
    %v251 = vld [vmem:[#allocation2 + $0x4b8] sm:$0xff]
    %v252 = vld [vmem:[#allocation2 + $0x4c0] sm:$0xff]
    %v253 = vld [vmem:[#allocation2 + $0x4c8] sm:$0xff]
    %v254 = vld [vmem:[#allocation2 + $0x4d0] sm:$0xff]
    %v255 = vld [vmem:[#allocation2 + $0x4d8] sm:$0xff]
    %v256 = vld [vmem:[#allocation2 + $0x4e0] sm:$0xff]
    %v257 = vld [vmem:[#allocation2 + $0x4e8] sm:$0xff]
    %v258 = vld [vmem:[#allocation2 + $0x4f0] sm:$0xff]
    %v259 = vld [vmem:[#allocation2 + $0x4f8] sm:$0xff]
    %v260 = vld [vmem:[#allocation2 + $0x500] sm:$0xff]
    %v261 = vld [vmem:[#allocation2 + $0x508] sm:$0xff]
    %v262 = vld [vmem:[#allocation2 + $0x510] sm:$0xff]
    %v263 = vld [vmem:[#allocation2 + $0x518] sm:$0xff]
    %v264 = vld [vmem:[#allocation2 + $0x520] sm:$0xff]
    %v265 = vld [vmem:[#allocation2 + $0x528] sm:$0xff]
    %v266 = vld [vmem:[#allocation2 + $0x530] sm:$0xff]
    %v267 = vld [vmem:[#allocation2 + $0x538] sm:$0xff]
    %v268 = vld [vmem:[#allocation2 + $0x540] sm:$0xff]
    %v269 = vld [vmem:[#allocation2 + $0x548] sm:$0xff]
    %v270 = vld [vmem:[#allocation2 + $0x550] sm:$0xff]
    %v271 = vld [vmem:[#allocation2 + $0x558] sm:$0xff]
    %v272 = vld [vmem:[#allocation2 + $0x560] sm:$0xff]
    %v273 = vld [vmem:[#allocation2 + $0x568] sm:$0xff]
    %v274 = vld [vmem:[#allocation2 + $0x570] sm:$0xff]
    %v275 = vld [vmem:[#allocation2 + $0x578] sm:$0xff]
    %v276 = vld [vmem:[#allocation2 + $0x580] sm:$0xff]
    %v277 = vld [vmem:[#allocation2 + $0x588] sm:$0xff]
    %v278 = vld [vmem:[#allocation2 + $0x590] sm:$0xff]
    %v279 = vld [vmem:[#allocation2 + $0x598] sm:$0xff]
    %v280 = vld [vmem:[#allocation2 + $0x5a0] sm:$0xff]
    %v281 = vld [vmem:[#allocation2 + $0x5a8] sm:$0xff]
    %v282 = vld [vmem:[#allocation2 + $0x5b0] sm:$0xff]
    %v283 = vld [vmem:[#allocation2 + $0x5b8] sm:$0xff]
    %v284 = vld [vmem:[#allocation2 + $0x5c0] sm:$0xff]
    %v285 = vld [vmem:[#allocation2 + $0x5c8] sm:$0xff]
    %v286 = vld [vmem:[#allocation2 + $0x5d0] sm:$0xff]
    %v287 = vld [vmem:[#allocation2 + $0x5d8] sm:$0xff]
    %v288 = vld [vmem:[#allocation2 + $0x5e0] sm:$0xff]
    %v289 = vld [vmem:[#allocation2 + $0x5e8] sm:$0xff]
    %v290 = vld [vmem:[#allocation2 + $0x5f0] sm:$0xff]
    %v291 = vld [vmem:[#allocation2 + $0x5f8] sm:$0xff]
    %v292 = vld [vmem:[#allocation2 + $0x600] sm:$0xff]
    %v293 = vld [vmem:[#allocation2 + $0x608] sm:$0xff]
    %v294 = vld [vmem:[#allocation2 + $0x610] sm:$0xff]
    %v295 = vld [vmem:[#allocation2 + $0x618] sm:$0xff]
    %v296 = vld [vmem:[#allocation2 + $0x620] sm:$0xff]
    %v297 = vld [vmem:[#allocation2 + $0x628] sm:$0xff]
    %v298 = vld [vmem:[#allocation2 + $0x630] sm:$0xff]
    %v299 = vld [vmem:[#allocation2 + $0x638] sm:$0xff]
    %v300 = vld [vmem:[#allocation2 + $0x640] sm:$0xff]
    %v301 = vld [vmem:[#allocation2 + $0x648] sm:$0xff]
    %v302 = vld [vmem:[#allocation2 + $0x650] sm:$0xff]
    %v303 = vld [vmem:[#allocation2 + $0x658] sm:$0xff]
    %v304 = vld [vmem:[#allocation2 + $0x660] sm:$0xff]
    %v305 = vld [vmem:[#allocation2 + $0x668] sm:$0xff]
    %v306 = vld [vmem:[#allocation2 + $0x670] sm:$0xff]
    %v307 = vld [vmem:[#allocation2 + $0x678] sm:$0xff]
    %v308 = vld [vmem:[#allocation2 + $0x680] sm:$0xff]
    %v309 = vld [vmem:[#allocation2 + $0x688] sm:$0xff]
    %v310 = vld [vmem:[#allocation2 + $0x690] sm:$0xff]
    %v311 = vld [vmem:[#allocation2 + $0x698] sm:$0xff]
    %v312 = vld [vmem:[#allocation2 + $0x6a0] sm:$0xff]
    %v313 = vld [vmem:[#allocation2 + $0x6a8] sm:$0xff]
    %v314 = vld [vmem:[#allocation2 + $0x6b0] sm:$0xff]
    %v315 = vld [vmem:[#allocation2 + $0x6b8] sm:$0xff]
    %v316 = vld [vmem:[#allocation2 + $0x6c0] sm:$0xff]
    %v317 = vld [vmem:[#allocation2 + $0x6c8] sm:$0xff]
    %v318 = vld [vmem:[#allocation2 + $0x6d0] sm:$0xff]
    %v319 = vld [vmem:[#allocation2 + $0x6d8] sm:$0xff]
    %v320 = vld [vmem:[#allocation2 + $0x6e0] sm:$0xff]
    %v321 = vld [vmem:[#allocation2 + $0x6e8] sm:$0xff]
    %v322 = vld [vmem:[#allocation2 + $0x6f0] sm:$0xff]
    %v323 = vld [vmem:[#allocation2 + $0x6f8] sm:$0xff]
    %v324 = vld [vmem:[#allocation2 + $0x700] sm:$0xff]
    %v325 = vld [vmem:[#allocation2 + $0x708] sm:$0xff]
    %v326 = vld [vmem:[#allocation2 + $0x710] sm:$0xff]
    %v327 = vld [vmem:[#allocation2 + $0x718] sm:$0xff]
    %v328 = vld [vmem:[#allocation2 + $0x720] sm:$0xff]
    %v329 = vld [vmem:[#allocation2 + $0x728] sm:$0xff]
    %v330 = vld [vmem:[#allocation2 + $0x730] sm:$0xff]
    %v331 = vld [vmem:[#allocation2 + $0x738] sm:$0xff]
    %v332 = vld [vmem:[#allocation2 + $0x740] sm:$0xff]
    %v333 = vld [vmem:[#allocation2 + $0x748] sm:$0xff]
    %v334 = vld [vmem:[#allocation2 + $0x750] sm:$0xff]
    %v335 = vld [vmem:[#allocation2 + $0x758] sm:$0xff]
    %v336 = vld [vmem:[#allocation2 + $0x760] sm:$0xff]
    %v337 = vld [vmem:[#allocation2 + $0x768] sm:$0xff]
    %v338 = vld [vmem:[#allocation2 + $0x770] sm:$0xff]
    %v339 = vld [vmem:[#allocation2 + $0x778] sm:$0xff]
    %v340 = vld [vmem:[#allocation2 + $0x780] sm:$0xff]
    %v341 = vld [vmem:[#allocation2 + $0x788] sm:$0xff]
    %v342 = vld [vmem:[#allocation2 + $0x790] sm:$0xff]
    %v343 = vld [vmem:[#allocation2 + $0x798] sm:$0xff]
    %v344 = vld [vmem:[#allocation2 + $0x7a0] sm:$0xff]
    %v345 = vld [vmem:[#allocation2 + $0x7a8] sm:$0xff]
    %v346 = vld [vmem:[#allocation2 + $0x7b0] sm:$0xff]
    %v347 = vld [vmem:[#allocation2 + $0x7b8] sm:$0xff]
    %v348 = vld [vmem:[#allocation2 + $0x7c0] sm:$0xff]
    %v349 = vld [vmem:[#allocation2 + $0x7c8] sm:$0xff]
    %v350 = vld [vmem:[#allocation2 + $0x7d0] sm:$0xff]
    %v351 = vld [vmem:[#allocation2 + $0x7d8] sm:$0xff]
    %v352 = vld [vmem:[#allocation2 + $0x7e0] sm:$0xff]
    %v353 = vld [vmem:[#allocation2 + $0x7e8] sm:$0xff]
    %v354 = vld [vmem:[#allocation2 + $0x7f0] sm:$0xff]
    %v355 = vld [vmem:[#allocation2 + $0x7f8] sm:$0xff]
    %v612 = vunpack.c.l.b16 %v100
    %v613 = vunpack.c.h.b16 %v100
    %v614 = vunpack.c.l.b16 %v101
    %v615 = vunpack.c.h.b16 %v101
    %v616 = vunpack.c.l.b16 %v102
    %v617 = vunpack.c.h.b16 %v102
    %v618 = vunpack.c.l.b16 %v103
    %v619 = vunpack.c.h.b16 %v103
    %v620 = vunpack.c.l.b16 %v104
    %v621 = vunpack.c.h.b16 %v104
    %v622 = vunpack.c.l.b16 %v105
    %v623 = vunpack.c.h.b16 %v105
    %v624 = vunpack.c.l.b16 %v106
    %v625 = vunpack.c.h.b16 %v106
    %v626 = vunpack.c.l.b16 %v107
    %v627 = vunpack.c.h.b16 %v107
    %v628 = vunpack.c.l.b16 %v108
    %v629 = vunpack.c.h.b16 %v108
    %v630 = vunpack.c.l.b16 %v109
    %v631 = vunpack.c.h.b16 %v109
    %v632 = vunpack.c.l.b16 %v110
    %v633 = vunpack.c.h.b16 %v110
    %v634 = vunpack.c.l.b16 %v111
    %v635 = vunpack.c.h.b16 %v111
    %v636 = vunpack.c.l.b16 %v112
    %v637 = vunpack.c.h.b16 %v112
    %v638 = vunpack.c.l.b16 %v113
    %v639 = vunpack.c.h.b16 %v113
    %v640 = vunpack.c.l.b16 %v114
    %v641 = vunpack.c.h.b16 %v114
    %v642 = vunpack.c.l.b16 %v115
    %v643 = vunpack.c.h.b16 %v115
    %v644 = vunpack.c.l.b16 %v116
    %v645 = vunpack.c.h.b16 %v116
    %v646 = vunpack.c.l.b16 %v117
    %v647 = vunpack.c.h.b16 %v117
    %v648 = vunpack.c.l.b16 %v118
    %v649 = vunpack.c.h.b16 %v118
    %v650 = vunpack.c.l.b16 %v119
    %v651 = vunpack.c.h.b16 %v119
    %v652 = vunpack.c.l.b16 %v120
    %v653 = vunpack.c.h.b16 %v120
    %v654 = vunpack.c.l.b16 %v121
    %v655 = vunpack.c.h.b16 %v121
    %v656 = vunpack.c.l.b16 %v122
    %v657 = vunpack.c.h.b16 %v122
    %v658 = vunpack.c.l.b16 %v123
    %v659 = vunpack.c.h.b16 %v123
    %v660 = vunpack.c.l.b16 %v124
    %v661 = vunpack.c.h.b16 %v124
    %v662 = vunpack.c.l.b16 %v125
    %v663 = vunpack.c.h.b16 %v125
    %v664 = vunpack.c.l.b16 %v126
    %v665 = vunpack.c.h.b16 %v126
    %v666 = vunpack.c.l.b16 %v127
    %v667 = vunpack.c.h.b16 %v127
    %v668 = vunpack.c.l.b16 %v128
    %v669 = vunpack.c.h.b16 %v128
    %v670 = vunpack.c.l.b16 %v129
    %v671 = vunpack.c.h.b16 %v129
    %v672 = vunpack.c.l.b16 %v130
    %v673 = vunpack.c.h.b16 %v130
    %v674 = vunpack.c.l.b16 %v131
    %v675 = vunpack.c.h.b16 %v131
    %v676 = vunpack.c.l.b16 %v132
    %v677 = vunpack.c.h.b16 %v132
    %v678 = vunpack.c.l.b16 %v133
    %v679 = vunpack.c.h.b16 %v133
    %v680 = vunpack.c.l.b16 %v134
    %v681 = vunpack.c.h.b16 %v134
    %v682 = vunpack.c.l.b16 %v135
    %v683 = vunpack.c.h.b16 %v135
    %v684 = vunpack.c.l.b16 %v136
    %v685 = vunpack.c.h.b16 %v136
    %v686 = vunpack.c.l.b16 %v137
    %v687 = vunpack.c.h.b16 %v137
    %v688 = vunpack.c.l.b16 %v138
    %v689 = vunpack.c.h.b16 %v138
    %v690 = vunpack.c.l.b16 %v139
    %v691 = vunpack.c.h.b16 %v139
    %v692 = vunpack.c.l.b16 %v140
    %v693 = vunpack.c.h.b16 %v140
    %v694 = vunpack.c.l.b16 %v141
    %v695 = vunpack.c.h.b16 %v141
    %v696 = vunpack.c.l.b16 %v142
    %v697 = vunpack.c.h.b16 %v142
    %v698 = vunpack.c.l.b16 %v143
    %v699 = vunpack.c.h.b16 %v143
    %v700 = vunpack.c.l.b16 %v144
    %v701 = vunpack.c.h.b16 %v144
    %v702 = vunpack.c.l.b16 %v145
    %v703 = vunpack.c.h.b16 %v145
    %v704 = vunpack.c.l.b16 %v146
    %v705 = vunpack.c.h.b16 %v146
    %v706 = vunpack.c.l.b16 %v147
    %v707 = vunpack.c.h.b16 %v147
    %v708 = vunpack.c.l.b16 %v148
    %v709 = vunpack.c.h.b16 %v148
    %v710 = vunpack.c.l.b16 %v149
    %v711 = vunpack.c.h.b16 %v149
    %v712 = vunpack.c.l.b16 %v150
    %v713 = vunpack.c.h.b16 %v150
    %v714 = vunpack.c.l.b16 %v151
    %v715 = vunpack.c.h.b16 %v151
    %v716 = vunpack.c.l.b16 %v152
    %v717 = vunpack.c.h.b16 %v152
    %v718 = vunpack.c.l.b16 %v153
    %v719 = vunpack.c.h.b16 %v153
    %v720 = vunpack.c.l.b16 %v154
    %v721 = vunpack.c.h.b16 %v154
    %v722 = vunpack.c.l.b16 %v155
    %v723 = vunpack.c.h.b16 %v155
    %v724 = vunpack.c.l.b16 %v156
    %v725 = vunpack.c.h.b16 %v156
    %v726 = vunpack.c.l.b16 %v157
    %v727 = vunpack.c.h.b16 %v157
    %v728 = vunpack.c.l.b16 %v158
    %v729 = vunpack.c.h.b16 %v158
    %v730 = vunpack.c.l.b16 %v159
    %v731 = vunpack.c.h.b16 %v159
    %v732 = vunpack.c.l.b16 %v160
    %v733 = vunpack.c.h.b16 %v160
    %v734 = vunpack.c.l.b16 %v161
    %v735 = vunpack.c.h.b16 %v161
    %v736 = vunpack.c.l.b16 %v162
    %v737 = vunpack.c.h.b16 %v162
    %v738 = vunpack.c.l.b16 %v163
    %v739 = vunpack.c.h.b16 %v163
    %v740 = vunpack.c.l.b16 %v164
    %v741 = vunpack.c.h.b16 %v164
    %v742 = vunpack.c.l.b16 %v165
    %v743 = vunpack.c.h.b16 %v165
    %v744 = vunpack.c.l.b16 %v166
    %v745 = vunpack.c.h.b16 %v166
    %v746 = vunpack.c.l.b16 %v167
    %v747 = vunpack.c.h.b16 %v167
    %v748 = vunpack.c.l.b16 %v168
    %v749 = vunpack.c.h.b16 %v168
    %v750 = vunpack.c.l.b16 %v169
    %v751 = vunpack.c.h.b16 %v169
    %v752 = vunpack.c.l.b16 %v170
    %v753 = vunpack.c.h.b16 %v170
    %v754 = vunpack.c.l.b16 %v171
    %v755 = vunpack.c.h.b16 %v171
    %v756 = vunpack.c.l.b16 %v172
    %v757 = vunpack.c.h.b16 %v172
    %v758 = vunpack.c.l.b16 %v173
    %v759 = vunpack.c.h.b16 %v173
    %v760 = vunpack.c.l.b16 %v174
    %v761 = vunpack.c.h.b16 %v174
    %v762 = vunpack.c.l.b16 %v175
    %v763 = vunpack.c.h.b16 %v175
    %v764 = vunpack.c.l.b16 %v176
    %v765 = vunpack.c.h.b16 %v176
    %v766 = vunpack.c.l.b16 %v177
    %v767 = vunpack.c.h.b16 %v177
    %v768 = vunpack.c.l.b16 %v178
    %v769 = vunpack.c.h.b16 %v178
    %v770 = vunpack.c.l.b16 %v179
    %v771 = vunpack.c.h.b16 %v179
    %v772 = vunpack.c.l.b16 %v180
    %v773 = vunpack.c.h.b16 %v180
    %v774 = vunpack.c.l.b16 %v181
    %v775 = vunpack.c.h.b16 %v181
    %v776 = vunpack.c.l.b16 %v182
    %v777 = vunpack.c.h.b16 %v182
    %v778 = vunpack.c.l.b16 %v183
    %v779 = vunpack.c.h.b16 %v183
    %v780 = vunpack.c.l.b16 %v184
    %v781 = vunpack.c.h.b16 %v184
    %v782 = vunpack.c.l.b16 %v185
    %v783 = vunpack.c.h.b16 %v185
    %v784 = vunpack.c.l.b16 %v186
    %v785 = vunpack.c.h.b16 %v186
    %v786 = vunpack.c.l.b16 %v187
    %v787 = vunpack.c.h.b16 %v187
    %v788 = vunpack.c.l.b16 %v188
    %v789 = vunpack.c.h.b16 %v188
    %v790 = vunpack.c.l.b16 %v189
    %v791 = vunpack.c.h.b16 %v189
    %v792 = vunpack.c.l.b16 %v190
    %v793 = vunpack.c.h.b16 %v190
    %v794 = vunpack.c.l.b16 %v191
    %v795 = vunpack.c.h.b16 %v191
    %v796 = vunpack.c.l.b16 %v192
    %v797 = vunpack.c.h.b16 %v192
    %v798 = vunpack.c.l.b16 %v193
    %v799 = vunpack.c.h.b16 %v193
    %v800 = vunpack.c.l.b16 %v194
    %v801 = vunpack.c.h.b16 %v194
    %v802 = vunpack.c.l.b16 %v195
    %v803 = vunpack.c.h.b16 %v195
    %v804 = vunpack.c.l.b16 %v196
    %v805 = vunpack.c.h.b16 %v196
    %v806 = vunpack.c.l.b16 %v197
    %v807 = vunpack.c.h.b16 %v197
    %v808 = vunpack.c.l.b16 %v198
    %v809 = vunpack.c.h.b16 %v198
    %v810 = vunpack.c.l.b16 %v199
    %v811 = vunpack.c.h.b16 %v199
    %v812 = vunpack.c.l.b16 %v200
    %v813 = vunpack.c.h.b16 %v200
    %v814 = vunpack.c.l.b16 %v201
    %v815 = vunpack.c.h.b16 %v201
    %v816 = vunpack.c.l.b16 %v202
    %v817 = vunpack.c.h.b16 %v202
    %v818 = vunpack.c.l.b16 %v203
    %v819 = vunpack.c.h.b16 %v203
    %v820 = vunpack.c.l.b16 %v204
    %v821 = vunpack.c.h.b16 %v204
    %v822 = vunpack.c.l.b16 %v205
    %v823 = vunpack.c.h.b16 %v205
    %v824 = vunpack.c.l.b16 %v206
    %v825 = vunpack.c.h.b16 %v206
    %v826 = vunpack.c.l.b16 %v207
    %v827 = vunpack.c.h.b16 %v207
    %v828 = vunpack.c.l.b16 %v208
    %v829 = vunpack.c.h.b16 %v208
    %v830 = vunpack.c.l.b16 %v209
    %v831 = vunpack.c.h.b16 %v209
    %v832 = vunpack.c.l.b16 %v210
    %v833 = vunpack.c.h.b16 %v210
    %v834 = vunpack.c.l.b16 %v211
    %v835 = vunpack.c.h.b16 %v211
    %v836 = vunpack.c.l.b16 %v212
    %v837 = vunpack.c.h.b16 %v212
    %v838 = vunpack.c.l.b16 %v213
    %v839 = vunpack.c.h.b16 %v213
    %v840 = vunpack.c.l.b16 %v214
    %v841 = vunpack.c.h.b16 %v214
    %v842 = vunpack.c.l.b16 %v215
    %v843 = vunpack.c.h.b16 %v215
    %v844 = vunpack.c.l.b16 %v216
    %v845 = vunpack.c.h.b16 %v216
    %v846 = vunpack.c.l.b16 %v217
    %v847 = vunpack.c.h.b16 %v217
    %v848 = vunpack.c.l.b16 %v218
    %v849 = vunpack.c.h.b16 %v218
    %v850 = vunpack.c.l.b16 %v219
    %v851 = vunpack.c.h.b16 %v219
    %v852 = vunpack.c.l.b16 %v220
    %v853 = vunpack.c.h.b16 %v220
    %v854 = vunpack.c.l.b16 %v221
    %v855 = vunpack.c.h.b16 %v221
    %v856 = vunpack.c.l.b16 %v222
    %v857 = vunpack.c.h.b16 %v222
    %v858 = vunpack.c.l.b16 %v223
    %v859 = vunpack.c.h.b16 %v223
    %v860 = vunpack.c.l.b16 %v224
    %v861 = vunpack.c.h.b16 %v224
    %v862 = vunpack.c.l.b16 %v225
    %v863 = vunpack.c.h.b16 %v225
    %v864 = vunpack.c.l.b16 %v226
    %v865 = vunpack.c.h.b16 %v226
    %v866 = vunpack.c.l.b16 %v227
    %v867 = vunpack.c.h.b16 %v227
    %v868 = vunpack.c.l.b16 %v228
    %v869 = vunpack.c.h.b16 %v228
    %v870 = vunpack.c.l.b16 %v229
    %v871 = vunpack.c.h.b16 %v229
    %v872 = vunpack.c.l.b16 %v230
    %v873 = vunpack.c.h.b16 %v230
    %v874 = vunpack.c.l.b16 %v231
    %v875 = vunpack.c.h.b16 %v231
    %v876 = vunpack.c.l.b16 %v232
    %v877 = vunpack.c.h.b16 %v232
    %v878 = vunpack.c.l.b16 %v233
    %v879 = vunpack.c.h.b16 %v233
    %v880 = vunpack.c.l.b16 %v234
    %v881 = vunpack.c.h.b16 %v234
    %v882 = vunpack.c.l.b16 %v235
    %v883 = vunpack.c.h.b16 %v235
    %v884 = vunpack.c.l.b16 %v236
    %v885 = vunpack.c.h.b16 %v236
    %v886 = vunpack.c.l.b16 %v237
    %v887 = vunpack.c.h.b16 %v237
    %v888 = vunpack.c.l.b16 %v238
    %v889 = vunpack.c.h.b16 %v238
    %v890 = vunpack.c.l.b16 %v239
    %v891 = vunpack.c.h.b16 %v239
    %v892 = vunpack.c.l.b16 %v240
    %v893 = vunpack.c.h.b16 %v240
    %v894 = vunpack.c.l.b16 %v241
    %v895 = vunpack.c.h.b16 %v241
    %v896 = vunpack.c.l.b16 %v242
    %v897 = vunpack.c.h.b16 %v242
    %v898 = vunpack.c.l.b16 %v243
    %v899 = vunpack.c.h.b16 %v243
    %v900 = vunpack.c.l.b16 %v244
    %v901 = vunpack.c.h.b16 %v244
    %v902 = vunpack.c.l.b16 %v245
    %v903 = vunpack.c.h.b16 %v245
    %v904 = vunpack.c.l.b16 %v246
    %v905 = vunpack.c.h.b16 %v246
    %v906 = vunpack.c.l.b16 %v247
    %v907 = vunpack.c.h.b16 %v247
    %v908 = vunpack.c.l.b16 %v248
    %v909 = vunpack.c.h.b16 %v248
    %v910 = vunpack.c.l.b16 %v249
    %v911 = vunpack.c.h.b16 %v249
    %v912 = vunpack.c.l.b16 %v250
    %v913 = vunpack.c.h.b16 %v250
    %v914 = vunpack.c.l.b16 %v251
    %v915 = vunpack.c.h.b16 %v251
    %v916 = vunpack.c.l.b16 %v252
    %v917 = vunpack.c.h.b16 %v252
    %v918 = vunpack.c.l.b16 %v253
    %v919 = vunpack.c.h.b16 %v253
    %v920 = vunpack.c.l.b16 %v254
    %v921 = vunpack.c.h.b16 %v254
    %v922 = vunpack.c.l.b16 %v255
    %v923 = vunpack.c.h.b16 %v255
    %v924 = vunpack.c.l.b16 %v256
    %v925 = vunpack.c.h.b16 %v256
    %v926 = vunpack.c.l.b16 %v257
    %v927 = vunpack.c.h.b16 %v257
    %v928 = vunpack.c.l.b16 %v258
    %v929 = vunpack.c.h.b16 %v258
    %v930 = vunpack.c.l.b16 %v259
    %v931 = vunpack.c.h.b16 %v259
    %v932 = vunpack.c.l.b16 %v260
    %v933 = vunpack.c.h.b16 %v260
    %v934 = vunpack.c.l.b16 %v261
    %v935 = vunpack.c.h.b16 %v261
    %v936 = vunpack.c.l.b16 %v262
    %v937 = vunpack.c.h.b16 %v262
    %v938 = vunpack.c.l.b16 %v263
    %v939 = vunpack.c.h.b16 %v263
    %v940 = vunpack.c.l.b16 %v264
    %v941 = vunpack.c.h.b16 %v264
    %v942 = vunpack.c.l.b16 %v265
    %v943 = vunpack.c.h.b16 %v265
    %v944 = vunpack.c.l.b16 %v266
    %v945 = vunpack.c.h.b16 %v266
    %v946 = vunpack.c.l.b16 %v267
    %v947 = vunpack.c.h.b16 %v267
    %v948 = vunpack.c.l.b16 %v268
    %v949 = vunpack.c.h.b16 %v268
    %v950 = vunpack.c.l.b16 %v269
    %v951 = vunpack.c.h.b16 %v269
    %v952 = vunpack.c.l.b16 %v270
    %v953 = vunpack.c.h.b16 %v270
    %v954 = vunpack.c.l.b16 %v271
    %v955 = vunpack.c.h.b16 %v271
    %v956 = vunpack.c.l.b16 %v272
    %v957 = vunpack.c.h.b16 %v272
    %v958 = vunpack.c.l.b16 %v273
    %v959 = vunpack.c.h.b16 %v273
    %v960 = vunpack.c.l.b16 %v274
    %v961 = vunpack.c.h.b16 %v274
    %v962 = vunpack.c.l.b16 %v275
    %v963 = vunpack.c.h.b16 %v275
    %v964 = vunpack.c.l.b16 %v276
    %v965 = vunpack.c.h.b16 %v276
    %v966 = vunpack.c.l.b16 %v277
    %v967 = vunpack.c.h.b16 %v277
    %v968 = vunpack.c.l.b16 %v278
    %v969 = vunpack.c.h.b16 %v278
    %v970 = vunpack.c.l.b16 %v279
    %v971 = vunpack.c.h.b16 %v279
    %v972 = vunpack.c.l.b16 %v280
    %v973 = vunpack.c.h.b16 %v280
    %v974 = vunpack.c.l.b16 %v281
    %v975 = vunpack.c.h.b16 %v281
    %v976 = vunpack.c.l.b16 %v282
    %v977 = vunpack.c.h.b16 %v282
    %v978 = vunpack.c.l.b16 %v283
    %v979 = vunpack.c.h.b16 %v283
    %v980 = vunpack.c.l.b16 %v284
    %v981 = vunpack.c.h.b16 %v284
    %v982 = vunpack.c.l.b16 %v285
    %v983 = vunpack.c.h.b16 %v285
    %v984 = vunpack.c.l.b16 %v286
    %v985 = vunpack.c.h.b16 %v286
    %v986 = vunpack.c.l.b16 %v287
    %v987 = vunpack.c.h.b16 %v287
    %v988 = vunpack.c.l.b16 %v288
    %v989 = vunpack.c.h.b16 %v288
    %v990 = vunpack.c.l.b16 %v289
    %v991 = vunpack.c.h.b16 %v289
    %v992 = vunpack.c.l.b16 %v290
    %v993 = vunpack.c.h.b16 %v290
    %v994 = vunpack.c.l.b16 %v291
    %v995 = vunpack.c.h.b16 %v291
    %v996 = vunpack.c.l.b16 %v292
    %v997 = vunpack.c.h.b16 %v292
    %v998 = vunpack.c.l.b16 %v293
    %v999 = vunpack.c.h.b16 %v293
    %v1000 = vunpack.c.l.b16 %v294
    %v1001 = vunpack.c.h.b16 %v294
    %v1002 = vunpack.c.l.b16 %v295
    %v1003 = vunpack.c.h.b16 %v295
    %v1004 = vunpack.c.l.b16 %v296
    %v1005 = vunpack.c.h.b16 %v296
    %v1006 = vunpack.c.l.b16 %v297
    %v1007 = vunpack.c.h.b16 %v297
    %v1008 = vunpack.c.l.b16 %v298
    %v1009 = vunpack.c.h.b16 %v298
    %v1010 = vunpack.c.l.b16 %v299
    %v1011 = vunpack.c.h.b16 %v299
    %v1012 = vunpack.c.l.b16 %v300
    %v1013 = vunpack.c.h.b16 %v300
    %v1014 = vunpack.c.l.b16 %v301
    %v1015 = vunpack.c.h.b16 %v301
    %v1016 = vunpack.c.l.b16 %v302
    %v1017 = vunpack.c.h.b16 %v302
    %v1018 = vunpack.c.l.b16 %v303
    %v1019 = vunpack.c.h.b16 %v303
    %v1020 = vunpack.c.l.b16 %v304
    %v1021 = vunpack.c.h.b16 %v304
    %v1022 = vunpack.c.l.b16 %v305
    %v1023 = vunpack.c.h.b16 %v305
    %v1024 = vunpack.c.l.b16 %v306
    %v1025 = vunpack.c.h.b16 %v306
    %v1026 = vunpack.c.l.b16 %v307
    %v1027 = vunpack.c.h.b16 %v307
    %v1028 = vunpack.c.l.b16 %v308
    %v1029 = vunpack.c.h.b16 %v308
    %v1030 = vunpack.c.l.b16 %v309
    %v1031 = vunpack.c.h.b16 %v309
    %v1032 = vunpack.c.l.b16 %v310
    %v1033 = vunpack.c.h.b16 %v310
    %v1034 = vunpack.c.l.b16 %v311
    %v1035 = vunpack.c.h.b16 %v311
    %v1036 = vunpack.c.l.b16 %v312
    %v1037 = vunpack.c.h.b16 %v312
    %v1038 = vunpack.c.l.b16 %v313
    %v1039 = vunpack.c.h.b16 %v313
    %v1040 = vunpack.c.l.b16 %v314
    %v1041 = vunpack.c.h.b16 %v314
    %v1042 = vunpack.c.l.b16 %v315
    %v1043 = vunpack.c.h.b16 %v315
    %v1044 = vunpack.c.l.b16 %v316
    %v1045 = vunpack.c.h.b16 %v316
    %v1046 = vunpack.c.l.b16 %v317
    %v1047 = vunpack.c.h.b16 %v317
    %v1048 = vunpack.c.l.b16 %v318
    %v1049 = vunpack.c.h.b16 %v318
    %v1050 = vunpack.c.l.b16 %v319
    %v1051 = vunpack.c.h.b16 %v319
    %v1052 = vunpack.c.l.b16 %v320
    %v1053 = vunpack.c.h.b16 %v320
    %v1054 = vunpack.c.l.b16 %v321
    %v1055 = vunpack.c.h.b16 %v321
    %v1056 = vunpack.c.l.b16 %v322
    %v1057 = vunpack.c.h.b16 %v322
    %v1058 = vunpack.c.l.b16 %v323
    %v1059 = vunpack.c.h.b16 %v323
    %v1060 = vunpack.c.l.b16 %v324
    %v1061 = vunpack.c.h.b16 %v324
    %v1062 = vunpack.c.l.b16 %v325
    %v1063 = vunpack.c.h.b16 %v325
    %v1064 = vunpack.c.l.b16 %v326
    %v1065 = vunpack.c.h.b16 %v326
    %v1066 = vunpack.c.l.b16 %v327
    %v1067 = vunpack.c.h.b16 %v327
    %v1068 = vunpack.c.l.b16 %v328
    %v1069 = vunpack.c.h.b16 %v328
    %v1070 = vunpack.c.l.b16 %v329
    %v1071 = vunpack.c.h.b16 %v329
    %v1072 = vunpack.c.l.b16 %v330
    %v1073 = vunpack.c.h.b16 %v330
    %v1074 = vunpack.c.l.b16 %v331
    %v1075 = vunpack.c.h.b16 %v331
    %v1076 = vunpack.c.l.b16 %v332
    %v1077 = vunpack.c.h.b16 %v332
    %v1078 = vunpack.c.l.b16 %v333
    %v1079 = vunpack.c.h.b16 %v333
    %v1080 = vunpack.c.l.b16 %v334
    %v1081 = vunpack.c.h.b16 %v334
    %v1082 = vunpack.c.l.b16 %v335
    %v1083 = vunpack.c.h.b16 %v335
    %v1084 = vunpack.c.l.b16 %v336
    %v1085 = vunpack.c.h.b16 %v336
    %v1086 = vunpack.c.l.b16 %v337
    %v1087 = vunpack.c.h.b16 %v337
    %v1088 = vunpack.c.l.b16 %v338
    %v1089 = vunpack.c.h.b16 %v338
    %v1090 = vunpack.c.l.b16 %v339
    %v1091 = vunpack.c.h.b16 %v339
    %v1092 = vunpack.c.l.b16 %v340
    %v1093 = vunpack.c.h.b16 %v340
    %v1094 = vunpack.c.l.b16 %v341
    %v1095 = vunpack.c.h.b16 %v341
    %v1096 = vunpack.c.l.b16 %v342
    %v1097 = vunpack.c.h.b16 %v342
    %v1098 = vunpack.c.l.b16 %v343
    %v1099 = vunpack.c.h.b16 %v343
    %v1100 = vunpack.c.l.b16 %v344
    %v1101 = vunpack.c.h.b16 %v344
    %v1102 = vunpack.c.l.b16 %v345
    %v1103 = vunpack.c.h.b16 %v345
    %v1104 = vunpack.c.l.b16 %v346
    %v1105 = vunpack.c.h.b16 %v346
    %v1106 = vunpack.c.l.b16 %v347
    %v1107 = vunpack.c.h.b16 %v347
    %v1108 = vunpack.c.l.b16 %v348
    %v1109 = vunpack.c.h.b16 %v348
    %v1110 = vunpack.c.l.b16 %v349
    %v1111 = vunpack.c.h.b16 %v349
    %v1112 = vunpack.c.l.b16 %v350
    %v1113 = vunpack.c.h.b16 %v350
    %v1114 = vunpack.c.l.b16 %v351
    %v1115 = vunpack.c.h.b16 %v351
    %v1116 = vunpack.c.l.b16 %v352
    %v1117 = vunpack.c.h.b16 %v352
    %v1118 = vunpack.c.l.b16 %v353
    %v1119 = vunpack.c.h.b16 %v353
    %v1120 = vunpack.c.l.b16 %v354
    %v1121 = vunpack.c.h.b16 %v354
    %v1122 = vunpack.c.l.b16 %v355
    %v1123 = vunpack.c.h.b16 %v355
    %v1124 = vpack.c.b16 %v616, %v612
    %v1125 = vpack.c.b16 %v617, %v613
    %v1126 = vpack.c.b16 %v618, %v614
    %v1127 = vpack.c.b16 %v619, %v615
    %v1128 = vpack.c.b16 %v624, %v620
    %v1129 = vpack.c.b16 %v625, %v621
    %v1130 = vpack.c.b16 %v626, %v622
    %v1131 = vpack.c.b16 %v627, %v623
    %v1132 = vpack.c.b16 %v632, %v628
    %v1133 = vpack.c.b16 %v633, %v629
    %v1134 = vpack.c.b16 %v634, %v630
    %v1135 = vpack.c.b16 %v635, %v631
    %v1136 = vpack.c.b16 %v640, %v636
    %v1137 = vpack.c.b16 %v641, %v637
    %v1138 = vpack.c.b16 %v642, %v638
    %v1139 = vpack.c.b16 %v643, %v639
    %v1140 = vpack.c.b16 %v648, %v644
    %v1141 = vpack.c.b16 %v649, %v645
    %v1142 = vpack.c.b16 %v650, %v646
    %v1143 = vpack.c.b16 %v651, %v647
    %v1144 = vpack.c.b16 %v656, %v652
    %v1145 = vpack.c.b16 %v657, %v653
    %v1146 = vpack.c.b16 %v658, %v654
    %v1147 = vpack.c.b16 %v659, %v655
    %v1148 = vpack.c.b16 %v664, %v660
    %v1149 = vpack.c.b16 %v665, %v661
    %v1150 = vpack.c.b16 %v666, %v662
    %v1151 = vpack.c.b16 %v667, %v663
    %v1152 = vpack.c.b16 %v672, %v668
    %v1153 = vpack.c.b16 %v673, %v669
    %v1154 = vpack.c.b16 %v674, %v670
    %v1155 = vpack.c.b16 %v675, %v671
    %v1156 = vpack.c.b16 %v680, %v676
    %v1157 = vpack.c.b16 %v681, %v677
    %v1158 = vpack.c.b16 %v682, %v678
    %v1159 = vpack.c.b16 %v683, %v679
    %v1160 = vpack.c.b16 %v688, %v684
    %v1161 = vpack.c.b16 %v689, %v685
    %v1162 = vpack.c.b16 %v690, %v686
    %v1163 = vpack.c.b16 %v691, %v687
    %v1164 = vpack.c.b16 %v696, %v692
    %v1165 = vpack.c.b16 %v697, %v693
    %v1166 = vpack.c.b16 %v698, %v694
    %v1167 = vpack.c.b16 %v699, %v695
    %v1168 = vpack.c.b16 %v704, %v700
    %v1169 = vpack.c.b16 %v705, %v701
    %v1170 = vpack.c.b16 %v706, %v702
    %v1171 = vpack.c.b16 %v707, %v703
    %v1172 = vpack.c.b16 %v712, %v708
    %v1173 = vpack.c.b16 %v713, %v709
    %v1174 = vpack.c.b16 %v714, %v710
    %v1175 = vpack.c.b16 %v715, %v711
    %v1176 = vpack.c.b16 %v720, %v716
    %v1177 = vpack.c.b16 %v721, %v717
    %v1178 = vpack.c.b16 %v722, %v718
    %v1179 = vpack.c.b16 %v723, %v719
    %v1180 = vpack.c.b16 %v728, %v724
    %v1181 = vpack.c.b16 %v729, %v725
    %v1182 = vpack.c.b16 %v730, %v726
    %v1183 = vpack.c.b16 %v731, %v727
    %v1184 = vpack.c.b16 %v736, %v732
    %v1185 = vpack.c.b16 %v737, %v733
    %v1186 = vpack.c.b16 %v738, %v734
    %v1187 = vpack.c.b16 %v739, %v735
    %v1188 = vpack.c.b16 %v744, %v740
    %v1189 = vpack.c.b16 %v745, %v741
    %v1190 = vpack.c.b16 %v746, %v742
    %v1191 = vpack.c.b16 %v747, %v743
    %v1192 = vpack.c.b16 %v752, %v748
    %v1193 = vpack.c.b16 %v753, %v749
    %v1194 = vpack.c.b16 %v754, %v750
    %v1195 = vpack.c.b16 %v755, %v751
    %v1196 = vpack.c.b16 %v760, %v756
    %v1197 = vpack.c.b16 %v761, %v757
    %v1198 = vpack.c.b16 %v762, %v758
    %v1199 = vpack.c.b16 %v763, %v759
    %v1200 = vpack.c.b16 %v768, %v764
    %v1201 = vpack.c.b16 %v769, %v765
    %v1202 = vpack.c.b16 %v770, %v766
    %v1203 = vpack.c.b16 %v771, %v767
    %v1204 = vpack.c.b16 %v776, %v772
    %v1205 = vpack.c.b16 %v777, %v773
    %v1206 = vpack.c.b16 %v778, %v774
    %v1207 = vpack.c.b16 %v779, %v775
    %v1208 = vpack.c.b16 %v784, %v780
    %v1209 = vpack.c.b16 %v785, %v781
    %v1210 = vpack.c.b16 %v786, %v782
    %v1211 = vpack.c.b16 %v787, %v783
    %v1212 = vpack.c.b16 %v792, %v788
    %v1213 = vpack.c.b16 %v793, %v789
    %v1214 = vpack.c.b16 %v794, %v790
    %v1215 = vpack.c.b16 %v795, %v791
    %v1216 = vpack.c.b16 %v800, %v796
    %v1217 = vpack.c.b16 %v801, %v797
    %v1218 = vpack.c.b16 %v802, %v798
    %v1219 = vpack.c.b16 %v803, %v799
    %v1220 = vpack.c.b16 %v808, %v804
    %v1221 = vpack.c.b16 %v809, %v805
    %v1222 = vpack.c.b16 %v810, %v806
    %v1223 = vpack.c.b16 %v811, %v807
    %v1224 = vpack.c.b16 %v816, %v812
    %v1225 = vpack.c.b16 %v817, %v813
    %v1226 = vpack.c.b16 %v818, %v814
    %v1227 = vpack.c.b16 %v819, %v815
    %v1228 = vpack.c.b16 %v824, %v820
    %v1229 = vpack.c.b16 %v825, %v821
    %v1230 = vpack.c.b16 %v826, %v822
    %v1231 = vpack.c.b16 %v827, %v823
    %v1232 = vpack.c.b16 %v832, %v828
    %v1233 = vpack.c.b16 %v833, %v829
    %v1234 = vpack.c.b16 %v834, %v830
    %v1235 = vpack.c.b16 %v835, %v831
    %v1236 = vpack.c.b16 %v840, %v836
    %v1237 = vpack.c.b16 %v841, %v837
    %v1238 = vpack.c.b16 %v842, %v838
    %v1239 = vpack.c.b16 %v843, %v839
    %v1240 = vpack.c.b16 %v848, %v844
    %v1241 = vpack.c.b16 %v849, %v845
    %v1242 = vpack.c.b16 %v850, %v846
    %v1243 = vpack.c.b16 %v851, %v847
    %v1244 = vpack.c.b16 %v856, %v852
    %v1245 = vpack.c.b16 %v857, %v853
    %v1246 = vpack.c.b16 %v858, %v854
    %v1247 = vpack.c.b16 %v859, %v855
    %v1248 = vpack.c.b16 %v864, %v860
    %v1249 = vpack.c.b16 %v865, %v861
    %v1250 = vpack.c.b16 %v866, %v862
    %v1251 = vpack.c.b16 %v867, %v863
    %v1252 = vpack.c.b16 %v872, %v868
    %v1253 = vpack.c.b16 %v873, %v869
    %v1254 = vpack.c.b16 %v874, %v870
    %v1255 = vpack.c.b16 %v875, %v871
    %v1256 = vpack.c.b16 %v880, %v876
    %v1257 = vpack.c.b16 %v881, %v877
    %v1258 = vpack.c.b16 %v882, %v878
    %v1259 = vpack.c.b16 %v883, %v879
    %v1260 = vpack.c.b16 %v888, %v884
    %v1261 = vpack.c.b16 %v889, %v885
    %v1262 = vpack.c.b16 %v890, %v886
    %v1263 = vpack.c.b16 %v891, %v887
    %v1264 = vpack.c.b16 %v896, %v892
    %v1265 = vpack.c.b16 %v897, %v893
    %v1266 = vpack.c.b16 %v898, %v894
    %v1267 = vpack.c.b16 %v899, %v895
    %v1268 = vpack.c.b16 %v904, %v900
    %v1269 = vpack.c.b16 %v905, %v901
    %v1270 = vpack.c.b16 %v906, %v902
    %v1271 = vpack.c.b16 %v907, %v903
    %v1272 = vpack.c.b16 %v912, %v908
    %v1273 = vpack.c.b16 %v913, %v909
    %v1274 = vpack.c.b16 %v914, %v910
    %v1275 = vpack.c.b16 %v915, %v911
    %v1276 = vpack.c.b16 %v920, %v916
    %v1277 = vpack.c.b16 %v921, %v917
    %v1278 = vpack.c.b16 %v922, %v918
    %v1279 = vpack.c.b16 %v923, %v919
    %v1280 = vpack.c.b16 %v928, %v924
    %v1281 = vpack.c.b16 %v929, %v925
    %v1282 = vpack.c.b16 %v930, %v926
    %v1283 = vpack.c.b16 %v931, %v927
    %v1284 = vpack.c.b16 %v936, %v932
    %v1285 = vpack.c.b16 %v937, %v933
    %v1286 = vpack.c.b16 %v938, %v934
    %v1287 = vpack.c.b16 %v939, %v935
    %v1288 = vpack.c.b16 %v944, %v940
    %v1289 = vpack.c.b16 %v945, %v941
    %v1290 = vpack.c.b16 %v946, %v942
    %v1291 = vpack.c.b16 %v947, %v943
    %v1292 = vpack.c.b16 %v952, %v948
    %v1293 = vpack.c.b16 %v953, %v949
    %v1294 = vpack.c.b16 %v954, %v950
    %v1295 = vpack.c.b16 %v955, %v951
    %v1296 = vpack.c.b16 %v960, %v956
    %v1297 = vpack.c.b16 %v961, %v957
    %v1298 = vpack.c.b16 %v962, %v958
    %v1299 = vpack.c.b16 %v963, %v959
    %v1300 = vpack.c.b16 %v968, %v964
    %v1301 = vpack.c.b16 %v969, %v965
    %v1302 = vpack.c.b16 %v970, %v966
    %v1303 = vpack.c.b16 %v971, %v967
    %v1304 = vpack.c.b16 %v976, %v972
    %v1305 = vpack.c.b16 %v977, %v973
    %v1306 = vpack.c.b16 %v978, %v974
    %v1307 = vpack.c.b16 %v979, %v975
    %v1308 = vpack.c.b16 %v984, %v980
    %v1309 = vpack.c.b16 %v985, %v981
    %v1310 = vpack.c.b16 %v986, %v982
    %v1311 = vpack.c.b16 %v987, %v983
    %v1312 = vpack.c.b16 %v992, %v988
    %v1313 = vpack.c.b16 %v993, %v989
    %v1314 = vpack.c.b16 %v994, %v990
    %v1315 = vpack.c.b16 %v995, %v991
    %v1316 = vpack.c.b16 %v1000, %v996
    %v1317 = vpack.c.b16 %v1001, %v997
    %v1318 = vpack.c.b16 %v1002, %v998
    %v1319 = vpack.c.b16 %v1003, %v999
    %v1320 = vpack.c.b16 %v1008, %v1004
    %v1321 = vpack.c.b16 %v1009, %v1005
    %v1322 = vpack.c.b16 %v1010, %v1006
    %v1323 = vpack.c.b16 %v1011, %v1007
    %v1324 = vpack.c.b16 %v1016, %v1012
    %v1325 = vpack.c.b16 %v1017, %v1013
    %v1326 = vpack.c.b16 %v1018, %v1014
    %v1327 = vpack.c.b16 %v1019, %v1015
    %v1328 = vpack.c.b16 %v1024, %v1020
    %v1329 = vpack.c.b16 %v1025, %v1021
    %v1330 = vpack.c.b16 %v1026, %v1022
    %v1331 = vpack.c.b16 %v1027, %v1023
    %v1332 = vpack.c.b16 %v1032, %v1028
    %v1333 = vpack.c.b16 %v1033, %v1029
    %v1334 = vpack.c.b16 %v1034, %v1030
    %v1335 = vpack.c.b16 %v1035, %v1031
    %v1336 = vpack.c.b16 %v1040, %v1036
    %v1337 = vpack.c.b16 %v1041, %v1037
    %v1338 = vpack.c.b16 %v1042, %v1038
    %v1339 = vpack.c.b16 %v1043, %v1039
    %v1340 = vpack.c.b16 %v1048, %v1044
    %v1341 = vpack.c.b16 %v1049, %v1045
    %v1342 = vpack.c.b16 %v1050, %v1046
    %v1343 = vpack.c.b16 %v1051, %v1047
    %v1344 = vpack.c.b16 %v1056, %v1052
    %v1345 = vpack.c.b16 %v1057, %v1053
    %v1346 = vpack.c.b16 %v1058, %v1054
    %v1347 = vpack.c.b16 %v1059, %v1055
    %v1348 = vpack.c.b16 %v1064, %v1060
    %v1349 = vpack.c.b16 %v1065, %v1061
    %v1350 = vpack.c.b16 %v1066, %v1062
    %v1351 = vpack.c.b16 %v1067, %v1063
    %v1352 = vpack.c.b16 %v1072, %v1068
    %v1353 = vpack.c.b16 %v1073, %v1069
    %v1354 = vpack.c.b16 %v1074, %v1070
    %v1355 = vpack.c.b16 %v1075, %v1071
    %v1356 = vpack.c.b16 %v1080, %v1076
    %v1357 = vpack.c.b16 %v1081, %v1077
    %v1358 = vpack.c.b16 %v1082, %v1078
    %v1359 = vpack.c.b16 %v1083, %v1079
    %v1360 = vpack.c.b16 %v1088, %v1084
    %v1361 = vpack.c.b16 %v1089, %v1085
    %v1362 = vpack.c.b16 %v1090, %v1086
    %v1363 = vpack.c.b16 %v1091, %v1087
    %v1364 = vpack.c.b16 %v1096, %v1092
    %v1365 = vpack.c.b16 %v1097, %v1093
    %v1366 = vpack.c.b16 %v1098, %v1094
    %v1367 = vpack.c.b16 %v1099, %v1095
    %v1368 = vpack.c.b16 %v1104, %v1100
    %v1369 = vpack.c.b16 %v1105, %v1101
    %v1370 = vpack.c.b16 %v1106, %v1102
    %v1371 = vpack.c.b16 %v1107, %v1103
    %v1372 = vpack.c.b16 %v1112, %v1108
    %v1373 = vpack.c.b16 %v1113, %v1109
    %v1374 = vpack.c.b16 %v1114, %v1110
    %v1375 = vpack.c.b16 %v1115, %v1111
    %v1376 = vpack.c.b16 %v1120, %v1116
    %v1377 = vpack.c.b16 %v1121, %v1117
    %v1378 = vpack.c.b16 %v1122, %v1118
    %v1379 = vpack.c.b16 %v1123, %v1119
    %1636 = vmatprep.subr.bf16.mxu0 %v1153
    %1637 = vmatpush1.bf16.msra.mxu0 %v1152
    %1638 = vmatprep.subr.bf16.mxu0 %v1149
    %1639 = vmatpush1.bf16.msra.mxu0 %v1148
    %1640 = vmatprep.subr.bf16.mxu0 %v1145
    %1641 = vmatpush1.bf16.msra.mxu0 %v1144
    %1642 = vmatprep.subr.bf16.mxu0 %v1141
    %1643 = vmatpush1.bf16.msra.mxu0 %v1140
    %1644 = vmatprep.subr.bf16.mxu0 %v1137
    %1645 = vmatpush1.bf16.msra.mxu0 %v1136
    %1646 = vmatprep.subr.bf16.mxu0 %v1133
    %1647 = vmatpush1.bf16.msra.mxu0 %v1132
    %1648 = vmatprep.subr.bf16.mxu0 %v1129
    %1649 = vmatpush1.bf16.msra.mxu0 %v1128
    %1650 = vmatprep.subr.bf16.mxu0 %v1125
    %1651 = vmatpush1.bf16.msra.mxu0 %v1124
    %1652 = vmatprep.subr.bf16.mxu0 %v1185
    %1653 = vmatpush2.bf16.msra.mxu0 %v1184
    %1654 = vmatprep.subr.bf16.mxu0 %v1181
    %1655 = vmatpush2.bf16.msra.mxu0 %v1180
    %1656 = vmatprep.subr.bf16.mxu0 %v1177
    %1657 = vmatpush2.bf16.msra.mxu0 %v1176
    %1658 = vmatprep.subr.bf16.mxu0 %v1173
    %1659 = vmatpush2.bf16.msra.mxu0 %v1172
    %1660 = vmatprep.subr.bf16.mxu0 %v1169
    %1661 = vmatpush2.bf16.msra.mxu0 %v1168
    %1662 = vmatprep.subr.bf16.mxu0 %v1165
    %1663 = vmatpush2.bf16.msra.mxu0 %v1164
    %1664 = vmatprep.subr.bf16.mxu0 %v1161
    %1665 = vmatpush2.bf16.msra.mxu0 %v1160
    %1666 = vmatprep.subr.bf16.mxu0 %v1157
    %1667 = vmatpush2.bf16.msra.mxu0 %v1156
    %1668 = vmatprep.mubr.bf16.mxu0 %v93
    %1669 = vmatmul.mubr.bf16.gmra.mxu0 %v92
    %v1670 = vpop.f32.mrf.mxu0
    %v1671 = vadd.f32 0.0, %v1670
    %v1672 = vpop.f32.mrf.mxu0
    %v1673 = vadd.f32 0.0, %v1672
    %v1674 = vpop.f32.mrf.mxu0
    %v1675 = vpop.f32.mrf.mxu0
    %1676 = vdwg.mxu0
    %1677 = vmatprep.subr.bf16.mxu0 %v1217
    %1678 = vmatpush1.bf16.msra.mxu0 %v1216
    %1679 = vmatprep.subr.bf16.mxu0 %v1213
    %1680 = vmatpush1.bf16.msra.mxu0 %v1212
    %1681 = vmatprep.subr.bf16.mxu0 %v1209
    %1682 = vmatpush1.bf16.msra.mxu0 %v1208
    %1683 = vmatprep.subr.bf16.mxu0 %v1205
    %1684 = vmatpush1.bf16.msra.mxu0 %v1204
    %1685 = vmatprep.subr.bf16.mxu0 %v1201
    %1686 = vmatpush1.bf16.msra.mxu0 %v1200
    %1687 = vmatprep.subr.bf16.mxu0 %v1197
    %1688 = vmatpush1.bf16.msra.mxu0 %v1196
    %1689 = vmatprep.subr.bf16.mxu0 %v1193
    %1690 = vmatpush1.bf16.msra.mxu0 %v1192
    %1691 = vmatprep.subr.bf16.mxu0 %v1189
    %1692 = vmatpush1.bf16.msra.mxu0 %v1188
    %1693 = vmatprep.subr.bf16.mxu0 %v1249
    %1694 = vmatpush2.bf16.msra.mxu0 %v1248
    %1695 = vmatprep.subr.bf16.mxu0 %v1245
    %1696 = vmatpush2.bf16.msra.mxu0 %v1244
    %1697 = vmatprep.subr.bf16.mxu0 %v1241
    %1698 = vmatpush2.bf16.msra.mxu0 %v1240
    %1699 = vmatprep.subr.bf16.mxu0 %v1237
    %1700 = vmatpush2.bf16.msra.mxu0 %v1236
    %1701 = vmatprep.subr.bf16.mxu0 %v1233
    %1702 = vmatpush2.bf16.msra.mxu0 %v1232
    %1703 = vmatprep.subr.bf16.mxu0 %v1229
    %1704 = vmatpush2.bf16.msra.mxu0 %v1228
    %1705 = vmatprep.subr.bf16.mxu0 %v1225
    %1706 = vmatpush2.bf16.msra.mxu0 %v1224
    %1707 = vmatprep.subr.bf16.mxu0 %v1221
    %1708 = vmatpush2.bf16.msra.mxu0 %v1220
    %1709 = vmatprep.mubr.bf16.mxu0 %v95
    %1710 = vmatmul.mubr.bf16.gmra.mxu0 %v94
    %v1711 = vpop.f32.mrf.mxu0
    %v1712 = vadd.f32 %v1671, %v1711
    %v1713 = vpop.f32.mrf.mxu0
    %v1714 = vadd.f32 %v1673, %v1713
    %v1715 = vpop.f32.mrf.mxu0
    %v1716 = vpop.f32.mrf.mxu0
    %1717 = vdwg.mxu0
    %1718 = vmatprep.subr.bf16.mxu0 %v1281
    %1719 = vmatpush1.bf16.msra.mxu0 %v1280
    %1720 = vmatprep.subr.bf16.mxu0 %v1277
    %1721 = vmatpush1.bf16.msra.mxu0 %v1276
    %1722 = vmatprep.subr.bf16.mxu0 %v1273
    %1723 = vmatpush1.bf16.msra.mxu0 %v1272
    %1724 = vmatprep.subr.bf16.mxu0 %v1269
    %1725 = vmatpush1.bf16.msra.mxu0 %v1268
    %1726 = vmatprep.subr.bf16.mxu0 %v1265
    %1727 = vmatpush1.bf16.msra.mxu0 %v1264
    %1728 = vmatprep.subr.bf16.mxu0 %v1261
    %1729 = vmatpush1.bf16.msra.mxu0 %v1260
    %1730 = vmatprep.subr.bf16.mxu0 %v1257
    %1731 = vmatpush1.bf16.msra.mxu0 %v1256
    %1732 = vmatprep.subr.bf16.mxu0 %v1253
    %1733 = vmatpush1.bf16.msra.mxu0 %v1252
    %1734 = vmatprep.subr.bf16.mxu0 %v1313
    %1735 = vmatpush2.bf16.msra.mxu0 %v1312
    %1736 = vmatprep.subr.bf16.mxu0 %v1309
    %1737 = vmatpush2.bf16.msra.mxu0 %v1308
    %1738 = vmatprep.subr.bf16.mxu0 %v1305
    %1739 = vmatpush2.bf16.msra.mxu0 %v1304
    %1740 = vmatprep.subr.bf16.mxu0 %v1301
    %1741 = vmatpush2.bf16.msra.mxu0 %v1300
    %1742 = vmatprep.subr.bf16.mxu0 %v1297
    %1743 = vmatpush2.bf16.msra.mxu0 %v1296
    %1744 = vmatprep.subr.bf16.mxu0 %v1293
    %1745 = vmatpush2.bf16.msra.mxu0 %v1292
    %1746 = vmatprep.subr.bf16.mxu0 %v1289
    %1747 = vmatpush2.bf16.msra.mxu0 %v1288
    %1748 = vmatprep.subr.bf16.mxu0 %v1285
    %1749 = vmatpush2.bf16.msra.mxu0 %v1284
    %1750 = vmatprep.mubr.bf16.mxu0 %v97
    %1751 = vmatmul.mubr.bf16.gmra.mxu0 %v96
    %v1752 = vpop.f32.mrf.mxu0
    %v1753 = vadd.f32 %v1712, %v1752
    %v1754 = vpop.f32.mrf.mxu0
    %v1755 = vadd.f32 %v1714, %v1754
    %v1756 = vpop.f32.mrf.mxu0
    %v1757 = vpop.f32.mrf.mxu0
    %1758 = vdwg.mxu0
    %1759 = vmatprep.subr.bf16.mxu0 %v1345
    %1760 = vmatpush1.bf16.msra.mxu0 %v1344
    %1761 = vmatprep.subr.bf16.mxu0 %v1341
    %1762 = vmatpush1.bf16.msra.mxu0 %v1340
    %1763 = vmatprep.subr.bf16.mxu0 %v1337
    %1764 = vmatpush1.bf16.msra.mxu0 %v1336
    %1765 = vmatprep.subr.bf16.mxu0 %v1333
    %1766 = vmatpush1.bf16.msra.mxu0 %v1332
    %1767 = vmatprep.subr.bf16.mxu0 %v1329
    %1768 = vmatpush1.bf16.msra.mxu0 %v1328
    %1769 = vmatprep.subr.bf16.mxu0 %v1325
    %1770 = vmatpush1.bf16.msra.mxu0 %v1324
    %1771 = vmatprep.subr.bf16.mxu0 %v1321
    %1772 = vmatpush1.bf16.msra.mxu0 %v1320
    %1773 = vmatprep.subr.bf16.mxu0 %v1317
    %1774 = vmatpush1.bf16.msra.mxu0 %v1316
    %1775 = vmatprep.subr.bf16.mxu0 %v1377
    %1776 = vmatpush2.bf16.msra.mxu0 %v1376
    %1777 = vmatprep.subr.bf16.mxu0 %v1373
    %1778 = vmatpush2.bf16.msra.mxu0 %v1372
    %1779 = vmatprep.subr.bf16.mxu0 %v1369
    %1780 = vmatpush2.bf16.msra.mxu0 %v1368
    %1781 = vmatprep.subr.bf16.mxu0 %v1365
    %1782 = vmatpush2.bf16.msra.mxu0 %v1364
    %1783 = vmatprep.subr.bf16.mxu0 %v1361
    %1784 = vmatpush2.bf16.msra.mxu0 %v1360
    %1785 = vmatprep.subr.bf16.mxu0 %v1357
    %1786 = vmatpush2.bf16.msra.mxu0 %v1356
    %1787 = vmatprep.subr.bf16.mxu0 %v1353
    %1788 = vmatpush2.bf16.msra.mxu0 %v1352
    %1789 = vmatprep.subr.bf16.mxu0 %v1349
    %1790 = vmatpush2.bf16.msra.mxu0 %v1348
    %1791 = vmatprep.mubr.bf16.mxu0 %v99
    %1792 = vmatmul.mubr.bf16.gmra.mxu0 %v98
    %v1793 = vpop.f32.mrf.mxu0
    %v1794 = vadd.f32 %v1753, %v1793
    %v1795 = vpop.f32.mrf.mxu0
    %v1796 = vadd.f32 %v1755, %v1795
    %v1797 = vpop.f32.mrf.mxu0
    %v1798 = vpop.f32.mrf.mxu0
    %1799 = vdwg.mxu0
    %1800 = vmatprep.subr.bf16.mxu0 %v1155
    %1801 = vmatpush1.bf16.msra.mxu0 %v1154
    %1802 = vmatprep.subr.bf16.mxu0 %v1151
    %1803 = vmatpush1.bf16.msra.mxu0 %v1150
    %1804 = vmatprep.subr.bf16.mxu0 %v1147
    %1805 = vmatpush1.bf16.msra.mxu0 %v1146
    %1806 = vmatprep.subr.bf16.mxu0 %v1143
    %1807 = vmatpush1.bf16.msra.mxu0 %v1142
    %1808 = vmatprep.subr.bf16.mxu0 %v1139
    %1809 = vmatpush1.bf16.msra.mxu0 %v1138
    %1810 = vmatprep.subr.bf16.mxu0 %v1135
    %1811 = vmatpush1.bf16.msra.mxu0 %v1134
    %1812 = vmatprep.subr.bf16.mxu0 %v1131
    %1813 = vmatpush1.bf16.msra.mxu0 %v1130
    %1814 = vmatprep.subr.bf16.mxu0 %v1127
    %1815 = vmatpush1.bf16.msra.mxu0 %v1126
    %1816 = vmatprep.subr.bf16.mxu0 %v1187
    %1817 = vmatpush2.bf16.msra.mxu0 %v1186
    %1818 = vmatprep.subr.bf16.mxu0 %v1183
    %1819 = vmatpush2.bf16.msra.mxu0 %v1182
    %1820 = vmatprep.subr.bf16.mxu0 %v1179
    %1821 = vmatpush2.bf16.msra.mxu0 %v1178
    %1822 = vmatprep.subr.bf16.mxu0 %v1175
    %1823 = vmatpush2.bf16.msra.mxu0 %v1174
    %1824 = vmatprep.subr.bf16.mxu0 %v1171
    %1825 = vmatpush2.bf16.msra.mxu0 %v1170
    %1826 = vmatprep.subr.bf16.mxu0 %v1167
    %1827 = vmatpush2.bf16.msra.mxu0 %v1166
    %1828 = vmatprep.subr.bf16.mxu0 %v1163
    %1829 = vmatpush2.bf16.msra.mxu0 %v1162
    %1830 = vmatprep.subr.bf16.mxu0 %v1159
    %1831 = vmatpush2.bf16.msra.mxu0 %v1158
    %1832 = vmatprep.mubr.bf16.mxu0 %v93
    %1833 = vmatmul.mubr.bf16.gmra.mxu0 %v92
    %v1834 = vpop.f32.mrf.mxu0
    %v1835 = vadd.f32 0.0, %v1834
    %v1836 = vpop.f32.mrf.mxu0
    %v1837 = vadd.f32 0.0, %v1836
    %v1838 = vpop.f32.mrf.mxu0
    %v1839 = vpop.f32.mrf.mxu0
    %1840 = vdwg.mxu0
    %1841 = vmatprep.subr.bf16.mxu0 %v1219
    %1842 = vmatpush1.bf16.msra.mxu0 %v1218
    %1843 = vmatprep.subr.bf16.mxu0 %v1215
    %1844 = vmatpush1.bf16.msra.mxu0 %v1214
    %1845 = vmatprep.subr.bf16.mxu0 %v1211
    %1846 = vmatpush1.bf16.msra.mxu0 %v1210
    %1847 = vmatprep.subr.bf16.mxu0 %v1207
    %1848 = vmatpush1.bf16.msra.mxu0 %v1206
    %1849 = vmatprep.subr.bf16.mxu0 %v1203
    %1850 = vmatpush1.bf16.msra.mxu0 %v1202
    %1851 = vmatprep.subr.bf16.mxu0 %v1199
    %1852 = vmatpush1.bf16.msra.mxu0 %v1198
    %1853 = vmatprep.subr.bf16.mxu0 %v1195
    %1854 = vmatpush1.bf16.msra.mxu0 %v1194
    %1855 = vmatprep.subr.bf16.mxu0 %v1191
    %1856 = vmatpush1.bf16.msra.mxu0 %v1190
    %1857 = vmatprep.subr.bf16.mxu0 %v1251
    %1858 = vmatpush2.bf16.msra.mxu0 %v1250
    %1859 = vmatprep.subr.bf16.mxu0 %v1247
    %1860 = vmatpush2.bf16.msra.mxu0 %v1246
    %1861 = vmatprep.subr.bf16.mxu0 %v1243
    %1862 = vmatpush2.bf16.msra.mxu0 %v1242
    %1863 = vmatprep.subr.bf16.mxu0 %v1239
    %1864 = vmatpush2.bf16.msra.mxu0 %v1238
    %1865 = vmatprep.subr.bf16.mxu0 %v1235
    %1866 = vmatpush2.bf16.msra.mxu0 %v1234
    %1867 = vmatprep.subr.bf16.mxu0 %v1231
    %1868 = vmatpush2.bf16.msra.mxu0 %v1230
    %1869 = vmatprep.subr.bf16.mxu0 %v1227
    %1870 = vmatpush2.bf16.msra.mxu0 %v1226
    %1871 = vmatprep.subr.bf16.mxu0 %v1223
    %1872 = vmatpush2.bf16.msra.mxu0 %v1222
    %1873 = vmatprep.mubr.bf16.mxu0 %v95
    %1874 = vmatmul.mubr.bf16.gmra.mxu0 %v94
    %v1875 = vpop.f32.mrf.mxu0
    %v1876 = vadd.f32 %v1835, %v1875
    %v1877 = vpop.f32.mrf.mxu0
    %v1878 = vadd.f32 %v1837, %v1877
    %v1879 = vpop.f32.mrf.mxu0
    %v1880 = vpop.f32.mrf.mxu0
    %1881 = vdwg.mxu0
    %1882 = vmatprep.subr.bf16.mxu0 %v1283
    %1883 = vmatpush1.bf16.msra.mxu0 %v1282
    %1884 = vmatprep.subr.bf16.mxu0 %v1279
    %1885 = vmatpush1.bf16.msra.mxu0 %v1278
    %1886 = vmatprep.subr.bf16.mxu0 %v1275
    %1887 = vmatpush1.bf16.msra.mxu0 %v1274
    %1888 = vmatprep.subr.bf16.mxu0 %v1271
    %1889 = vmatpush1.bf16.msra.mxu0 %v1270
    %1890 = vmatprep.subr.bf16.mxu0 %v1267
    %1891 = vmatpush1.bf16.msra.mxu0 %v1266
    %1892 = vmatprep.subr.bf16.mxu0 %v1263
    %1893 = vmatpush1.bf16.msra.mxu0 %v1262
    %1894 = vmatprep.subr.bf16.mxu0 %v1259
    %1895 = vmatpush1.bf16.msra.mxu0 %v1258
    %1896 = vmatprep.subr.bf16.mxu0 %v1255
    %1897 = vmatpush1.bf16.msra.mxu0 %v1254
    %1898 = vmatprep.subr.bf16.mxu0 %v1315
    %1899 = vmatpush2.bf16.msra.mxu0 %v1314
    %1900 = vmatprep.subr.bf16.mxu0 %v1311
    %1901 = vmatpush2.bf16.msra.mxu0 %v1310
    %1902 = vmatprep.subr.bf16.mxu0 %v1307
    %1903 = vmatpush2.bf16.msra.mxu0 %v1306
    %1904 = vmatprep.subr.bf16.mxu0 %v1303
    %1905 = vmatpush2.bf16.msra.mxu0 %v1302
    %1906 = vmatprep.subr.bf16.mxu0 %v1299
    %1907 = vmatpush2.bf16.msra.mxu0 %v1298
    %1908 = vmatprep.subr.bf16.mxu0 %v1295
    %1909 = vmatpush2.bf16.msra.mxu0 %v1294
    %1910 = vmatprep.subr.bf16.mxu0 %v1291
    %1911 = vmatpush2.bf16.msra.mxu0 %v1290
    %1912 = vmatprep.subr.bf16.mxu0 %v1287
    %1913 = vmatpush2.bf16.msra.mxu0 %v1286
    %1914 = vmatprep.mubr.bf16.mxu0 %v97
    %1915 = vmatmul.mubr.bf16.gmra.mxu0 %v96
    %v1916 = vpop.f32.mrf.mxu0
    %v1917 = vadd.f32 %v1876, %v1916
    %v1918 = vpop.f32.mrf.mxu0
    %v1919 = vadd.f32 %v1878, %v1918
    %v1920 = vpop.f32.mrf.mxu0
    %v1921 = vpop.f32.mrf.mxu0
    %1922 = vdwg.mxu0
    %1923 = vmatprep.subr.bf16.mxu0 %v1347
    %1924 = vmatpush1.bf16.msra.mxu0 %v1346
    %1925 = vmatprep.subr.bf16.mxu0 %v1343
    %1926 = vmatpush1.bf16.msra.mxu0 %v1342
    %1927 = vmatprep.subr.bf16.mxu0 %v1339
    %1928 = vmatpush1.bf16.msra.mxu0 %v1338
    %1929 = vmatprep.subr.bf16.mxu0 %v1335
    %1930 = vmatpush1.bf16.msra.mxu0 %v1334
    %1931 = vmatprep.subr.bf16.mxu0 %v1331
    %1932 = vmatpush1.bf16.msra.mxu0 %v1330
    %1933 = vmatprep.subr.bf16.mxu0 %v1327
    %1934 = vmatpush1.bf16.msra.mxu0 %v1326
    %1935 = vmatprep.subr.bf16.mxu0 %v1323
    %1936 = vmatpush1.bf16.msra.mxu0 %v1322
    %1937 = vmatprep.subr.bf16.mxu0 %v1319
    %1938 = vmatpush1.bf16.msra.mxu0 %v1318
    %1939 = vmatprep.subr.bf16.mxu0 %v1379
    %1940 = vmatpush2.bf16.msra.mxu0 %v1378
    %1941 = vmatprep.subr.bf16.mxu0 %v1375
    %1942 = vmatpush2.bf16.msra.mxu0 %v1374
    %1943 = vmatprep.subr.bf16.mxu0 %v1371
    %1944 = vmatpush2.bf16.msra.mxu0 %v1370
    %1945 = vmatprep.subr.bf16.mxu0 %v1367
    %1946 = vmatpush2.bf16.msra.mxu0 %v1366
    %1947 = vmatprep.subr.bf16.mxu0 %v1363
    %1948 = vmatpush2.bf16.msra.mxu0 %v1362
    %1949 = vmatprep.subr.bf16.mxu0 %v1359
    %1950 = vmatpush2.bf16.msra.mxu0 %v1358
    %1951 = vmatprep.subr.bf16.mxu0 %v1355
    %1952 = vmatpush2.bf16.msra.mxu0 %v1354
    %1953 = vmatprep.subr.bf16.mxu0 %v1351
    %1954 = vmatpush2.bf16.msra.mxu0 %v1350
    %1955 = vmatprep.mubr.bf16.mxu0 %v99
    %1956 = vmatmul.mubr.bf16.gmra.mxu0 %v98
    %v1957 = vpop.f32.mrf.mxu0
    %v1958 = vadd.f32 %v1917, %v1957
    %v1959 = vpop.f32.mrf.mxu0
    %v1960 = vadd.f32 %v1919, %v1959
    %v1961 = vpop.f32.mrf.mxu0
    %v1962 = vpop.f32.mrf.mxu0
    %1963 = vdwg.mxu0
    %v1964 = vld [vmem:[%s5] sm:$0xf]
    %v1965 = vld [vmem:[%s6] sm:$0xf]
    %vm1966 = vcmask 1041408
    %v1967 = vsel %vm1966, %v1794, 0.0
    %v1968 = vrot.slane %v1967, 4
    %v1969 = vadd.f32 %v1967, %v1968
    %v1970 = vrot.slane %v1969, 2
    %v1971 = vadd.f32 %v1969, %v1970
    %v1972 = vrot.slane %v1971, 1
    %v1973 = vadd.f32 %v1971, %v1972
    %v1974 = vsel %vm1966, %v1796, 0.0
    %v1975 = vrot.slane %v1974, 4
    %v1976 = vadd.f32 %v1974, %v1975
    %v1977 = vrot.slane %v1976, 2
    %v1978 = vadd.f32 %v1976, %v1977
    %v1979 = vrot.slane %v1978, 1
    %v1980 = vadd.f32 %v1978, %v1979
    %v1981 = vsel %vm1966, %v1958, 0.0
    %v1982 = vrot.slane %v1981, 4
    %v1983 = vadd.f32 %v1981, %v1982
    %v1984 = vrot.slane %v1983, 2
    %v1985 = vadd.f32 %v1983, %v1984
    %v1986 = vrot.slane %v1985, 1
    %v1987 = vadd.f32 %v1985, %v1986
    %v1988 = vsel %vm1966, %v1960, 0.0
    %v1989 = vrot.slane %v1988, 4
    %v1990 = vadd.f32 %v1988, %v1989
    %v1991 = vrot.slane %v1990, 2
    %v1992 = vadd.f32 %v1990, %v1991
    %v1993 = vrot.slane %v1992, 1
    %v1994 = vadd.f32 %v1992, %v1993
    %v1995 = vrcp.pop 2.0
    %v1996 = vmul.f32 %v1973, %v1995
    %v1997 = vmul.f32 %v1980, %v1995
    %v1998 = vmul.f32 %v1987, %v1995
    %v1999 = vmul.f32 %v1994, %v1995
    %v2000 = vsub.f32 %v1794, %v1996
    %v2001 = vsub.f32 %v1796, %v1997
    %v2002 = vsub.f32 %v1958, %v1998
    %v2003 = vsub.f32 %v1960, %v1999
    %v2004 = vmul.f32 %v2000, %v2000
    %v2005 = vmul.f32 %v2001, %v2001
    %v2006 = vmul.f32 %v2002, %v2002
    %v2007 = vmul.f32 %v2003, %v2003
    %v2008 = vsel %vm1966, %v2004, 0.0
    %v2009 = vrot.slane %v2008, 4
    %v2010 = vadd.f32 %v2008, %v2009
    %v2011 = vrot.slane %v2010, 2
    %v2012 = vadd.f32 %v2010, %v2011
    %v2013 = vrot.slane %v2012, 1
    %v2014 = vadd.f32 %v2012, %v2013
    %v2015 = vsel %vm1966, %v2005, 0.0
    %v2016 = vrot.slane %v2015, 4
    %v2017 = vadd.f32 %v2015, %v2016
    %v2018 = vrot.slane %v2017, 2
    %v2019 = vadd.f32 %v2017, %v2018
    %v2020 = vrot.slane %v2019, 1
    %v2021 = vadd.f32 %v2019, %v2020
    %v2022 = vsel %vm1966, %v2006, 0.0
    %v2023 = vrot.slane %v2022, 4
    %v2024 = vadd.f32 %v2022, %v2023
    %v2025 = vrot.slane %v2024, 2
    %v2026 = vadd.f32 %v2024, %v2025
    %v2027 = vrot.slane %v2026, 1
    %v2028 = vadd.f32 %v2026, %v2027
    %v2029 = vsel %vm1966, %v2007, 0.0
    %v2030 = vrot.slane %v2029, 4
    %v2031 = vadd.f32 %v2029, %v2030
    %v2032 = vrot.slane %v2031, 2
    %v2033 = vadd.f32 %v2031, %v2032
    %v2034 = vrot.slane %v2033, 1
    %v2035 = vadd.f32 %v2033, %v2034
    %v2036 = vmul.f32 %v2014, %v1995
    %v2037 = vmul.f32 %v2021, %v1995
    %v2038 = vmul.f32 %v2028, %v1995
    %v2039 = vmul.f32 %v2035, %v1995
    %v2040 = vadd.f32 %v2036, 1e-05
    %v2041 = vadd.f32 %v2037, 1e-05
    %v2042 = vadd.f32 %v2038, 1e-05
    %v2043 = vadd.f32 %v2039, 1e-05
    %v2044 = vrsqrt.pop %v2040
    %v2045 = vrsqrt.pop %v2041
    %v2046 = vrsqrt.pop %v2042
    %v2047 = vrsqrt.pop %v2043
    %v2048 = vmul.f32 %v2000, %v2044
    %v2049 = vmul.f32 %v2001, %v2045
    %v2050 = vmul.f32 %v2002, %v2046
    %v2051 = vmul.f32 %v2003, %v2047
    %v2053 = vlaneseq
    %v2054 = vshrl.u32 %v2053, 7
    %v2055 = vsub.s32 0, %v2054
    %v2056 = vrot.slane %v1964, %v2055
    %v2057 = vlaneseq
    %v2058 = vshrl.u32 %v2057, 7
    %v2059 = vsub.s32 1, %v2058
    %v2060 = vrot.slane %v1964, %v2059
    %v2061 = vlaneseq
    %v2062 = vshrl.u32 %v2061, 7
    %v2063 = vsub.s32 2, %v2062
    %v2064 = vrot.slane %v1964, %v2063
    %v2065 = vlaneseq
    %v2066 = vshrl.u32 %v2065, 7
    %v2067 = vsub.s32 3, %v2066
    %v2068 = vrot.slane %v1964, %v2067
    %v2073 = vmul.f32 %v2048, %v2056
    %v2074 = vmul.f32 %v2049, %v2060
    %v2075 = vmul.f32 %v2050, %v2064
    %v2076 = vmul.f32 %v2051, %v2068
    %v2078 = vlaneseq
    %v2079 = vshrl.u32 %v2078, 7
    %v2080 = vsub.s32 0, %v2079
    %v2081 = vrot.slane %v1965, %v2080
    %v2082 = vlaneseq
    %v2083 = vshrl.u32 %v2082, 7
    %v2084 = vsub.s32 1, %v2083
    %v2085 = vrot.slane %v1965, %v2084
    %v2086 = vlaneseq
    %v2087 = vshrl.u32 %v2086, 7
    %v2088 = vsub.s32 2, %v2087
    %v2089 = vrot.slane %v1965, %v2088
    %v2090 = vlaneseq
    %v2091 = vshrl.u32 %v2090, 7
    %v2092 = vsub.s32 3, %v2091
    %v2093 = vrot.slane %v1965, %v2092
    %v2098 = vadd.f32 %v2073, %v2081
    %v2099 = vadd.f32 %v2074, %v2085
    %v2100 = vadd.f32 %v2075, %v2089
    %v2101 = vadd.f32 %v2076, %v2093
    %v2102 = vmax.f32 %v2098, 0.0
    %v2103 = vmax.f32 %v2099, 0.0
    %v2104 = vmax.f32 %v2100, 0.0
    %v2105 = vmax.f32 %v2101, 0.0
    %v2106 = vpack.c.bf16 %v2102, %v2102
    %v2107 = vpack.c.bf16 %v2103, %v2103
    %v2108 = vpack.c.bf16 %v2104, %v2104
    %v2109 = vpack.c.bf16 %v2105, %v2105
    %v2110 = vld [vmem:[%s2] sm:$0xff]
    %v2111 = vld [vmem:[%s2 + $0x8] sm:$0xff]
    %v2112 = vld [vmem:[%s2 + $0x10] sm:$0xff]
    %v2113 = vld [vmem:[%s2 + $0x18] sm:$0xff]
    %v2114 = vld [vmem:[%s2 + $0x20] sm:$0xff]
    %v2115 = vld [vmem:[%s2 + $0x28] sm:$0xff]
    %v2116 = vld [vmem:[%s2 + $0x30] sm:$0xff]
    %v2117 = vld [vmem:[%s2 + $0x38] sm:$0xff]
    %v2118 = vld [vmem:[%s2 + $0x40] sm:$0xff]
    %v2119 = vld [vmem:[%s2 + $0x48] sm:$0xff]
    %v2120 = vld [vmem:[%s2 + $0x50] sm:$0xff]
    %v2121 = vld [vmem:[%s2 + $0x58] sm:$0xff]
    %v2122 = vld [vmem:[%s2 + $0x60] sm:$0xff]
    %v2123 = vld [vmem:[%s2 + $0x68] sm:$0xff]
    %v2124 = vld [vmem:[%s2 + $0x70] sm:$0xff]
    %v2125 = vld [vmem:[%s2 + $0x78] sm:$0xff]
    %v2126 = vld [vmem:[%s2 + $0x80] sm:$0xff]
    %v2127 = vld [vmem:[%s2 + $0x88] sm:$0xff]
    %v2128 = vld [vmem:[%s2 + $0x90] sm:$0xff]
    %v2129 = vld [vmem:[%s2 + $0x98] sm:$0xff]
    %v2130 = vld [vmem:[%s2 + $0xa0] sm:$0xff]
    %v2131 = vld [vmem:[%s2 + $0xa8] sm:$0xff]
    %v2132 = vld [vmem:[%s2 + $0xb0] sm:$0xff]
    %v2133 = vld [vmem:[%s2 + $0xb8] sm:$0xff]
    %v2134 = vld [vmem:[%s2 + $0xc0] sm:$0xff]
    %v2135 = vld [vmem:[%s2 + $0xc8] sm:$0xff]
    %v2136 = vld [vmem:[%s2 + $0xd0] sm:$0xff]
    %v2137 = vld [vmem:[%s2 + $0xd8] sm:$0xff]
    %v2138 = vld [vmem:[%s2 + $0xe0] sm:$0xff]
    %v2139 = vld [vmem:[%s2 + $0xe8] sm:$0xff]
    %v2140 = vld [vmem:[%s2 + $0xf0] sm:$0xff]
    %v2141 = vld [vmem:[%s2 + $0xf8] sm:$0xff]
    %v2142 = vld [vmem:[%s2 + $0x100] sm:$0xff]
    %v2143 = vld [vmem:[%s2 + $0x108] sm:$0xff]
    %v2144 = vld [vmem:[%s2 + $0x110] sm:$0xff]
    %v2145 = vld [vmem:[%s2 + $0x118] sm:$0xff]
    %v2146 = vld [vmem:[%s2 + $0x120] sm:$0xff]
    %v2147 = vld [vmem:[%s2 + $0x128] sm:$0xff]
    %v2148 = vld [vmem:[%s2 + $0x130] sm:$0xff]
    %v2149 = vld [vmem:[%s2 + $0x138] sm:$0xff]
    %v2150 = vld [vmem:[%s2 + $0x140] sm:$0xff]
    %v2151 = vld [vmem:[%s2 + $0x148] sm:$0xff]
    %v2152 = vld [vmem:[%s2 + $0x150] sm:$0xff]
    %v2153 = vld [vmem:[%s2 + $0x158] sm:$0xff]
    %v2154 = vld [vmem:[%s2 + $0x160] sm:$0xff]
    %v2155 = vld [vmem:[%s2 + $0x168] sm:$0xff]
    %v2156 = vld [vmem:[%s2 + $0x170] sm:$0xff]
    %v2157 = vld [vmem:[%s2 + $0x178] sm:$0xff]
    %v2158 = vld [vmem:[%s2 + $0x180] sm:$0xff]
    %v2159 = vld [vmem:[%s2 + $0x188] sm:$0xff]
    %v2160 = vld [vmem:[%s2 + $0x190] sm:$0xff]
    %v2161 = vld [vmem:[%s2 + $0x198] sm:$0xff]
    %v2162 = vld [vmem:[%s2 + $0x1a0] sm:$0xff]
    %v2163 = vld [vmem:[%s2 + $0x1a8] sm:$0xff]
    %v2164 = vld [vmem:[%s2 + $0x1b0] sm:$0xff]
    %v2165 = vld [vmem:[%s2 + $0x1b8] sm:$0xff]
    %v2166 = vld [vmem:[%s2 + $0x1c0] sm:$0xff]
    %v2167 = vld [vmem:[%s2 + $0x1c8] sm:$0xff]
    %v2168 = vld [vmem:[%s2 + $0x1d0] sm:$0xff]
    %v2169 = vld [vmem:[%s2 + $0x1d8] sm:$0xff]
    %v2170 = vld [vmem:[%s2 + $0x1e0] sm:$0xff]
    %v2171 = vld [vmem:[%s2 + $0x1e8] sm:$0xff]
    %v2172 = vld [vmem:[%s2 + $0x1f0] sm:$0xff]
    %v2173 = vld [vmem:[%s2 + $0x1f8] sm:$0xff]
    %v2238 = vunpack.c.l.b16 %v2110
    %v2239 = vunpack.c.h.b16 %v2110
    %v2240 = vunpack.c.l.b16 %v2111
    %v2241 = vunpack.c.h.b16 %v2111
    %v2242 = vunpack.c.l.b16 %v2112
    %v2243 = vunpack.c.h.b16 %v2112
    %v2244 = vunpack.c.l.b16 %v2113
    %v2245 = vunpack.c.h.b16 %v2113
    %v2246 = vunpack.c.l.b16 %v2114
    %v2247 = vunpack.c.h.b16 %v2114
    %v2248 = vunpack.c.l.b16 %v2115
    %v2249 = vunpack.c.h.b16 %v2115
    %v2250 = vunpack.c.l.b16 %v2116
    %v2251 = vunpack.c.h.b16 %v2116
    %v2252 = vunpack.c.l.b16 %v2117
    %v2253 = vunpack.c.h.b16 %v2117
    %v2254 = vunpack.c.l.b16 %v2118
    %v2255 = vunpack.c.h.b16 %v2118
    %v2256 = vunpack.c.l.b16 %v2119
    %v2257 = vunpack.c.h.b16 %v2119
    %v2258 = vunpack.c.l.b16 %v2120
    %v2259 = vunpack.c.h.b16 %v2120
    %v2260 = vunpack.c.l.b16 %v2121
    %v2261 = vunpack.c.h.b16 %v2121
    %v2262 = vunpack.c.l.b16 %v2122
    %v2263 = vunpack.c.h.b16 %v2122
    %v2264 = vunpack.c.l.b16 %v2123
    %v2265 = vunpack.c.h.b16 %v2123
    %v2266 = vunpack.c.l.b16 %v2124
    %v2267 = vunpack.c.h.b16 %v2124
    %v2268 = vunpack.c.l.b16 %v2125
    %v2269 = vunpack.c.h.b16 %v2125
    %v2270 = vunpack.c.l.b16 %v2126
    %v2271 = vunpack.c.h.b16 %v2126
    %v2272 = vunpack.c.l.b16 %v2127
    %v2273 = vunpack.c.h.b16 %v2127
    %v2274 = vunpack.c.l.b16 %v2128
    %v2275 = vunpack.c.h.b16 %v2128
    %v2276 = vunpack.c.l.b16 %v2129
    %v2277 = vunpack.c.h.b16 %v2129
    %v2278 = vunpack.c.l.b16 %v2130
    %v2279 = vunpack.c.h.b16 %v2130
    %v2280 = vunpack.c.l.b16 %v2131
    %v2281 = vunpack.c.h.b16 %v2131
    %v2282 = vunpack.c.l.b16 %v2132
    %v2283 = vunpack.c.h.b16 %v2132
    %v2284 = vunpack.c.l.b16 %v2133
    %v2285 = vunpack.c.h.b16 %v2133
    %v2286 = vunpack.c.l.b16 %v2134
    %v2287 = vunpack.c.h.b16 %v2134
    %v2288 = vunpack.c.l.b16 %v2135
    %v2289 = vunpack.c.h.b16 %v2135
    %v2290 = vunpack.c.l.b16 %v2136
    %v2291 = vunpack.c.h.b16 %v2136
    %v2292 = vunpack.c.l.b16 %v2137
    %v2293 = vunpack.c.h.b16 %v2137
    %v2294 = vunpack.c.l.b16 %v2138
    %v2295 = vunpack.c.h.b16 %v2138
    %v2296 = vunpack.c.l.b16 %v2139
    %v2297 = vunpack.c.h.b16 %v2139
    %v2298 = vunpack.c.l.b16 %v2140
    %v2299 = vunpack.c.h.b16 %v2140
    %v2300 = vunpack.c.l.b16 %v2141
    %v2301 = vunpack.c.h.b16 %v2141
    %v2302 = vunpack.c.l.b16 %v2142
    %v2303 = vunpack.c.h.b16 %v2142
    %v2304 = vunpack.c.l.b16 %v2143
    %v2305 = vunpack.c.h.b16 %v2143
    %v2306 = vunpack.c.l.b16 %v2144
    %v2307 = vunpack.c.h.b16 %v2144
    %v2308 = vunpack.c.l.b16 %v2145
    %v2309 = vunpack.c.h.b16 %v2145
    %v2310 = vunpack.c.l.b16 %v2146
    %v2311 = vunpack.c.h.b16 %v2146
    %v2312 = vunpack.c.l.b16 %v2147
    %v2313 = vunpack.c.h.b16 %v2147
    %v2314 = vunpack.c.l.b16 %v2148
    %v2315 = vunpack.c.h.b16 %v2148
    %v2316 = vunpack.c.l.b16 %v2149
    %v2317 = vunpack.c.h.b16 %v2149
    %v2318 = vunpack.c.l.b16 %v2150
    %v2319 = vunpack.c.h.b16 %v2150
    %v2320 = vunpack.c.l.b16 %v2151
    %v2321 = vunpack.c.h.b16 %v2151
    %v2322 = vunpack.c.l.b16 %v2152
    %v2323 = vunpack.c.h.b16 %v2152
    %v2324 = vunpack.c.l.b16 %v2153
    %v2325 = vunpack.c.h.b16 %v2153
    %v2326 = vunpack.c.l.b16 %v2154
    %v2327 = vunpack.c.h.b16 %v2154
    %v2328 = vunpack.c.l.b16 %v2155
    %v2329 = vunpack.c.h.b16 %v2155
    %v2330 = vunpack.c.l.b16 %v2156
    %v2331 = vunpack.c.h.b16 %v2156
    %v2332 = vunpack.c.l.b16 %v2157
    %v2333 = vunpack.c.h.b16 %v2157
    %v2334 = vunpack.c.l.b16 %v2158
    %v2335 = vunpack.c.h.b16 %v2158
    %v2336 = vunpack.c.l.b16 %v2159
    %v2337 = vunpack.c.h.b16 %v2159
    %v2338 = vunpack.c.l.b16 %v2160
    %v2339 = vunpack.c.h.b16 %v2160
    %v2340 = vunpack.c.l.b16 %v2161
    %v2341 = vunpack.c.h.b16 %v2161
    %v2342 = vunpack.c.l.b16 %v2162
    %v2343 = vunpack.c.h.b16 %v2162
    %v2344 = vunpack.c.l.b16 %v2163
    %v2345 = vunpack.c.h.b16 %v2163
    %v2346 = vunpack.c.l.b16 %v2164
    %v2347 = vunpack.c.h.b16 %v2164
    %v2348 = vunpack.c.l.b16 %v2165
    %v2349 = vunpack.c.h.b16 %v2165
    %v2350 = vunpack.c.l.b16 %v2166
    %v2351 = vunpack.c.h.b16 %v2166
    %v2352 = vunpack.c.l.b16 %v2167
    %v2353 = vunpack.c.h.b16 %v2167
    %v2354 = vunpack.c.l.b16 %v2168
    %v2355 = vunpack.c.h.b16 %v2168
    %v2356 = vunpack.c.l.b16 %v2169
    %v2357 = vunpack.c.h.b16 %v2169
    %v2358 = vunpack.c.l.b16 %v2170
    %v2359 = vunpack.c.h.b16 %v2170
    %v2360 = vunpack.c.l.b16 %v2171
    %v2361 = vunpack.c.h.b16 %v2171
    %v2362 = vunpack.c.l.b16 %v2172
    %v2363 = vunpack.c.h.b16 %v2172
    %v2364 = vunpack.c.l.b16 %v2173
    %v2365 = vunpack.c.h.b16 %v2173
    %v2366 = vpack.c.b16 %v2240, %v2238
    %v2367 = vpack.c.b16 %v2241, %v2239
    %v2368 = vpack.c.b16 %v2244, %v2242
    %v2369 = vpack.c.b16 %v2245, %v2243
    %v2370 = vpack.c.b16 %v2248, %v2246
    %v2371 = vpack.c.b16 %v2249, %v2247
    %v2372 = vpack.c.b16 %v2252, %v2250
    %v2373 = vpack.c.b16 %v2253, %v2251
    %v2374 = vpack.c.b16 %v2256, %v2254
    %v2375 = vpack.c.b16 %v2257, %v2255
    %v2376 = vpack.c.b16 %v2260, %v2258
    %v2377 = vpack.c.b16 %v2261, %v2259
    %v2378 = vpack.c.b16 %v2264, %v2262
    %v2379 = vpack.c.b16 %v2265, %v2263
    %v2380 = vpack.c.b16 %v2268, %v2266
    %v2381 = vpack.c.b16 %v2269, %v2267
    %v2382 = vpack.c.b16 %v2272, %v2270
    %v2383 = vpack.c.b16 %v2273, %v2271
    %v2384 = vpack.c.b16 %v2276, %v2274
    %v2385 = vpack.c.b16 %v2277, %v2275
    %v2386 = vpack.c.b16 %v2280, %v2278
    %v2387 = vpack.c.b16 %v2281, %v2279
    %v2388 = vpack.c.b16 %v2284, %v2282
    %v2389 = vpack.c.b16 %v2285, %v2283
    %v2390 = vpack.c.b16 %v2288, %v2286
    %v2391 = vpack.c.b16 %v2289, %v2287
    %v2392 = vpack.c.b16 %v2292, %v2290
    %v2393 = vpack.c.b16 %v2293, %v2291
    %v2394 = vpack.c.b16 %v2296, %v2294
    %v2395 = vpack.c.b16 %v2297, %v2295
    %v2396 = vpack.c.b16 %v2300, %v2298
    %v2397 = vpack.c.b16 %v2301, %v2299
    %v2398 = vpack.c.b16 %v2304, %v2302
    %v2399 = vpack.c.b16 %v2305, %v2303
    %v2400 = vpack.c.b16 %v2308, %v2306
    %v2401 = vpack.c.b16 %v2309, %v2307
    %v2402 = vpack.c.b16 %v2312, %v2310
    %v2403 = vpack.c.b16 %v2313, %v2311
    %v2404 = vpack.c.b16 %v2316, %v2314
    %v2405 = vpack.c.b16 %v2317, %v2315
    %v2406 = vpack.c.b16 %v2320, %v2318
    %v2407 = vpack.c.b16 %v2321, %v2319
    %v2408 = vpack.c.b16 %v2324, %v2322
    %v2409 = vpack.c.b16 %v2325, %v2323
    %v2410 = vpack.c.b16 %v2328, %v2326
    %v2411 = vpack.c.b16 %v2329, %v2327
    %v2412 = vpack.c.b16 %v2332, %v2330
    %v2413 = vpack.c.b16 %v2333, %v2331
    %v2414 = vpack.c.b16 %v2336, %v2334
    %v2415 = vpack.c.b16 %v2337, %v2335
    %v2416 = vpack.c.b16 %v2340, %v2338
    %v2417 = vpack.c.b16 %v2341, %v2339
    %v2418 = vpack.c.b16 %v2344, %v2342
    %v2419 = vpack.c.b16 %v2345, %v2343
    %v2420 = vpack.c.b16 %v2348, %v2346
    %v2421 = vpack.c.b16 %v2349, %v2347
    %v2422 = vpack.c.b16 %v2352, %v2350
    %v2423 = vpack.c.b16 %v2353, %v2351
    %v2424 = vpack.c.b16 %v2356, %v2354
    %v2425 = vpack.c.b16 %v2357, %v2355
    %v2426 = vpack.c.b16 %v2360, %v2358
    %v2427 = vpack.c.b16 %v2361, %v2359
    %v2428 = vpack.c.b16 %v2364, %v2362
    %v2429 = vpack.c.b16 %v2365, %v2363
    %2494 = vmatprep.subr.bf16.mxu0 %v2381
    %2495 = vmatpush1.bf16.msra.mxu0 %v2380
    %2496 = vmatprep.subr.bf16.mxu0 %v2379
    %2497 = vmatpush1.bf16.msra.mxu0 %v2378
    %2498 = vmatprep.subr.bf16.mxu0 %v2377
    %2499 = vmatpush1.bf16.msra.mxu0 %v2376
    %2500 = vmatprep.subr.bf16.mxu0 %v2375
    %2501 = vmatpush1.bf16.msra.mxu0 %v2374
    %2502 = vmatprep.subr.bf16.mxu0 %v2373
    %2503 = vmatpush1.bf16.msra.mxu0 %v2372
    %2504 = vmatprep.subr.bf16.mxu0 %v2371
    %2505 = vmatpush1.bf16.msra.mxu0 %v2370
    %2506 = vmatprep.subr.bf16.mxu0 %v2369
    %2507 = vmatpush1.bf16.msra.mxu0 %v2368
    %2508 = vmatprep.subr.bf16.mxu0 %v2367
    %2509 = vmatpush1.bf16.msra.mxu0 %v2366
    %2510 = vmatprep.subr.bf16.mxu0 %v2397
    %2511 = vmatpush2.bf16.msra.mxu0 %v2396
    %2512 = vmatprep.subr.bf16.mxu0 %v2395
    %2513 = vmatpush2.bf16.msra.mxu0 %v2394
    %2514 = vmatprep.subr.bf16.mxu0 %v2393
    %2515 = vmatpush2.bf16.msra.mxu0 %v2392
    %2516 = vmatprep.subr.bf16.mxu0 %v2391
    %2517 = vmatpush2.bf16.msra.mxu0 %v2390
    %2518 = vmatprep.subr.bf16.mxu0 %v2389
    %2519 = vmatpush2.bf16.msra.mxu0 %v2388
    %2520 = vmatprep.subr.bf16.mxu0 %v2387
    %2521 = vmatpush2.bf16.msra.mxu0 %v2386
    %2522 = vmatprep.subr.bf16.mxu0 %v2385
    %2523 = vmatpush2.bf16.msra.mxu0 %v2384
    %2524 = vmatprep.subr.bf16.mxu0 %v2383
    %2525 = vmatpush2.bf16.msra.mxu0 %v2382
    %2526 = vmatprep.mubr.bf16.mxu0 %v2107
    %2527 = vmatmul.mubr.bf16.gmra.mxu0 %v2106
    %v2528 = vpop.f32.mrf.mxu0
    %v2529 = vadd.f32 0.0, %v2528
    %v2530 = vpop.f32.mrf.mxu0
    %v2531 = vadd.f32 0.0, %v2530
    %v2532 = vpop.f32.mrf.mxu0
    %v2533 = vpop.f32.mrf.mxu0
    %2534 = vdwg.mxu0
    %2535 = vmatprep.subr.bf16.mxu0 %v2413
    %2536 = vmatpush1.bf16.msra.mxu0 %v2412
    %2537 = vmatprep.subr.bf16.mxu0 %v2411
    %2538 = vmatpush1.bf16.msra.mxu0 %v2410
    %2539 = vmatprep.subr.bf16.mxu0 %v2409
    %2540 = vmatpush1.bf16.msra.mxu0 %v2408
    %2541 = vmatprep.subr.bf16.mxu0 %v2407
    %2542 = vmatpush1.bf16.msra.mxu0 %v2406
    %2543 = vmatprep.subr.bf16.mxu0 %v2405
    %2544 = vmatpush1.bf16.msra.mxu0 %v2404
    %2545 = vmatprep.subr.bf16.mxu0 %v2403
    %2546 = vmatpush1.bf16.msra.mxu0 %v2402
    %2547 = vmatprep.subr.bf16.mxu0 %v2401
    %2548 = vmatpush1.bf16.msra.mxu0 %v2400
    %2549 = vmatprep.subr.bf16.mxu0 %v2399
    %2550 = vmatpush1.bf16.msra.mxu0 %v2398
    %2551 = vmatprep.subr.bf16.mxu0 %v2429
    %2552 = vmatpush2.bf16.msra.mxu0 %v2428
    %2553 = vmatprep.subr.bf16.mxu0 %v2427
    %2554 = vmatpush2.bf16.msra.mxu0 %v2426
    %2555 = vmatprep.subr.bf16.mxu0 %v2425
    %2556 = vmatpush2.bf16.msra.mxu0 %v2424
    %2557 = vmatprep.subr.bf16.mxu0 %v2423
    %2558 = vmatpush2.bf16.msra.mxu0 %v2422
    %2559 = vmatprep.subr.bf16.mxu0 %v2421
    %2560 = vmatpush2.bf16.msra.mxu0 %v2420
    %2561 = vmatprep.subr.bf16.mxu0 %v2419
    %2562 = vmatpush2.bf16.msra.mxu0 %v2418
    %2563 = vmatprep.subr.bf16.mxu0 %v2417
    %2564 = vmatpush2.bf16.msra.mxu0 %v2416
    %2565 = vmatprep.subr.bf16.mxu0 %v2415
    %2566 = vmatpush2.bf16.msra.mxu0 %v2414
    %2567 = vmatprep.mubr.bf16.mxu0 %v2109
    %2568 = vmatmul.mubr.bf16.gmra.mxu0 %v2108
    %v2569 = vpop.f32.mrf.mxu0
    %v2570 = vadd.f32 %v2529, %v2569
    %v2571 = vpop.f32.mrf.mxu0
    %v2572 = vadd.f32 %v2531, %v2571
    %v2573 = vpop.f32.mrf.mxu0
    %v2574 = vpop.f32.mrf.mxu0
    %2575 = vdwg.mxu0
    %v2576 = vld [vmem:[%s7] sm:$0x3]
    %v2577 = vld [vmem:[%s8] sm:$0x3]
    %v2578 = vsel %vm1966, %v2570, 0.0
    %v2579 = vrot.slane %v2578, 4
    %v2580 = vadd.f32 %v2578, %v2579
    %v2581 = vrot.slane %v2580, 2
    %v2582 = vadd.f32 %v2580, %v2581
    %v2583 = vrot.slane %v2582, 1
    %v2584 = vadd.f32 %v2582, %v2583
    %v2585 = vsel %vm1966, %v2572, 0.0
    %v2586 = vrot.slane %v2585, 4
    %v2587 = vadd.f32 %v2585, %v2586
    %v2588 = vrot.slane %v2587, 2
    %v2589 = vadd.f32 %v2587, %v2588
    %v2590 = vrot.slane %v2589, 1
    %v2591 = vadd.f32 %v2589, %v2590
    %v2592 = vmul.f32 %v2584, %v1995
    %v2593 = vmul.f32 %v2591, %v1995
    %v2594 = vsub.f32 %v2570, %v2592
    %v2595 = vsub.f32 %v2572, %v2593
    %v2596 = vmul.f32 %v2594, %v2594
    %v2597 = vmul.f32 %v2595, %v2595
    %v2598 = vsel %vm1966, %v2596, 0.0
    %v2599 = vrot.slane %v2598, 4
    %v2600 = vadd.f32 %v2598, %v2599
    %v2601 = vrot.slane %v2600, 2
    %v2602 = vadd.f32 %v2600, %v2601
    %v2603 = vrot.slane %v2602, 1
    %v2604 = vadd.f32 %v2602, %v2603
    %v2605 = vsel %vm1966, %v2597, 0.0
    %v2606 = vrot.slane %v2605, 4
    %v2607 = vadd.f32 %v2605, %v2606
    %v2608 = vrot.slane %v2607, 2
    %v2609 = vadd.f32 %v2607, %v2608
    %v2610 = vrot.slane %v2609, 1
    %v2611 = vadd.f32 %v2609, %v2610
    %v2612 = vmul.f32 %v2604, %v1995
    %v2613 = vmul.f32 %v2611, %v1995
    %v2614 = vadd.f32 %v2612, 1e-05
    %v2615 = vadd.f32 %v2613, 1e-05
    %v2616 = vrsqrt.pop %v2614
    %v2617 = vrsqrt.pop %v2615
    %v2618 = vmul.f32 %v2594, %v2616
    %v2619 = vmul.f32 %v2595, %v2617
    %v2621 = vlaneseq
    %v2622 = vshrl.u32 %v2621, 7
    %v2623 = vsub.s32 0, %v2622
    %v2624 = vrot.slane %v2576, %v2623
    %v2625 = vlaneseq
    %v2626 = vshrl.u32 %v2625, 7
    %v2627 = vsub.s32 1, %v2626
    %v2628 = vrot.slane %v2576, %v2627
    %v2631 = vmul.f32 %v2618, %v2624
    %v2632 = vmul.f32 %v2619, %v2628
    %v2634 = vlaneseq
    %v2635 = vshrl.u32 %v2634, 7
    %v2636 = vsub.s32 0, %v2635
    %v2637 = vrot.slane %v2577, %v2636
    %v2638 = vlaneseq
    %v2639 = vshrl.u32 %v2638, 7
    %v2640 = vsub.s32 1, %v2639
    %v2641 = vrot.slane %v2577, %v2640
    %v2644 = vadd.f32 %v2631, %v2637
    %v2645 = vadd.f32 %v2632, %v2641
    %v2646 = vmax.f32 %v2644, 0.0
    %v2647 = vmax.f32 %v2645, 0.0
    %v2648 = vld [vmem:[%s3] sm:$0xff]
    %v2649 = vld [vmem:[%s3 + $0x8] sm:$0xff]
    %v2650 = vld [vmem:[%s3 + $0x10] sm:$0xff]
    %v2651 = vld [vmem:[%s3 + $0x18] sm:$0xff]
    %v2652 = vld [vmem:[%s3 + $0x20] sm:$0xff]
    %v2653 = vld [vmem:[%s3 + $0x28] sm:$0xff]
    %v2654 = vld [vmem:[%s3 + $0x30] sm:$0xff]
    %v2655 = vld [vmem:[%s3 + $0x38] sm:$0xff]
    %v2656 = vld [vmem:[%s3 + $0x40] sm:$0xff]
    %v2657 = vld [vmem:[%s3 + $0x48] sm:$0xff]
    %v2658 = vld [vmem:[%s3 + $0x50] sm:$0xff]
    %v2659 = vld [vmem:[%s3 + $0x58] sm:$0xff]
    %v2660 = vld [vmem:[%s3 + $0x60] sm:$0xff]
    %v2661 = vld [vmem:[%s3 + $0x68] sm:$0xff]
    %v2662 = vld [vmem:[%s3 + $0x70] sm:$0xff]
    %v2663 = vld [vmem:[%s3 + $0x78] sm:$0xff]
    %v2664 = vld [vmem:[%s3 + $0x80] sm:$0xff]
    %v2665 = vld [vmem:[%s3 + $0x88] sm:$0xff]
    %v2666 = vld [vmem:[%s3 + $0x90] sm:$0xff]
    %v2667 = vld [vmem:[%s3 + $0x98] sm:$0xff]
    %v2668 = vld [vmem:[%s3 + $0xa0] sm:$0xff]
    %v2669 = vld [vmem:[%s3 + $0xa8] sm:$0xff]
    %v2670 = vld [vmem:[%s3 + $0xb0] sm:$0xff]
    %v2671 = vld [vmem:[%s3 + $0xb8] sm:$0xff]
    %v2672 = vld [vmem:[%s3 + $0xc0] sm:$0xff]
    %v2673 = vld [vmem:[%s3 + $0xc8] sm:$0xff]
    %v2674 = vld [vmem:[%s3 + $0xd0] sm:$0xff]
    %v2675 = vld [vmem:[%s3 + $0xd8] sm:$0xff]
    %v2676 = vld [vmem:[%s3 + $0xe0] sm:$0xff]
    %v2677 = vld [vmem:[%s3 + $0xe8] sm:$0xff]
    %v2678 = vld [vmem:[%s3 + $0xf0] sm:$0xff]
    %v2679 = vld [vmem:[%s3 + $0xf8] sm:$0xff]
    %v2680 = vld [vmem:[%s4] sm:$0x1]
    %v2682 = vlaneseq
    %v2683 = vshrl.u32 %v2682, 7
    %v2684 = vsub.s32 0, %v2683
    %v2685 = vrot.slane %v2680, %v2684
    %2687 = vmatprep.subr.mxu0 0.0
    %2688 = vmatpush1.msra.mxu0 %v2663
    %2689 = vmatprep.subr.mxu0 0.0
    %2690 = vmatpush1.msra.mxu0 %v2662
    %2691 = vmatprep.subr.mxu0 0.0
    %2692 = vmatpush1.msra.mxu0 %v2661
    %2693 = vmatprep.subr.mxu0 0.0
    %2694 = vmatpush1.msra.mxu0 %v2660
    %2695 = vmatprep.subr.mxu0 0.0
    %2696 = vmatpush1.msra.mxu0 %v2659
    %2697 = vmatprep.subr.mxu0 0.0
    %2698 = vmatpush1.msra.mxu0 %v2658
    %2699 = vmatprep.subr.mxu0 0.0
    %2700 = vmatpush1.msra.mxu0 %v2657
    %2701 = vmatprep.subr.mxu0 0.0
    %2702 = vmatpush1.msra.mxu0 %v2656
    %2703 = vmatprep.subr.mxu0 0.0
    %2704 = vmatpush1.msra.mxu0 %v2655
    %2705 = vmatprep.subr.mxu0 0.0
    %2706 = vmatpush1.msra.mxu0 %v2654
    %2707 = vmatprep.subr.mxu0 0.0
    %2708 = vmatpush1.msra.mxu0 %v2653
    %2709 = vmatprep.subr.mxu0 0.0
    %2710 = vmatpush1.msra.mxu0 %v2652
    %2711 = vmatprep.subr.mxu0 0.0
    %2712 = vmatpush1.msra.mxu0 %v2651
    %2713 = vmatprep.subr.mxu0 0.0
    %2714 = vmatpush1.msra.mxu0 %v2650
    %2715 = vmatprep.subr.mxu0 0.0
    %2716 = vmatpush1.msra.mxu0 %v2649
    %2717 = vmatprep.subr.mxu0 0.0
    %2718 = vmatpush1.msra.mxu0 %v2648
    %2719 = vmatprep.subr.mxu0 0.0
    %2720 = vmatpush2.msra.mxu0 %v2679
    %2721 = vmatprep.subr.mxu0 0.0
    %2722 = vmatpush2.msra.mxu0 %v2678
    %2723 = vmatprep.subr.mxu0 0.0
    %2724 = vmatpush2.msra.mxu0 %v2677
    %2725 = vmatprep.subr.mxu0 0.0
    %2726 = vmatpush2.msra.mxu0 %v2676
    %2727 = vmatprep.subr.mxu0 0.0
    %2728 = vmatpush2.msra.mxu0 %v2675
    %2729 = vmatprep.subr.mxu0 0.0
    %2730 = vmatpush2.msra.mxu0 %v2674
    %2731 = vmatprep.subr.mxu0 0.0
    %2732 = vmatpush2.msra.mxu0 %v2673
    %2733 = vmatprep.subr.mxu0 0.0
    %2734 = vmatpush2.msra.mxu0 %v2672
    %2735 = vmatprep.subr.mxu0 0.0
    %2736 = vmatpush2.msra.mxu0 %v2671
    %2737 = vmatprep.subr.mxu0 0.0
    %2738 = vmatpush2.msra.mxu0 %v2670
    %2739 = vmatprep.subr.mxu0 0.0
    %2740 = vmatpush2.msra.mxu0 %v2669
    %2741 = vmatprep.subr.mxu0 0.0
    %2742 = vmatpush2.msra.mxu0 %v2668
    %2743 = vmatprep.subr.mxu0 0.0
    %2744 = vmatpush2.msra.mxu0 %v2667
    %2745 = vmatprep.subr.mxu0 0.0
    %2746 = vmatpush2.msra.mxu0 %v2666
    %2747 = vmatprep.subr.mxu0 0.0
    %2748 = vmatpush2.msra.mxu0 %v2665
    %2749 = vmatprep.subr.mxu0 0.0
    %2750 = vmatpush2.msra.mxu0 %v2664
    %2751 = vmatprep.mubr.f32.mxu0 %v2647
    %2752 = vmatmul.mubr.f32.gmra.mxu0 %v2646
    %v2753 = vpop.f32.mrf.mxu0
    %v2754 = vadd.f32 %v2685, %v2753
    %v2755 = vpop.f32.mrf.mxu0
    %2756 = vdwg.mxu0
    %v2757 = vlaneseq
    %v2758 = vand.u32 %v2757, 127
    %vm2759 = vcmp.eq.s32.totalorder %v2758, 0
    %vm2760 = vcmp.eq.s32.totalorder %v2758, 3
    %vm2761 = vmor %vm2759, %vm2760
    %v2762 = vsel %vm2761, 1.0, 0.0
    %v2763 = vadd.f32 %v2754, %v2762
    %vm2764 = vcmask 25600
    %2765 = vst.msk [vmem:[%s9] sm:$0x3] %vm2764, %v2763
    // Predicated region
    $region42: #{_lambda_.4} parent=1 // pred_check
      _
    $region43: #{_lambda_.4} parent=1 // pred_check_branch
      %2767 = sbr.rel (0) target = $region45
    $region44: #{_lambda_.4} parent=1 // pred_region
      _
    $region45: #{_lambda_.4} parent=1 // pred_fallthru
      _
    // Predicated region
    $region46: #{_lambda_.4} parent=1 // pred_check
      _
    $region47: #{_lambda_.4} parent=1 // pred_check_branch
      %2769 = sbr.rel (0) target = $region49
    $region48: #{_lambda_.4} parent=1 // pred_region
      _
    $region49: #{_lambda_.4} parent=1 // pred_fallthru
      _
    %2770 = vsyncpa [#allocation3], 1

</llo_original>
